<compile_context>
chip_gen: v7x
topology: tpu7x:2x2x1
jax: 0.10.0
libtpu: 0.0.40
codegen_flags: <defaults>
</compile_context>

<pallas_src>
import functools

import jax
import jax.numpy as jnp
from jax.experimental import pallas as pl
from jax.experimental.pallas import tpu as pltpu


def _round_up(x, m):
    return ((x + m - 1) // m) * m


# ---------------------------------------------------------------------------
# Kernel
# ---------------------------------------------------------------------------
def _column_predictor_kernel(q_ref, csum_ref,
                             w_ih_ref, w_hh_ref, b_ref,
                             wq_ref, bq_ref, wc_ref, bc_ref,
                             out_ref):
    # Per-grid-step views:
    #   q_ref    : (Tq, Bt, E)   time-major question embeddings (bf16)
    #   csum_ref : (Bt, C, E)    token-summed column embeddings (bf16)
    #   out_ref  : (Bt, C)       cosine similarities (f32)
    Tq, Bt, E = q_ref.shape
    H2, H8 = w_hh_ref.shape            # (2H, 8H) block-diagonal, H = padded hidden
    H = H2 // 2
    H3, H4 = 3 * H, 4 * H

    # ---- input->gate precompute: one dense bf16 matmul, bias folded --------
    # Column layout of gx: [fwd: i,f,o,g | bwd: i,f,o,g], each block H lanes.
    q2d = q_ref[...].reshape(Tq * Bt, E)
    gx = (jnp.dot(q2d, w_ih_ref[...], preferred_element_type=jnp.float32)
          + b_ref[...]).reshape(Tq, Bt, H8)             # f32, single buffer

    # ---- fused fwd+bwd LSTM recurrence: one MXU push per timestep ---------
    w_hh = w_hh_ref[...]                                 # bf16 (2H, 8H)
    h = jnp.zeros((Bt, H2), jnp.float32)                 # [h_fwd | h_bwd]
    c_f = jnp.zeros((Bt, H), jnp.float32)
    c_b = jnp.zeros((Bt, H), jnp.float32)

    # Static unroll of the short fixed-length recurrence: static, 128-lane
    # aligned slices everywhere; only h @ W_hh is on the serial MXU path.
    for t in range(Tq):
        hw = jnp.dot(h.astype(w_hh.dtype), w_hh,
                     preferred_element_type=jnp.float32)          # (Bt, 8H)
        g_f = hw[:, :H4] + gx[t, :, :H4]                # fwd gates, time t
        g_b = hw[:, H4:] + gx[Tq - 1 - t, :, H4:]       # bwd gates, time Tq-1-t
        # per-direction gate order [i, f, o, g]: one contiguous 3H sigmoid and
        # one contiguous H tanh per direction (all slices 128-lane aligned).
        s_f = jax.nn.sigmoid(g_f[:, :H3])
        s_b = jax.nn.sigmoid(g_b[:, :H3])
        t_f = jnp.tanh(g_f[:, H3:])
        t_b = jnp.tanh(g_b[:, H3:])
        c_f = s_f[:, H:2 * H] * c_f + s_f[:, :H] * t_f
        c_b = s_b[:, H:2 * H] * c_b + s_b[:, :H] * t_b
        h_f = s_f[:, 2 * H:H3] * jnp.tanh(c_f)
        h_b = s_b[:, 2 * H:H3] * jnp.tanh(c_b)
        h = jnp.concatenate([h_f, h_b], axis=1)         # lane-aligned concat

    # h == [h_fwd_final | h_bwd_final] == torch.cat((q_hidden[-2], q_hidden[-1]), 1)
    q_enc = (jnp.dot(h.astype(wq_ref.dtype), wq_ref[...],
                     preferred_element_type=jnp.float32)
             + bq_ref[...])                                        # (Bt, H)

    # ---- column projection: one flattened matmul per tile ------------------
    C = csum_ref.shape[1]
    c2d = csum_ref[...].reshape(Bt * C, E)
    c_enc = (jnp.dot(c2d, wc_ref[...], preferred_element_type=jnp.float32)
             + bc_ref[...]).reshape(Bt, C, H)

    # ---- F.cosine_similarity(q_enc.unsqueeze(1), c_enc, dim=2), eps=1e-8 ---
    eps = jnp.float32(1e-8)
    dots = jnp.sum(q_enc[:, None, :] * c_enc, axis=-1)                 # (Bt, C)
    q_norm = jnp.sqrt(jnp.sum(q_enc * q_enc, axis=-1, keepdims=True))  # (Bt, 1)
    c_norm = jnp.sqrt(jnp.sum(c_enc * c_enc, axis=-1))                 # (Bt, C)
    out_ref[...] = dots / (jnp.maximum(q_norm, eps) * jnp.maximum(c_norm, eps))


# ---------------------------------------------------------------------------
# Weight preparation (done once, outside the kernel)
# ---------------------------------------------------------------------------
def _prep_weights(params, E, H, E_pad, H_pad, mat_dtype=jnp.bfloat16):
    """Reorder gates [i,f,g,o] -> [i,f,o,g], pad E/H to 128 lanes, fuse dirs.

    Returns:
      w_ih  : (E_pad, 8*H_pad) dense  [fwd i,f,o,g | bwd i,f,o,g]   (bf16)
      w_hh  : (2*H_pad, 8*H_pad) block-diagonal                     (bf16)
      b     : (1, 8*H_pad) folded bias_ih+bias_hh                   (f32)
      wq,bq : question projection (2*H_pad, H_pad), (1, H_pad)
      wc,bc : column projection   (E_pad, H_pad),  (1, H_pad)
    Padded gate lanes carry zero weight and zero bias, so the padded c/h lanes
    stay exactly 0 through the recurrence.
    """
    def reorder_pad(w, in_dim, in_pad):
        i, f, g, o = (w[:, 0:H], w[:, H:2 * H], w[:, 2 * H:3 * H], w[:, 3 * H:4 * H])
        blocks = [jnp.pad(x, ((0, in_pad - in_dim), (0, H_pad - H)))
                  for x in (i, f, o, g)]
        return jnp.concatenate(blocks, axis=1)           # (in_pad, 4*H_pad)

    # Dense input->gate weight (no structural zeros in the big precompute).
    w_ih = jnp.concatenate([reorder_pad(params["w_ih_f"], E, E_pad),
                            reorder_pad(params["w_ih_b"], E, E_pad)], axis=1)

    # Block-diagonal hidden->gate weight: keeps ONE MXU push per serial step.
    whh_f = reorder_pad(params["w_hh_f"], H, H_pad)
    whh_b = reorder_pad(params["w_hh_b"], H, H_pad)
    z = jnp.zeros_like(whh_f)
    w_hh = jnp.concatenate(
        [jnp.concatenate([whh_f, z], axis=1),
         jnp.concatenate([z, whh_b], axis=1)], axis=0)   # (2H_pad, 8H_pad)

    b = jnp.concatenate([reorder_pad(params["b_f"], 1, 1),
                         reorder_pad(params["b_b"], 1, 1)], axis=1)  # (1, 8H_pad)

    wq_f, wq_b = params["wq"][:H], params["wq"][H:]
    wq = jnp.concatenate(
        [jnp.pad(wq_f, ((0, H_pad - H), (0, H_pad - H))),
         jnp.pad(wq_b, ((0, H_pad - H), (0, H_pad - H)))], axis=0)   # (2H_pad, H_pad)
    bq = jnp.pad(params["bq"], ((0, 0), (0, H_pad - H)))
    wc = jnp.pad(params["wc"], ((0, E_pad - E), (0, H_pad - H)))
    bc = jnp.pad(params["bc"], ((0, 0), (0, H_pad - H)))

    return (w_ih.astype(mat_dtype), w_hh.astype(mat_dtype), b.astype(jnp.float32),
            wq.astype(mat_dtype), bq.astype(jnp.float32),
            wc.astype(mat_dtype), bc.astype(jnp.float32))


def _vmem_limit_bytes(Tq, Bt, C, E_pad, H_pad):
    """Explicit per-tile VMEM budget (bf16 tiles, f32 temporaries) + slack."""
    bf16, f32 = 2, 4
    tiles = 2 * (Tq * Bt * E_pad * bf16          # q tile (double-buffered)
                 + Bt * C * E_pad * bf16         # column-sum tile
                 + Bt * C * f32)                 # output tile
    weights = ((E_pad + 2 * H_pad) * 8 * H_pad
               + (2 * H_pad + E_pad) * H_pad) * bf16 + 10 * H_pad * f32
    temps = (Tq * Bt * 8 * H_pad * f32           # fused gx buffer (single)
             + Bt * C * H_pad * f32              # c_enc
             + 6 * Bt * 8 * H_pad * f32)         # recurrence working set
    budget = int(1.5 * (tiles + 2 * weights + temps)) + (4 << 20)
    return int(min(max(budget, 32 << 20), 100 << 20))


# ---------------------------------------------------------------------------
# Wrapper
# ---------------------------------------------------------------------------
@functools.partial(jax.jit, static_argnames=("b_tile", "single_buffer_weights"))
def column_predictor_forward(question, columns, params, *, b_tile=128,
                             single_buffer_weights=True):
    """question: int32 (B, Tq); columns: int32 (B, C, Tc) -> float32 (B, C)."""
    emb = params["embedding"]
    E = emb.shape[1]
    H = params["wq"].shape[1]
    E_pad = _round_up(E, 128)
    H_pad = _round_up(H, 128)

    # Embedding gather is data-dependent -> kept as plain-JAX glue.  Columns
    # are pre-summed over their tokens so the kernel DMAs Tc x less data.
    # TODO(synk): fold the column token gather+sum into the kernel (scalar-
    # prefetch DMA gather) to avoid materializing the (B, C, Tc, E) slab.
    q_emb = emb[question].astype(jnp.float32)               # (B, Tq, E)
    c_sum = emb[columns].astype(jnp.float32).sum(axis=2)    # (B, C, E)

    B, Tq, _ = q_emb.shape
    C = c_sum.shape[1]

    # Pad the embedding dimension to 128 lanes (zero columns are inert).
    if E_pad != E:
        q_emb = jnp.pad(q_emb, ((0, 0), (0, 0), (0, E_pad - E)))
        c_sum = jnp.pad(c_sum, ((0, 0), (0, 0), (0, E_pad - E)))

    w_ih, w_hh, b_fused, wq, bq, wc, bc = _prep_weights(params, E, H, E_pad, H_pad)

    # Batch tiling: Bt=128 fills the MXU M dim, bounds vreg/VMEM pressure, and
    # gives nb >= 2 for megacore (v7x) once B >= 256.  Small batches are padded
    # up to a multiple of 8 sublanes so tiles stay aligned and stores unmasked.
    if B <= b_tile:
        Bt = max(8, _round_up(B, 8))
        Bp = Bt
    else:
        Bt = b_tile
        Bp = pl.cdiv(B, Bt) * Bt
    nb = Bp // Bt
    if Bp != B:
        pad = Bp - B
        q_emb = jnp.pad(q_emb, ((0, pad), (0, 0), (0, 0)))
        c_sum = jnp.pad(c_sum, ((0, pad), (0, 0), (0, 0)))

    # bf16 activations halve HBM DMA and VMEM tiles; accumulation stays f32.
    q_tm = jnp.transpose(q_emb, (1, 0, 2)).astype(jnp.bfloat16)   # (Tq, Bp, E_pad)
    c_sum = c_sum.astype(jnp.bfloat16)                            # (Bp, C, E_pad)

    H2, H8 = 2 * H_pad, 8 * H_pad

    def w_spec(shape):
        # Grid-invariant weights/biases: single-buffer them to free VMEM.
        if single_buffer_weights:
            return pl.BlockSpec(shape, lambda i: (0,) * len(shape),
                                pipeline_mode=pl.Buffered(1))
        return pl.BlockSpec(shape, lambda i: (0,) * len(shape))

    in_specs = [
        pl.BlockSpec((Tq, Bt, E_pad), lambda i: (0, i, 0)),
        pl.BlockSpec((Bt, C, E_pad), lambda i: (i, 0, 0)),
        w_spec((E_pad, H8)),     # w_ih (dense, fused dirs)
        w_spec((H2, H8)),        # w_hh (block-diagonal)
        w_spec((1, H8)),         # fused bias
        w_spec((H2, H_pad)),     # wq
        w_spec((1, H_pad)),      # bq
        w_spec((E_pad, H_pad)),  # wc
        w_spec((1, H_pad)),      # bc
    ]
    out_specs = pl.BlockSpec((Bt, C), lambda i: (i, 0))

    out = pl.pallas_call(
        _column_predictor_kernel,
        grid=(nb,),
        in_specs=in_specs,
        out_specs=out_specs,
        out_shape=jax.ShapeDtypeStruct((Bp, C), jnp.float32),
        compiler_params=pltpu.CompilerParams(
            dimension_semantics=("parallel",),
            vmem_limit_bytes=_vmem_limit_bytes(Tq, Bt, C, E_pad, H_pad)),
    )(q_tm, c_sum, w_ih, w_hh, b_fused, wq, bq, wc, bc)

    return out[:B]                                        # (B, C)


# ---------------------------------------------------------------------------
# Pure-JAX reference of the PyTorch forward (for verification)
# ---------------------------------------------------------------------------
def reference_forward(question, columns, params):
    emb = params["embedding"]
    q_emb = emb[question]
    c_emb = emb[columns]
    B, Tq, E = q_emb.shape
    H = params["wq"].shape[1]

    def lstm_dir(w_ih, w_hh, b, reverse):
        seq = jnp.flip(q_emb, axis=1) if reverse else q_emb
        xs = jnp.swapaxes(seq, 0, 1)                      # (Tq, B, E)

        def step(carry, x_t):
            h, c = carry
            gates = x_t @ w_ih + h @ w_hh + b
            i_g = jax.nn.sigmoid(gates[:, 0:H])
            f_g = jax.nn.sigmoid(gates[:, H:2 * H])
            g_g = jnp.tanh(gates[:, 2 * H:3 * H])
            o_g = jax.nn.sigmoid(gates[:, 3 * H:4 * H])
            c_new = f_g * c + i_g * g_g
            h_new = o_g * jnp.tanh(c_new)
            return (h_new, c_new), None

        init = (jnp.zeros((B, H), jnp.float32), jnp.zeros((B, H), jnp.float32))
        (h, _), _ = jax.lax.scan(step, init, xs)
        return h

    h_f = lstm_dir(params["w_ih_f"], params["w_hh_f"], params["b_f"][0], False)
    h_b = lstm_dir(params["w_ih_b"], params["w_hh_b"], params["b_b"][0], True)
    h_cat = jnp.concatenate([h_f, h_b], axis=1)
    q_enc = h_cat @ params["wq"] + params["bq"][0]
    c_sum = c_emb.sum(axis=2)
    c_enc = jnp.einsum("bce,eh->bch", c_sum, params["wc"]) + params["bc"][0]
    eps = 1e-8
    dots = jnp.sum(q_enc[:, None, :] * c_enc, axis=-1)
    qn = jnp.sqrt(jnp.sum(q_enc * q_enc, axis=-1, keepdims=True))
    cn = jnp.sqrt(jnp.sum(c_enc * c_enc, axis=-1))
    return dots / (jnp.maximum(qn, eps) * jnp.maximum(cn, eps))


# ---------------------------------------------------------------------------
if __name__ == "__main__":
    # Small synthetic sizes consistent with the module's forward.
    V, E, H = 64, 32, 32        # vocab, embedding dim, hidden dim
    B, Tq, C, Tc = 2, 8, 4, 3   # batch, question len, #columns, tokens/column

    key = jax.random.PRNGKey(0)
    keys = jax.random.split(key, 16)

    def uni(k, shape, scale=0.1):
        return jax.random.uniform(k, shape, jnp.float32, -scale, scale)

    params = {
        "embedding": jax.random.normal(keys[0], (V, E), jnp.float32),
        # forward-direction LSTM (weights pre-transposed to (in, out));
        # bias = bias_ih + bias_hh folded into one row; gate order [i,f,g,o].
        "w_ih_f": uni(keys[1], (E, 4 * H)),
        "w_hh_f": uni(keys[2], (H, 4 * H)),
        "b_f": uni(keys[3], (1, 4 * H)),
        # backward-direction LSTM
        "w_ih_b": uni(keys[4], (E, 4 * H)),
        "w_hh_b": uni(keys[5], (H, 4 * H)),
        "b_b": uni(keys[6], (1, 4 * H)),
        # question_projection: Linear(2H -> H)
        "wq": uni(keys[7], (2 * H, H)),
        "bq": uni(keys[8], (1, H)),
        # column_projection: Linear(E -> H)
        "wc": uni(keys[9], (E, H)),
        "bc": uni(keys[10], (1, H)),
    }

    question = jax.random.randint(keys[11], (B, Tq), 0, V, jnp.int32)
    columns = jax.random.randint(keys[12], (B, C, Tc), 0, V, jnp.int32)

    try:
        out = jax.block_until_ready(
            column_predictor_forward(question, columns, params))
    except Exception:
        # pl.Buffered(1) single-buffering of the grid-invariant weights is a
        # perf hint; fall back to default double-buffered specs if this
        # JAX/Mosaic build rejects pipeline_mode on the pallas_call pipeline.
        out = jax.block_until_ready(
            column_predictor_forward(question, columns, params,
                                     single_buffer_weights=False))

    ref = reference_forward(question, columns, params)
    assert out.shape == (B, C)
    # bf16 matmul operands (f32 accumulation/state) -> slightly relaxed tol.
    assert jnp.allclose(out, ref, atol=2e-2, rtol=2e-2)

    print("KERNEL_OK")
</pallas_src>

<mosaic_0001>
module attributes {stable_mosaic.version = 11 : i64} {
  func.func @_column_predictor_kernel(%arg0: i32, %arg1: memref<8x8x128xbf16, #tpu.memory_space<vmem>>, %arg2: memref<8x4x128xbf16, #tpu.memory_space<vmem>>, %arg3: memref<128x1024xbf16, #tpu.memory_space<vmem>>, %arg4: memref<256x1024xbf16, #tpu.memory_space<vmem>>, %arg5: memref<1x1024xf32, #tpu.memory_space<vmem>>, %arg6: memref<256x128xbf16, #tpu.memory_space<vmem>>, %arg7: memref<1x128xf32, #tpu.memory_space<vmem>>, %arg8: memref<128x128xbf16, #tpu.memory_space<vmem>>, %arg9: memref<1x128xf32, #tpu.memory_space<vmem>>, %arg10: memref<8x4xf32, #tpu.memory_space<vmem>>) attributes {dimension_semantics = [#tpu.dimension_semantics<parallel>], iteration_bounds = array<i64: 1>, scalar_prefetch = 0 : i64, scratch_operands = 0 : i64, tpu.core_type = #tpu.core_type<tc>, window_params = [{transform_indices = @transform_0, window_bounds = array<i64: 8, 8, 128>}, {transform_indices = @transform_1, window_bounds = array<i64: 8, 4, 128>}, {pipeline_mode = #tpu.pipeline_mode<synchronous>, transform_indices = @transform_2, window_bounds = array<i64: 128, 1024>}, {pipeline_mode = #tpu.pipeline_mode<synchronous>, transform_indices = @transform_3, window_bounds = array<i64: 256, 1024>}, {pipeline_mode = #tpu.pipeline_mode<synchronous>, transform_indices = @transform_4, window_bounds = array<i64: 1, 1024>}, {pipeline_mode = #tpu.pipeline_mode<synchronous>, transform_indices = @transform_5, window_bounds = array<i64: 256, 128>}, {pipeline_mode = #tpu.pipeline_mode<synchronous>, transform_indices = @transform_6, window_bounds = array<i64: 1, 128>}, {pipeline_mode = #tpu.pipeline_mode<synchronous>, transform_indices = @transform_7, window_bounds = array<i64: 128, 128>}, {pipeline_mode = #tpu.pipeline_mode<synchronous>, transform_indices = @transform_8, window_bounds = array<i64: 1, 128>}, {transform_indices = @transform_9, window_bounds = array<i64: 8, 4>}]} {
    %c0 = arith.constant 0 : index
    %c0_0 = arith.constant 0 : index
    %c0_1 = arith.constant 0 : index
    %0 = vector.load %arg1[%c0, %c0_0, %c0_1] : memref<8x8x128xbf16, #tpu.memory_space<vmem>>, vector<8x8x128xbf16>
    %1 = vector.shape_cast %0 : vector<8x8x128xbf16> to vector<64x128xbf16>
    %c0_2 = arith.constant 0 : index
    %c0_3 = arith.constant 0 : index
    %2 = vector.load %arg3[%c0_2, %c0_3] : memref<128x1024xbf16, #tpu.memory_space<vmem>>, vector<128x1024xbf16>
    %cst = arith.constant dense<0.000000e+00> : vector<64x1024xf32>
    %3 = tpu.matmul %1, %2, %cst {dimension_numbers = #tpu.dot_dimension_numbers<[1], [0], [0], [1], [0, 0, 1, 1], [], []>} : vector<64x128xbf16>, vector<128x1024xbf16>, vector<64x1024xf32> -> vector<64x1024xf32>
    %c0_4 = arith.constant 0 : index
    %c0_5 = arith.constant 0 : index
    %4 = vector.load %arg5[%c0_4, %c0_5] : memref<1x1024xf32, #tpu.memory_space<vmem>>, vector<1x1024xf32>
    %5 = vector.broadcast %4 : vector<1x1024xf32> to vector<64x1024xf32>
    %6 = arith.addf %3, %5 : vector<64x1024xf32>
    %7 = vector.shape_cast %6 : vector<64x1024xf32> to vector<8x8x1024xf32>
    %c0_6 = arith.constant 0 : index
    %c0_7 = arith.constant 0 : index
    %8 = vector.load %arg4[%c0_6, %c0_7] : memref<256x1024xbf16, #tpu.memory_space<vmem>>, vector<256x1024xbf16>
    %cst_8 = arith.constant 0.000000e+00 : f32
    %9 = vector.broadcast %cst_8 : f32 to vector<8x256xf32>
    %cst_9 = arith.constant 0.000000e+00 : f32
    %10 = vector.broadcast %cst_9 : f32 to vector<8x128xf32>
    %cst_10 = arith.constant 0.000000e+00 : f32
    %11 = vector.broadcast %cst_10 : f32 to vector<8x128xf32>
    %12 = arith.truncf %9 : vector<8x256xf32> to vector<8x256xbf16>
    %cst_11 = arith.constant dense<0.000000e+00> : vector<8x1024xf32>
    %13 = tpu.matmul %12, %8, %cst_11 {dimension_numbers = #tpu.dot_dimension_numbers<[1], [0], [0], [1], [0, 0, 1, 1], [], []>} : vector<8x256xbf16>, vector<256x1024xbf16>, vector<8x1024xf32> -> vector<8x1024xf32>
    %14 = vector.extract_strided_slice %13 {offsets = [0, 0], sizes = [8, 512], strides = [1, 1]} : vector<8x1024xf32> to vector<8x512xf32>
    %15 = vector.extract_strided_slice %7 {offsets = [0, 0, 0], sizes = [1, 8, 512], strides = [1, 1, 1]} : vector<8x8x1024xf32> to vector<1x8x512xf32>
    %16 = vector.shape_cast %15 : vector<1x8x512xf32> to vector<8x512xf32>
    %17 = arith.addf %14, %16 : vector<8x512xf32>
    %18 = vector.extract_strided_slice %13 {offsets = [0, 512], sizes = [8, 512], strides = [1, 1]} : vector<8x1024xf32> to vector<8x512xf32>
    %19 = vector.extract_strided_slice %7 {offsets = [7, 0, 512], sizes = [1, 8, 512], strides = [1, 1, 1]} : vector<8x8x1024xf32> to vector<1x8x512xf32>
    %20 = vector.shape_cast %19 : vector<1x8x512xf32> to vector<8x512xf32>
    %21 = arith.addf %18, %20 : vector<8x512xf32>
    %22 = vector.extract_strided_slice %17 {offsets = [0, 0], sizes = [8, 384], strides = [1, 1]} : vector<8x512xf32> to vector<8x384xf32>
    %23 = arith.negf %22 : vector<8x384xf32>
    %24 = math.exp %23 : vector<8x384xf32>
    %cst_12 = arith.constant 1.000000e+00 : f32
    %25 = vector.broadcast %cst_12 : f32 to vector<8x384xf32>
    %26 = arith.addf %25, %24 : vector<8x384xf32>
    %27 = arith.divf %25, %26 : vector<8x384xf32>
    %28 = vector.extract_strided_slice %21 {offsets = [0, 0], sizes = [8, 384], strides = [1, 1]} : vector<8x512xf32> to vector<8x384xf32>
    %29 = arith.negf %28 : vector<8x384xf32>
    %30 = math.exp %29 : vector<8x384xf32>
    %cst_13 = arith.constant 1.000000e+00 : f32
    %31 = vector.broadcast %cst_13 : f32 to vector<8x384xf32>
    %32 = arith.addf %31, %30 : vector<8x384xf32>
    %33 = arith.divf %31, %32 : vector<8x384xf32>
    %34 = vector.extract_strided_slice %17 {offsets = [0, 384], sizes = [8, 128], strides = [1, 1]} : vector<8x512xf32> to vector<8x128xf32>
    %35 = math.tanh %34 : vector<8x128xf32>
    %36 = vector.extract_strided_slice %21 {offsets = [0, 384], sizes = [8, 128], strides = [1, 1]} : vector<8x512xf32> to vector<8x128xf32>
    %37 = math.tanh %36 : vector<8x128xf32>
    %38 = vector.extract_strided_slice %27 {offsets = [0, 128], sizes = [8, 128], strides = [1, 1]} : vector<8x384xf32> to vector<8x128xf32>
    %39 = arith.mulf %38, %10 : vector<8x128xf32>
    %40 = vector.extract_strided_slice %27 {offsets = [0, 0], sizes = [8, 128], strides = [1, 1]} : vector<8x384xf32> to vector<8x128xf32>
    %41 = arith.mulf %40, %35 : vector<8x128xf32>
    %42 = arith.addf %39, %41 : vector<8x128xf32>
    %43 = vector.extract_strided_slice %33 {offsets = [0, 128], sizes = [8, 128], strides = [1, 1]} : vector<8x384xf32> to vector<8x128xf32>
    %44 = arith.mulf %43, %11 : vector<8x128xf32>
    %45 = vector.extract_strided_slice %33 {offsets = [0, 0], sizes = [8, 128], strides = [1, 1]} : vector<8x384xf32> to vector<8x128xf32>
    %46 = arith.mulf %45, %37 : vector<8x128xf32>
    %47 = arith.addf %44, %46 : vector<8x128xf32>
    %48 = vector.extract_strided_slice %27 {offsets = [0, 256], sizes = [8, 128], strides = [1, 1]} : vector<8x384xf32> to vector<8x128xf32>
    %49 = math.tanh %42 : vector<8x128xf32>
    %50 = arith.mulf %48, %49 : vector<8x128xf32>
    %51 = vector.extract_strided_slice %33 {offsets = [0, 256], sizes = [8, 128], strides = [1, 1]} : vector<8x384xf32> to vector<8x128xf32>
    %52 = math.tanh %47 : vector<8x128xf32>
    %53 = arith.mulf %51, %52 : vector<8x128xf32>
    %54 = tpu.concatenate %50, %53 in 1 : vector<8x128xf32>, vector<8x128xf32> -> vector<8x256xf32>
    %55 = arith.truncf %54 : vector<8x256xf32> to vector<8x256xbf16>
    %cst_14 = arith.constant dense<0.000000e+00> : vector<8x1024xf32>
    %56 = tpu.matmul %55, %8, %cst_14 {dimension_numbers = #tpu.dot_dimension_numbers<[1], [0], [0], [1], [0, 0, 1, 1], [], []>} : vector<8x256xbf16>, vector<256x1024xbf16>, vector<8x1024xf32> -> vector<8x1024xf32>
    %57 = vector.extract_strided_slice %56 {offsets = [0, 0], sizes = [8, 512], strides = [1, 1]} : vector<8x1024xf32> to vector<8x512xf32>
    %58 = vector.extract_strided_slice %7 {offsets = [1, 0, 0], sizes = [1, 8, 512], strides = [1, 1, 1]} : vector<8x8x1024xf32> to vector<1x8x512xf32>
    %59 = vector.shape_cast %58 : vector<1x8x512xf32> to vector<8x512xf32>
    %60 = arith.addf %57, %59 : vector<8x512xf32>
    %61 = vector.extract_strided_slice %56 {offsets = [0, 512], sizes = [8, 512], strides = [1, 1]} : vector<8x1024xf32> to vector<8x512xf32>
    %62 = vector.extract_strided_slice %7 {offsets = [6, 0, 512], sizes = [1, 8, 512], strides = [1, 1, 1]} : vector<8x8x1024xf32> to vector<1x8x512xf32>
    %63 = vector.shape_cast %62 : vector<1x8x512xf32> to vector<8x512xf32>
    %64 = arith.addf %61, %63 : vector<8x512xf32>
    %65 = vector.extract_strided_slice %60 {offsets = [0, 0], sizes = [8, 384], strides = [1, 1]} : vector<8x512xf32> to vector<8x384xf32>
    %66 = arith.negf %65 : vector<8x384xf32>
    %67 = math.exp %66 : vector<8x384xf32>
    %cst_15 = arith.constant 1.000000e+00 : f32
    %68 = vector.broadcast %cst_15 : f32 to vector<8x384xf32>
    %69 = arith.addf %68, %67 : vector<8x384xf32>
    %70 = arith.divf %68, %69 : vector<8x384xf32>
    %71 = vector.extract_strided_slice %64 {offsets = [0, 0], sizes = [8, 384], strides = [1, 1]} : vector<8x512xf32> to vector<8x384xf32>
    %72 = arith.negf %71 : vector<8x384xf32>
    %73 = math.exp %72 : vector<8x384xf32>
    %cst_16 = arith.constant 1.000000e+00 : f32
    %74 = vector.broadcast %cst_16 : f32 to vector<8x384xf32>
    %75 = arith.addf %74, %73 : vector<8x384xf32>
    %76 = arith.divf %74, %75 : vector<8x384xf32>
    %77 = vector.extract_strided_slice %60 {offsets = [0, 384], sizes = [8, 128], strides = [1, 1]} : vector<8x512xf32> to vector<8x128xf32>
    %78 = math.tanh %77 : vector<8x128xf32>
    %79 = vector.extract_strided_slice %64 {offsets = [0, 384], sizes = [8, 128], strides = [1, 1]} : vector<8x512xf32> to vector<8x128xf32>
    %80 = math.tanh %79 : vector<8x128xf32>
    %81 = vector.extract_strided_slice %70 {offsets = [0, 128], sizes = [8, 128], strides = [1, 1]} : vector<8x384xf32> to vector<8x128xf32>
    %82 = arith.mulf %81, %42 : vector<8x128xf32>
    %83 = vector.extract_strided_slice %70 {offsets = [0, 0], sizes = [8, 128], strides = [1, 1]} : vector<8x384xf32> to vector<8x128xf32>
    %84 = arith.mulf %83, %78 : vector<8x128xf32>
    %85 = arith.addf %82, %84 : vector<8x128xf32>
    %86 = vector.extract_strided_slice %76 {offsets = [0, 128], sizes = [8, 128], strides = [1, 1]} : vector<8x384xf32> to vector<8x128xf32>
    %87 = arith.mulf %86, %47 : vector<8x128xf32>
    %88 = vector.extract_strided_slice %76 {offsets = [0, 0], sizes = [8, 128], strides = [1, 1]} : vector<8x384xf32> to vector<8x128xf32>
    %89 = arith.mulf %88, %80 : vector<8x128xf32>
    %90 = arith.addf %87, %89 : vector<8x128xf32>
    %91 = vector.extract_strided_slice %70 {offsets = [0, 256], sizes = [8, 128], strides = [1, 1]} : vector<8x384xf32> to vector<8x128xf32>
    %92 = math.tanh %85 : vector<8x128xf32>
    %93 = arith.mulf %91, %92 : vector<8x128xf32>
    %94 = vector.extract_strided_slice %76 {offsets = [0, 256], sizes = [8, 128], strides = [1, 1]} : vector<8x384xf32> to vector<8x128xf32>
    %95 = math.tanh %90 : vector<8x128xf32>
    %96 = arith.mulf %94, %95 : vector<8x128xf32>
    %97 = tpu.concatenate %93, %96 in 1 : vector<8x128xf32>, vector<8x128xf32> -> vector<8x256xf32>
    %98 = arith.truncf %97 : vector<8x256xf32> to vector<8x256xbf16>
    %cst_17 = arith.constant dense<0.000000e+00> : vector<8x1024xf32>
    %99 = tpu.matmul %98, %8, %cst_17 {dimension_numbers = #tpu.dot_dimension_numbers<[1], [0], [0], [1], [0, 0, 1, 1], [], []>} : vector<8x256xbf16>, vector<256x1024xbf16>, vector<8x1024xf32> -> vector<8x1024xf32>
    %100 = vector.extract_strided_slice %99 {offsets = [0, 0], sizes = [8, 512], strides = [1, 1]} : vector<8x1024xf32> to vector<8x512xf32>
    %101 = vector.extract_strided_slice %7 {offsets = [2, 0, 0], sizes = [1, 8, 512], strides = [1, 1, 1]} : vector<8x8x1024xf32> to vector<1x8x512xf32>
    %102 = vector.shape_cast %101 : vector<1x8x512xf32> to vector<8x512xf32>
    %103 = arith.addf %100, %102 : vector<8x512xf32>
    %104 = vector.extract_strided_slice %99 {offsets = [0, 512], sizes = [8, 512], strides = [1, 1]} : vector<8x1024xf32> to vector<8x512xf32>
    %105 = vector.extract_strided_slice %7 {offsets = [5, 0, 512], sizes = [1, 8, 512], strides = [1, 1, 1]} : vector<8x8x1024xf32> to vector<1x8x512xf32>
    %106 = vector.shape_cast %105 : vector<1x8x512xf32> to vector<8x512xf32>
    %107 = arith.addf %104, %106 : vector<8x512xf32>
    %108 = vector.extract_strided_slice %103 {offsets = [0, 0], sizes = [8, 384], strides = [1, 1]} : vector<8x512xf32> to vector<8x384xf32>
    %109 = arith.negf %108 : vector<8x384xf32>
    %110 = math.exp %109 : vector<8x384xf32>
    %cst_18 = arith.constant 1.000000e+00 : f32
    %111 = vector.broadcast %cst_18 : f32 to vector<8x384xf32>
    %112 = arith.addf %111, %110 : vector<8x384xf32>
    %113 = arith.divf %111, %112 : vector<8x384xf32>
    %114 = vector.extract_strided_slice %107 {offsets = [0, 0], sizes = [8, 384], strides = [1, 1]} : vector<8x512xf32> to vector<8x384xf32>
    %115 = arith.negf %114 : vector<8x384xf32>
    %116 = math.exp %115 : vector<8x384xf32>
    %cst_19 = arith.constant 1.000000e+00 : f32
    %117 = vector.broadcast %cst_19 : f32 to vector<8x384xf32>
    %118 = arith.addf %117, %116 : vector<8x384xf32>
    %119 = arith.divf %117, %118 : vector<8x384xf32>
    %120 = vector.extract_strided_slice %103 {offsets = [0, 384], sizes = [8, 128], strides = [1, 1]} : vector<8x512xf32> to vector<8x128xf32>
    %121 = math.tanh %120 : vector<8x128xf32>
    %122 = vector.extract_strided_slice %107 {offsets = [0, 384], sizes = [8, 128], strides = [1, 1]} : vector<8x512xf32> to vector<8x128xf32>
    %123 = math.tanh %122 : vector<8x128xf32>
    %124 = vector.extract_strided_slice %113 {offsets = [0, 128], sizes = [8, 128], strides = [1, 1]} : vector<8x384xf32> to vector<8x128xf32>
    %125 = arith.mulf %124, %85 : vector<8x128xf32>
    %126 = vector.extract_strided_slice %113 {offsets = [0, 0], sizes = [8, 128], strides = [1, 1]} : vector<8x384xf32> to vector<8x128xf32>
    %127 = arith.mulf %126, %121 : vector<8x128xf32>
    %128 = arith.addf %125, %127 : vector<8x128xf32>
    %129 = vector.extract_strided_slice %119 {offsets = [0, 128], sizes = [8, 128], strides = [1, 1]} : vector<8x384xf32> to vector<8x128xf32>
    %130 = arith.mulf %129, %90 : vector<8x128xf32>
    %131 = vector.extract_strided_slice %119 {offsets = [0, 0], sizes = [8, 128], strides = [1, 1]} : vector<8x384xf32> to vector<8x128xf32>
    %132 = arith.mulf %131, %123 : vector<8x128xf32>
    %133 = arith.addf %130, %132 : vector<8x128xf32>
    %134 = vector.extract_strided_slice %113 {offsets = [0, 256], sizes = [8, 128], strides = [1, 1]} : vector<8x384xf32> to vector<8x128xf32>
    %135 = math.tanh %128 : vector<8x128xf32>
    %136 = arith.mulf %134, %135 : vector<8x128xf32>
    %137 = vector.extract_strided_slice %119 {offsets = [0, 256], sizes = [8, 128], strides = [1, 1]} : vector<8x384xf32> to vector<8x128xf32>
    %138 = math.tanh %133 : vector<8x128xf32>
    %139 = arith.mulf %137, %138 : vector<8x128xf32>
    %140 = tpu.concatenate %136, %139 in 1 : vector<8x128xf32>, vector<8x128xf32> -> vector<8x256xf32>
    %141 = arith.truncf %140 : vector<8x256xf32> to vector<8x256xbf16>
    %cst_20 = arith.constant dense<0.000000e+00> : vector<8x1024xf32>
    %142 = tpu.matmul %141, %8, %cst_20 {dimension_numbers = #tpu.dot_dimension_numbers<[1], [0], [0], [1], [0, 0, 1, 1], [], []>} : vector<8x256xbf16>, vector<256x1024xbf16>, vector<8x1024xf32> -> vector<8x1024xf32>
    %143 = vector.extract_strided_slice %142 {offsets = [0, 0], sizes = [8, 512], strides = [1, 1]} : vector<8x1024xf32> to vector<8x512xf32>
    %144 = vector.extract_strided_slice %7 {offsets = [3, 0, 0], sizes = [1, 8, 512], strides = [1, 1, 1]} : vector<8x8x1024xf32> to vector<1x8x512xf32>
    %145 = vector.shape_cast %144 : vector<1x8x512xf32> to vector<8x512xf32>
    %146 = arith.addf %143, %145 : vector<8x512xf32>
    %147 = vector.extract_strided_slice %142 {offsets = [0, 512], sizes = [8, 512], strides = [1, 1]} : vector<8x1024xf32> to vector<8x512xf32>
    %148 = vector.extract_strided_slice %7 {offsets = [4, 0, 512], sizes = [1, 8, 512], strides = [1, 1, 1]} : vector<8x8x1024xf32> to vector<1x8x512xf32>
    %149 = vector.shape_cast %148 : vector<1x8x512xf32> to vector<8x512xf32>
    %150 = arith.addf %147, %149 : vector<8x512xf32>
    %151 = vector.extract_strided_slice %146 {offsets = [0, 0], sizes = [8, 384], strides = [1, 1]} : vector<8x512xf32> to vector<8x384xf32>
    %152 = arith.negf %151 : vector<8x384xf32>
    %153 = math.exp %152 : vector<8x384xf32>
    %cst_21 = arith.constant 1.000000e+00 : f32
    %154 = vector.broadcast %cst_21 : f32 to vector<8x384xf32>
    %155 = arith.addf %154, %153 : vector<8x384xf32>
    %156 = arith.divf %154, %155 : vector<8x384xf32>
    %157 = vector.extract_strided_slice %150 {offsets = [0, 0], sizes = [8, 384], strides = [1, 1]} : vector<8x512xf32> to vector<8x384xf32>
    %158 = arith.negf %157 : vector<8x384xf32>
    %159 = math.exp %158 : vector<8x384xf32>
    %cst_22 = arith.constant 1.000000e+00 : f32
    %160 = vector.broadcast %cst_22 : f32 to vector<8x384xf32>
    %161 = arith.addf %160, %159 : vector<8x384xf32>
    %162 = arith.divf %160, %161 : vector<8x384xf32>
    %163 = vector.extract_strided_slice %146 {offsets = [0, 384], sizes = [8, 128], strides = [1, 1]} : vector<8x512xf32> to vector<8x128xf32>
    %164 = math.tanh %163 : vector<8x128xf32>
    %165 = vector.extract_strided_slice %150 {offsets = [0, 384], sizes = [8, 128], strides = [1, 1]} : vector<8x512xf32> to vector<8x128xf32>
    %166 = math.tanh %165 : vector<8x128xf32>
    %167 = vector.extract_strided_slice %156 {offsets = [0, 128], sizes = [8, 128], strides = [1, 1]} : vector<8x384xf32> to vector<8x128xf32>
    %168 = arith.mulf %167, %128 : vector<8x128xf32>
    %169 = vector.extract_strided_slice %156 {offsets = [0, 0], sizes = [8, 128], strides = [1, 1]} : vector<8x384xf32> to vector<8x128xf32>
    %170 = arith.mulf %169, %164 : vector<8x128xf32>
    %171 = arith.addf %168, %170 : vector<8x128xf32>
    %172 = vector.extract_strided_slice %162 {offsets = [0, 128], sizes = [8, 128], strides = [1, 1]} : vector<8x384xf32> to vector<8x128xf32>
    %173 = arith.mulf %172, %133 : vector<8x128xf32>
    %174 = vector.extract_strided_slice %162 {offsets = [0, 0], sizes = [8, 128], strides = [1, 1]} : vector<8x384xf32> to vector<8x128xf32>
    %175 = arith.mulf %174, %166 : vector<8x128xf32>
    %176 = arith.addf %173, %175 : vector<8x128xf32>
    %177 = vector.extract_strided_slice %156 {offsets = [0, 256], sizes = [8, 128], strides = [1, 1]} : vector<8x384xf32> to vector<8x128xf32>
    %178 = math.tanh %171 : vector<8x128xf32>
    %179 = arith.mulf %177, %178 : vector<8x128xf32>
    %180 = vector.extract_strided_slice %162 {offsets = [0, 256], sizes = [8, 128], strides = [1, 1]} : vector<8x384xf32> to vector<8x128xf32>
    %181 = math.tanh %176 : vector<8x128xf32>
    %182 = arith.mulf %180, %181 : vector<8x128xf32>
    %183 = tpu.concatenate %179, %182 in 1 : vector<8x128xf32>, vector<8x128xf32> -> vector<8x256xf32>
    %184 = arith.truncf %183 : vector<8x256xf32> to vector<8x256xbf16>
    %cst_23 = arith.constant dense<0.000000e+00> : vector<8x1024xf32>
    %185 = tpu.matmul %184, %8, %cst_23 {dimension_numbers = #tpu.dot_dimension_numbers<[1], [0], [0], [1], [0, 0, 1, 1], [], []>} : vector<8x256xbf16>, vector<256x1024xbf16>, vector<8x1024xf32> -> vector<8x1024xf32>
    %186 = vector.extract_strided_slice %185 {offsets = [0, 0], sizes = [8, 512], strides = [1, 1]} : vector<8x1024xf32> to vector<8x512xf32>
    %187 = vector.extract_strided_slice %7 {offsets = [4, 0, 0], sizes = [1, 8, 512], strides = [1, 1, 1]} : vector<8x8x1024xf32> to vector<1x8x512xf32>
    %188 = vector.shape_cast %187 : vector<1x8x512xf32> to vector<8x512xf32>
    %189 = arith.addf %186, %188 : vector<8x512xf32>
    %190 = vector.extract_strided_slice %185 {offsets = [0, 512], sizes = [8, 512], strides = [1, 1]} : vector<8x1024xf32> to vector<8x512xf32>
    %191 = vector.extract_strided_slice %7 {offsets = [3, 0, 512], sizes = [1, 8, 512], strides = [1, 1, 1]} : vector<8x8x1024xf32> to vector<1x8x512xf32>
    %192 = vector.shape_cast %191 : vector<1x8x512xf32> to vector<8x512xf32>
    %193 = arith.addf %190, %192 : vector<8x512xf32>
    %194 = vector.extract_strided_slice %189 {offsets = [0, 0], sizes = [8, 384], strides = [1, 1]} : vector<8x512xf32> to vector<8x384xf32>
    %195 = arith.negf %194 : vector<8x384xf32>
    %196 = math.exp %195 : vector<8x384xf32>
    %cst_24 = arith.constant 1.000000e+00 : f32
    %197 = vector.broadcast %cst_24 : f32 to vector<8x384xf32>
    %198 = arith.addf %197, %196 : vector<8x384xf32>
    %199 = arith.divf %197, %198 : vector<8x384xf32>
    %200 = vector.extract_strided_slice %193 {offsets = [0, 0], sizes = [8, 384], strides = [1, 1]} : vector<8x512xf32> to vector<8x384xf32>
    %201 = arith.negf %200 : vector<8x384xf32>
    %202 = math.exp %201 : vector<8x384xf32>
    %cst_25 = arith.constant 1.000000e+00 : f32
    %203 = vector.broadcast %cst_25 : f32 to vector<8x384xf32>
    %204 = arith.addf %203, %202 : vector<8x384xf32>
    %205 = arith.divf %203, %204 : vector<8x384xf32>
    %206 = vector.extract_strided_slice %189 {offsets = [0, 384], sizes = [8, 128], strides = [1, 1]} : vector<8x512xf32> to vector<8x128xf32>
    %207 = math.tanh %206 : vector<8x128xf32>
    %208 = vector.extract_strided_slice %193 {offsets = [0, 384], sizes = [8, 128], strides = [1, 1]} : vector<8x512xf32> to vector<8x128xf32>
    %209 = math.tanh %208 : vector<8x128xf32>
    %210 = vector.extract_strided_slice %199 {offsets = [0, 128], sizes = [8, 128], strides = [1, 1]} : vector<8x384xf32> to vector<8x128xf32>
    %211 = arith.mulf %210, %171 : vector<8x128xf32>
    %212 = vector.extract_strided_slice %199 {offsets = [0, 0], sizes = [8, 128], strides = [1, 1]} : vector<8x384xf32> to vector<8x128xf32>
    %213 = arith.mulf %212, %207 : vector<8x128xf32>
    %214 = arith.addf %211, %213 : vector<8x128xf32>
    %215 = vector.extract_strided_slice %205 {offsets = [0, 128], sizes = [8, 128], strides = [1, 1]} : vector<8x384xf32> to vector<8x128xf32>
    %216 = arith.mulf %215, %176 : vector<8x128xf32>
    %217 = vector.extract_strided_slice %205 {offsets = [0, 0], sizes = [8, 128], strides = [1, 1]} : vector<8x384xf32> to vector<8x128xf32>
    %218 = arith.mulf %217, %209 : vector<8x128xf32>
    %219 = arith.addf %216, %218 : vector<8x128xf32>
    %220 = vector.extract_strided_slice %199 {offsets = [0, 256], sizes = [8, 128], strides = [1, 1]} : vector<8x384xf32> to vector<8x128xf32>
    %221 = math.tanh %214 : vector<8x128xf32>
    %222 = arith.mulf %220, %221 : vector<8x128xf32>
    %223 = vector.extract_strided_slice %205 {offsets = [0, 256], sizes = [8, 128], strides = [1, 1]} : vector<8x384xf32> to vector<8x128xf32>
    %224 = math.tanh %219 : vector<8x128xf32>
    %225 = arith.mulf %223, %224 : vector<8x128xf32>
    %226 = tpu.concatenate %222, %225 in 1 : vector<8x128xf32>, vector<8x128xf32> -> vector<8x256xf32>
    %227 = arith.truncf %226 : vector<8x256xf32> to vector<8x256xbf16>
    %cst_26 = arith.constant dense<0.000000e+00> : vector<8x1024xf32>
    %228 = tpu.matmul %227, %8, %cst_26 {dimension_numbers = #tpu.dot_dimension_numbers<[1], [0], [0], [1], [0, 0, 1, 1], [], []>} : vector<8x256xbf16>, vector<256x1024xbf16>, vector<8x1024xf32> -> vector<8x1024xf32>
    %229 = vector.extract_strided_slice %228 {offsets = [0, 0], sizes = [8, 512], strides = [1, 1]} : vector<8x1024xf32> to vector<8x512xf32>
    %230 = vector.extract_strided_slice %7 {offsets = [5, 0, 0], sizes = [1, 8, 512], strides = [1, 1, 1]} : vector<8x8x1024xf32> to vector<1x8x512xf32>
    %231 = vector.shape_cast %230 : vector<1x8x512xf32> to vector<8x512xf32>
    %232 = arith.addf %229, %231 : vector<8x512xf32>
    %233 = vector.extract_strided_slice %228 {offsets = [0, 512], sizes = [8, 512], strides = [1, 1]} : vector<8x1024xf32> to vector<8x512xf32>
    %234 = vector.extract_strided_slice %7 {offsets = [2, 0, 512], sizes = [1, 8, 512], strides = [1, 1, 1]} : vector<8x8x1024xf32> to vector<1x8x512xf32>
    %235 = vector.shape_cast %234 : vector<1x8x512xf32> to vector<8x512xf32>
    %236 = arith.addf %233, %235 : vector<8x512xf32>
    %237 = vector.extract_strided_slice %232 {offsets = [0, 0], sizes = [8, 384], strides = [1, 1]} : vector<8x512xf32> to vector<8x384xf32>
    %238 = arith.negf %237 : vector<8x384xf32>
    %239 = math.exp %238 : vector<8x384xf32>
    %cst_27 = arith.constant 1.000000e+00 : f32
    %240 = vector.broadcast %cst_27 : f32 to vector<8x384xf32>
    %241 = arith.addf %240, %239 : vector<8x384xf32>
    %242 = arith.divf %240, %241 : vector<8x384xf32>
    %243 = vector.extract_strided_slice %236 {offsets = [0, 0], sizes = [8, 384], strides = [1, 1]} : vector<8x512xf32> to vector<8x384xf32>
    %244 = arith.negf %243 : vector<8x384xf32>
    %245 = math.exp %244 : vector<8x384xf32>
    %cst_28 = arith.constant 1.000000e+00 : f32
    %246 = vector.broadcast %cst_28 : f32 to vector<8x384xf32>
    %247 = arith.addf %246, %245 : vector<8x384xf32>
    %248 = arith.divf %246, %247 : vector<8x384xf32>
    %249 = vector.extract_strided_slice %232 {offsets = [0, 384], sizes = [8, 128], strides = [1, 1]} : vector<8x512xf32> to vector<8x128xf32>
    %250 = math.tanh %249 : vector<8x128xf32>
    %251 = vector.extract_strided_slice %236 {offsets = [0, 384], sizes = [8, 128], strides = [1, 1]} : vector<8x512xf32> to vector<8x128xf32>
    %252 = math.tanh %251 : vector<8x128xf32>
    %253 = vector.extract_strided_slice %242 {offsets = [0, 128], sizes = [8, 128], strides = [1, 1]} : vector<8x384xf32> to vector<8x128xf32>
    %254 = arith.mulf %253, %214 : vector<8x128xf32>
    %255 = vector.extract_strided_slice %242 {offsets = [0, 0], sizes = [8, 128], strides = [1, 1]} : vector<8x384xf32> to vector<8x128xf32>
    %256 = arith.mulf %255, %250 : vector<8x128xf32>
    %257 = arith.addf %254, %256 : vector<8x128xf32>
    %258 = vector.extract_strided_slice %248 {offsets = [0, 128], sizes = [8, 128], strides = [1, 1]} : vector<8x384xf32> to vector<8x128xf32>
    %259 = arith.mulf %258, %219 : vector<8x128xf32>
    %260 = vector.extract_strided_slice %248 {offsets = [0, 0], sizes = [8, 128], strides = [1, 1]} : vector<8x384xf32> to vector<8x128xf32>
    %261 = arith.mulf %260, %252 : vector<8x128xf32>
    %262 = arith.addf %259, %261 : vector<8x128xf32>
    %263 = vector.extract_strided_slice %242 {offsets = [0, 256], sizes = [8, 128], strides = [1, 1]} : vector<8x384xf32> to vector<8x128xf32>
    %264 = math.tanh %257 : vector<8x128xf32>
    %265 = arith.mulf %263, %264 : vector<8x128xf32>
    %266 = vector.extract_strided_slice %248 {offsets = [0, 256], sizes = [8, 128], strides = [1, 1]} : vector<8x384xf32> to vector<8x128xf32>
    %267 = math.tanh %262 : vector<8x128xf32>
    %268 = arith.mulf %266, %267 : vector<8x128xf32>
    %269 = tpu.concatenate %265, %268 in 1 : vector<8x128xf32>, vector<8x128xf32> -> vector<8x256xf32>
    %270 = arith.truncf %269 : vector<8x256xf32> to vector<8x256xbf16>
    %cst_29 = arith.constant dense<0.000000e+00> : vector<8x1024xf32>
    %271 = tpu.matmul %270, %8, %cst_29 {dimension_numbers = #tpu.dot_dimension_numbers<[1], [0], [0], [1], [0, 0, 1, 1], [], []>} : vector<8x256xbf16>, vector<256x1024xbf16>, vector<8x1024xf32> -> vector<8x1024xf32>
    %272 = vector.extract_strided_slice %271 {offsets = [0, 0], sizes = [8, 512], strides = [1, 1]} : vector<8x1024xf32> to vector<8x512xf32>
    %273 = vector.extract_strided_slice %7 {offsets = [6, 0, 0], sizes = [1, 8, 512], strides = [1, 1, 1]} : vector<8x8x1024xf32> to vector<1x8x512xf32>
    %274 = vector.shape_cast %273 : vector<1x8x512xf32> to vector<8x512xf32>
    %275 = arith.addf %272, %274 : vector<8x512xf32>
    %276 = vector.extract_strided_slice %271 {offsets = [0, 512], sizes = [8, 512], strides = [1, 1]} : vector<8x1024xf32> to vector<8x512xf32>
    %277 = vector.extract_strided_slice %7 {offsets = [1, 0, 512], sizes = [1, 8, 512], strides = [1, 1, 1]} : vector<8x8x1024xf32> to vector<1x8x512xf32>
    %278 = vector.shape_cast %277 : vector<1x8x512xf32> to vector<8x512xf32>
    %279 = arith.addf %276, %278 : vector<8x512xf32>
    %280 = vector.extract_strided_slice %275 {offsets = [0, 0], sizes = [8, 384], strides = [1, 1]} : vector<8x512xf32> to vector<8x384xf32>
    %281 = arith.negf %280 : vector<8x384xf32>
    %282 = math.exp %281 : vector<8x384xf32>
    %cst_30 = arith.constant 1.000000e+00 : f32
    %283 = vector.broadcast %cst_30 : f32 to vector<8x384xf32>
    %284 = arith.addf %283, %282 : vector<8x384xf32>
    %285 = arith.divf %283, %284 : vector<8x384xf32>
    %286 = vector.extract_strided_slice %279 {offsets = [0, 0], sizes = [8, 384], strides = [1, 1]} : vector<8x512xf32> to vector<8x384xf32>
    %287 = arith.negf %286 : vector<8x384xf32>
    %288 = math.exp %287 : vector<8x384xf32>
    %cst_31 = arith.constant 1.000000e+00 : f32
    %289 = vector.broadcast %cst_31 : f32 to vector<8x384xf32>
    %290 = arith.addf %289, %288 : vector<8x384xf32>
    %291 = arith.divf %289, %290 : vector<8x384xf32>
    %292 = vector.extract_strided_slice %275 {offsets = [0, 384], sizes = [8, 128], strides = [1, 1]} : vector<8x512xf32> to vector<8x128xf32>
    %293 = math.tanh %292 : vector<8x128xf32>
    %294 = vector.extract_strided_slice %279 {offsets = [0, 384], sizes = [8, 128], strides = [1, 1]} : vector<8x512xf32> to vector<8x128xf32>
    %295 = math.tanh %294 : vector<8x128xf32>
    %296 = vector.extract_strided_slice %285 {offsets = [0, 128], sizes = [8, 128], strides = [1, 1]} : vector<8x384xf32> to vector<8x128xf32>
    %297 = arith.mulf %296, %257 : vector<8x128xf32>
    %298 = vector.extract_strided_slice %285 {offsets = [0, 0], sizes = [8, 128], strides = [1, 1]} : vector<8x384xf32> to vector<8x128xf32>
    %299 = arith.mulf %298, %293 : vector<8x128xf32>
    %300 = arith.addf %297, %299 : vector<8x128xf32>
    %301 = vector.extract_strided_slice %291 {offsets = [0, 128], sizes = [8, 128], strides = [1, 1]} : vector<8x384xf32> to vector<8x128xf32>
    %302 = arith.mulf %301, %262 : vector<8x128xf32>
    %303 = vector.extract_strided_slice %291 {offsets = [0, 0], sizes = [8, 128], strides = [1, 1]} : vector<8x384xf32> to vector<8x128xf32>
    %304 = arith.mulf %303, %295 : vector<8x128xf32>
    %305 = arith.addf %302, %304 : vector<8x128xf32>
    %306 = vector.extract_strided_slice %285 {offsets = [0, 256], sizes = [8, 128], strides = [1, 1]} : vector<8x384xf32> to vector<8x128xf32>
    %307 = math.tanh %300 : vector<8x128xf32>
    %308 = arith.mulf %306, %307 : vector<8x128xf32>
    %309 = vector.extract_strided_slice %291 {offsets = [0, 256], sizes = [8, 128], strides = [1, 1]} : vector<8x384xf32> to vector<8x128xf32>
    %310 = math.tanh %305 : vector<8x128xf32>
    %311 = arith.mulf %309, %310 : vector<8x128xf32>
    %312 = tpu.concatenate %308, %311 in 1 : vector<8x128xf32>, vector<8x128xf32> -> vector<8x256xf32>
    %313 = arith.truncf %312 : vector<8x256xf32> to vector<8x256xbf16>
    %cst_32 = arith.constant dense<0.000000e+00> : vector<8x1024xf32>
    %314 = tpu.matmul %313, %8, %cst_32 {dimension_numbers = #tpu.dot_dimension_numbers<[1], [0], [0], [1], [0, 0, 1, 1], [], []>} : vector<8x256xbf16>, vector<256x1024xbf16>, vector<8x1024xf32> -> vector<8x1024xf32>
    %315 = vector.extract_strided_slice %314 {offsets = [0, 0], sizes = [8, 512], strides = [1, 1]} : vector<8x1024xf32> to vector<8x512xf32>
    %316 = vector.extract_strided_slice %7 {offsets = [7, 0, 0], sizes = [1, 8, 512], strides = [1, 1, 1]} : vector<8x8x1024xf32> to vector<1x8x512xf32>
    %317 = vector.shape_cast %316 : vector<1x8x512xf32> to vector<8x512xf32>
    %318 = arith.addf %315, %317 : vector<8x512xf32>
    %319 = vector.extract_strided_slice %314 {offsets = [0, 512], sizes = [8, 512], strides = [1, 1]} : vector<8x1024xf32> to vector<8x512xf32>
    %320 = vector.extract_strided_slice %7 {offsets = [0, 0, 512], sizes = [1, 8, 512], strides = [1, 1, 1]} : vector<8x8x1024xf32> to vector<1x8x512xf32>
    %321 = vector.shape_cast %320 : vector<1x8x512xf32> to vector<8x512xf32>
    %322 = arith.addf %319, %321 : vector<8x512xf32>
    %323 = vector.extract_strided_slice %318 {offsets = [0, 0], sizes = [8, 384], strides = [1, 1]} : vector<8x512xf32> to vector<8x384xf32>
    %324 = arith.negf %323 : vector<8x384xf32>
    %325 = math.exp %324 : vector<8x384xf32>
    %cst_33 = arith.constant 1.000000e+00 : f32
    %326 = vector.broadcast %cst_33 : f32 to vector<8x384xf32>
    %327 = arith.addf %326, %325 : vector<8x384xf32>
    %328 = arith.divf %326, %327 : vector<8x384xf32>
    %329 = vector.extract_strided_slice %322 {offsets = [0, 0], sizes = [8, 384], strides = [1, 1]} : vector<8x512xf32> to vector<8x384xf32>
    %330 = arith.negf %329 : vector<8x384xf32>
    %331 = math.exp %330 : vector<8x384xf32>
    %cst_34 = arith.constant 1.000000e+00 : f32
    %332 = vector.broadcast %cst_34 : f32 to vector<8x384xf32>
    %333 = arith.addf %332, %331 : vector<8x384xf32>
    %334 = arith.divf %332, %333 : vector<8x384xf32>
    %335 = vector.extract_strided_slice %318 {offsets = [0, 384], sizes = [8, 128], strides = [1, 1]} : vector<8x512xf32> to vector<8x128xf32>
    %336 = math.tanh %335 : vector<8x128xf32>
    %337 = vector.extract_strided_slice %322 {offsets = [0, 384], sizes = [8, 128], strides = [1, 1]} : vector<8x512xf32> to vector<8x128xf32>
    %338 = math.tanh %337 : vector<8x128xf32>
    %339 = vector.extract_strided_slice %328 {offsets = [0, 128], sizes = [8, 128], strides = [1, 1]} : vector<8x384xf32> to vector<8x128xf32>
    %340 = arith.mulf %339, %300 : vector<8x128xf32>
    %341 = vector.extract_strided_slice %328 {offsets = [0, 0], sizes = [8, 128], strides = [1, 1]} : vector<8x384xf32> to vector<8x128xf32>
    %342 = arith.mulf %341, %336 : vector<8x128xf32>
    %343 = arith.addf %340, %342 : vector<8x128xf32>
    %344 = vector.extract_strided_slice %334 {offsets = [0, 128], sizes = [8, 128], strides = [1, 1]} : vector<8x384xf32> to vector<8x128xf32>
    %345 = arith.mulf %344, %305 : vector<8x128xf32>
    %346 = vector.extract_strided_slice %334 {offsets = [0, 0], sizes = [8, 128], strides = [1, 1]} : vector<8x384xf32> to vector<8x128xf32>
    %347 = arith.mulf %346, %338 : vector<8x128xf32>
    %348 = arith.addf %345, %347 : vector<8x128xf32>
    %349 = vector.extract_strided_slice %328 {offsets = [0, 256], sizes = [8, 128], strides = [1, 1]} : vector<8x384xf32> to vector<8x128xf32>
    %350 = math.tanh %343 : vector<8x128xf32>
    %351 = arith.mulf %349, %350 : vector<8x128xf32>
    %352 = vector.extract_strided_slice %334 {offsets = [0, 256], sizes = [8, 128], strides = [1, 1]} : vector<8x384xf32> to vector<8x128xf32>
    %353 = math.tanh %348 : vector<8x128xf32>
    %354 = arith.mulf %352, %353 : vector<8x128xf32>
    %355 = tpu.concatenate %351, %354 in 1 : vector<8x128xf32>, vector<8x128xf32> -> vector<8x256xf32>
    %356 = arith.truncf %355 : vector<8x256xf32> to vector<8x256xbf16>
    %c0_35 = arith.constant 0 : index
    %c0_36 = arith.constant 0 : index
    %357 = vector.load %arg6[%c0_35, %c0_36] : memref<256x128xbf16, #tpu.memory_space<vmem>>, vector<256x128xbf16>
    %cst_37 = arith.constant dense<0.000000e+00> : vector<8x128xf32>
    %358 = tpu.matmul %356, %357, %cst_37 {dimension_numbers = #tpu.dot_dimension_numbers<[1], [0], [0], [1], [0, 0, 1, 1], [], []>} : vector<8x256xbf16>, vector<256x128xbf16>, vector<8x128xf32> -> vector<8x128xf32>
    %c0_38 = arith.constant 0 : index
    %c0_39 = arith.constant 0 : index
    %359 = vector.load %arg7[%c0_38, %c0_39] : memref<1x128xf32, #tpu.memory_space<vmem>>, vector<1x128xf32>
    %360 = vector.broadcast %359 : vector<1x128xf32> to vector<8x128xf32>
    %361 = arith.addf %358, %360 : vector<8x128xf32>
    %c0_40 = arith.constant 0 : index
    %c0_41 = arith.constant 0 : index
    %c0_42 = arith.constant 0 : index
    %362 = vector.load %arg2[%c0_40, %c0_41, %c0_42] : memref<8x4x128xbf16, #tpu.memory_space<vmem>>, vector<8x4x128xbf16>
    %363 = vector.shape_cast %362 : vector<8x4x128xbf16> to vector<32x128xbf16>
    %c0_43 = arith.constant 0 : index
    %c0_44 = arith.constant 0 : index
    %364 = vector.load %arg8[%c0_43, %c0_44] : memref<128x128xbf16, #tpu.memory_space<vmem>>, vector<128x128xbf16>
    %cst_45 = arith.constant dense<0.000000e+00> : vector<32x128xf32>
    %365 = tpu.matmul %363, %364, %cst_45 {dimension_numbers = #tpu.dot_dimension_numbers<[1], [0], [0], [1], [0, 0, 1, 1], [], []>} : vector<32x128xbf16>, vector<128x128xbf16>, vector<32x128xf32> -> vector<32x128xf32>
    %c0_46 = arith.constant 0 : index
    %c0_47 = arith.constant 0 : index
    %366 = vector.load %arg9[%c0_46, %c0_47] : memref<1x128xf32, #tpu.memory_space<vmem>>, vector<1x128xf32>
    %367 = vector.broadcast %366 : vector<1x128xf32> to vector<32x128xf32>
    %368 = arith.addf %365, %367 : vector<32x128xf32>
    %369 = vector.shape_cast %368 : vector<32x128xf32> to vector<8x4x128xf32>
    %370 = vector.shape_cast %361 : vector<8x128xf32> to vector<8x1x128xf32>
    %371 = vector.broadcast %370 : vector<8x1x128xf32> to vector<8x4x128xf32>
    %372 = arith.mulf %371, %369 : vector<8x4x128xf32>
    %cst_48 = arith.constant dense<0.000000e+00> : vector<8x4xf32>
    %373 = vector.multi_reduction <add>, %372, %cst_48 [2] : vector<8x4x128xf32> to vector<8x4xf32>
    %374 = arith.mulf %361, %361 : vector<8x128xf32>
    %cst_49 = arith.constant dense<0.000000e+00> : vector<8xf32>
    %375 = vector.multi_reduction <add>, %374, %cst_49 [1] : vector<8x128xf32> to vector<8xf32>
    %376 = vector.shape_cast %375 : vector<8xf32> to vector<8x1xf32>
    %377 = math.sqrt %376 : vector<8x1xf32>
    %378 = arith.mulf %369, %369 : vector<8x4x128xf32>
    %cst_50 = arith.constant dense<0.000000e+00> : vector<8x4xf32>
    %379 = vector.multi_reduction <add>, %378, %cst_50 [2] : vector<8x4x128xf32> to vector<8x4xf32>
    %380 = math.sqrt %379 : vector<8x4xf32>
    %cst_51 = arith.constant 9.99999993E-9 : f32
    %381 = vector.broadcast %cst_51 : f32 to vector<8x1xf32>
    %382 = arith.maximumf %377, %381 : vector<8x1xf32>
    %cst_52 = arith.constant 9.99999993E-9 : f32
    %383 = vector.broadcast %cst_52 : f32 to vector<8x4xf32>
    %384 = arith.maximumf %380, %383 : vector<8x4xf32>
    %385 = vector.broadcast %382 : vector<8x1xf32> to vector<8x4xf32>
    %386 = arith.mulf %385, %384 : vector<8x4xf32>
    %387 = arith.divf %373, %386 : vector<8x4xf32>
    %c0_53 = arith.constant 0 : index
    %c0_54 = arith.constant 0 : index
    %388 = vector.load %arg10[%c0_53, %c0_54] : memref<8x4xf32, #tpu.memory_space<vmem>>, vector<8x4xf32>
    tpu.vector_store %arg10[%c0_53, %c0_54], %387 {strides = array<i32>} : memref<8x4xf32, #tpu.memory_space<vmem>>, vector<8x4xf32>,
    return
  }
  func.func @transform_0(%arg0: i32) -> (i32, i32, i32) {
    %c0_i32 = arith.constant 0 : i32
    %c0_i32_0 = arith.constant 0 : i32
    %c0_i32_1 = arith.constant 0 : i32
    return %c0_i32, %arg0, %c0_i32_0 : i32, i32, i32
  }
  func.func @transform_1(%arg0: i32) -> (i32, i32, i32) {
    %c0_i32 = arith.constant 0 : i32
    %c0_i32_0 = arith.constant 0 : i32
    %c0_i32_1 = arith.constant 0 : i32
    return %arg0, %c0_i32, %c0_i32_0 : i32, i32, i32
  }
  func.func @transform_2(%arg0: i32) -> (i32, i32) {
    %c0_i32 = arith.constant 0 : i32
    %c0_i32_0 = arith.constant 0 : i32
    %c0_i32_1 = arith.constant 0 : i32
    return %c0_i32, %c0_i32_0 : i32, i32
  }
  func.func @transform_3(%arg0: i32) -> (i32, i32) {
    %c0_i32 = arith.constant 0 : i32
    %c0_i32_0 = arith.constant 0 : i32
    %c0_i32_1 = arith.constant 0 : i32
    return %c0_i32, %c0_i32_0 : i32, i32
  }
  func.func @transform_4(%arg0: i32) -> (i32, i32) {
    %c0_i32 = arith.constant 0 : i32
    %c0_i32_0 = arith.constant 0 : i32
    %c0_i32_1 = arith.constant 0 : i32
    return %c0_i32, %c0_i32_0 : i32, i32
  }
  func.func @transform_5(%arg0: i32) -> (i32, i32) {
    %c0_i32 = arith.constant 0 : i32
    %c0_i32_0 = arith.constant 0 : i32
    %c0_i32_1 = arith.constant 0 : i32
    return %c0_i32, %c0_i32_0 : i32, i32
  }
  func.func @transform_6(%arg0: i32) -> (i32, i32) {
    %c0_i32 = arith.constant 0 : i32
    %c0_i32_0 = arith.constant 0 : i32
    %c0_i32_1 = arith.constant 0 : i32
    return %c0_i32, %c0_i32_0 : i32, i32
  }
  func.func @transform_7(%arg0: i32) -> (i32, i32) {
    %c0_i32 = arith.constant 0 : i32
    %c0_i32_0 = arith.constant 0 : i32
    %c0_i32_1 = arith.constant 0 : i32
    return %c0_i32, %c0_i32_0 : i32, i32
  }
  func.func @transform_8(%arg0: i32) -> (i32, i32) {
    %c0_i32 = arith.constant 0 : i32
    %c0_i32_0 = arith.constant 0 : i32
    %c0_i32_1 = arith.constant 0 : i32
    return %c0_i32, %c0_i32_0 : i32, i32
  }
  func.func @transform_9(%arg0: i32) -> (i32, i32) {
    %c0_i32 = arith.constant 0 : i32
    %c0_i32_0 = arith.constant 0 : i32
    return %arg0, %c0_i32 : i32, i32
  }
}

module attributes {stable_mosaic.version = 11 : i64} {
  func.func @_column_predictor_kernel(%arg0: i32, %arg1: memref<8x8x128xbf16, #tpu.memory_space<vmem>>, %arg2: memref<8x4x128xbf16, #tpu.memory_space<vmem>>, %arg3: memref<128x1024xbf16, #tpu.memory_space<vmem>>, %arg4: memref<256x1024xbf16, #tpu.memory_space<vmem>>, %arg5: memref<1x1024xf32, #tpu.memory_space<vmem>>, %arg6: memref<256x128xbf16, #tpu.memory_space<vmem>>, %arg7: memref<1x128xf32, #tpu.memory_space<vmem>>, %arg8: memref<128x128xbf16, #tpu.memory_space<vmem>>, %arg9: memref<1x128xf32, #tpu.memory_space<vmem>>, %arg10: memref<8x4xf32, #tpu.memory_space<vmem>>) attributes {dimension_semantics = [#tpu.dimension_semantics<parallel>], iteration_bounds = array<i64: 1>, scalar_prefetch = 0 : i64, scratch_operands = 0 : i64, tpu.core_type = #tpu.core_type<tc>, window_params = [{transform_indices = @transform_0, window_bounds = array<i64: 8, 8, 128>}, {transform_indices = @transform_1, window_bounds = array<i64: 8, 4, 128>}, {pipeline_mode = #tpu.pipeline_mode<synchronous>, transform_indices = @transform_2, window_bounds = array<i64: 128, 1024>}, {pipeline_mode = #tpu.pipeline_mode<synchronous>, transform_indices = @transform_3, window_bounds = array<i64: 256, 1024>}, {pipeline_mode = #tpu.pipeline_mode<synchronous>, transform_indices = @transform_4, window_bounds = array<i64: 1, 1024>}, {pipeline_mode = #tpu.pipeline_mode<synchronous>, transform_indices = @transform_5, window_bounds = array<i64: 256, 128>}, {pipeline_mode = #tpu.pipeline_mode<synchronous>, transform_indices = @transform_6, window_bounds = array<i64: 1, 128>}, {pipeline_mode = #tpu.pipeline_mode<synchronous>, transform_indices = @transform_7, window_bounds = array<i64: 128, 128>}, {pipeline_mode = #tpu.pipeline_mode<synchronous>, transform_indices = @transform_8, window_bounds = array<i64: 1, 128>}, {transform_indices = @transform_9, window_bounds = array<i64: 8, 4>}]} {
    %c0 = arith.constant 0 : index
    %c0_0 = arith.constant 0 : index
    %c0_1 = arith.constant 0 : index
    %0 = vector.load %arg1[%c0, %c0_0, %c0_1] : memref<8x8x128xbf16, #tpu.memory_space<vmem>>, vector<8x8x128xbf16>
    %1 = vector.shape_cast %0 : vector<8x8x128xbf16> to vector<64x128xbf16>
    %c0_2 = arith.constant 0 : index
    %c0_3 = arith.constant 0 : index
    %2 = vector.load %arg3[%c0_2, %c0_3] : memref<128x1024xbf16, #tpu.memory_space<vmem>>, vector<128x1024xbf16>
    %cst = arith.constant dense<0.000000e+00> : vector<64x1024xf32>
    %3 = tpu.matmul %1, %2, %cst {dimension_numbers = #tpu.dot_dimension_numbers<[1], [0], [0], [1], [0, 0, 1, 1], [], []>} : vector<64x128xbf16>, vector<128x1024xbf16>, vector<64x1024xf32> -> vector<64x1024xf32>
    %c0_4 = arith.constant 0 : index
    %c0_5 = arith.constant 0 : index
    %4 = vector.load %arg5[%c0_4, %c0_5] : memref<1x1024xf32, #tpu.memory_space<vmem>>, vector<1x1024xf32>
    %5 = vector.broadcast %4 : vector<1x1024xf32> to vector<64x1024xf32>
    %6 = arith.addf %3, %5 : vector<64x1024xf32>
    %7 = vector.shape_cast %6 : vector<64x1024xf32> to vector<8x8x1024xf32>
    %c0_6 = arith.constant 0 : index
    %c0_7 = arith.constant 0 : index
    %8 = vector.load %arg4[%c0_6, %c0_7] : memref<256x1024xbf16, #tpu.memory_space<vmem>>, vector<256x1024xbf16>
    %cst_8 = arith.constant 0.000000e+00 : f32
    %9 = vector.broadcast %cst_8 : f32 to vector<8x256xf32>
    %cst_9 = arith.constant 0.000000e+00 : f32
    %10 = vector.broadcast %cst_9 : f32 to vector<8x128xf32>
    %cst_10 = arith.constant 0.000000e+00 : f32
    %11 = vector.broadcast %cst_10 : f32 to vector<8x128xf32>
    %12 = arith.truncf %9 : vector<8x256xf32> to vector<8x256xbf16>
    %cst_11 = arith.constant dense<0.000000e+00> : vector<8x1024xf32>
    %13 = tpu.matmul %12, %8, %cst_11 {dimension_numbers = #tpu.dot_dimension_numbers<[1], [0], [0], [1], [0, 0, 1, 1], [], []>} : vector<8x256xbf16>, vector<256x1024xbf16>, vector<8x1024xf32> -> vector<8x1024xf32>
    %14 = vector.extract_strided_slice %13 {offsets = [0, 0], sizes = [8, 512], strides = [1, 1]} : vector<8x1024xf32> to vector<8x512xf32>
    %15 = vector.extract_strided_slice %7 {offsets = [0, 0, 0], sizes = [1, 8, 512], strides = [1, 1, 1]} : vector<8x8x1024xf32> to vector<1x8x512xf32>
    %16 = vector.shape_cast %15 : vector<1x8x512xf32> to vector<8x512xf32>
    %17 = arith.addf %14, %16 : vector<8x512xf32>
    %18 = vector.extract_strided_slice %13 {offsets = [0, 512], sizes = [8, 512], strides = [1, 1]} : vector<8x1024xf32> to vector<8x512xf32>
    %19 = vector.extract_strided_slice %7 {offsets = [7, 0, 512], sizes = [1, 8, 512], strides = [1, 1, 1]} : vector<8x8x1024xf32> to vector<1x8x512xf32>
    %20 = vector.shape_cast %19 : vector<1x8x512xf32> to vector<8x512xf32>
    %21 = arith.addf %18, %20 : vector<8x512xf32>
    %22 = vector.extract_strided_slice %17 {offsets = [0, 0], sizes = [8, 384], strides = [1, 1]} : vector<8x512xf32> to vector<8x384xf32>
    %23 = arith.negf %22 : vector<8x384xf32>
    %24 = math.exp %23 : vector<8x384xf32>
    %cst_12 = arith.constant 1.000000e+00 : f32
    %25 = vector.broadcast %cst_12 : f32 to vector<8x384xf32>
    %26 = arith.addf %25, %24 : vector<8x384xf32>
    %27 = arith.divf %25, %26 : vector<8x384xf32>
    %28 = vector.extract_strided_slice %21 {offsets = [0, 0], sizes = [8, 384], strides = [1, 1]} : vector<8x512xf32> to vector<8x384xf32>
    %29 = arith.negf %28 : vector<8x384xf32>
    %30 = math.exp %29 : vector<8x384xf32>
    %cst_13 = arith.constant 1.000000e+00 : f32
    %31 = vector.broadcast %cst_13 : f32 to vector<8x384xf32>
    %32 = arith.addf %31, %30 : vector<8x384xf32>
    %33 = arith.divf %31, %32 : vector<8x384xf32>
    %34 = vector.extract_strided_slice %17 {offsets = [0, 384], sizes = [8, 128], strides = [1, 1]} : vector<8x512xf32> to vector<8x128xf32>
    %35 = math.tanh %34 : vector<8x128xf32>
    %36 = vector.extract_strided_slice %21 {offsets = [0, 384], sizes = [8, 128], strides = [1, 1]} : vector<8x512xf32> to vector<8x128xf32>
    %37 = math.tanh %36 : vector<8x128xf32>
    %38 = vector.extract_strided_slice %27 {offsets = [0, 128], sizes = [8, 128], strides = [1, 1]} : vector<8x384xf32> to vector<8x128xf32>
    %39 = arith.mulf %38, %10 : vector<8x128xf32>
    %40 = vector.extract_strided_slice %27 {offsets = [0, 0], sizes = [8, 128], strides = [1, 1]} : vector<8x384xf32> to vector<8x128xf32>
    %41 = arith.mulf %40, %35 : vector<8x128xf32>
    %42 = arith.addf %39, %41 : vector<8x128xf32>
    %43 = vector.extract_strided_slice %33 {offsets = [0, 128], sizes = [8, 128], strides = [1, 1]} : vector<8x384xf32> to vector<8x128xf32>
    %44 = arith.mulf %43, %11 : vector<8x128xf32>
    %45 = vector.extract_strided_slice %33 {offsets = [0, 0], sizes = [8, 128], strides = [1, 1]} : vector<8x384xf32> to vector<8x128xf32>
    %46 = arith.mulf %45, %37 : vector<8x128xf32>
    %47 = arith.addf %44, %46 : vector<8x128xf32>
    %48 = vector.extract_strided_slice %27 {offsets = [0, 256], sizes = [8, 128], strides = [1, 1]} : vector<8x384xf32> to vector<8x128xf32>
    %49 = math.tanh %42 : vector<8x128xf32>
    %50 = arith.mulf %48, %49 : vector<8x128xf32>
    %51 = vector.extract_strided_slice %33 {offsets = [0, 256], sizes = [8, 128], strides = [1, 1]} : vector<8x384xf32> to vector<8x128xf32>
    %52 = math.tanh %47 : vector<8x128xf32>
    %53 = arith.mulf %51, %52 : vector<8x128xf32>
    %54 = tpu.concatenate %50, %53 in 1 : vector<8x128xf32>, vector<8x128xf32> -> vector<8x256xf32>
    %55 = arith.truncf %54 : vector<8x256xf32> to vector<8x256xbf16>
    %cst_14 = arith.constant dense<0.000000e+00> : vector<8x1024xf32>
    %56 = tpu.matmul %55, %8, %cst_14 {dimension_numbers = #tpu.dot_dimension_numbers<[1], [0], [0], [1], [0, 0, 1, 1], [], []>} : vector<8x256xbf16>, vector<256x1024xbf16>, vector<8x1024xf32> -> vector<8x1024xf32>
    %57 = vector.extract_strided_slice %56 {offsets = [0, 0], sizes = [8, 512], strides = [1, 1]} : vector<8x1024xf32> to vector<8x512xf32>
    %58 = vector.extract_strided_slice %7 {offsets = [1, 0, 0], sizes = [1, 8, 512], strides = [1, 1, 1]} : vector<8x8x1024xf32> to vector<1x8x512xf32>
    %59 = vector.shape_cast %58 : vector<1x8x512xf32> to vector<8x512xf32>
    %60 = arith.addf %57, %59 : vector<8x512xf32>
    %61 = vector.extract_strided_slice %56 {offsets = [0, 512], sizes = [8, 512], strides = [1, 1]} : vector<8x1024xf32> to vector<8x512xf32>
    %62 = vector.extract_strided_slice %7 {offsets = [6, 0, 512], sizes = [1, 8, 512], strides = [1, 1, 1]} : vector<8x8x1024xf32> to vector<1x8x512xf32>
    %63 = vector.shape_cast %62 : vector<1x8x512xf32> to vector<8x512xf32>
    %64 = arith.addf %61, %63 : vector<8x512xf32>
    %65 = vector.extract_strided_slice %60 {offsets = [0, 0], sizes = [8, 384], strides = [1, 1]} : vector<8x512xf32> to vector<8x384xf32>
    %66 = arith.negf %65 : vector<8x384xf32>
    %67 = math.exp %66 : vector<8x384xf32>
    %cst_15 = arith.constant 1.000000e+00 : f32
    %68 = vector.broadcast %cst_15 : f32 to vector<8x384xf32>
    %69 = arith.addf %68, %67 : vector<8x384xf32>
    %70 = arith.divf %68, %69 : vector<8x384xf32>
    %71 = vector.extract_strided_slice %64 {offsets = [0, 0], sizes = [8, 384], strides = [1, 1]} : vector<8x512xf32> to vector<8x384xf32>
    %72 = arith.negf %71 : vector<8x384xf32>
    %73 = math.exp %72 : vector<8x384xf32>
    %cst_16 = arith.constant 1.000000e+00 : f32
    %74 = vector.broadcast %cst_16 : f32 to vector<8x384xf32>
    %75 = arith.addf %74, %73 : vector<8x384xf32>
    %76 = arith.divf %74, %75 : vector<8x384xf32>
    %77 = vector.extract_strided_slice %60 {offsets = [0, 384], sizes = [8, 128], strides = [1, 1]} : vector<8x512xf32> to vector<8x128xf32>
    %78 = math.tanh %77 : vector<8x128xf32>
    %79 = vector.extract_strided_slice %64 {offsets = [0, 384], sizes = [8, 128], strides = [1, 1]} : vector<8x512xf32> to vector<8x128xf32>
    %80 = math.tanh %79 : vector<8x128xf32>
    %81 = vector.extract_strided_slice %70 {offsets = [0, 128], sizes = [8, 128], strides = [1, 1]} : vector<8x384xf32> to vector<8x128xf32>
    %82 = arith.mulf %81, %42 : vector<8x128xf32>
    %83 = vector.extract_strided_slice %70 {offsets = [0, 0], sizes = [8, 128], strides = [1, 1]} : vector<8x384xf32> to vector<8x128xf32>
    %84 = arith.mulf %83, %78 : vector<8x128xf32>
    %85 = arith.addf %82, %84 : vector<8x128xf32>
    %86 = vector.extract_strided_slice %76 {offsets = [0, 128], sizes = [8, 128], strides = [1, 1]} : vector<8x384xf32> to vector<8x128xf32>
    %87 = arith.mulf %86, %47 : vector<8x128xf32>
    %88 = vector.extract_strided_slice %76 {offsets = [0, 0], sizes = [8, 128], strides = [1, 1]} : vector<8x384xf32> to vector<8x128xf32>
    %89 = arith.mulf %88, %80 : vector<8x128xf32>
    %90 = arith.addf %87, %89 : vector<8x128xf32>
    %91 = vector.extract_strided_slice %70 {offsets = [0, 256], sizes = [8, 128], strides = [1, 1]} : vector<8x384xf32> to vector<8x128xf32>
    %92 = math.tanh %85 : vector<8x128xf32>
    %93 = arith.mulf %91, %92 : vector<8x128xf32>
    %94 = vector.extract_strided_slice %76 {offsets = [0, 256], sizes = [8, 128], strides = [1, 1]} : vector<8x384xf32> to vector<8x128xf32>
    %95 = math.tanh %90 : vector<8x128xf32>
    %96 = arith.mulf %94, %95 : vector<8x128xf32>
    %97 = tpu.concatenate %93, %96 in 1 : vector<8x128xf32>, vector<8x128xf32> -> vector<8x256xf32>
    %98 = arith.truncf %97 : vector<8x256xf32> to vector<8x256xbf16>
    %cst_17 = arith.constant dense<0.000000e+00> : vector<8x1024xf32>
    %99 = tpu.matmul %98, %8, %cst_17 {dimension_numbers = #tpu.dot_dimension_numbers<[1], [0], [0], [1], [0, 0, 1, 1], [], []>} : vector<8x256xbf16>, vector<256x1024xbf16>, vector<8x1024xf32> -> vector<8x1024xf32>
    %100 = vector.extract_strided_slice %99 {offsets = [0, 0], sizes = [8, 512], strides = [1, 1]} : vector<8x1024xf32> to vector<8x512xf32>
    %101 = vector.extract_strided_slice %7 {offsets = [2, 0, 0], sizes = [1, 8, 512], strides = [1, 1, 1]} : vector<8x8x1024xf32> to vector<1x8x512xf32>
    %102 = vector.shape_cast %101 : vector<1x8x512xf32> to vector<8x512xf32>
    %103 = arith.addf %100, %102 : vector<8x512xf32>
    %104 = vector.extract_strided_slice %99 {offsets = [0, 512], sizes = [8, 512], strides = [1, 1]} : vector<8x1024xf32> to vector<8x512xf32>
    %105 = vector.extract_strided_slice %7 {offsets = [5, 0, 512], sizes = [1, 8, 512], strides = [1, 1, 1]} : vector<8x8x1024xf32> to vector<1x8x512xf32>
    %106 = vector.shape_cast %105 : vector<1x8x512xf32> to vector<8x512xf32>
    %107 = arith.addf %104, %106 : vector<8x512xf32>
    %108 = vector.extract_strided_slice %103 {offsets = [0, 0], sizes = [8, 384], strides = [1, 1]} : vector<8x512xf32> to vector<8x384xf32>
    %109 = arith.negf %108 : vector<8x384xf32>
    %110 = math.exp %109 : vector<8x384xf32>
    %cst_18 = arith.constant 1.000000e+00 : f32
    %111 = vector.broadcast %cst_18 : f32 to vector<8x384xf32>
    %112 = arith.addf %111, %110 : vector<8x384xf32>
    %113 = arith.divf %111, %112 : vector<8x384xf32>
    %114 = vector.extract_strided_slice %107 {offsets = [0, 0], sizes = [8, 384], strides = [1, 1]} : vector<8x512xf32> to vector<8x384xf32>
    %115 = arith.negf %114 : vector<8x384xf32>
    %116 = math.exp %115 : vector<8x384xf32>
    %cst_19 = arith.constant 1.000000e+00 : f32
    %117 = vector.broadcast %cst_19 : f32 to vector<8x384xf32>
    %118 = arith.addf %117, %116 : vector<8x384xf32>
    %119 = arith.divf %117, %118 : vector<8x384xf32>
    %120 = vector.extract_strided_slice %103 {offsets = [0, 384], sizes = [8, 128], strides = [1, 1]} : vector<8x512xf32> to vector<8x128xf32>
    %121 = math.tanh %120 : vector<8x128xf32>
    %122 = vector.extract_strided_slice %107 {offsets = [0, 384], sizes = [8, 128], strides = [1, 1]} : vector<8x512xf32> to vector<8x128xf32>
    %123 = math.tanh %122 : vector<8x128xf32>
    %124 = vector.extract_strided_slice %113 {offsets = [0, 128], sizes = [8, 128], strides = [1, 1]} : vector<8x384xf32> to vector<8x128xf32>
    %125 = arith.mulf %124, %85 : vector<8x128xf32>
    %126 = vector.extract_strided_slice %113 {offsets = [0, 0], sizes = [8, 128], strides = [1, 1]} : vector<8x384xf32> to vector<8x128xf32>
    %127 = arith.mulf %126, %121 : vector<8x128xf32>
    %128 = arith.addf %125, %127 : vector<8x128xf32>
    %129 = vector.extract_strided_slice %119 {offsets = [0, 128], sizes = [8, 128], strides = [1, 1]} : vector<8x384xf32> to vector<8x128xf32>
    %130 = arith.mulf %129, %90 : vector<8x128xf32>
    %131 = vector.extract_strided_slice %119 {offsets = [0, 0], sizes = [8, 128], strides = [1, 1]} : vector<8x384xf32> to vector<8x128xf32>
    %132 = arith.mulf %131, %123 : vector<8x128xf32>
    %133 = arith.addf %130, %132 : vector<8x128xf32>
    %134 = vector.extract_strided_slice %113 {offsets = [0, 256], sizes = [8, 128], strides = [1, 1]} : vector<8x384xf32> to vector<8x128xf32>
    %135 = math.tanh %128 : vector<8x128xf32>
    %136 = arith.mulf %134, %135 : vector<8x128xf32>
    %137 = vector.extract_strided_slice %119 {offsets = [0, 256], sizes = [8, 128], strides = [1, 1]} : vector<8x384xf32> to vector<8x128xf32>
    %138 = math.tanh %133 : vector<8x128xf32>
    %139 = arith.mulf %137, %138 : vector<8x128xf32>
    %140 = tpu.concatenate %136, %139 in 1 : vector<8x128xf32>, vector<8x128xf32> -> vector<8x256xf32>
    %141 = arith.truncf %140 : vector<8x256xf32> to vector<8x256xbf16>
    %cst_20 = arith.constant dense<0.000000e+00> : vector<8x1024xf32>
    %142 = tpu.matmul %141, %8, %cst_20 {dimension_numbers = #tpu.dot_dimension_numbers<[1], [0], [0], [1], [0, 0, 1, 1], [], []>} : vector<8x256xbf16>, vector<256x1024xbf16>, vector<8x1024xf32> -> vector<8x1024xf32>
    %143 = vector.extract_strided_slice %142 {offsets = [0, 0], sizes = [8, 512], strides = [1, 1]} : vector<8x1024xf32> to vector<8x512xf32>
    %144 = vector.extract_strided_slice %7 {offsets = [3, 0, 0], sizes = [1, 8, 512], strides = [1, 1, 1]} : vector<8x8x1024xf32> to vector<1x8x512xf32>
    %145 = vector.shape_cast %144 : vector<1x8x512xf32> to vector<8x512xf32>
    %146 = arith.addf %143, %145 : vector<8x512xf32>
    %147 = vector.extract_strided_slice %142 {offsets = [0, 512], sizes = [8, 512], strides = [1, 1]} : vector<8x1024xf32> to vector<8x512xf32>
    %148 = vector.extract_strided_slice %7 {offsets = [4, 0, 512], sizes = [1, 8, 512], strides = [1, 1, 1]} : vector<8x8x1024xf32> to vector<1x8x512xf32>
    %149 = vector.shape_cast %148 : vector<1x8x512xf32> to vector<8x512xf32>
    %150 = arith.addf %147, %149 : vector<8x512xf32>
    %151 = vector.extract_strided_slice %146 {offsets = [0, 0], sizes = [8, 384], strides = [1, 1]} : vector<8x512xf32> to vector<8x384xf32>
    %152 = arith.negf %151 : vector<8x384xf32>
    %153 = math.exp %152 : vector<8x384xf32>
    %cst_21 = arith.constant 1.000000e+00 : f32
    %154 = vector.broadcast %cst_21 : f32 to vector<8x384xf32>
    %155 = arith.addf %154, %153 : vector<8x384xf32>
    %156 = arith.divf %154, %155 : vector<8x384xf32>
    %157 = vector.extract_strided_slice %150 {offsets = [0, 0], sizes = [8, 384], strides = [1, 1]} : vector<8x512xf32> to vector<8x384xf32>
    %158 = arith.negf %157 : vector<8x384xf32>
    %159 = math.exp %158 : vector<8x384xf32>
    %cst_22 = arith.constant 1.000000e+00 : f32
    %160 = vector.broadcast %cst_22 : f32 to vector<8x384xf32>
    %161 = arith.addf %160, %159 : vector<8x384xf32>
    %162 = arith.divf %160, %161 : vector<8x384xf32>
    %163 = vector.extract_strided_slice %146 {offsets = [0, 384], sizes = [8, 128], strides = [1, 1]} : vector<8x512xf32> to vector<8x128xf32>
    %164 = math.tanh %163 : vector<8x128xf32>
    %165 = vector.extract_strided_slice %150 {offsets = [0, 384], sizes = [8, 128], strides = [1, 1]} : vector<8x512xf32> to vector<8x128xf32>
    %166 = math.tanh %165 : vector<8x128xf32>
    %167 = vector.extract_strided_slice %156 {offsets = [0, 128], sizes = [8, 128], strides = [1, 1]} : vector<8x384xf32> to vector<8x128xf32>
    %168 = arith.mulf %167, %128 : vector<8x128xf32>
    %169 = vector.extract_strided_slice %156 {offsets = [0, 0], sizes = [8, 128], strides = [1, 1]} : vector<8x384xf32> to vector<8x128xf32>
    %170 = arith.mulf %169, %164 : vector<8x128xf32>
    %171 = arith.addf %168, %170 : vector<8x128xf32>
    %172 = vector.extract_strided_slice %162 {offsets = [0, 128], sizes = [8, 128], strides = [1, 1]} : vector<8x384xf32> to vector<8x128xf32>
    %173 = arith.mulf %172, %133 : vector<8x128xf32>
    %174 = vector.extract_strided_slice %162 {offsets = [0, 0], sizes = [8, 128], strides = [1, 1]} : vector<8x384xf32> to vector<8x128xf32>
    %175 = arith.mulf %174, %166 : vector<8x128xf32>
    %176 = arith.addf %173, %175 : vector<8x128xf32>
    %177 = vector.extract_strided_slice %156 {offsets = [0, 256], sizes = [8, 128], strides = [1, 1]} : vector<8x384xf32> to vector<8x128xf32>
    %178 = math.tanh %171 : vector<8x128xf32>
    %179 = arith.mulf %177, %178 : vector<8x128xf32>
    %180 = vector.extract_strided_slice %162 {offsets = [0, 256], sizes = [8, 128], strides = [1, 1]} : vector<8x384xf32> to vector<8x128xf32>
    %181 = math.tanh %176 : vector<8x128xf32>
    %182 = arith.mulf %180, %181 : vector<8x128xf32>
    %183 = tpu.concatenate %179, %182 in 1 : vector<8x128xf32>, vector<8x128xf32> -> vector<8x256xf32>
    %184 = arith.truncf %183 : vector<8x256xf32> to vector<8x256xbf16>
    %cst_23 = arith.constant dense<0.000000e+00> : vector<8x1024xf32>
    %185 = tpu.matmul %184, %8, %cst_23 {dimension_numbers = #tpu.dot_dimension_numbers<[1], [0], [0], [1], [0, 0, 1, 1], [], []>} : vector<8x256xbf16>, vector<256x1024xbf16>, vector<8x1024xf32> -> vector<8x1024xf32>
    %186 = vector.extract_strided_slice %185 {offsets = [0, 0], sizes = [8, 512], strides = [1, 1]} : vector<8x1024xf32> to vector<8x512xf32>
    %187 = vector.extract_strided_slice %7 {offsets = [4, 0, 0], sizes = [1, 8, 512], strides = [1, 1, 1]} : vector<8x8x1024xf32> to vector<1x8x512xf32>
    %188 = vector.shape_cast %187 : vector<1x8x512xf32> to vector<8x512xf32>
    %189 = arith.addf %186, %188 : vector<8x512xf32>
    %190 = vector.extract_strided_slice %185 {offsets = [0, 512], sizes = [8, 512], strides = [1, 1]} : vector<8x1024xf32> to vector<8x512xf32>
    %191 = vector.extract_strided_slice %7 {offsets = [3, 0, 512], sizes = [1, 8, 512], strides = [1, 1, 1]} : vector<8x8x1024xf32> to vector<1x8x512xf32>
    %192 = vector.shape_cast %191 : vector<1x8x512xf32> to vector<8x512xf32>
    %193 = arith.addf %190, %192 : vector<8x512xf32>
    %194 = vector.extract_strided_slice %189 {offsets = [0, 0], sizes = [8, 384], strides = [1, 1]} : vector<8x512xf32> to vector<8x384xf32>
    %195 = arith.negf %194 : vector<8x384xf32>
    %196 = math.exp %195 : vector<8x384xf32>
    %cst_24 = arith.constant 1.000000e+00 : f32
    %197 = vector.broadcast %cst_24 : f32 to vector<8x384xf32>
    %198 = arith.addf %197, %196 : vector<8x384xf32>
    %199 = arith.divf %197, %198 : vector<8x384xf32>
    %200 = vector.extract_strided_slice %193 {offsets = [0, 0], sizes = [8, 384], strides = [1, 1]} : vector<8x512xf32> to vector<8x384xf32>
    %201 = arith.negf %200 : vector<8x384xf32>
    %202 = math.exp %201 : vector<8x384xf32>
    %cst_25 = arith.constant 1.000000e+00 : f32
    %203 = vector.broadcast %cst_25 : f32 to vector<8x384xf32>
    %204 = arith.addf %203, %202 : vector<8x384xf32>
    %205 = arith.divf %203, %204 : vector<8x384xf32>
    %206 = vector.extract_strided_slice %189 {offsets = [0, 384], sizes = [8, 128], strides = [1, 1]} : vector<8x512xf32> to vector<8x128xf32>
    %207 = math.tanh %206 : vector<8x128xf32>
    %208 = vector.extract_strided_slice %193 {offsets = [0, 384], sizes = [8, 128], strides = [1, 1]} : vector<8x512xf32> to vector<8x128xf32>
    %209 = math.tanh %208 : vector<8x128xf32>
    %210 = vector.extract_strided_slice %199 {offsets = [0, 128], sizes = [8, 128], strides = [1, 1]} : vector<8x384xf32> to vector<8x128xf32>
    %211 = arith.mulf %210, %171 : vector<8x128xf32>
    %212 = vector.extract_strided_slice %199 {offsets = [0, 0], sizes = [8, 128], strides = [1, 1]} : vector<8x384xf32> to vector<8x128xf32>
    %213 = arith.mulf %212, %207 : vector<8x128xf32>
    %214 = arith.addf %211, %213 : vector<8x128xf32>
    %215 = vector.extract_strided_slice %205 {offsets = [0, 128], sizes = [8, 128], strides = [1, 1]} : vector<8x384xf32> to vector<8x128xf32>
    %216 = arith.mulf %215, %176 : vector<8x128xf32>
    %217 = vector.extract_strided_slice %205 {offsets = [0, 0], sizes = [8, 128], strides = [1, 1]} : vector<8x384xf32> to vector<8x128xf32>
    %218 = arith.mulf %217, %209 : vector<8x128xf32>
    %219 = arith.addf %216, %218 : vector<8x128xf32>
    %220 = vector.extract_strided_slice %199 {offsets = [0, 256], sizes = [8, 128], strides = [1, 1]} : vector<8x384xf32> to vector<8x128xf32>
    %221 = math.tanh %214 : vector<8x128xf32>
    %222 = arith.mulf %220, %221 : vector<8x128xf32>
    %223 = vector.extract_strided_slice %205 {offsets = [0, 256], sizes = [8, 128], strides = [1, 1]} : vector<8x384xf32> to vector<8x128xf32>
    %224 = math.tanh %219 : vector<8x128xf32>
    %225 = arith.mulf %223, %224 : vector<8x128xf32>
    %226 = tpu.concatenate %222, %225 in 1 : vector<8x128xf32>, vector<8x128xf32> -> vector<8x256xf32>
    %227 = arith.truncf %226 : vector<8x256xf32> to vector<8x256xbf16>
    %cst_26 = arith.constant dense<0.000000e+00> : vector<8x1024xf32>
    %228 = tpu.matmul %227, %8, %cst_26 {dimension_numbers = #tpu.dot_dimension_numbers<[1], [0], [0], [1], [0, 0, 1, 1], [], []>} : vector<8x256xbf16>, vector<256x1024xbf16>, vector<8x1024xf32> -> vector<8x1024xf32>
    %229 = vector.extract_strided_slice %228 {offsets = [0, 0], sizes = [8, 512], strides = [1, 1]} : vector<8x1024xf32> to vector<8x512xf32>
    %230 = vector.extract_strided_slice %7 {offsets = [5, 0, 0], sizes = [1, 8, 512], strides = [1, 1, 1]} : vector<8x8x1024xf32> to vector<1x8x512xf32>
    %231 = vector.shape_cast %230 : vector<1x8x512xf32> to vector<8x512xf32>
    %232 = arith.addf %229, %231 : vector<8x512xf32>
    %233 = vector.extract_strided_slice %228 {offsets = [0, 512], sizes = [8, 512], strides = [1, 1]} : vector<8x1024xf32> to vector<8x512xf32>
    %234 = vector.extract_strided_slice %7 {offsets = [2, 0, 512], sizes = [1, 8, 512], strides = [1, 1, 1]} : vector<8x8x1024xf32> to vector<1x8x512xf32>
    %235 = vector.shape_cast %234 : vector<1x8x512xf32> to vector<8x512xf32>
    %236 = arith.addf %233, %235 : vector<8x512xf32>
    %237 = vector.extract_strided_slice %232 {offsets = [0, 0], sizes = [8, 384], strides = [1, 1]} : vector<8x512xf32> to vector<8x384xf32>
    %238 = arith.negf %237 : vector<8x384xf32>
    %239 = math.exp %238 : vector<8x384xf32>
    %cst_27 = arith.constant 1.000000e+00 : f32
    %240 = vector.broadcast %cst_27 : f32 to vector<8x384xf32>
    %241 = arith.addf %240, %239 : vector<8x384xf32>
    %242 = arith.divf %240, %241 : vector<8x384xf32>
    %243 = vector.extract_strided_slice %236 {offsets = [0, 0], sizes = [8, 384], strides = [1, 1]} : vector<8x512xf32> to vector<8x384xf32>
    %244 = arith.negf %243 : vector<8x384xf32>
    %245 = math.exp %244 : vector<8x384xf32>
    %cst_28 = arith.constant 1.000000e+00 : f32
    %246 = vector.broadcast %cst_28 : f32 to vector<8x384xf32>
    %247 = arith.addf %246, %245 : vector<8x384xf32>
    %248 = arith.divf %246, %247 : vector<8x384xf32>
    %249 = vector.extract_strided_slice %232 {offsets = [0, 384], sizes = [8, 128], strides = [1, 1]} : vector<8x512xf32> to vector<8x128xf32>
    %250 = math.tanh %249 : vector<8x128xf32>
    %251 = vector.extract_strided_slice %236 {offsets = [0, 384], sizes = [8, 128], strides = [1, 1]} : vector<8x512xf32> to vector<8x128xf32>
    %252 = math.tanh %251 : vector<8x128xf32>
    %253 = vector.extract_strided_slice %242 {offsets = [0, 128], sizes = [8, 128], strides = [1, 1]} : vector<8x384xf32> to vector<8x128xf32>
    %254 = arith.mulf %253, %214 : vector<8x128xf32>
    %255 = vector.extract_strided_slice %242 {offsets = [0, 0], sizes = [8, 128], strides = [1, 1]} : vector<8x384xf32> to vector<8x128xf32>
    %256 = arith.mulf %255, %250 : vector<8x128xf32>
    %257 = arith.addf %254, %256 : vector<8x128xf32>
    %258 = vector.extract_strided_slice %248 {offsets = [0, 128], sizes = [8, 128], strides = [1, 1]} : vector<8x384xf32> to vector<8x128xf32>
    %259 = arith.mulf %258, %219 : vector<8x128xf32>
    %260 = vector.extract_strided_slice %248 {offsets = [0, 0], sizes = [8, 128], strides = [1, 1]} : vector<8x384xf32> to vector<8x128xf32>
    %261 = arith.mulf %260, %252 : vector<8x128xf32>
    %262 = arith.addf %259, %261 : vector<8x128xf32>
    %263 = vector.extract_strided_slice %242 {offsets = [0, 256], sizes = [8, 128], strides = [1, 1]} : vector<8x384xf32> to vector<8x128xf32>
    %264 = math.tanh %257 : vector<8x128xf32>
    %265 = arith.mulf %263, %264 : vector<8x128xf32>
    %266 = vector.extract_strided_slice %248 {offsets = [0, 256], sizes = [8, 128], strides = [1, 1]} : vector<8x384xf32> to vector<8x128xf32>
    %267 = math.tanh %262 : vector<8x128xf32>
    %268 = arith.mulf %266, %267 : vector<8x128xf32>
    %269 = tpu.concatenate %265, %268 in 1 : vector<8x128xf32>, vector<8x128xf32> -> vector<8x256xf32>
    %270 = arith.truncf %269 : vector<8x256xf32> to vector<8x256xbf16>
    %cst_29 = arith.constant dense<0.000000e+00> : vector<8x1024xf32>
    %271 = tpu.matmul %270, %8, %cst_29 {dimension_numbers = #tpu.dot_dimension_numbers<[1], [0], [0], [1], [0, 0, 1, 1], [], []>} : vector<8x256xbf16>, vector<256x1024xbf16>, vector<8x1024xf32> -> vector<8x1024xf32>
    %272 = vector.extract_strided_slice %271 {offsets = [0, 0], sizes = [8, 512], strides = [1, 1]} : vector<8x1024xf32> to vector<8x512xf32>
    %273 = vector.extract_strided_slice %7 {offsets = [6, 0, 0], sizes = [1, 8, 512], strides = [1, 1, 1]} : vector<8x8x1024xf32> to vector<1x8x512xf32>
    %274 = vector.shape_cast %273 : vector<1x8x512xf32> to vector<8x512xf32>
    %275 = arith.addf %272, %274 : vector<8x512xf32>
    %276 = vector.extract_strided_slice %271 {offsets = [0, 512], sizes = [8, 512], strides = [1, 1]} : vector<8x1024xf32> to vector<8x512xf32>
    %277 = vector.extract_strided_slice %7 {offsets = [1, 0, 512], sizes = [1, 8, 512], strides = [1, 1, 1]} : vector<8x8x1024xf32> to vector<1x8x512xf32>
    %278 = vector.shape_cast %277 : vector<1x8x512xf32> to vector<8x512xf32>
    %279 = arith.addf %276, %278 : vector<8x512xf32>
    %280 = vector.extract_strided_slice %275 {offsets = [0, 0], sizes = [8, 384], strides = [1, 1]} : vector<8x512xf32> to vector<8x384xf32>
    %281 = arith.negf %280 : vector<8x384xf32>
    %282 = math.exp %281 : vector<8x384xf32>
    %cst_30 = arith.constant 1.000000e+00 : f32
    %283 = vector.broadcast %cst_30 : f32 to vector<8x384xf32>
    %284 = arith.addf %283, %282 : vector<8x384xf32>
    %285 = arith.divf %283, %284 : vector<8x384xf32>
    %286 = vector.extract_strided_slice %279 {offsets = [0, 0], sizes = [8, 384], strides = [1, 1]} : vector<8x512xf32> to vector<8x384xf32>
    %287 = arith.negf %286 : vector<8x384xf32>
    %288 = math.exp %287 : vector<8x384xf32>
    %cst_31 = arith.constant 1.000000e+00 : f32
    %289 = vector.broadcast %cst_31 : f32 to vector<8x384xf32>
    %290 = arith.addf %289, %288 : vector<8x384xf32>
    %291 = arith.divf %289, %290 : vector<8x384xf32>
    %292 = vector.extract_strided_slice %275 {offsets = [0, 384], sizes = [8, 128], strides = [1, 1]} : vector<8x512xf32> to vector<8x128xf32>
    %293 = math.tanh %292 : vector<8x128xf32>
    %294 = vector.extract_strided_slice %279 {offsets = [0, 384], sizes = [8, 128], strides = [1, 1]} : vector<8x512xf32> to vector<8x128xf32>
    %295 = math.tanh %294 : vector<8x128xf32>
    %296 = vector.extract_strided_slice %285 {offsets = [0, 128], sizes = [8, 128], strides = [1, 1]} : vector<8x384xf32> to vector<8x128xf32>
    %297 = arith.mulf %296, %257 : vector<8x128xf32>
    %298 = vector.extract_strided_slice %285 {offsets = [0, 0], sizes = [8, 128], strides = [1, 1]} : vector<8x384xf32> to vector<8x128xf32>
    %299 = arith.mulf %298, %293 : vector<8x128xf32>
    %300 = arith.addf %297, %299 : vector<8x128xf32>
    %301 = vector.extract_strided_slice %291 {offsets = [0, 128], sizes = [8, 128], strides = [1, 1]} : vector<8x384xf32> to vector<8x128xf32>
    %302 = arith.mulf %301, %262 : vector<8x128xf32>
    %303 = vector.extract_strided_slice %291 {offsets = [0, 0], sizes = [8, 128], strides = [1, 1]} : vector<8x384xf32> to vector<8x128xf32>
    %304 = arith.mulf %303, %295 : vector<8x128xf32>
    %305 = arith.addf %302, %304 : vector<8x128xf32>
    %306 = vector.extract_strided_slice %285 {offsets = [0, 256], sizes = [8, 128], strides = [1, 1]} : vector<8x384xf32> to vector<8x128xf32>
    %307 = math.tanh %300 : vector<8x128xf32>
    %308 = arith.mulf %306, %307 : vector<8x128xf32>
    %309 = vector.extract_strided_slice %291 {offsets = [0, 256], sizes = [8, 128], strides = [1, 1]} : vector<8x384xf32> to vector<8x128xf32>
    %310 = math.tanh %305 : vector<8x128xf32>
    %311 = arith.mulf %309, %310 : vector<8x128xf32>
    %312 = tpu.concatenate %308, %311 in 1 : vector<8x128xf32>, vector<8x128xf32> -> vector<8x256xf32>
    %313 = arith.truncf %312 : vector<8x256xf32> to vector<8x256xbf16>
    %cst_32 = arith.constant dense<0.000000e+00> : vector<8x1024xf32>
    %314 = tpu.matmul %313, %8, %cst_32 {dimension_numbers = #tpu.dot_dimension_numbers<[1], [0], [0], [1], [0, 0, 1, 1], [], []>} : vector<8x256xbf16>, vector<256x1024xbf16>, vector<8x1024xf32> -> vector<8x1024xf32>
    %315 = vector.extract_strided_slice %314 {offsets = [0, 0], sizes = [8, 512], strides = [1, 1]} : vector<8x1024xf32> to vector<8x512xf32>
    %316 = vector.extract_strided_slice %7 {offsets = [7, 0, 0], sizes = [1, 8, 512], strides = [1, 1, 1]} : vector<8x8x1024xf32> to vector<1x8x512xf32>
    %317 = vector.shape_cast %316 : vector<1x8x512xf32> to vector<8x512xf32>
    %318 = arith.addf %315, %317 : vector<8x512xf32>
    %319 = vector.extract_strided_slice %314 {offsets = [0, 512], sizes = [8, 512], strides = [1, 1]} : vector<8x1024xf32> to vector<8x512xf32>
    %320 = vector.extract_strided_slice %7 {offsets = [0, 0, 512], sizes = [1, 8, 512], strides = [1, 1, 1]} : vector<8x8x1024xf32> to vector<1x8x512xf32>
    %321 = vector.shape_cast %320 : vector<1x8x512xf32> to vector<8x512xf32>
    %322 = arith.addf %319, %321 : vector<8x512xf32>
    %323 = vector.extract_strided_slice %318 {offsets = [0, 0], sizes = [8, 384], strides = [1, 1]} : vector<8x512xf32> to vector<8x384xf32>
    %324 = arith.negf %323 : vector<8x384xf32>
    %325 = math.exp %324 : vector<8x384xf32>
    %cst_33 = arith.constant 1.000000e+00 : f32
    %326 = vector.broadcast %cst_33 : f32 to vector<8x384xf32>
    %327 = arith.addf %326, %325 : vector<8x384xf32>
    %328 = arith.divf %326, %327 : vector<8x384xf32>
    %329 = vector.extract_strided_slice %322 {offsets = [0, 0], sizes = [8, 384], strides = [1, 1]} : vector<8x512xf32> to vector<8x384xf32>
    %330 = arith.negf %329 : vector<8x384xf32>
    %331 = math.exp %330 : vector<8x384xf32>
    %cst_34 = arith.constant 1.000000e+00 : f32
    %332 = vector.broadcast %cst_34 : f32 to vector<8x384xf32>
    %333 = arith.addf %332, %331 : vector<8x384xf32>
    %334 = arith.divf %332, %333 : vector<8x384xf32>
    %335 = vector.extract_strided_slice %318 {offsets = [0, 384], sizes = [8, 128], strides = [1, 1]} : vector<8x512xf32> to vector<8x128xf32>
    %336 = math.tanh %335 : vector<8x128xf32>
    %337 = vector.extract_strided_slice %322 {offsets = [0, 384], sizes = [8, 128], strides = [1, 1]} : vector<8x512xf32> to vector<8x128xf32>
    %338 = math.tanh %337 : vector<8x128xf32>
    %339 = vector.extract_strided_slice %328 {offsets = [0, 128], sizes = [8, 128], strides = [1, 1]} : vector<8x384xf32> to vector<8x128xf32>
    %340 = arith.mulf %339, %300 : vector<8x128xf32>
    %341 = vector.extract_strided_slice %328 {offsets = [0, 0], sizes = [8, 128], strides = [1, 1]} : vector<8x384xf32> to vector<8x128xf32>
    %342 = arith.mulf %341, %336 : vector<8x128xf32>
    %343 = arith.addf %340, %342 : vector<8x128xf32>
    %344 = vector.extract_strided_slice %334 {offsets = [0, 128], sizes = [8, 128], strides = [1, 1]} : vector<8x384xf32> to vector<8x128xf32>
    %345 = arith.mulf %344, %305 : vector<8x128xf32>
    %346 = vector.extract_strided_slice %334 {offsets = [0, 0], sizes = [8, 128], strides = [1, 1]} : vector<8x384xf32> to vector<8x128xf32>
    %347 = arith.mulf %346, %338 : vector<8x128xf32>
    %348 = arith.addf %345, %347 : vector<8x128xf32>
    %349 = vector.extract_strided_slice %328 {offsets = [0, 256], sizes = [8, 128], strides = [1, 1]} : vector<8x384xf32> to vector<8x128xf32>
    %350 = math.tanh %343 : vector<8x128xf32>
    %351 = arith.mulf %349, %350 : vector<8x128xf32>
    %352 = vector.extract_strided_slice %334 {offsets = [0, 256], sizes = [8, 128], strides = [1, 1]} : vector<8x384xf32> to vector<8x128xf32>
    %353 = math.tanh %348 : vector<8x128xf32>
    %354 = arith.mulf %352, %353 : vector<8x128xf32>
    %355 = tpu.concatenate %351, %354 in 1 : vector<8x128xf32>, vector<8x128xf32> -> vector<8x256xf32>
    %356 = arith.truncf %355 : vector<8x256xf32> to vector<8x256xbf16>
    %c0_35 = arith.constant 0 : index
    %c0_36 = arith.constant 0 : index
    %357 = vector.load %arg6[%c0_35, %c0_36] : memref<256x128xbf16, #tpu.memory_space<vmem>>, vector<256x128xbf16>
    %cst_37 = arith.constant dense<0.000000e+00> : vector<8x128xf32>
    %358 = tpu.matmul %356, %357, %cst_37 {dimension_numbers = #tpu.dot_dimension_numbers<[1], [0], [0], [1], [0, 0, 1, 1], [], []>} : vector<8x256xbf16>, vector<256x128xbf16>, vector<8x128xf32> -> vector<8x128xf32>
    %c0_38 = arith.constant 0 : index
    %c0_39 = arith.constant 0 : index
    %359 = vector.load %arg7[%c0_38, %c0_39] : memref<1x128xf32, #tpu.memory_space<vmem>>, vector<1x128xf32>
    %360 = vector.broadcast %359 : vector<1x128xf32> to vector<8x128xf32>
    %361 = arith.addf %358, %360 : vector<8x128xf32>
    %c0_40 = arith.constant 0 : index
    %c0_41 = arith.constant 0 : index
    %c0_42 = arith.constant 0 : index
    %362 = vector.load %arg2[%c0_40, %c0_41, %c0_42] : memref<8x4x128xbf16, #tpu.memory_space<vmem>>, vector<8x4x128xbf16>
    %363 = vector.shape_cast %362 : vector<8x4x128xbf16> to vector<32x128xbf16>
    %c0_43 = arith.constant 0 : index
    %c0_44 = arith.constant 0 : index
    %364 = vector.load %arg8[%c0_43, %c0_44] : memref<128x128xbf16, #tpu.memory_space<vmem>>, vector<128x128xbf16>
    %cst_45 = arith.constant dense<0.000000e+00> : vector<32x128xf32>
    %365 = tpu.matmul %363, %364, %cst_45 {dimension_numbers = #tpu.dot_dimension_numbers<[1], [0], [0], [1], [0, 0, 1, 1], [], []>} : vector<32x128xbf16>, vector<128x128xbf16>, vector<32x128xf32> -> vector<32x128xf32>
    %c0_46 = arith.constant 0 : index
    %c0_47 = arith.constant 0 : index
    %366 = vector.load %arg9[%c0_46, %c0_47] : memref<1x128xf32, #tpu.memory_space<vmem>>, vector<1x128xf32>
    %367 = vector.broadcast %366 : vector<1x128xf32> to vector<32x128xf32>
    %368 = arith.addf %365, %367 : vector<32x128xf32>
    %369 = vector.shape_cast %368 : vector<32x128xf32> to vector<8x4x128xf32>
    %370 = vector.shape_cast %361 : vector<8x128xf32> to vector<8x1x128xf32>
    %371 = vector.broadcast %370 : vector<8x1x128xf32> to vector<8x4x128xf32>
    %372 = arith.mulf %371, %369 : vector<8x4x128xf32>
    %cst_48 = arith.constant dense<0.000000e+00> : vector<8x4xf32>
    %373 = vector.multi_reduction <add>, %372, %cst_48 [2] : vector<8x4x128xf32> to vector<8x4xf32>
    %374 = arith.mulf %361, %361 : vector<8x128xf32>
    %cst_49 = arith.constant dense<0.000000e+00> : vector<8xf32>
    %375 = vector.multi_reduction <add>, %374, %cst_49 [1] : vector<8x128xf32> to vector<8xf32>
    %376 = vector.shape_cast %375 : vector<8xf32> to vector<8x1xf32>
    %377 = math.sqrt %376 : vector<8x1xf32>
    %378 = arith.mulf %369, %369 : vector<8x4x128xf32>
    %cst_50 = arith.constant dense<0.000000e+00> : vector<8x4xf32>
    %379 = vector.multi_reduction <add>, %378, %cst_50 [2] : vector<8x4x128xf32> to vector<8x4xf32>
    %380 = math.sqrt %379 : vector<8x4xf32>
    %cst_51 = arith.constant 9.99999993E-9 : f32
    %381 = vector.broadcast %cst_51 : f32 to vector<8x1xf32>
    %382 = arith.maximumf %377, %381 : vector<8x1xf32>
    %cst_52 = arith.constant 9.99999993E-9 : f32
    %383 = vector.broadcast %cst_52 : f32 to vector<8x4xf32>
    %384 = arith.maximumf %380, %383 : vector<8x4xf32>
    %385 = vector.broadcast %382 : vector<8x1xf32> to vector<8x4xf32>
    %386 = arith.mulf %385, %384 : vector<8x4xf32>
    %387 = arith.divf %373, %386 : vector<8x4xf32>
    %c0_53 = arith.constant 0 : index
    %c0_54 = arith.constant 0 : index
    %388 = vector.load %arg10[%c0_53, %c0_54] : memref<8x4xf32, #tpu.memory_space<vmem>>, vector<8x4xf32>
    tpu.vector_store %arg10[%c0_53, %c0_54], %387 {strides = array<i32>} : memref<8x4xf32, #tpu.memory_space<vmem>>, vector<8x4xf32>,
    return
  }
  func.func @transform_0(%arg0: i32) -> (i32, i32, i32) {
    %c0_i32 = arith.constant 0 : i32
    %c0_i32_0 = arith.constant 0 : i32
    %c0_i32_1 = arith.constant 0 : i32
    return %c0_i32, %arg0, %c0_i32_0 : i32, i32, i32
  }
  func.func @transform_1(%arg0: i32) -> (i32, i32, i32) {
    %c0_i32 = arith.constant 0 : i32
    %c0_i32_0 = arith.constant 0 : i32
    %c0_i32_1 = arith.constant 0 : i32
    return %arg0, %c0_i32, %c0_i32_0 : i32, i32, i32
  }
  func.func @transform_2(%arg0: i32) -> (i32, i32) {
    %c0_i32 = arith.constant 0 : i32
    %c0_i32_0 = arith.constant 0 : i32
    %c0_i32_1 = arith.constant 0 : i32
    return %c0_i32, %c0_i32_0 : i32, i32
  }
  func.func @transform_3(%arg0: i32) -> (i32, i32) {
    %c0_i32 = arith.constant 0 : i32
    %c0_i32_0 = arith.constant 0 : i32
    %c0_i32_1 = arith.constant 0 : i32
    return %c0_i32, %c0_i32_0 : i32, i32
  }
  func.func @transform_4(%arg0: i32) -> (i32, i32) {
    %c0_i32 = arith.constant 0 : i32
    %c0_i32_0 = arith.constant 0 : i32
    %c0_i32_1 = arith.constant 0 : i32
    return %c0_i32, %c0_i32_0 : i32, i32
  }
  func.func @transform_5(%arg0: i32) -> (i32, i32) {
    %c0_i32 = arith.constant 0 : i32
    %c0_i32_0 = arith.constant 0 : i32
    %c0_i32_1 = arith.constant 0 : i32
    return %c0_i32, %c0_i32_0 : i32, i32
  }
  func.func @transform_6(%arg0: i32) -> (i32, i32) {
    %c0_i32 = arith.constant 0 : i32
    %c0_i32_0 = arith.constant 0 : i32
    %c0_i32_1 = arith.constant 0 : i32
    return %c0_i32, %c0_i32_0 : i32, i32
  }
  func.func @transform_7(%arg0: i32) -> (i32, i32) {
    %c0_i32 = arith.constant 0 : i32
    %c0_i32_0 = arith.constant 0 : i32
    %c0_i32_1 = arith.constant 0 : i32
    return %c0_i32, %c0_i32_0 : i32, i32
  }
  func.func @transform_8(%arg0: i32) -> (i32, i32) {
    %c0_i32 = arith.constant 0 : i32
    %c0_i32_0 = arith.constant 0 : i32
    %c0_i32_1 = arith.constant 0 : i32
    return %c0_i32, %c0_i32_0 : i32, i32
  }
  func.func @transform_9(%arg0: i32) -> (i32, i32) {
    %c0_i32 = arith.constant 0 : i32
    %c0_i32_0 = arith.constant 0 : i32
    return %arg0, %c0_i32 : i32, i32
  }
}

</mosaic_0001>

<llo_original>
// kernel: column_predictor_forward.1
$region0: #{column_predictor_forward.1}
  #allocation0 [shape = 'u32[]', space=smem, size = 0x4, offset = 0x4, fixed_abs, tag = 'smem constant byte address 0x4 - core index']
  #allocation1 [shape = 'u32[144,128]{1,0:T(1,128)}', space=vmem, size = 0x12000, scoped, tag = 'internal scratch']
  %s0 = inlined_call_operand.vmem [shape: bf16[8,8,128], index: 0, kind: input, shape index: {}]
  %s1 = inlined_call_operand.vmem [shape: bf16[8,4,128], index: 1, kind: input, shape index: {}]
  %s2 = inlined_call_operand.vmem [shape: bf16[128,1024], index: 2, kind: input, shape index: {}]
  %s3 = inlined_call_operand.vmem [shape: bf16[256,1024], index: 3, kind: input, shape index: {}]
  %s4 = inlined_call_operand.vmem [shape: f32[1,1024], index: 4, kind: input, shape index: {}]
  %s5 = inlined_call_operand.vmem [shape: bf16[256,128], index: 5, kind: input, shape index: {}]
  %s6 = inlined_call_operand.vmem [shape: f32[1,128], index: 6, kind: input, shape index: {}]
  %s7 = inlined_call_operand.vmem [shape: bf16[128,128], index: 7, kind: input, shape index: {}]
  %s8 = inlined_call_operand.vmem [shape: f32[1,128], index: 8, kind: input, shape index: {}]
  %s9 = inlined_call_operand.vmem [shape: f32[8,4], index: 9, kind: output, shape index: {}]
  %s10 = sld [smem:[#allocation0]]
  $region46: #{column_predictor_forward.1} parent=0
    _
  %s12 = ssub.s32 1, %s10
  %s13 = scalar_select 0, %s12, %s10
  // Predicated region
  $region2: #{column_predictor_forward.1} parent=0 // pred_check
    _
  $region3: #{column_predictor_forward.1} parent=0 // pred_check_branch
    %15 = sbr.rel (0) target = $region5
  $region4: #{column_predictor_forward.1} parent=0 // pred_region
    _
  $region5: #{column_predictor_forward.1} parent=0 // pred_fallthru
    _
  // Predicated region
  $region6: #{column_predictor_forward.1} parent=0 // pred_check
    _
  $region7: #{column_predictor_forward.1} parent=0 // pred_check_branch
    %17 = sbr.rel (0) target = $region9
  $region8: #{column_predictor_forward.1} parent=0 // pred_region
    _
  $region9: #{column_predictor_forward.1} parent=0 // pred_fallthru
    _
  // Predicated region
  $region10: #{column_predictor_forward.1} parent=0 // pred_check
    _
  $region11: #{column_predictor_forward.1} parent=0 // pred_check_branch
    %19 = sbr.rel (0) target = $region13
  $region12: #{column_predictor_forward.1} parent=0 // pred_region
    _
  $region13: #{column_predictor_forward.1} parent=0 // pred_fallthru
    _
  // Predicated region
  $region14: #{column_predictor_forward.1} parent=0 // pred_check
    _
  $region15: #{column_predictor_forward.1} parent=0 // pred_check_branch
    %21 = sbr.rel (0) target = $region17
  $region16: #{column_predictor_forward.1} parent=0 // pred_region
    _
  $region17: #{column_predictor_forward.1} parent=0 // pred_fallthru
    _
  // Predicated region
  $region18: #{column_predictor_forward.1} parent=0 // pred_check
    _
  $region19: #{column_predictor_forward.1} parent=0 // pred_check_branch
    %23 = sbr.rel (0) target = $region21
  $region20: #{column_predictor_forward.1} parent=0 // pred_region
    _
  $region21: #{column_predictor_forward.1} parent=0 // pred_fallthru
    _
  // Predicated region
  $region22: #{column_predictor_forward.1} parent=0 // pred_check
    _
  $region23: #{column_predictor_forward.1} parent=0 // pred_check_branch
    %25 = sbr.rel (0) target = $region25
  $region24: #{column_predictor_forward.1} parent=0 // pred_region
    _
  $region25: #{column_predictor_forward.1} parent=0 // pred_fallthru
    _
  // Predicated region
  $region26: #{column_predictor_forward.1} parent=0 // pred_check
    _
  $region27: #{column_predictor_forward.1} parent=0 // pred_check_branch
    %27 = sbr.rel (0) target = $region29
  $region28: #{column_predictor_forward.1} parent=0 // pred_region
    _
  $region29: #{column_predictor_forward.1} parent=0 // pred_fallthru
    _
  // Predicated region
  $region30: #{column_predictor_forward.1} parent=0 // pred_check
    _
  $region31: #{column_predictor_forward.1} parent=0 // pred_check_branch
    %29 = sbr.rel (0) target = $region33
  $region32: #{column_predictor_forward.1} parent=0 // pred_region
    _
  $region33: #{column_predictor_forward.1} parent=0 // pred_fallthru
    _
  // Predicated region
  $region34: #{column_predictor_forward.1} parent=0 // pred_check
    _
  $region35: #{column_predictor_forward.1} parent=0 // pred_check_branch
    %31 = sbr.rel (0) target = $region37
  $region36: #{column_predictor_forward.1} parent=0 // pred_region
    _
  $region37: #{column_predictor_forward.1} parent=0 // pred_fallthru
    _
  %v33 = vld [vmem:[%s0] sm:$0xf]
  %v34 = vld [vmem:[%s0 + $0x4] sm:$0xf]
  %v35 = vld [vmem:[%s0 + $0x8] sm:$0xf]
  %v36 = vld [vmem:[%s0 + $0xc] sm:$0xf]
  %v37 = vld [vmem:[%s0 + $0x10] sm:$0xf]
  %v38 = vld [vmem:[%s0 + $0x14] sm:$0xf]
  %v39 = vld [vmem:[%s0 + $0x18] sm:$0xf]
  %v40 = vld [vmem:[%s0 + $0x1c] sm:$0xf]
  %v41 = vld [vmem:[%s2] sm:$0xff]
  %v42 = vld [vmem:[%s2 + $0x8] sm:$0xff]
  %v43 = vld [vmem:[%s2 + $0x10] sm:$0xff]
  %v44 = vld [vmem:[%s2 + $0x18] sm:$0xff]
  %v45 = vld [vmem:[%s2 + $0x20] sm:$0xff]
  %v46 = vld [vmem:[%s2 + $0x28] sm:$0xff]
  %v47 = vld [vmem:[%s2 + $0x30] sm:$0xff]
  %v48 = vld [vmem:[%s2 + $0x38] sm:$0xff]
  %v49 = vld [vmem:[%s2 + $0x40] sm:$0xff]
  %v50 = vld [vmem:[%s2 + $0x48] sm:$0xff]
  %v51 = vld [vmem:[%s2 + $0x50] sm:$0xff]
  %v52 = vld [vmem:[%s2 + $0x58] sm:$0xff]
  %v53 = vld [vmem:[%s2 + $0x60] sm:$0xff]
  %v54 = vld [vmem:[%s2 + $0x68] sm:$0xff]
  %v55 = vld [vmem:[%s2 + $0x70] sm:$0xff]
  %v56 = vld [vmem:[%s2 + $0x78] sm:$0xff]
  %v57 = vld [vmem:[%s2 + $0x80] sm:$0xff]
  %v58 = vld [vmem:[%s2 + $0x88] sm:$0xff]
  %v59 = vld [vmem:[%s2 + $0x90] sm:$0xff]
  %v60 = vld [vmem:[%s2 + $0x98] sm:$0xff]
  %v61 = vld [vmem:[%s2 + $0xa0] sm:$0xff]
  %v62 = vld [vmem:[%s2 + $0xa8] sm:$0xff]
  %v63 = vld [vmem:[%s2 + $0xb0] sm:$0xff]
  %v64 = vld [vmem:[%s2 + $0xb8] sm:$0xff]
  %v65 = vld [vmem:[%s2 + $0xc0] sm:$0xff]
  %v66 = vld [vmem:[%s2 + $0xc8] sm:$0xff]
  %v67 = vld [vmem:[%s2 + $0xd0] sm:$0xff]
  %v68 = vld [vmem:[%s2 + $0xd8] sm:$0xff]
  %v69 = vld [vmem:[%s2 + $0xe0] sm:$0xff]
  %v70 = vld [vmem:[%s2 + $0xe8] sm:$0xff]
  %v71 = vld [vmem:[%s2 + $0xf0] sm:$0xff]
  %v72 = vld [vmem:[%s2 + $0xf8] sm:$0xff]
  %v73 = vld [vmem:[%s2 + $0x100] sm:$0xff]
  %v74 = vld [vmem:[%s2 + $0x108] sm:$0xff]
  %v75 = vld [vmem:[%s2 + $0x110] sm:$0xff]
  %v76 = vld [vmem:[%s2 + $0x118] sm:$0xff]
  %v77 = vld [vmem:[%s2 + $0x120] sm:$0xff]
  %v78 = vld [vmem:[%s2 + $0x128] sm:$0xff]
  %v79 = vld [vmem:[%s2 + $0x130] sm:$0xff]
  %v80 = vld [vmem:[%s2 + $0x138] sm:$0xff]
  %v81 = vld [vmem:[%s2 + $0x140] sm:$0xff]
  %v82 = vld [vmem:[%s2 + $0x148] sm:$0xff]
  %v83 = vld [vmem:[%s2 + $0x150] sm:$0xff]
  %v84 = vld [vmem:[%s2 + $0x158] sm:$0xff]
  %v85 = vld [vmem:[%s2 + $0x160] sm:$0xff]
  %v86 = vld [vmem:[%s2 + $0x168] sm:$0xff]
  %v87 = vld [vmem:[%s2 + $0x170] sm:$0xff]
  %v88 = vld [vmem:[%s2 + $0x178] sm:$0xff]
  %v89 = vld [vmem:[%s2 + $0x180] sm:$0xff]
  %v90 = vld [vmem:[%s2 + $0x188] sm:$0xff]
  %v91 = vld [vmem:[%s2 + $0x190] sm:$0xff]
  %v92 = vld [vmem:[%s2 + $0x198] sm:$0xff]
  %v93 = vld [vmem:[%s2 + $0x1a0] sm:$0xff]
  %v94 = vld [vmem:[%s2 + $0x1a8] sm:$0xff]
  %v95 = vld [vmem:[%s2 + $0x1b0] sm:$0xff]
  %v96 = vld [vmem:[%s2 + $0x1b8] sm:$0xff]
  %v97 = vld [vmem:[%s2 + $0x1c0] sm:$0xff]
  %v98 = vld [vmem:[%s2 + $0x1c8] sm:$0xff]
  %v99 = vld [vmem:[%s2 + $0x1d0] sm:$0xff]
  %v100 = vld [vmem:[%s2 + $0x1d8] sm:$0xff]
  %v101 = vld [vmem:[%s2 + $0x1e0] sm:$0xff]
  %v102 = vld [vmem:[%s2 + $0x1e8] sm:$0xff]
  %v103 = vld [vmem:[%s2 + $0x1f0] sm:$0xff]
  %v104 = vld [vmem:[%s2 + $0x1f8] sm:$0xff]
  %v105 = vld [vmem:[%s4] sm:$0xff]
  %v107 = vlaneseq
  %v108 = vshrl.u32 %v107, 7
  %v109 = vsub.s32 0, %v108
  %v110 = vrot.slane %v105, %v109
  %v111 = vlaneseq
  %v112 = vshrl.u32 %v111, 7
  %v113 = vsub.s32 1, %v112
  %v114 = vrot.slane %v105, %v113
  %v115 = vlaneseq
  %v116 = vshrl.u32 %v115, 7
  %v117 = vsub.s32 2, %v116
  %v118 = vrot.slane %v105, %v117
  %v119 = vlaneseq
  %v120 = vshrl.u32 %v119, 7
  %v121 = vsub.s32 3, %v120
  %v122 = vrot.slane %v105, %v121
  %v123 = vlaneseq
  %v124 = vshrl.u32 %v123, 7
  %v125 = vsub.s32 4, %v124
  %v126 = vrot.slane %v105, %v125
  %v127 = vlaneseq
  %v128 = vshrl.u32 %v127, 7
  %v129 = vsub.s32 5, %v128
  %v130 = vrot.slane %v105, %v129
  %v131 = vlaneseq
  %v132 = vshrl.u32 %v131, 7
  %v133 = vsub.s32 6, %v132
  %v134 = vrot.slane %v105, %v133
  %v135 = vlaneseq
  %v136 = vshrl.u32 %v135, 7
  %v137 = vsub.s32 7, %v136
  %v138 = vrot.slane %v105, %v137
  %v155 = vunpack.c.l.b16 %v33
  %v156 = vunpack.c.l.b16 %v34
  %v157 = vunpack.c.l.b16 %v35
  %v158 = vunpack.c.l.b16 %v36
  %v159 = vunpack.c.l.b16 %v37
  %v160 = vunpack.c.l.b16 %v38
  %v161 = vunpack.c.l.b16 %v39
  %v162 = vunpack.c.l.b16 %v40
  %v163 = vpack.c.b16 %v156, %v155
  %v164 = vpack.c.b16 %v158, %v157
  %v165 = vpack.c.b16 %v160, %v159
  %v166 = vpack.c.b16 %v162, %v161
  %v235 = vunpack.c.l.b16 %v41
  %v236 = vunpack.c.h.b16 %v41
  %v237 = vunpack.c.l.b16 %v42
  %v238 = vunpack.c.h.b16 %v42
  %v239 = vunpack.c.l.b16 %v43
  %v240 = vunpack.c.h.b16 %v43
  %v241 = vunpack.c.l.b16 %v44
  %v242 = vunpack.c.h.b16 %v44
  %v243 = vunpack.c.l.b16 %v45
  %v244 = vunpack.c.h.b16 %v45
  %v245 = vunpack.c.l.b16 %v46
  %v246 = vunpack.c.h.b16 %v46
  %v247 = vunpack.c.l.b16 %v47
  %v248 = vunpack.c.h.b16 %v47
  %v249 = vunpack.c.l.b16 %v48
  %v250 = vunpack.c.h.b16 %v48
  %v251 = vunpack.c.l.b16 %v49
  %v252 = vunpack.c.h.b16 %v49
  %v253 = vunpack.c.l.b16 %v50
  %v254 = vunpack.c.h.b16 %v50
  %v255 = vunpack.c.l.b16 %v51
  %v256 = vunpack.c.h.b16 %v51
  %v257 = vunpack.c.l.b16 %v52
  %v258 = vunpack.c.h.b16 %v52
  %v259 = vunpack.c.l.b16 %v53
  %v260 = vunpack.c.h.b16 %v53
  %v261 = vunpack.c.l.b16 %v54
  %v262 = vunpack.c.h.b16 %v54
  %v263 = vunpack.c.l.b16 %v55
  %v264 = vunpack.c.h.b16 %v55
  %v265 = vunpack.c.l.b16 %v56
  %v266 = vunpack.c.h.b16 %v56
  %v267 = vunpack.c.l.b16 %v57
  %v268 = vunpack.c.h.b16 %v57
  %v269 = vunpack.c.l.b16 %v58
  %v270 = vunpack.c.h.b16 %v58
  %v271 = vunpack.c.l.b16 %v59
  %v272 = vunpack.c.h.b16 %v59
  %v273 = vunpack.c.l.b16 %v60
  %v274 = vunpack.c.h.b16 %v60
  %v275 = vunpack.c.l.b16 %v61
  %v276 = vunpack.c.h.b16 %v61
  %v277 = vunpack.c.l.b16 %v62
  %v278 = vunpack.c.h.b16 %v62
  %v279 = vunpack.c.l.b16 %v63
  %v280 = vunpack.c.h.b16 %v63
  %v281 = vunpack.c.l.b16 %v64
  %v282 = vunpack.c.h.b16 %v64
  %v283 = vunpack.c.l.b16 %v65
  %v284 = vunpack.c.h.b16 %v65
  %v285 = vunpack.c.l.b16 %v66
  %v286 = vunpack.c.h.b16 %v66
  %v287 = vunpack.c.l.b16 %v67
  %v288 = vunpack.c.h.b16 %v67
  %v289 = vunpack.c.l.b16 %v68
  %v290 = vunpack.c.h.b16 %v68
  %v291 = vunpack.c.l.b16 %v69
  %v292 = vunpack.c.h.b16 %v69
  %v293 = vunpack.c.l.b16 %v70
  %v294 = vunpack.c.h.b16 %v70
  %v295 = vunpack.c.l.b16 %v71
  %v296 = vunpack.c.h.b16 %v71
  %v297 = vunpack.c.l.b16 %v72
  %v298 = vunpack.c.h.b16 %v72
  %v299 = vunpack.c.l.b16 %v73
  %v300 = vunpack.c.h.b16 %v73
  %v301 = vunpack.c.l.b16 %v74
  %v302 = vunpack.c.h.b16 %v74
  %v303 = vunpack.c.l.b16 %v75
  %v304 = vunpack.c.h.b16 %v75
  %v305 = vunpack.c.l.b16 %v76
  %v306 = vunpack.c.h.b16 %v76
  %v307 = vunpack.c.l.b16 %v77
  %v308 = vunpack.c.h.b16 %v77
  %v309 = vunpack.c.l.b16 %v78
  %v310 = vunpack.c.h.b16 %v78
  %v311 = vunpack.c.l.b16 %v79
  %v312 = vunpack.c.h.b16 %v79
  %v313 = vunpack.c.l.b16 %v80
  %v314 = vunpack.c.h.b16 %v80
  %v315 = vunpack.c.l.b16 %v81
  %v316 = vunpack.c.h.b16 %v81
  %v317 = vunpack.c.l.b16 %v82
  %v318 = vunpack.c.h.b16 %v82
  %v319 = vunpack.c.l.b16 %v83
  %v320 = vunpack.c.h.b16 %v83
  %v321 = vunpack.c.l.b16 %v84
  %v322 = vunpack.c.h.b16 %v84
  %v323 = vunpack.c.l.b16 %v85
  %v324 = vunpack.c.h.b16 %v85
  %v325 = vunpack.c.l.b16 %v86
  %v326 = vunpack.c.h.b16 %v86
  %v327 = vunpack.c.l.b16 %v87
  %v328 = vunpack.c.h.b16 %v87
  %v329 = vunpack.c.l.b16 %v88
  %v330 = vunpack.c.h.b16 %v88
  %v331 = vunpack.c.l.b16 %v89
  %v332 = vunpack.c.h.b16 %v89
  %v333 = vunpack.c.l.b16 %v90
  %v334 = vunpack.c.h.b16 %v90
  %v335 = vunpack.c.l.b16 %v91
  %v336 = vunpack.c.h.b16 %v91
  %v337 = vunpack.c.l.b16 %v92
  %v338 = vunpack.c.h.b16 %v92
  %v339 = vunpack.c.l.b16 %v93
  %v340 = vunpack.c.h.b16 %v93
  %v341 = vunpack.c.l.b16 %v94
  %v342 = vunpack.c.h.b16 %v94
  %v343 = vunpack.c.l.b16 %v95
  %v344 = vunpack.c.h.b16 %v95
  %v345 = vunpack.c.l.b16 %v96
  %v346 = vunpack.c.h.b16 %v96
  %v347 = vunpack.c.l.b16 %v97
  %v348 = vunpack.c.h.b16 %v97
  %v349 = vunpack.c.l.b16 %v98
  %v350 = vunpack.c.h.b16 %v98
  %v351 = vunpack.c.l.b16 %v99
  %v352 = vunpack.c.h.b16 %v99
  %v353 = vunpack.c.l.b16 %v100
  %v354 = vunpack.c.h.b16 %v100
  %v355 = vunpack.c.l.b16 %v101
  %v356 = vunpack.c.h.b16 %v101
  %v357 = vunpack.c.l.b16 %v102
  %v358 = vunpack.c.h.b16 %v102
  %v359 = vunpack.c.l.b16 %v103
  %v360 = vunpack.c.h.b16 %v103
  %v361 = vunpack.c.l.b16 %v104
  %v362 = vunpack.c.h.b16 %v104
  %v363 = vpack.c.b16 %v243, %v235
  %v364 = vpack.c.b16 %v244, %v236
  %v365 = vpack.c.b16 %v245, %v237
  %v366 = vpack.c.b16 %v246, %v238
  %v367 = vpack.c.b16 %v247, %v239
  %v368 = vpack.c.b16 %v248, %v240
  %v369 = vpack.c.b16 %v249, %v241
  %v370 = vpack.c.b16 %v250, %v242
  %v371 = vpack.c.b16 %v259, %v251
  %v372 = vpack.c.b16 %v260, %v252
  %v373 = vpack.c.b16 %v261, %v253
  %v374 = vpack.c.b16 %v262, %v254
  %v375 = vpack.c.b16 %v263, %v255
  %v376 = vpack.c.b16 %v264, %v256
  %v377 = vpack.c.b16 %v265, %v257
  %v378 = vpack.c.b16 %v266, %v258
  %v379 = vpack.c.b16 %v275, %v267
  %v380 = vpack.c.b16 %v276, %v268
  %v381 = vpack.c.b16 %v277, %v269
  %v382 = vpack.c.b16 %v278, %v270
  %v383 = vpack.c.b16 %v279, %v271
  %v384 = vpack.c.b16 %v280, %v272
  %v385 = vpack.c.b16 %v281, %v273
  %v386 = vpack.c.b16 %v282, %v274
  %v387 = vpack.c.b16 %v291, %v283
  %v388 = vpack.c.b16 %v292, %v284
  %v389 = vpack.c.b16 %v293, %v285
  %v390 = vpack.c.b16 %v294, %v286
  %v391 = vpack.c.b16 %v295, %v287
  %v392 = vpack.c.b16 %v296, %v288
  %v393 = vpack.c.b16 %v297, %v289
  %v394 = vpack.c.b16 %v298, %v290
  %v395 = vpack.c.b16 %v307, %v299
  %v396 = vpack.c.b16 %v308, %v300
  %v397 = vpack.c.b16 %v309, %v301
  %v398 = vpack.c.b16 %v310, %v302
  %v399 = vpack.c.b16 %v311, %v303
  %v400 = vpack.c.b16 %v312, %v304
  %v401 = vpack.c.b16 %v313, %v305
  %v402 = vpack.c.b16 %v314, %v306
  %v403 = vpack.c.b16 %v323, %v315
  %v404 = vpack.c.b16 %v324, %v316
  %v405 = vpack.c.b16 %v325, %v317
  %v406 = vpack.c.b16 %v326, %v318
  %v407 = vpack.c.b16 %v327, %v319
  %v408 = vpack.c.b16 %v328, %v320
  %v409 = vpack.c.b16 %v329, %v321
  %v410 = vpack.c.b16 %v330, %v322
  %v411 = vpack.c.b16 %v339, %v331
  %v412 = vpack.c.b16 %v340, %v332
  %v413 = vpack.c.b16 %v341, %v333
  %v414 = vpack.c.b16 %v342, %v334
  %v415 = vpack.c.b16 %v343, %v335
  %v416 = vpack.c.b16 %v344, %v336
  %v417 = vpack.c.b16 %v345, %v337
  %v418 = vpack.c.b16 %v346, %v338
  %v419 = vpack.c.b16 %v355, %v347
  %v420 = vpack.c.b16 %v356, %v348
  %v421 = vpack.c.b16 %v357, %v349
  %v422 = vpack.c.b16 %v358, %v350
  %v423 = vpack.c.b16 %v359, %v351
  %v424 = vpack.c.b16 %v360, %v352
  %v425 = vpack.c.b16 %v361, %v353
  %v426 = vpack.c.b16 %v362, %v354
  %491 = vmatprep.subr.bf16.mxu0 %v364
  %492 = vmatpush1.bf16.msra.mxu0 %v363
  %493 = vmatprep.subr.bf16.mxu0 %v372
  %494 = vmatpush1.bf16.msra.mxu0 %v371
  %495 = vmatprep.subr.bf16.mxu0 %v380
  %496 = vmatpush1.bf16.msra.mxu0 %v379
  %497 = vmatprep.subr.bf16.mxu0 %v388
  %498 = vmatpush1.bf16.msra.mxu0 %v387
  %499 = vmatprep.subr.bf16.mxu0 %v396
  %500 = vmatpush1.bf16.msra.mxu0 %v395
  %501 = vmatprep.subr.bf16.mxu0 %v404
  %502 = vmatpush1.bf16.msra.mxu0 %v403
  %503 = vmatprep.subr.bf16.mxu0 %v412
  %504 = vmatpush1.bf16.msra.mxu0 %v411
  %505 = vmatprep.subr.bf16.mxu0 %v420
  %506 = vmatpush1.bf16.msra.mxu0 %v419
  %507 = vmatprep.subr.bf16.mxu0 0
  %508 = vmatpush1.bf16.msra.mxu0 0
  %509 = vmatprep.subr.bf16.mxu0 0
  %510 = vmatpush1.bf16.msra.mxu0 0
  %511 = vmatprep.subr.bf16.mxu0 0
  %512 = vmatpush1.bf16.msra.mxu0 0
  %513 = vmatprep.subr.bf16.mxu0 0
  %514 = vmatpush1.bf16.msra.mxu0 0
  %515 = vmatprep.subr.bf16.mxu0 0
  %516 = vmatpush1.bf16.msra.mxu0 0
  %517 = vmatprep.subr.bf16.mxu0 0
  %518 = vmatpush1.bf16.msra.mxu0 0
  %519 = vmatprep.subr.bf16.mxu0 0
  %520 = vmatpush1.bf16.msra.mxu0 0
  %521 = vmatprep.subr.bf16.mxu0 0
  %522 = vmatpush1.bf16.msra.mxu0 0
  %523 = vmatprep.mubr.bf16.mxu0 0
  %524 = vmatmul.mubr.bf16.gmra.mrb[0].mxu0 %v163
  %v525 = vpop.f32.mrb[0].mxu0
  %v526 = vadd.f32 %v110, %v525
  %v527 = vpop.f32.mrb[0].mxu0
  %v528 = vadd.f32 %v114, %v527
  %v529 = vpop.f32.mrb[0].mxu0
  %v530 = vadd.f32 %v110, %v529
  %v531 = vpop.f32.mrb[0].mxu0
  %v532 = vadd.f32 %v114, %v531
  %533 = vmatprep.mubr.bf16.mxu0 0
  %534 = vmatmul.mubr.bf16.gmra.mrb[0].mxu0 %v164
  %v535 = vpop.f32.mrb[0].mxu0
  %v536 = vadd.f32 %v110, %v535
  %v537 = vpop.f32.mrb[0].mxu0
  %v538 = vadd.f32 %v114, %v537
  %v539 = vpop.f32.mrb[0].mxu0
  %v540 = vadd.f32 %v110, %v539
  %v541 = vpop.f32.mrb[0].mxu0
  %v542 = vadd.f32 %v114, %v541
  %543 = vmatprep.mubr.bf16.mxu0 0
  %544 = vmatmul.mubr.bf16.gmra.mrb[0].mxu0 %v165
  %v545 = vpop.f32.mrb[0].mxu0
  %v546 = vadd.f32 %v110, %v545
  %v547 = vpop.f32.mrb[0].mxu0
  %v548 = vadd.f32 %v114, %v547
  %v549 = vpop.f32.mrb[0].mxu0
  %v550 = vadd.f32 %v110, %v549
  %v551 = vpop.f32.mrb[0].mxu0
  %v552 = vadd.f32 %v114, %v551
  %553 = vmatprep.mubr.bf16.mxu0 0
  %554 = vmatmul.mubr.bf16.gmra.mrb[0].mxu0 %v166
  %v555 = vpop.f32.mrb[0].mxu0
  %v556 = vadd.f32 %v110, %v555
  %v557 = vpop.f32.mrb[0].mxu0
  %v558 = vadd.f32 %v114, %v557
  %v559 = vpop.f32.mrb[0].mxu0
  %v560 = vadd.f32 %v110, %v559
  %v561 = vpop.f32.mrb[0].mxu0
  %v562 = vadd.f32 %v114, %v561
  %563 = vdwg.mxu0
  %564 = vmatprep.subr.bf16.mxu0 %v366
  %565 = vmatpush1.bf16.msra.mxu0 %v365
  %566 = vmatprep.subr.bf16.mxu0 %v374
  %567 = vmatpush1.bf16.msra.mxu0 %v373
  %568 = vmatprep.subr.bf16.mxu0 %v382
  %569 = vmatpush1.bf16.msra.mxu0 %v381
  %570 = vmatprep.subr.bf16.mxu0 %v390
  %571 = vmatpush1.bf16.msra.mxu0 %v389
  %572 = vmatprep.subr.bf16.mxu0 %v398
  %573 = vmatpush1.bf16.msra.mxu0 %v397
  %574 = vmatprep.subr.bf16.mxu0 %v406
  %575 = vmatpush1.bf16.msra.mxu0 %v405
  %576 = vmatprep.subr.bf16.mxu0 %v414
  %577 = vmatpush1.bf16.msra.mxu0 %v413
  %578 = vmatprep.subr.bf16.mxu0 %v422
  %579 = vmatpush1.bf16.msra.mxu0 %v421
  %580 = vmatprep.subr.bf16.mxu0 0
  %581 = vmatpush1.bf16.msra.mxu0 0
  %582 = vmatprep.subr.bf16.mxu0 0
  %583 = vmatpush1.bf16.msra.mxu0 0
  %584 = vmatprep.subr.bf16.mxu0 0
  %585 = vmatpush1.bf16.msra.mxu0 0
  %586 = vmatprep.subr.bf16.mxu0 0
  %587 = vmatpush1.bf16.msra.mxu0 0
  %588 = vmatprep.subr.bf16.mxu0 0
  %589 = vmatpush1.bf16.msra.mxu0 0
  %590 = vmatprep.subr.bf16.mxu0 0
  %591 = vmatpush1.bf16.msra.mxu0 0
  %592 = vmatprep.subr.bf16.mxu0 0
  %593 = vmatpush1.bf16.msra.mxu0 0
  %594 = vmatprep.subr.bf16.mxu0 0
  %595 = vmatpush1.bf16.msra.mxu0 0
  %596 = vmatprep.mubr.bf16.mxu0 0
  %597 = vmatmul.mubr.bf16.gmra.mrb[0].mxu0 %v163
  %v598 = vpop.f32.mrb[0].mxu0
  %v599 = vadd.f32 %v118, %v598
  %v600 = vpop.f32.mrb[0].mxu0
  %v601 = vadd.f32 %v122, %v600
  %v602 = vpop.f32.mrb[0].mxu0
  %v603 = vadd.f32 %v118, %v602
  %v604 = vpop.f32.mrb[0].mxu0
  %v605 = vadd.f32 %v122, %v604
  %606 = vmatprep.mubr.bf16.mxu0 0
  %607 = vmatmul.mubr.bf16.gmra.mrb[0].mxu0 %v164
  %v608 = vpop.f32.mrb[0].mxu0
  %v609 = vadd.f32 %v118, %v608
  %v610 = vpop.f32.mrb[0].mxu0
  %v611 = vadd.f32 %v122, %v610
  %v612 = vpop.f32.mrb[0].mxu0
  %v613 = vadd.f32 %v118, %v612
  %v614 = vpop.f32.mrb[0].mxu0
  %v615 = vadd.f32 %v122, %v614
  %616 = vmatprep.mubr.bf16.mxu0 0
  %617 = vmatmul.mubr.bf16.gmra.mrb[0].mxu0 %v165
  %v618 = vpop.f32.mrb[0].mxu0
  %v619 = vadd.f32 %v118, %v618
  %v620 = vpop.f32.mrb[0].mxu0
  %v621 = vadd.f32 %v122, %v620
  %v622 = vpop.f32.mrb[0].mxu0
  %v623 = vadd.f32 %v118, %v622
  %v624 = vpop.f32.mrb[0].mxu0
  %v625 = vadd.f32 %v122, %v624
  %626 = vmatprep.mubr.bf16.mxu0 0
  %627 = vmatmul.mubr.bf16.gmra.mrb[0].mxu0 %v166
  %v628 = vpop.f32.mrb[0].mxu0
  %v629 = vadd.f32 %v118, %v628
  %v630 = vpop.f32.mrb[0].mxu0
  %v631 = vadd.f32 %v122, %v630
  %v632 = vpop.f32.mrb[0].mxu0
  %v633 = vadd.f32 %v118, %v632
  %v634 = vpop.f32.mrb[0].mxu0
  %v635 = vadd.f32 %v122, %v634
  %636 = vdwg.mxu0
  %637 = vmatprep.subr.bf16.mxu0 %v368
  %638 = vmatpush1.bf16.msra.mxu0 %v367
  %639 = vmatprep.subr.bf16.mxu0 %v376
  %640 = vmatpush1.bf16.msra.mxu0 %v375
  %641 = vmatprep.subr.bf16.mxu0 %v384
  %642 = vmatpush1.bf16.msra.mxu0 %v383
  %643 = vmatprep.subr.bf16.mxu0 %v392
  %644 = vmatpush1.bf16.msra.mxu0 %v391
  %645 = vmatprep.subr.bf16.mxu0 %v400
  %646 = vmatpush1.bf16.msra.mxu0 %v399
  %647 = vmatprep.subr.bf16.mxu0 %v408
  %648 = vmatpush1.bf16.msra.mxu0 %v407
  %649 = vmatprep.subr.bf16.mxu0 %v416
  %650 = vmatpush1.bf16.msra.mxu0 %v415
  %651 = vmatprep.subr.bf16.mxu0 %v424
  %652 = vmatpush1.bf16.msra.mxu0 %v423
  %653 = vmatprep.subr.bf16.mxu0 0
  %654 = vmatpush1.bf16.msra.mxu0 0
  %655 = vmatprep.subr.bf16.mxu0 0
  %656 = vmatpush1.bf16.msra.mxu0 0
  %657 = vmatprep.subr.bf16.mxu0 0
  %658 = vmatpush1.bf16.msra.mxu0 0
  %659 = vmatprep.subr.bf16.mxu0 0
  %660 = vmatpush1.bf16.msra.mxu0 0
  %661 = vmatprep.subr.bf16.mxu0 0
  %662 = vmatpush1.bf16.msra.mxu0 0
  %663 = vmatprep.subr.bf16.mxu0 0
  %664 = vmatpush1.bf16.msra.mxu0 0
  %665 = vmatprep.subr.bf16.mxu0 0
  %666 = vmatpush1.bf16.msra.mxu0 0
  %667 = vmatprep.subr.bf16.mxu0 0
  %668 = vmatpush1.bf16.msra.mxu0 0
  %669 = vmatprep.mubr.bf16.mxu0 0
  %670 = vmatmul.mubr.bf16.gmra.mrb[0].mxu0 %v163
  %v671 = vpop.f32.mrb[0].mxu0
  %v672 = vadd.f32 %v126, %v671
  %v673 = vpop.f32.mrb[0].mxu0
  %v674 = vadd.f32 %v130, %v673
  %v675 = vpop.f32.mrb[0].mxu0
  %v676 = vadd.f32 %v126, %v675
  %v677 = vpop.f32.mrb[0].mxu0
  %v678 = vadd.f32 %v130, %v677
  %679 = vmatprep.mubr.bf16.mxu0 0
  %680 = vmatmul.mubr.bf16.gmra.mrb[0].mxu0 %v164
  %v681 = vpop.f32.mrb[0].mxu0
  %v682 = vadd.f32 %v126, %v681
  %v683 = vpop.f32.mrb[0].mxu0
  %v684 = vadd.f32 %v130, %v683
  %v685 = vpop.f32.mrb[0].mxu0
  %v686 = vadd.f32 %v126, %v685
  %v687 = vpop.f32.mrb[0].mxu0
  %v688 = vadd.f32 %v130, %v687
  %689 = vmatprep.mubr.bf16.mxu0 0
  %690 = vmatmul.mubr.bf16.gmra.mrb[0].mxu0 %v165
  %v691 = vpop.f32.mrb[0].mxu0
  %v692 = vadd.f32 %v126, %v691
  %v693 = vpop.f32.mrb[0].mxu0
  %v694 = vadd.f32 %v130, %v693
  %v695 = vpop.f32.mrb[0].mxu0
  %v696 = vadd.f32 %v126, %v695
  %v697 = vpop.f32.mrb[0].mxu0
  %v698 = vadd.f32 %v130, %v697
  %699 = vmatprep.mubr.bf16.mxu0 0
  %700 = vmatmul.mubr.bf16.gmra.mrb[0].mxu0 %v166
  %v701 = vpop.f32.mrb[0].mxu0
  %v702 = vadd.f32 %v126, %v701
  %v703 = vpop.f32.mrb[0].mxu0
  %v704 = vadd.f32 %v130, %v703
  %v705 = vpop.f32.mrb[0].mxu0
  %v706 = vadd.f32 %v126, %v705
  %v707 = vpop.f32.mrb[0].mxu0
  %v708 = vadd.f32 %v130, %v707
  %709 = vdwg.mxu0
  %710 = vmatprep.subr.bf16.mxu0 %v370
  %711 = vmatpush1.bf16.msra.mxu0 %v369
  %712 = vmatprep.subr.bf16.mxu0 %v378
  %713 = vmatpush1.bf16.msra.mxu0 %v377
  %714 = vmatprep.subr.bf16.mxu0 %v386
  %715 = vmatpush1.bf16.msra.mxu0 %v385
  %716 = vmatprep.subr.bf16.mxu0 %v394
  %717 = vmatpush1.bf16.msra.mxu0 %v393
  %718 = vmatprep.subr.bf16.mxu0 %v402
  %719 = vmatpush1.bf16.msra.mxu0 %v401
  %720 = vmatprep.subr.bf16.mxu0 %v410
  %721 = vmatpush1.bf16.msra.mxu0 %v409
  %722 = vmatprep.subr.bf16.mxu0 %v418
  %723 = vmatpush1.bf16.msra.mxu0 %v417
  %724 = vmatprep.subr.bf16.mxu0 %v426
  %725 = vmatpush1.bf16.msra.mxu0 %v425
  %726 = vmatprep.subr.bf16.mxu0 0
  %727 = vmatpush1.bf16.msra.mxu0 0
  %728 = vmatprep.subr.bf16.mxu0 0
  %729 = vmatpush1.bf16.msra.mxu0 0
  %730 = vmatprep.subr.bf16.mxu0 0
  %731 = vmatpush1.bf16.msra.mxu0 0
  %732 = vmatprep.subr.bf16.mxu0 0
  %733 = vmatpush1.bf16.msra.mxu0 0
  %734 = vmatprep.subr.bf16.mxu0 0
  %735 = vmatpush1.bf16.msra.mxu0 0
  %736 = vmatprep.subr.bf16.mxu0 0
  %737 = vmatpush1.bf16.msra.mxu0 0
  %738 = vmatprep.subr.bf16.mxu0 0
  %739 = vmatpush1.bf16.msra.mxu0 0
  %740 = vmatprep.subr.bf16.mxu0 0
  %741 = vmatpush1.bf16.msra.mxu0 0
  %742 = vmatprep.mubr.bf16.mxu0 0
  %743 = vmatmul.mubr.bf16.gmra.mrb[0].mxu0 %v163
  %v744 = vpop.f32.mrb[0].mxu0
  %v745 = vadd.f32 %v134, %v744
  %v746 = vpop.f32.mrb[0].mxu0
  %v747 = vadd.f32 %v138, %v746
  %v748 = vpop.f32.mrb[0].mxu0
  %v749 = vadd.f32 %v134, %v748
  %v750 = vpop.f32.mrb[0].mxu0
  %v751 = vadd.f32 %v138, %v750
  %752 = vmatprep.mubr.bf16.mxu0 0
  %753 = vmatmul.mubr.bf16.gmra.mrb[0].mxu0 %v164
  %v754 = vpop.f32.mrb[0].mxu0
  %v755 = vadd.f32 %v134, %v754
  %v756 = vpop.f32.mrb[0].mxu0
  %v757 = vadd.f32 %v138, %v756
  %v758 = vpop.f32.mrb[0].mxu0
  %v759 = vadd.f32 %v134, %v758
  %v760 = vpop.f32.mrb[0].mxu0
  %v761 = vadd.f32 %v138, %v760
  %762 = vmatprep.mubr.bf16.mxu0 0
  %763 = vmatmul.mubr.bf16.gmra.mrb[0].mxu0 %v165
  %v764 = vpop.f32.mrb[0].mxu0
  %v765 = vadd.f32 %v134, %v764
  %v766 = vpop.f32.mrb[0].mxu0
  %v767 = vadd.f32 %v138, %v766
  %v768 = vpop.f32.mrb[0].mxu0
  %v769 = vadd.f32 %v134, %v768
  %v770 = vpop.f32.mrb[0].mxu0
  %v771 = vadd.f32 %v138, %v770
  %772 = vmatprep.mubr.bf16.mxu0 0
  %773 = vmatmul.mubr.bf16.gmra.mrb[0].mxu0 %v166
  %v774 = vpop.f32.mrb[0].mxu0
  %v775 = vadd.f32 %v134, %v774
  %v776 = vpop.f32.mrb[0].mxu0
  %v777 = vadd.f32 %v138, %v776
  %v778 = vpop.f32.mrb[0].mxu0
  %v779 = vadd.f32 %v134, %v778
  %v780 = vpop.f32.mrb[0].mxu0
  %v781 = vadd.f32 %v138, %v780
  %782 = vdwg.mxu0
  %v783 = vld [vmem:[%s3] sm:$0xff]
  %v784 = vld [vmem:[%s3 + $0x8] sm:$0xff]
  %v785 = vld [vmem:[%s3 + $0x10] sm:$0xff]
  %v786 = vld [vmem:[%s3 + $0x18] sm:$0xff]
  %v787 = vld [vmem:[%s3 + $0x20] sm:$0xff]
  %v788 = vld [vmem:[%s3 + $0x28] sm:$0xff]
  %v789 = vld [vmem:[%s3 + $0x30] sm:$0xff]
  %v790 = vld [vmem:[%s3 + $0x38] sm:$0xff]
  %v791 = vld [vmem:[%s3 + $0x40] sm:$0xff]
  %v792 = vld [vmem:[%s3 + $0x48] sm:$0xff]
  %v793 = vld [vmem:[%s3 + $0x50] sm:$0xff]
  %v794 = vld [vmem:[%s3 + $0x58] sm:$0xff]
  %v795 = vld [vmem:[%s3 + $0x60] sm:$0xff]
  %v796 = vld [vmem:[%s3 + $0x68] sm:$0xff]
  %v797 = vld [vmem:[%s3 + $0x70] sm:$0xff]
  %v798 = vld [vmem:[%s3 + $0x78] sm:$0xff]
  %v799 = vld [vmem:[%s3 + $0x80] sm:$0xff]
  %v800 = vld [vmem:[%s3 + $0x88] sm:$0xff]
  %v801 = vld [vmem:[%s3 + $0x90] sm:$0xff]
  %v802 = vld [vmem:[%s3 + $0x98] sm:$0xff]
  %v803 = vld [vmem:[%s3 + $0xa0] sm:$0xff]
  %v804 = vld [vmem:[%s3 + $0xa8] sm:$0xff]
  %v805 = vld [vmem:[%s3 + $0xb0] sm:$0xff]
  %v806 = vld [vmem:[%s3 + $0xb8] sm:$0xff]
  %v807 = vld [vmem:[%s3 + $0xc0] sm:$0xff]
  %v808 = vld [vmem:[%s3 + $0xc8] sm:$0xff]
  %v809 = vld [vmem:[%s3 + $0xd0] sm:$0xff]
  %v810 = vld [vmem:[%s3 + $0xd8] sm:$0xff]
  %v811 = vld [vmem:[%s3 + $0xe0] sm:$0xff]
  %v812 = vld [vmem:[%s3 + $0xe8] sm:$0xff]
  %v813 = vld [vmem:[%s3 + $0xf0] sm:$0xff]
  %v814 = vld [vmem:[%s3 + $0xf8] sm:$0xff]
  %v815 = vld [vmem:[%s3 + $0x100] sm:$0xff]
  %v816 = vld [vmem:[%s3 + $0x108] sm:$0xff]
  %v817 = vld [vmem:[%s3 + $0x110] sm:$0xff]
  %v818 = vld [vmem:[%s3 + $0x118] sm:$0xff]
  %v819 = vld [vmem:[%s3 + $0x120] sm:$0xff]
  %v820 = vld [vmem:[%s3 + $0x128] sm:$0xff]
  %v821 = vld [vmem:[%s3 + $0x130] sm:$0xff]
  %v822 = vld [vmem:[%s3 + $0x138] sm:$0xff]
  %v823 = vld [vmem:[%s3 + $0x140] sm:$0xff]
  %v824 = vld [vmem:[%s3 + $0x148] sm:$0xff]
  %v825 = vld [vmem:[%s3 + $0x150] sm:$0xff]
  %v826 = vld [vmem:[%s3 + $0x158] sm:$0xff]
  %v827 = vld [vmem:[%s3 + $0x160] sm:$0xff]
  %v828 = vld [vmem:[%s3 + $0x168] sm:$0xff]
  %v829 = vld [vmem:[%s3 + $0x170] sm:$0xff]
  %v830 = vld [vmem:[%s3 + $0x178] sm:$0xff]
  %v831 = vld [vmem:[%s3 + $0x180] sm:$0xff]
  %v832 = vld [vmem:[%s3 + $0x188] sm:$0xff]
  %v833 = vld [vmem:[%s3 + $0x190] sm:$0xff]
  %v834 = vld [vmem:[%s3 + $0x198] sm:$0xff]
  %v835 = vld [vmem:[%s3 + $0x1a0] sm:$0xff]
  %v836 = vld [vmem:[%s3 + $0x1a8] sm:$0xff]
  %v837 = vld [vmem:[%s3 + $0x1b0] sm:$0xff]
  %v838 = vld [vmem:[%s3 + $0x1b8] sm:$0xff]
  %v839 = vld [vmem:[%s3 + $0x1c0] sm:$0xff]
  %v840 = vld [vmem:[%s3 + $0x1c8] sm:$0xff]
  %v841 = vld [vmem:[%s3 + $0x1d0] sm:$0xff]
  %v842 = vld [vmem:[%s3 + $0x1d8] sm:$0xff]
  %v843 = vld [vmem:[%s3 + $0x1e0] sm:$0xff]
  %v844 = vld [vmem:[%s3 + $0x1e8] sm:$0xff]
  %v845 = vld [vmem:[%s3 + $0x1f0] sm:$0xff]
  %v846 = vld [vmem:[%s3 + $0x1f8] sm:$0xff]
  %v847 = vld [vmem:[%s3 + $0x200] sm:$0xff]
  %v848 = vld [vmem:[%s3 + $0x208] sm:$0xff]
  %v849 = vld [vmem:[%s3 + $0x210] sm:$0xff]
  %v850 = vld [vmem:[%s3 + $0x218] sm:$0xff]
  %v851 = vld [vmem:[%s3 + $0x220] sm:$0xff]
  %v852 = vld [vmem:[%s3 + $0x228] sm:$0xff]
  %v853 = vld [vmem:[%s3 + $0x230] sm:$0xff]
  %v854 = vld [vmem:[%s3 + $0x238] sm:$0xff]
  %v855 = vld [vmem:[%s3 + $0x240] sm:$0xff]
  %v856 = vld [vmem:[%s3 + $0x248] sm:$0xff]
  %v857 = vld [vmem:[%s3 + $0x250] sm:$0xff]
  %v858 = vld [vmem:[%s3 + $0x258] sm:$0xff]
  %v859 = vld [vmem:[%s3 + $0x260] sm:$0xff]
  %v860 = vld [vmem:[%s3 + $0x268] sm:$0xff]
  %v861 = vld [vmem:[%s3 + $0x270] sm:$0xff]
  %v862 = vld [vmem:[%s3 + $0x278] sm:$0xff]
  %v863 = vld [vmem:[%s3 + $0x280] sm:$0xff]
  %v864 = vld [vmem:[%s3 + $0x288] sm:$0xff]
  %v865 = vld [vmem:[%s3 + $0x290] sm:$0xff]
  %v866 = vld [vmem:[%s3 + $0x298] sm:$0xff]
  %v867 = vld [vmem:[%s3 + $0x2a0] sm:$0xff]
  %v868 = vld [vmem:[%s3 + $0x2a8] sm:$0xff]
  %v869 = vld [vmem:[%s3 + $0x2b0] sm:$0xff]
  %v870 = vld [vmem:[%s3 + $0x2b8] sm:$0xff]
  %v871 = vld [vmem:[%s3 + $0x2c0] sm:$0xff]
  %v872 = vld [vmem:[%s3 + $0x2c8] sm:$0xff]
  %v873 = vld [vmem:[%s3 + $0x2d0] sm:$0xff]
  %v874 = vld [vmem:[%s3 + $0x2d8] sm:$0xff]
  %v875 = vld [vmem:[%s3 + $0x2e0] sm:$0xff]
  %v876 = vld [vmem:[%s3 + $0x2e8] sm:$0xff]
  %v877 = vld [vmem:[%s3 + $0x2f0] sm:$0xff]
  %v878 = vld [vmem:[%s3 + $0x2f8] sm:$0xff]
  %v879 = vld [vmem:[%s3 + $0x300] sm:$0xff]
  %v880 = vld [vmem:[%s3 + $0x308] sm:$0xff]
  %v881 = vld [vmem:[%s3 + $0x310] sm:$0xff]
  %v882 = vld [vmem:[%s3 + $0x318] sm:$0xff]
  %v883 = vld [vmem:[%s3 + $0x320] sm:$0xff]
  %v884 = vld [vmem:[%s3 + $0x328] sm:$0xff]
  %v885 = vld [vmem:[%s3 + $0x330] sm:$0xff]
  %v886 = vld [vmem:[%s3 + $0x338] sm:$0xff]
  %v887 = vld [vmem:[%s3 + $0x340] sm:$0xff]
  %v888 = vld [vmem:[%s3 + $0x348] sm:$0xff]
  %v889 = vld [vmem:[%s3 + $0x350] sm:$0xff]
  %v890 = vld [vmem:[%s3 + $0x358] sm:$0xff]
  %v891 = vld [vmem:[%s3 + $0x360] sm:$0xff]
  %v892 = vld [vmem:[%s3 + $0x368] sm:$0xff]
  %v893 = vld [vmem:[%s3 + $0x370] sm:$0xff]
  %v894 = vld [vmem:[%s3 + $0x378] sm:$0xff]
  %v895 = vld [vmem:[%s3 + $0x380] sm:$0xff]
  %v896 = vld [vmem:[%s3 + $0x388] sm:$0xff]
  %v897 = vld [vmem:[%s3 + $0x390] sm:$0xff]
  %v898 = vld [vmem:[%s3 + $0x398] sm:$0xff]
  %v899 = vld [vmem:[%s3 + $0x3a0] sm:$0xff]
  %v900 = vld [vmem:[%s3 + $0x3a8] sm:$0xff]
  %v901 = vld [vmem:[%s3 + $0x3b0] sm:$0xff]
  %v902 = vld [vmem:[%s3 + $0x3b8] sm:$0xff]
  %v903 = vld [vmem:[%s3 + $0x3c0] sm:$0xff]
  %v904 = vld [vmem:[%s3 + $0x3c8] sm:$0xff]
  %v905 = vld [vmem:[%s3 + $0x3d0] sm:$0xff]
  %v906 = vld [vmem:[%s3 + $0x3d8] sm:$0xff]
  %v907 = vld [vmem:[%s3 + $0x3e0] sm:$0xff]
  %v908 = vld [vmem:[%s3 + $0x3e8] sm:$0xff]
  %v909 = vld [vmem:[%s3 + $0x3f0] sm:$0xff]
  %v910 = vld [vmem:[%s3 + $0x3f8] sm:$0xff]
  %v1039 = vunpack.c.l.b16 %v783
  %v1040 = vunpack.c.h.b16 %v783
  %v1041 = vunpack.c.l.b16 %v784
  %v1042 = vunpack.c.h.b16 %v784
  %v1043 = vunpack.c.l.b16 %v785
  %v1044 = vunpack.c.h.b16 %v785
  %v1045 = vunpack.c.l.b16 %v786
  %v1046 = vunpack.c.h.b16 %v786
  %v1047 = vunpack.c.l.b16 %v787
  %v1048 = vunpack.c.h.b16 %v787
  %v1049 = vunpack.c.l.b16 %v788
  %v1050 = vunpack.c.h.b16 %v788
  %v1051 = vunpack.c.l.b16 %v789
  %v1052 = vunpack.c.h.b16 %v789
  %v1053 = vunpack.c.l.b16 %v790
  %v1054 = vunpack.c.h.b16 %v790
  %v1055 = vunpack.c.l.b16 %v791
  %v1056 = vunpack.c.h.b16 %v791
  %v1057 = vunpack.c.l.b16 %v792
  %v1058 = vunpack.c.h.b16 %v792
  %v1059 = vunpack.c.l.b16 %v793
  %v1060 = vunpack.c.h.b16 %v793
  %v1061 = vunpack.c.l.b16 %v794
  %v1062 = vunpack.c.h.b16 %v794
  %v1063 = vunpack.c.l.b16 %v795
  %v1064 = vunpack.c.h.b16 %v795
  %v1065 = vunpack.c.l.b16 %v796
  %v1066 = vunpack.c.h.b16 %v796
  %v1067 = vunpack.c.l.b16 %v797
  %v1068 = vunpack.c.h.b16 %v797
  %v1069 = vunpack.c.l.b16 %v798
  %v1070 = vunpack.c.h.b16 %v798
  %v1071 = vunpack.c.l.b16 %v799
  %v1072 = vunpack.c.h.b16 %v799
  %v1073 = vunpack.c.l.b16 %v800
  %v1074 = vunpack.c.h.b16 %v800
  %v1075 = vunpack.c.l.b16 %v801
  %v1076 = vunpack.c.h.b16 %v801
  %v1077 = vunpack.c.l.b16 %v802
  %v1078 = vunpack.c.h.b16 %v802
  %v1079 = vunpack.c.l.b16 %v803
  %v1080 = vunpack.c.h.b16 %v803
  %v1081 = vunpack.c.l.b16 %v804
  %v1082 = vunpack.c.h.b16 %v804
  %v1083 = vunpack.c.l.b16 %v805
  %v1084 = vunpack.c.h.b16 %v805
  %v1085 = vunpack.c.l.b16 %v806
  %v1086 = vunpack.c.h.b16 %v806
  %v1087 = vunpack.c.l.b16 %v807
  %v1088 = vunpack.c.h.b16 %v807
  %v1089 = vunpack.c.l.b16 %v808
  %v1090 = vunpack.c.h.b16 %v808
  %v1091 = vunpack.c.l.b16 %v809
  %v1092 = vunpack.c.h.b16 %v809
  %v1093 = vunpack.c.l.b16 %v810
  %v1094 = vunpack.c.h.b16 %v810
  %v1095 = vunpack.c.l.b16 %v811
  %v1096 = vunpack.c.h.b16 %v811
  %v1097 = vunpack.c.l.b16 %v812
  %v1098 = vunpack.c.h.b16 %v812
  %v1099 = vunpack.c.l.b16 %v813
  %v1100 = vunpack.c.h.b16 %v813
  %v1101 = vunpack.c.l.b16 %v814
  %v1102 = vunpack.c.h.b16 %v814
  %v1103 = vunpack.c.l.b16 %v815
  %v1104 = vunpack.c.h.b16 %v815
  %v1105 = vunpack.c.l.b16 %v816
  %v1106 = vunpack.c.h.b16 %v816
  %v1107 = vunpack.c.l.b16 %v817
  %v1108 = vunpack.c.h.b16 %v817
  %v1109 = vunpack.c.l.b16 %v818
  %v1110 = vunpack.c.h.b16 %v818
  %v1111 = vunpack.c.l.b16 %v819
  %v1112 = vunpack.c.h.b16 %v819
  %v1113 = vunpack.c.l.b16 %v820
  %v1114 = vunpack.c.h.b16 %v820
  %v1115 = vunpack.c.l.b16 %v821
  %v1116 = vunpack.c.h.b16 %v821
  %v1117 = vunpack.c.l.b16 %v822
  %v1118 = vunpack.c.h.b16 %v822
  %v1119 = vunpack.c.l.b16 %v823
  %v1120 = vunpack.c.h.b16 %v823
  %v1121 = vunpack.c.l.b16 %v824
  %v1122 = vunpack.c.h.b16 %v824
  %v1123 = vunpack.c.l.b16 %v825
  %v1124 = vunpack.c.h.b16 %v825
  %v1125 = vunpack.c.l.b16 %v826
  %v1126 = vunpack.c.h.b16 %v826
  %v1127 = vunpack.c.l.b16 %v827
  %v1128 = vunpack.c.h.b16 %v827
  %v1129 = vunpack.c.l.b16 %v828
  %v1130 = vunpack.c.h.b16 %v828
  %v1131 = vunpack.c.l.b16 %v829
  %v1132 = vunpack.c.h.b16 %v829
  %v1133 = vunpack.c.l.b16 %v830
  %v1134 = vunpack.c.h.b16 %v830
  %v1135 = vunpack.c.l.b16 %v831
  %v1136 = vunpack.c.h.b16 %v831
  %v1137 = vunpack.c.l.b16 %v832
  %v1138 = vunpack.c.h.b16 %v832
  %v1139 = vunpack.c.l.b16 %v833
  %v1140 = vunpack.c.h.b16 %v833
  %v1141 = vunpack.c.l.b16 %v834
  %v1142 = vunpack.c.h.b16 %v834
  %v1143 = vunpack.c.l.b16 %v835
  %v1144 = vunpack.c.h.b16 %v835
  %v1145 = vunpack.c.l.b16 %v836
  %v1146 = vunpack.c.h.b16 %v836
  %v1147 = vunpack.c.l.b16 %v837
  %v1148 = vunpack.c.h.b16 %v837
  %v1149 = vunpack.c.l.b16 %v838
  %v1150 = vunpack.c.h.b16 %v838
  %v1151 = vunpack.c.l.b16 %v839
  %v1152 = vunpack.c.h.b16 %v839
  %v1153 = vunpack.c.l.b16 %v840
  %v1154 = vunpack.c.h.b16 %v840
  %v1155 = vunpack.c.l.b16 %v841
  %v1156 = vunpack.c.h.b16 %v841
  %v1157 = vunpack.c.l.b16 %v842
  %v1158 = vunpack.c.h.b16 %v842
  %v1159 = vunpack.c.l.b16 %v843
  %v1160 = vunpack.c.h.b16 %v843
  %v1161 = vunpack.c.l.b16 %v844
  %v1162 = vunpack.c.h.b16 %v844
  %v1163 = vunpack.c.l.b16 %v845
  %v1164 = vunpack.c.h.b16 %v845
  %v1165 = vunpack.c.l.b16 %v846
  %v1166 = vunpack.c.h.b16 %v846
  %v1167 = vunpack.c.l.b16 %v847
  %v1168 = vunpack.c.h.b16 %v847
  %v1169 = vunpack.c.l.b16 %v848
  %v1170 = vunpack.c.h.b16 %v848
  %v1171 = vunpack.c.l.b16 %v849
  %v1172 = vunpack.c.h.b16 %v849
  %v1173 = vunpack.c.l.b16 %v850
  %v1174 = vunpack.c.h.b16 %v850
  %v1175 = vunpack.c.l.b16 %v851
  %v1176 = vunpack.c.h.b16 %v851
  %v1177 = vunpack.c.l.b16 %v852
  %v1178 = vunpack.c.h.b16 %v852
  %v1179 = vunpack.c.l.b16 %v853
  %v1180 = vunpack.c.h.b16 %v853
  %v1181 = vunpack.c.l.b16 %v854
  %v1182 = vunpack.c.h.b16 %v854
  %v1183 = vunpack.c.l.b16 %v855
  %v1184 = vunpack.c.h.b16 %v855
  %v1185 = vunpack.c.l.b16 %v856
  %v1186 = vunpack.c.h.b16 %v856
  %v1187 = vunpack.c.l.b16 %v857
  %v1188 = vunpack.c.h.b16 %v857
  %v1189 = vunpack.c.l.b16 %v858
  %v1190 = vunpack.c.h.b16 %v858
  %v1191 = vunpack.c.l.b16 %v859
  %v1192 = vunpack.c.h.b16 %v859
  %v1193 = vunpack.c.l.b16 %v860
  %v1194 = vunpack.c.h.b16 %v860
  %v1195 = vunpack.c.l.b16 %v861
  %v1196 = vunpack.c.h.b16 %v861
  %v1197 = vunpack.c.l.b16 %v862
  %v1198 = vunpack.c.h.b16 %v862
  %v1199 = vunpack.c.l.b16 %v863
  %v1200 = vunpack.c.h.b16 %v863
  %v1201 = vunpack.c.l.b16 %v864
  %v1202 = vunpack.c.h.b16 %v864
  %v1203 = vunpack.c.l.b16 %v865
  %v1204 = vunpack.c.h.b16 %v865
  %v1205 = vunpack.c.l.b16 %v866
  %v1206 = vunpack.c.h.b16 %v866
  %v1207 = vunpack.c.l.b16 %v867
  %v1208 = vunpack.c.h.b16 %v867
  %v1209 = vunpack.c.l.b16 %v868
  %v1210 = vunpack.c.h.b16 %v868
  %v1211 = vunpack.c.l.b16 %v869
  %v1212 = vunpack.c.h.b16 %v869
  %v1213 = vunpack.c.l.b16 %v870
  %v1214 = vunpack.c.h.b16 %v870
  %v1215 = vunpack.c.l.b16 %v871
  %v1216 = vunpack.c.h.b16 %v871
  %v1217 = vunpack.c.l.b16 %v872
  %v1218 = vunpack.c.h.b16 %v872
  %v1219 = vunpack.c.l.b16 %v873
  %v1220 = vunpack.c.h.b16 %v873
  %v1221 = vunpack.c.l.b16 %v874
  %v1222 = vunpack.c.h.b16 %v874
  %v1223 = vunpack.c.l.b16 %v875
  %v1224 = vunpack.c.h.b16 %v875
  %v1225 = vunpack.c.l.b16 %v876
  %v1226 = vunpack.c.h.b16 %v876
  %v1227 = vunpack.c.l.b16 %v877
  %v1228 = vunpack.c.h.b16 %v877
  %v1229 = vunpack.c.l.b16 %v878
  %v1230 = vunpack.c.h.b16 %v878
  %v1231 = vunpack.c.l.b16 %v879
  %v1232 = vunpack.c.h.b16 %v879
  %v1233 = vunpack.c.l.b16 %v880
  %v1234 = vunpack.c.h.b16 %v880
  %v1235 = vunpack.c.l.b16 %v881
  %v1236 = vunpack.c.h.b16 %v881
  %v1237 = vunpack.c.l.b16 %v882
  %v1238 = vunpack.c.h.b16 %v882
  %v1239 = vunpack.c.l.b16 %v883
  %v1240 = vunpack.c.h.b16 %v883
  %v1241 = vunpack.c.l.b16 %v884
  %v1242 = vunpack.c.h.b16 %v884
  %v1243 = vunpack.c.l.b16 %v885
  %v1244 = vunpack.c.h.b16 %v885
  %v1245 = vunpack.c.l.b16 %v886
  %v1246 = vunpack.c.h.b16 %v886
  %v1247 = vunpack.c.l.b16 %v887
  %v1248 = vunpack.c.h.b16 %v887
  %v1249 = vunpack.c.l.b16 %v888
  %v1250 = vunpack.c.h.b16 %v888
  %v1251 = vunpack.c.l.b16 %v889
  %v1252 = vunpack.c.h.b16 %v889
  %v1253 = vunpack.c.l.b16 %v890
  %v1254 = vunpack.c.h.b16 %v890
  %v1255 = vunpack.c.l.b16 %v891
  %v1256 = vunpack.c.h.b16 %v891
  %v1257 = vunpack.c.l.b16 %v892
  %v1258 = vunpack.c.h.b16 %v892
  %v1259 = vunpack.c.l.b16 %v893
  %v1260 = vunpack.c.h.b16 %v893
  %v1261 = vunpack.c.l.b16 %v894
  %v1262 = vunpack.c.h.b16 %v894
  %v1263 = vunpack.c.l.b16 %v895
  %v1264 = vunpack.c.h.b16 %v895
  %v1265 = vunpack.c.l.b16 %v896
  %v1266 = vunpack.c.h.b16 %v896
  %v1267 = vunpack.c.l.b16 %v897
  %v1268 = vunpack.c.h.b16 %v897
  %v1269 = vunpack.c.l.b16 %v898
  %v1270 = vunpack.c.h.b16 %v898
  %v1271 = vunpack.c.l.b16 %v899
  %v1272 = vunpack.c.h.b16 %v899
  %v1273 = vunpack.c.l.b16 %v900
  %v1274 = vunpack.c.h.b16 %v900
  %v1275 = vunpack.c.l.b16 %v901
  %v1276 = vunpack.c.h.b16 %v901
  %v1277 = vunpack.c.l.b16 %v902
  %v1278 = vunpack.c.h.b16 %v902
  %v1279 = vunpack.c.l.b16 %v903
  %v1280 = vunpack.c.h.b16 %v903
  %v1281 = vunpack.c.l.b16 %v904
  %v1282 = vunpack.c.h.b16 %v904
  %v1283 = vunpack.c.l.b16 %v905
  %v1284 = vunpack.c.h.b16 %v905
  %v1285 = vunpack.c.l.b16 %v906
  %v1286 = vunpack.c.h.b16 %v906
  %v1287 = vunpack.c.l.b16 %v907
  %v1288 = vunpack.c.h.b16 %v907
  %v1289 = vunpack.c.l.b16 %v908
  %v1290 = vunpack.c.h.b16 %v908
  %v1291 = vunpack.c.l.b16 %v909
  %v1292 = vunpack.c.h.b16 %v909
  %v1293 = vunpack.c.l.b16 %v910
  %v1294 = vunpack.c.h.b16 %v910
  %v1295 = vpack.c.b16 %v1047, %v1039
  %v1296 = vpack.c.b16 %v1048, %v1040
  %v1297 = vpack.c.b16 %v1049, %v1041
  %v1298 = vpack.c.b16 %v1050, %v1042
  %v1299 = vpack.c.b16 %v1051, %v1043
  %v1300 = vpack.c.b16 %v1052, %v1044
  %v1301 = vpack.c.b16 %v1053, %v1045
  %v1302 = vpack.c.b16 %v1054, %v1046
  %v1303 = vpack.c.b16 %v1063, %v1055
  %v1304 = vpack.c.b16 %v1064, %v1056
  %v1305 = vpack.c.b16 %v1065, %v1057
  %v1306 = vpack.c.b16 %v1066, %v1058
  %v1307 = vpack.c.b16 %v1067, %v1059
  %v1308 = vpack.c.b16 %v1068, %v1060
  %v1309 = vpack.c.b16 %v1069, %v1061
  %v1310 = vpack.c.b16 %v1070, %v1062
  %v1311 = vpack.c.b16 %v1079, %v1071
  %v1312 = vpack.c.b16 %v1080, %v1072
  %v1313 = vpack.c.b16 %v1081, %v1073
  %v1314 = vpack.c.b16 %v1082, %v1074
  %v1315 = vpack.c.b16 %v1083, %v1075
  %v1316 = vpack.c.b16 %v1084, %v1076
  %v1317 = vpack.c.b16 %v1085, %v1077
  %v1318 = vpack.c.b16 %v1086, %v1078
  %v1319 = vpack.c.b16 %v1095, %v1087
  %v1320 = vpack.c.b16 %v1096, %v1088
  %v1321 = vpack.c.b16 %v1097, %v1089
  %v1322 = vpack.c.b16 %v1098, %v1090
  %v1323 = vpack.c.b16 %v1099, %v1091
  %v1324 = vpack.c.b16 %v1100, %v1092
  %v1325 = vpack.c.b16 %v1101, %v1093
  %v1326 = vpack.c.b16 %v1102, %v1094
  %v1327 = vpack.c.b16 %v1111, %v1103
  %v1328 = vpack.c.b16 %v1112, %v1104
  %v1329 = vpack.c.b16 %v1113, %v1105
  %v1330 = vpack.c.b16 %v1114, %v1106
  %v1331 = vpack.c.b16 %v1115, %v1107
  %v1332 = vpack.c.b16 %v1116, %v1108
  %v1333 = vpack.c.b16 %v1117, %v1109
  %v1334 = vpack.c.b16 %v1118, %v1110
  %v1335 = vpack.c.b16 %v1127, %v1119
  %v1336 = vpack.c.b16 %v1128, %v1120
  %v1337 = vpack.c.b16 %v1129, %v1121
  %v1338 = vpack.c.b16 %v1130, %v1122
  %v1339 = vpack.c.b16 %v1131, %v1123
  %v1340 = vpack.c.b16 %v1132, %v1124
  %v1341 = vpack.c.b16 %v1133, %v1125
  %v1342 = vpack.c.b16 %v1134, %v1126
  %v1343 = vpack.c.b16 %v1143, %v1135
  %v1344 = vpack.c.b16 %v1144, %v1136
  %v1345 = vpack.c.b16 %v1145, %v1137
  %v1346 = vpack.c.b16 %v1146, %v1138
  %v1347 = vpack.c.b16 %v1147, %v1139
  %v1348 = vpack.c.b16 %v1148, %v1140
  %v1349 = vpack.c.b16 %v1149, %v1141
  %v1350 = vpack.c.b16 %v1150, %v1142
  %v1351 = vpack.c.b16 %v1159, %v1151
  %v1352 = vpack.c.b16 %v1160, %v1152
  %v1353 = vpack.c.b16 %v1161, %v1153
  %v1354 = vpack.c.b16 %v1162, %v1154
  %v1355 = vpack.c.b16 %v1163, %v1155
  %v1356 = vpack.c.b16 %v1164, %v1156
  %v1357 = vpack.c.b16 %v1165, %v1157
  %v1358 = vpack.c.b16 %v1166, %v1158
  %v1359 = vpack.c.b16 %v1175, %v1167
  %v1360 = vpack.c.b16 %v1176, %v1168
  %v1361 = vpack.c.b16 %v1177, %v1169
  %v1362 = vpack.c.b16 %v1178, %v1170
  %v1363 = vpack.c.b16 %v1179, %v1171
  %v1364 = vpack.c.b16 %v1180, %v1172
  %v1365 = vpack.c.b16 %v1181, %v1173
  %v1366 = vpack.c.b16 %v1182, %v1174
  %v1367 = vpack.c.b16 %v1191, %v1183
  %v1368 = vpack.c.b16 %v1192, %v1184
  %v1369 = vpack.c.b16 %v1193, %v1185
  %v1370 = vpack.c.b16 %v1194, %v1186
  %v1371 = vpack.c.b16 %v1195, %v1187
  %v1372 = vpack.c.b16 %v1196, %v1188
  %v1373 = vpack.c.b16 %v1197, %v1189
  %v1374 = vpack.c.b16 %v1198, %v1190
  %v1375 = vpack.c.b16 %v1207, %v1199
  %v1376 = vpack.c.b16 %v1208, %v1200
  %v1377 = vpack.c.b16 %v1209, %v1201
  %v1378 = vpack.c.b16 %v1210, %v1202
  %v1379 = vpack.c.b16 %v1211, %v1203
  %v1380 = vpack.c.b16 %v1212, %v1204
  %v1381 = vpack.c.b16 %v1213, %v1205
  %v1382 = vpack.c.b16 %v1214, %v1206
  %v1383 = vpack.c.b16 %v1223, %v1215
  %v1384 = vpack.c.b16 %v1224, %v1216
  %v1385 = vpack.c.b16 %v1225, %v1217
  %v1386 = vpack.c.b16 %v1226, %v1218
  %v1387 = vpack.c.b16 %v1227, %v1219
  %v1388 = vpack.c.b16 %v1228, %v1220
  %v1389 = vpack.c.b16 %v1229, %v1221
  %v1390 = vpack.c.b16 %v1230, %v1222
  %v1391 = vpack.c.b16 %v1239, %v1231
  %v1392 = vpack.c.b16 %v1240, %v1232
  %v1393 = vpack.c.b16 %v1241, %v1233
  %v1394 = vpack.c.b16 %v1242, %v1234
  %v1395 = vpack.c.b16 %v1243, %v1235
  %v1396 = vpack.c.b16 %v1244, %v1236
  %v1397 = vpack.c.b16 %v1245, %v1237
  %v1398 = vpack.c.b16 %v1246, %v1238
  %v1399 = vpack.c.b16 %v1255, %v1247
  %v1400 = vpack.c.b16 %v1256, %v1248
  %v1401 = vpack.c.b16 %v1257, %v1249
  %v1402 = vpack.c.b16 %v1258, %v1250
  %v1403 = vpack.c.b16 %v1259, %v1251
  %v1404 = vpack.c.b16 %v1260, %v1252
  %v1405 = vpack.c.b16 %v1261, %v1253
  %v1406 = vpack.c.b16 %v1262, %v1254
  %v1407 = vpack.c.b16 %v1271, %v1263
  %v1408 = vpack.c.b16 %v1272, %v1264
  %v1409 = vpack.c.b16 %v1273, %v1265
  %v1410 = vpack.c.b16 %v1274, %v1266
  %v1411 = vpack.c.b16 %v1275, %v1267
  %v1412 = vpack.c.b16 %v1276, %v1268
  %v1413 = vpack.c.b16 %v1277, %v1269
  %v1414 = vpack.c.b16 %v1278, %v1270
  %v1415 = vpack.c.b16 %v1287, %v1279
  %v1416 = vpack.c.b16 %v1288, %v1280
  %v1417 = vpack.c.b16 %v1289, %v1281
  %v1418 = vpack.c.b16 %v1290, %v1282
  %v1419 = vpack.c.b16 %v1291, %v1283
  %v1420 = vpack.c.b16 %v1292, %v1284
  %v1421 = vpack.c.b16 %v1293, %v1285
  %v1422 = vpack.c.b16 %v1294, %v1286
  %1551 = vmatprep.subr.bf16.mxu0 %v1296
  %1552 = vmatpush1.bf16.msra.mxu0 %v1295
  %1553 = vmatprep.subr.bf16.mxu0 %v1304
  %1554 = vmatpush1.bf16.msra.mxu0 %v1303
  %1555 = vmatprep.subr.bf16.mxu0 %v1312
  %1556 = vmatpush1.bf16.msra.mxu0 %v1311
  %1557 = vmatprep.subr.bf16.mxu0 %v1320
  %1558 = vmatpush1.bf16.msra.mxu0 %v1319
  %1559 = vmatprep.subr.bf16.mxu0 %v1328
  %1560 = vmatpush1.bf16.msra.mxu0 %v1327
  %1561 = vmatprep.subr.bf16.mxu0 %v1336
  %1562 = vmatpush1.bf16.msra.mxu0 %v1335
  %1563 = vmatprep.subr.bf16.mxu0 %v1344
  %1564 = vmatpush1.bf16.msra.mxu0 %v1343
  %1565 = vmatprep.subr.bf16.mxu0 %v1352
  %1566 = vmatpush1.bf16.msra.mxu0 %v1351
  %1567 = vmatprep.subr.bf16.mxu0 %v1360
  %1568 = vmatpush1.bf16.msra.mxu0 %v1359
  %1569 = vmatprep.subr.bf16.mxu0 %v1368
  %1570 = vmatpush1.bf16.msra.mxu0 %v1367
  %1571 = vmatprep.subr.bf16.mxu0 %v1376
  %1572 = vmatpush1.bf16.msra.mxu0 %v1375
  %1573 = vmatprep.subr.bf16.mxu0 %v1384
  %1574 = vmatpush1.bf16.msra.mxu0 %v1383
  %1575 = vmatprep.subr.bf16.mxu0 %v1392
  %1576 = vmatpush1.bf16.msra.mxu0 %v1391
  %1577 = vmatprep.subr.bf16.mxu0 %v1400
  %1578 = vmatpush1.bf16.msra.mxu0 %v1399
  %1579 = vmatprep.subr.bf16.mxu0 %v1408
  %1580 = vmatpush1.bf16.msra.mxu0 %v1407
  %1581 = vmatprep.subr.bf16.mxu0 %v1416
  %1582 = vmatpush1.bf16.msra.mxu0 %v1415
  %1583 = vmatprep.mubr.bf16.mxu0 0
  %1584 = vmatmul.mubr.bf16.gmra.mrb[0].mxu0 0
  %v1585 = vpop.f32.mrb[0].mxu0
  %v1586 = vadd.f32 0.0, %v1585
  %v1587 = vpop.f32.mrb[0].mxu0
  %v1588 = vadd.f32 0.0, %v1587
  %v1589 = vpop.f32.mrb[0].mxu0
  %v1590 = vpop.f32.mrb[0].mxu0
  %1591 = vdwg.mxu0
  %1592 = vmatprep.subr.bf16.mxu0 %v1298
  %1593 = vmatpush1.bf16.msra.mxu0 %v1297
  %1594 = vmatprep.subr.bf16.mxu0 %v1306
  %1595 = vmatpush1.bf16.msra.mxu0 %v1305
  %1596 = vmatprep.subr.bf16.mxu0 %v1314
  %1597 = vmatpush1.bf16.msra.mxu0 %v1313
  %1598 = vmatprep.subr.bf16.mxu0 %v1322
  %1599 = vmatpush1.bf16.msra.mxu0 %v1321
  %1600 = vmatprep.subr.bf16.mxu0 %v1330
  %1601 = vmatpush1.bf16.msra.mxu0 %v1329
  %1602 = vmatprep.subr.bf16.mxu0 %v1338
  %1603 = vmatpush1.bf16.msra.mxu0 %v1337
  %1604 = vmatprep.subr.bf16.mxu0 %v1346
  %1605 = vmatpush1.bf16.msra.mxu0 %v1345
  %1606 = vmatprep.subr.bf16.mxu0 %v1354
  %1607 = vmatpush1.bf16.msra.mxu0 %v1353
  %1608 = vmatprep.subr.bf16.mxu0 %v1362
  %1609 = vmatpush1.bf16.msra.mxu0 %v1361
  %1610 = vmatprep.subr.bf16.mxu0 %v1370
  %1611 = vmatpush1.bf16.msra.mxu0 %v1369
  %1612 = vmatprep.subr.bf16.mxu0 %v1378
  %1613 = vmatpush1.bf16.msra.mxu0 %v1377
  %1614 = vmatprep.subr.bf16.mxu0 %v1386
  %1615 = vmatpush1.bf16.msra.mxu0 %v1385
  %1616 = vmatprep.subr.bf16.mxu0 %v1394
  %1617 = vmatpush1.bf16.msra.mxu0 %v1393
  %1618 = vmatprep.subr.bf16.mxu0 %v1402
  %1619 = vmatpush1.bf16.msra.mxu0 %v1401
  %1620 = vmatprep.subr.bf16.mxu0 %v1410
  %1621 = vmatpush1.bf16.msra.mxu0 %v1409
  %1622 = vmatprep.subr.bf16.mxu0 %v1418
  %1623 = vmatpush1.bf16.msra.mxu0 %v1417
  %1624 = vmatprep.mubr.bf16.mxu0 0
  %1625 = vmatmul.mubr.bf16.gmra.mrb[0].mxu0 0
  %v1626 = vpop.f32.mrb[0].mxu0
  %v1627 = vadd.f32 0.0, %v1626
  %v1628 = vpop.f32.mrb[0].mxu0
  %v1629 = vadd.f32 0.0, %v1628
  %v1630 = vpop.f32.mrb[0].mxu0
  %v1631 = vpop.f32.mrb[0].mxu0
  %1632 = vdwg.mxu0
  %1633 = vmatprep.subr.bf16.mxu0 %v1300
  %1634 = vmatpush1.bf16.msra.mxu0 %v1299
  %1635 = vmatprep.subr.bf16.mxu0 %v1308
  %1636 = vmatpush1.bf16.msra.mxu0 %v1307
  %1637 = vmatprep.subr.bf16.mxu0 %v1316
  %1638 = vmatpush1.bf16.msra.mxu0 %v1315
  %1639 = vmatprep.subr.bf16.mxu0 %v1324
  %1640 = vmatpush1.bf16.msra.mxu0 %v1323
  %1641 = vmatprep.subr.bf16.mxu0 %v1332
  %1642 = vmatpush1.bf16.msra.mxu0 %v1331
  %1643 = vmatprep.subr.bf16.mxu0 %v1340
  %1644 = vmatpush1.bf16.msra.mxu0 %v1339
  %1645 = vmatprep.subr.bf16.mxu0 %v1348
  %1646 = vmatpush1.bf16.msra.mxu0 %v1347
  %1647 = vmatprep.subr.bf16.mxu0 %v1356
  %1648 = vmatpush1.bf16.msra.mxu0 %v1355
  %1649 = vmatprep.subr.bf16.mxu0 %v1364
  %1650 = vmatpush1.bf16.msra.mxu0 %v1363
  %1651 = vmatprep.subr.bf16.mxu0 %v1372
  %1652 = vmatpush1.bf16.msra.mxu0 %v1371
  %1653 = vmatprep.subr.bf16.mxu0 %v1380
  %1654 = vmatpush1.bf16.msra.mxu0 %v1379
  %1655 = vmatprep.subr.bf16.mxu0 %v1388
  %1656 = vmatpush1.bf16.msra.mxu0 %v1387
  %1657 = vmatprep.subr.bf16.mxu0 %v1396
  %1658 = vmatpush1.bf16.msra.mxu0 %v1395
  %1659 = vmatprep.subr.bf16.mxu0 %v1404
  %1660 = vmatpush1.bf16.msra.mxu0 %v1403
  %1661 = vmatprep.subr.bf16.mxu0 %v1412
  %1662 = vmatpush1.bf16.msra.mxu0 %v1411
  %1663 = vmatprep.subr.bf16.mxu0 %v1420
  %1664 = vmatpush1.bf16.msra.mxu0 %v1419
  %1665 = vmatprep.mubr.bf16.mxu0 0
  %1666 = vmatmul.mubr.bf16.gmra.mrb[0].mxu0 0
  %v1667 = vpop.f32.mrb[0].mxu0
  %v1668 = vadd.f32 0.0, %v1667
  %v1669 = vpop.f32.mrb[0].mxu0
  %v1670 = vadd.f32 0.0, %v1669
  %v1671 = vpop.f32.mrb[0].mxu0
  %v1672 = vpop.f32.mrb[0].mxu0
  %1673 = vdwg.mxu0
  %1674 = vmatprep.subr.bf16.mxu0 %v1302
  %1675 = vmatpush1.bf16.msra.mxu0 %v1301
  %1676 = vmatprep.subr.bf16.mxu0 %v1310
  %1677 = vmatpush1.bf16.msra.mxu0 %v1309
  %1678 = vmatprep.subr.bf16.mxu0 %v1318
  %1679 = vmatpush1.bf16.msra.mxu0 %v1317
  %1680 = vmatprep.subr.bf16.mxu0 %v1326
  %1681 = vmatpush1.bf16.msra.mxu0 %v1325
  %1682 = vmatprep.subr.bf16.mxu0 %v1334
  %1683 = vmatpush1.bf16.msra.mxu0 %v1333
  %1684 = vmatprep.subr.bf16.mxu0 %v1342
  %1685 = vmatpush1.bf16.msra.mxu0 %v1341
  %1686 = vmatprep.subr.bf16.mxu0 %v1350
  %1687 = vmatpush1.bf16.msra.mxu0 %v1349
  %1688 = vmatprep.subr.bf16.mxu0 %v1358
  %1689 = vmatpush1.bf16.msra.mxu0 %v1357
  %1690 = vmatprep.subr.bf16.mxu0 %v1366
  %1691 = vmatpush1.bf16.msra.mxu0 %v1365
  %1692 = vmatprep.subr.bf16.mxu0 %v1374
  %1693 = vmatpush1.bf16.msra.mxu0 %v1373
  %1694 = vmatprep.subr.bf16.mxu0 %v1382
  %1695 = vmatpush1.bf16.msra.mxu0 %v1381
  %1696 = vmatprep.subr.bf16.mxu0 %v1390
  %1697 = vmatpush1.bf16.msra.mxu0 %v1389
  %1698 = vmatprep.subr.bf16.mxu0 %v1398
  %1699 = vmatpush1.bf16.msra.mxu0 %v1397
  %1700 = vmatprep.subr.bf16.mxu0 %v1406
  %1701 = vmatpush1.bf16.msra.mxu0 %v1405
  %1702 = vmatprep.subr.bf16.mxu0 %v1414
  %1703 = vmatpush1.bf16.msra.mxu0 %v1413
  %1704 = vmatprep.subr.bf16.mxu0 %v1422
  %1705 = vmatpush1.bf16.msra.mxu0 %v1421
  %1706 = vmatprep.mubr.bf16.mxu0 0
  %1707 = vmatmul.mubr.bf16.gmra.mrb[0].mxu0 0
  %v1708 = vpop.f32.mrb[0].mxu0
  %v1709 = vadd.f32 0.0, %v1708
  %v1710 = vpop.f32.mrb[0].mxu0
  %v1711 = vadd.f32 0.0, %v1710
  %v1712 = vpop.f32.mrb[0].mxu0
  %v1713 = vpop.f32.mrb[0].mxu0
  %1714 = vdwg.mxu0
  %v1715 = vadd.f32 %v1586, %v526
  %v1716 = vadd.f32 %v1588, %v528
  %v1717 = vadd.f32 %v1627, %v599
  %v1718 = vadd.f32 %v1629, %v601
  %v1719 = vadd.f32 %v1668, %v706
  %v1720 = vadd.f32 %v1670, %v708
  %v1721 = vadd.f32 %v1709, %v779
  %v1722 = vadd.f32 %v1711, %v781
  %v1723 = vxor.u32 %v1715, 2147483648
  %v1724 = vxor.u32 %v1716, 2147483648
  %v1725 = vxor.u32 %v1717, 2147483648
  %v1726 = vmul.f32 %v1723, 1.442695
  %v1727 = vpow.pop %v1726
  %v1728 = vmul.f32 %v1724, 1.442695
  %v1729 = vpow.pop %v1728
  %v1730 = vmul.f32 %v1725, 1.442695
  %v1731 = vpow.pop %v1730
  %v1732 = vadd.f32 %v1727, 1.0
  %v1733 = vadd.f32 %v1729, 1.0
  %v1734 = vadd.f32 %v1731, 1.0
  %v1735 = vrcp.pop %v1732
  %v1736 = vmul.f32 1.0, %v1735
  %v1737 = vrcp.pop %v1733
  %v1738 = vmul.f32 1.0, %v1737
  %v1739 = vrcp.pop %v1734
  %v1740 = vmul.f32 1.0, %v1739
  %v1741 = vxor.u32 %v1719, 2147483648
  %v1742 = vxor.u32 %v1720, 2147483648
  %v1743 = vxor.u32 %v1721, 2147483648
  %v1744 = vmul.f32 %v1741, 1.442695
  %v1745 = vpow.pop %v1744
  %v1746 = vmul.f32 %v1742, 1.442695
  %v1747 = vpow.pop %v1746
  %v1748 = vmul.f32 %v1743, 1.442695
  %v1749 = vpow.pop %v1748
  %v1750 = vadd.f32 %v1745, 1.0
  %v1751 = vadd.f32 %v1747, 1.0
  %v1752 = vadd.f32 %v1749, 1.0
  %v1753 = vrcp.pop %v1750
  %v1754 = vmul.f32 1.0, %v1753
  %v1755 = vrcp.pop %v1751
  %v1756 = vmul.f32 1.0, %v1755
  %v1757 = vrcp.pop %v1752
  %v1758 = vmul.f32 1.0, %v1757
  %v1759 = vtanh.pop %v1718
  %v1760 = vtanh.pop %v1722
  %v1761 = vmul.f32 %v1738, 0.0
  %v1762 = vmul.f32 %v1736, %v1759
  %v1763 = vadd.f32 %v1761, %v1762
  %v1764 = vmul.f32 %v1756, 0.0
  %v1765 = vmul.f32 %v1754, %v1760
  %v1766 = vadd.f32 %v1764, %v1765
  %v1767 = vtanh.pop %v1763
  %v1768 = vmul.f32 %v1740, %v1767
  %v1769 = vtanh.pop %v1766
  %v1770 = vmul.f32 %v1758, %v1769
  %v1771 = vpack.c.bf16 %v1768, %v1768
  %v1772 = vpack.c.bf16 %v1770, %v1770
  %1773 = vmatprep.subr.bf16.mxu0 %v1296
  %1774 = vmatpush1.bf16.msra.mxu0 %v1295
  %1775 = vmatprep.subr.bf16.mxu0 %v1304
  %1776 = vmatpush1.bf16.msra.mxu0 %v1303
  %1777 = vmatprep.subr.bf16.mxu0 %v1312
  %1778 = vmatpush1.bf16.msra.mxu0 %v1311
  %1779 = vmatprep.subr.bf16.mxu0 %v1320
  %1780 = vmatpush1.bf16.msra.mxu0 %v1319
  %1781 = vmatprep.subr.bf16.mxu0 %v1328
  %1782 = vmatpush1.bf16.msra.mxu0 %v1327
  %1783 = vmatprep.subr.bf16.mxu0 %v1336
  %1784 = vmatpush1.bf16.msra.mxu0 %v1335
  %1785 = vmatprep.subr.bf16.mxu0 %v1344
  %1786 = vmatpush1.bf16.msra.mxu0 %v1343
  %1787 = vmatprep.subr.bf16.mxu0 %v1352
  %1788 = vmatpush1.bf16.msra.mxu0 %v1351
  %1789 = vmatprep.subr.bf16.mxu0 %v1360
  %1790 = vmatpush1.bf16.msra.mxu0 %v1359
  %1791 = vmatprep.subr.bf16.mxu0 %v1368
  %1792 = vmatpush1.bf16.msra.mxu0 %v1367
  %1793 = vmatprep.subr.bf16.mxu0 %v1376
  %1794 = vmatpush1.bf16.msra.mxu0 %v1375
  %1795 = vmatprep.subr.bf16.mxu0 %v1384
  %1796 = vmatpush1.bf16.msra.mxu0 %v1383
  %1797 = vmatprep.subr.bf16.mxu0 %v1392
  %1798 = vmatpush1.bf16.msra.mxu0 %v1391
  %1799 = vmatprep.subr.bf16.mxu0 %v1400
  %1800 = vmatpush1.bf16.msra.mxu0 %v1399
  %1801 = vmatprep.subr.bf16.mxu0 %v1408
  %1802 = vmatpush1.bf16.msra.mxu0 %v1407
  %1803 = vmatprep.subr.bf16.mxu0 %v1416
  %1804 = vmatpush1.bf16.msra.mxu0 %v1415
  %1805 = vmatprep.mubr.bf16.mxu0 %v1772
  %1806 = vmatmul.mubr.bf16.gmra.mrb[0].mxu0 %v1771
  %v1807 = vpop.f32.mrb[0].mxu0
  %v1808 = vadd.f32 0.0, %v1807
  %v1809 = vpop.f32.mrb[0].mxu0
  %v1810 = vadd.f32 0.0, %v1809
  %v1811 = vpop.f32.mrb[0].mxu0
  %v1812 = vpop.f32.mrb[0].mxu0
  %1813 = vdwg.mxu0
  %1814 = vmatprep.subr.bf16.mxu0 %v1298
  %1815 = vmatpush1.bf16.msra.mxu0 %v1297
  %1816 = vmatprep.subr.bf16.mxu0 %v1306
  %1817 = vmatpush1.bf16.msra.mxu0 %v1305
  %1818 = vmatprep.subr.bf16.mxu0 %v1314
  %1819 = vmatpush1.bf16.msra.mxu0 %v1313
  %1820 = vmatprep.subr.bf16.mxu0 %v1322
  %1821 = vmatpush1.bf16.msra.mxu0 %v1321
  %1822 = vmatprep.subr.bf16.mxu0 %v1330
  %1823 = vmatpush1.bf16.msra.mxu0 %v1329
  %1824 = vmatprep.subr.bf16.mxu0 %v1338
  %1825 = vmatpush1.bf16.msra.mxu0 %v1337
  %1826 = vmatprep.subr.bf16.mxu0 %v1346
  %1827 = vmatpush1.bf16.msra.mxu0 %v1345
  %1828 = vmatprep.subr.bf16.mxu0 %v1354
  %1829 = vmatpush1.bf16.msra.mxu0 %v1353
  %1830 = vmatprep.subr.bf16.mxu0 %v1362
  %1831 = vmatpush1.bf16.msra.mxu0 %v1361
  %1832 = vmatprep.subr.bf16.mxu0 %v1370
  %1833 = vmatpush1.bf16.msra.mxu0 %v1369
  %1834 = vmatprep.subr.bf16.mxu0 %v1378
  %1835 = vmatpush1.bf16.msra.mxu0 %v1377
  %1836 = vmatprep.subr.bf16.mxu0 %v1386
  %1837 = vmatpush1.bf16.msra.mxu0 %v1385
  %1838 = vmatprep.subr.bf16.mxu0 %v1394
  %1839 = vmatpush1.bf16.msra.mxu0 %v1393
  %1840 = vmatprep.subr.bf16.mxu0 %v1402
  %1841 = vmatpush1.bf16.msra.mxu0 %v1401
  %1842 = vmatprep.subr.bf16.mxu0 %v1410
  %1843 = vmatpush1.bf16.msra.mxu0 %v1409
  %1844 = vmatprep.subr.bf16.mxu0 %v1418
  %1845 = vmatpush1.bf16.msra.mxu0 %v1417
  %1846 = vmatprep.mubr.bf16.mxu0 %v1772
  %1847 = vmatmul.mubr.bf16.gmra.mrb[0].mxu0 %v1771
  %v1848 = vpop.f32.mrb[0].mxu0
  %v1849 = vadd.f32 0.0, %v1848
  %v1850 = vpop.f32.mrb[0].mxu0
  %v1851 = vadd.f32 0.0, %v1850
  %v1852 = vpop.f32.mrb[0].mxu0
  %v1853 = vpop.f32.mrb[0].mxu0
  %1854 = vdwg.mxu0
  %1855 = vmatprep.subr.bf16.mxu0 %v1300
  %1856 = vmatpush1.bf16.msra.mxu0 %v1299
  %1857 = vmatprep.subr.bf16.mxu0 %v1308
  %1858 = vmatpush1.bf16.msra.mxu0 %v1307
  %1859 = vmatprep.subr.bf16.mxu0 %v1316
  %1860 = vmatpush1.bf16.msra.mxu0 %v1315
  %1861 = vmatprep.subr.bf16.mxu0 %v1324
  %1862 = vmatpush1.bf16.msra.mxu0 %v1323
  %1863 = vmatprep.subr.bf16.mxu0 %v1332
  %1864 = vmatpush1.bf16.msra.mxu0 %v1331
  %1865 = vmatprep.subr.bf16.mxu0 %v1340
  %1866 = vmatpush1.bf16.msra.mxu0 %v1339
  %1867 = vmatprep.subr.bf16.mxu0 %v1348
  %1868 = vmatpush1.bf16.msra.mxu0 %v1347
  %1869 = vmatprep.subr.bf16.mxu0 %v1356
  %1870 = vmatpush1.bf16.msra.mxu0 %v1355
  %1871 = vmatprep.subr.bf16.mxu0 %v1364
  %1872 = vmatpush1.bf16.msra.mxu0 %v1363
  %1873 = vmatprep.subr.bf16.mxu0 %v1372
  %1874 = vmatpush1.bf16.msra.mxu0 %v1371
  %1875 = vmatprep.subr.bf16.mxu0 %v1380
  %1876 = vmatpush1.bf16.msra.mxu0 %v1379
  %1877 = vmatprep.subr.bf16.mxu0 %v1388
  %1878 = vmatpush1.bf16.msra.mxu0 %v1387
  %1879 = vmatprep.subr.bf16.mxu0 %v1396
  %1880 = vmatpush1.bf16.msra.mxu0 %v1395
  %1881 = vmatprep.subr.bf16.mxu0 %v1404
  %1882 = vmatpush1.bf16.msra.mxu0 %v1403
  %1883 = vmatprep.subr.bf16.mxu0 %v1412
  %1884 = vmatpush1.bf16.msra.mxu0 %v1411
  %1885 = vmatprep.subr.bf16.mxu0 %v1420
  %1886 = vmatpush1.bf16.msra.mxu0 %v1419
  %1887 = vmatprep.mubr.bf16.mxu0 %v1772
  %1888 = vmatmul.mubr.bf16.gmra.mrb[0].mxu0 %v1771
  %v1889 = vpop.f32.mrb[0].mxu0
  %v1890 = vadd.f32 0.0, %v1889
  %v1891 = vpop.f32.mrb[0].mxu0
  %v1892 = vadd.f32 0.0, %v1891
  %v1893 = vpop.f32.mrb[0].mxu0
  %v1894 = vpop.f32.mrb[0].mxu0
  %1895 = vdwg.mxu0
  %1896 = vmatprep.subr.bf16.mxu0 %v1302
  %1897 = vmatpush1.bf16.msra.mxu0 %v1301
  %1898 = vmatprep.subr.bf16.mxu0 %v1310
  %1899 = vmatpush1.bf16.msra.mxu0 %v1309
  %1900 = vmatprep.subr.bf16.mxu0 %v1318
  %1901 = vmatpush1.bf16.msra.mxu0 %v1317
  %1902 = vmatprep.subr.bf16.mxu0 %v1326
  %1903 = vmatpush1.bf16.msra.mxu0 %v1325
  %1904 = vmatprep.subr.bf16.mxu0 %v1334
  %1905 = vmatpush1.bf16.msra.mxu0 %v1333
  %1906 = vmatprep.subr.bf16.mxu0 %v1342
  %1907 = vmatpush1.bf16.msra.mxu0 %v1341
  %1908 = vmatprep.subr.bf16.mxu0 %v1350
  %1909 = vmatpush1.bf16.msra.mxu0 %v1349
  %1910 = vmatprep.subr.bf16.mxu0 %v1358
  %1911 = vmatpush1.bf16.msra.mxu0 %v1357
  %1912 = vmatprep.subr.bf16.mxu0 %v1366
  %1913 = vmatpush1.bf16.msra.mxu0 %v1365
  %1914 = vmatprep.subr.bf16.mxu0 %v1374
  %1915 = vmatpush1.bf16.msra.mxu0 %v1373
  %1916 = vmatprep.subr.bf16.mxu0 %v1382
  %1917 = vmatpush1.bf16.msra.mxu0 %v1381
  %1918 = vmatprep.subr.bf16.mxu0 %v1390
  %1919 = vmatpush1.bf16.msra.mxu0 %v1389
  %1920 = vmatprep.subr.bf16.mxu0 %v1398
  %1921 = vmatpush1.bf16.msra.mxu0 %v1397
  %1922 = vmatprep.subr.bf16.mxu0 %v1406
  %1923 = vmatpush1.bf16.msra.mxu0 %v1405
  %1924 = vmatprep.subr.bf16.mxu0 %v1414
  %1925 = vmatpush1.bf16.msra.mxu0 %v1413
  %1926 = vmatprep.subr.bf16.mxu0 %v1422
  %1927 = vmatpush1.bf16.msra.mxu0 %v1421
  %1928 = vmatprep.mubr.bf16.mxu0 %v1772
  %1929 = vmatmul.mubr.bf16.gmra.mrb[0].mxu0 %v1771
  %v1930 = vpop.f32.mrb[0].mxu0
  %v1931 = vadd.f32 0.0, %v1930
  %v1932 = vpop.f32.mrb[0].mxu0
  %v1933 = vadd.f32 0.0, %v1932
  %v1934 = vpop.f32.mrb[0].mxu0
  %v1935 = vpop.f32.mrb[0].mxu0
  %1936 = vdwg.mxu0
  %v1937 = vadd.f32 %v1808, %v530
  %v1938 = vadd.f32 %v1810, %v532
  %v1939 = vadd.f32 %v1849, %v603
  %v1940 = vadd.f32 %v1851, %v605
  %v1941 = vadd.f32 %v1890, %v702
  %v1942 = vadd.f32 %v1892, %v704
  %v1943 = vadd.f32 %v1931, %v775
  %v1944 = vadd.f32 %v1933, %v777
  %v1945 = vxor.u32 %v1937, 2147483648
  %v1946 = vxor.u32 %v1938, 2147483648
  %v1947 = vxor.u32 %v1939, 2147483648
  %v1948 = vmul.f32 %v1945, 1.442695
  %v1949 = vpow.pop %v1948
  %v1950 = vmul.f32 %v1946, 1.442695
  %v1951 = vpow.pop %v1950
  %v1952 = vmul.f32 %v1947, 1.442695
  %v1953 = vpow.pop %v1952
  %v1954 = vadd.f32 %v1949, 1.0
  %v1955 = vadd.f32 %v1951, 1.0
  %v1956 = vadd.f32 %v1953, 1.0
  %v1957 = vrcp.pop %v1954
  %v1958 = vmul.f32 1.0, %v1957
  %v1959 = vrcp.pop %v1955
  %v1960 = vmul.f32 1.0, %v1959
  %v1961 = vrcp.pop %v1956
  %v1962 = vmul.f32 1.0, %v1961
  %v1963 = vxor.u32 %v1941, 2147483648
  %v1964 = vxor.u32 %v1942, 2147483648
  %v1965 = vxor.u32 %v1943, 2147483648
  %v1966 = vmul.f32 %v1963, 1.442695
  %v1967 = vpow.pop %v1966
  %v1968 = vmul.f32 %v1964, 1.442695
  %v1969 = vpow.pop %v1968
  %v1970 = vmul.f32 %v1965, 1.442695
  %v1971 = vpow.pop %v1970
  %v1972 = vadd.f32 %v1967, 1.0
  %v1973 = vadd.f32 %v1969, 1.0
  %v1974 = vadd.f32 %v1971, 1.0
  %v1975 = vrcp.pop %v1972
  %v1976 = vmul.f32 1.0, %v1975
  %v1977 = vrcp.pop %v1973
  %v1978 = vmul.f32 1.0, %v1977
  %v1979 = vrcp.pop %v1974
  %v1980 = vmul.f32 1.0, %v1979
  %v1981 = vtanh.pop %v1940
  %v1982 = vtanh.pop %v1944
  %v1983 = vmul.f32 %v1960, %v1763
  %v1984 = vmul.f32 %v1958, %v1981
  %v1985 = vadd.f32 %v1983, %v1984
  %v1986 = vmul.f32 %v1978, %v1766
  %v1987 = vmul.f32 %v1976, %v1982
  %v1988 = vadd.f32 %v1986, %v1987
  %v1989 = vtanh.pop %v1985
  %v1990 = vmul.f32 %v1962, %v1989
  %v1991 = vtanh.pop %v1988
  %v1992 = vmul.f32 %v1980, %v1991
  %v1993 = vpack.c.bf16 %v1990, %v1990
  %v1994 = vpack.c.bf16 %v1992, %v1992
  %1995 = vmatprep.subr.bf16.mxu0 %v1296
  %1996 = vmatpush1.bf16.msra.mxu0 %v1295
  %1997 = vmatprep.subr.bf16.mxu0 %v1304
  %1998 = vmatpush1.bf16.msra.mxu0 %v1303
  %1999 = vmatprep.subr.bf16.mxu0 %v1312
  %2000 = vmatpush1.bf16.msra.mxu0 %v1311
  %2001 = vmatprep.subr.bf16.mxu0 %v1320
  %2002 = vmatpush1.bf16.msra.mxu0 %v1319
  %2003 = vmatprep.subr.bf16.mxu0 %v1328
  %2004 = vmatpush1.bf16.msra.mxu0 %v1327
  %2005 = vmatprep.subr.bf16.mxu0 %v1336
  %2006 = vmatpush1.bf16.msra.mxu0 %v1335
  %2007 = vmatprep.subr.bf16.mxu0 %v1344
  %2008 = vmatpush1.bf16.msra.mxu0 %v1343
  %2009 = vmatprep.subr.bf16.mxu0 %v1352
  %2010 = vmatpush1.bf16.msra.mxu0 %v1351
  %2011 = vmatprep.subr.bf16.mxu0 %v1360
  %2012 = vmatpush1.bf16.msra.mxu0 %v1359
  %2013 = vmatprep.subr.bf16.mxu0 %v1368
  %2014 = vmatpush1.bf16.msra.mxu0 %v1367
  %2015 = vmatprep.subr.bf16.mxu0 %v1376
  %2016 = vmatpush1.bf16.msra.mxu0 %v1375
  %2017 = vmatprep.subr.bf16.mxu0 %v1384
  %2018 = vmatpush1.bf16.msra.mxu0 %v1383
  %2019 = vmatprep.subr.bf16.mxu0 %v1392
  %2020 = vmatpush1.bf16.msra.mxu0 %v1391
  %2021 = vmatprep.subr.bf16.mxu0 %v1400
  %2022 = vmatpush1.bf16.msra.mxu0 %v1399
  %2023 = vmatprep.subr.bf16.mxu0 %v1408
  %2024 = vmatpush1.bf16.msra.mxu0 %v1407
  %2025 = vmatprep.subr.bf16.mxu0 %v1416
  %2026 = vmatpush1.bf16.msra.mxu0 %v1415
  %2027 = vmatprep.mubr.bf16.mxu0 %v1994
  %2028 = vmatmul.mubr.bf16.gmra.mrb[0].mxu0 %v1993
  %v2029 = vpop.f32.mrb[0].mxu0
  %v2030 = vadd.f32 0.0, %v2029
  %v2031 = vpop.f32.mrb[0].mxu0
  %v2032 = vadd.f32 0.0, %v2031
  %v2033 = vpop.f32.mrb[0].mxu0
  %v2034 = vpop.f32.mrb[0].mxu0
  %2035 = vdwg.mxu0
  %2036 = vmatprep.subr.bf16.mxu0 %v1298
  %2037 = vmatpush1.bf16.msra.mxu0 %v1297
  %2038 = vmatprep.subr.bf16.mxu0 %v1306
  %2039 = vmatpush1.bf16.msra.mxu0 %v1305
  %2040 = vmatprep.subr.bf16.mxu0 %v1314
  %2041 = vmatpush1.bf16.msra.mxu0 %v1313
  %2042 = vmatprep.subr.bf16.mxu0 %v1322
  %2043 = vmatpush1.bf16.msra.mxu0 %v1321
  %2044 = vmatprep.subr.bf16.mxu0 %v1330
  %2045 = vmatpush1.bf16.msra.mxu0 %v1329
  %2046 = vmatprep.subr.bf16.mxu0 %v1338
  %2047 = vmatpush1.bf16.msra.mxu0 %v1337
  %2048 = vmatprep.subr.bf16.mxu0 %v1346
  %2049 = vmatpush1.bf16.msra.mxu0 %v1345
  %2050 = vmatprep.subr.bf16.mxu0 %v1354
  %2051 = vmatpush1.bf16.msra.mxu0 %v1353
  %2052 = vmatprep.subr.bf16.mxu0 %v1362
  %2053 = vmatpush1.bf16.msra.mxu0 %v1361
  %2054 = vmatprep.subr.bf16.mxu0 %v1370
  %2055 = vmatpush1.bf16.msra.mxu0 %v1369
  %2056 = vmatprep.subr.bf16.mxu0 %v1378
  %2057 = vmatpush1.bf16.msra.mxu0 %v1377
  %2058 = vmatprep.subr.bf16.mxu0 %v1386
  %2059 = vmatpush1.bf16.msra.mxu0 %v1385
  %2060 = vmatprep.subr.bf16.mxu0 %v1394
  %2061 = vmatpush1.bf16.msra.mxu0 %v1393
  %2062 = vmatprep.subr.bf16.mxu0 %v1402
  %2063 = vmatpush1.bf16.msra.mxu0 %v1401
  %2064 = vmatprep.subr.bf16.mxu0 %v1410
  %2065 = vmatpush1.bf16.msra.mxu0 %v1409
  %2066 = vmatprep.subr.bf16.mxu0 %v1418
  %2067 = vmatpush1.bf16.msra.mxu0 %v1417
  %2068 = vmatprep.mubr.bf16.mxu0 %v1994
  %2069 = vmatmul.mubr.bf16.gmra.mrb[0].mxu0 %v1993
  %v2070 = vpop.f32.mrb[0].mxu0
  %v2071 = vadd.f32 0.0, %v2070
  %v2072 = vpop.f32.mrb[0].mxu0
  %v2073 = vadd.f32 0.0, %v2072
  %v2074 = vpop.f32.mrb[0].mxu0
  %v2075 = vpop.f32.mrb[0].mxu0
  %2076 = vdwg.mxu0
  %2077 = vmatprep.subr.bf16.mxu0 %v1300
  %2078 = vmatpush1.bf16.msra.mxu0 %v1299
  %2079 = vmatprep.subr.bf16.mxu0 %v1308
  %2080 = vmatpush1.bf16.msra.mxu0 %v1307
  %2081 = vmatprep.subr.bf16.mxu0 %v1316
  %2082 = vmatpush1.bf16.msra.mxu0 %v1315
  %2083 = vmatprep.subr.bf16.mxu0 %v1324
  %2084 = vmatpush1.bf16.msra.mxu0 %v1323
  %2085 = vmatprep.subr.bf16.mxu0 %v1332
  %2086 = vmatpush1.bf16.msra.mxu0 %v1331
  %2087 = vmatprep.subr.bf16.mxu0 %v1340
  %2088 = vmatpush1.bf16.msra.mxu0 %v1339
  %2089 = vmatprep.subr.bf16.mxu0 %v1348
  %2090 = vmatpush1.bf16.msra.mxu0 %v1347
  %2091 = vmatprep.subr.bf16.mxu0 %v1356
  %2092 = vmatpush1.bf16.msra.mxu0 %v1355
  %2093 = vmatprep.subr.bf16.mxu0 %v1364
  %2094 = vmatpush1.bf16.msra.mxu0 %v1363
  %2095 = vmatprep.subr.bf16.mxu0 %v1372
  %2096 = vmatpush1.bf16.msra.mxu0 %v1371
  %2097 = vmatprep.subr.bf16.mxu0 %v1380
  %2098 = vmatpush1.bf16.msra.mxu0 %v1379
  %2099 = vmatprep.subr.bf16.mxu0 %v1388
  %2100 = vmatpush1.bf16.msra.mxu0 %v1387
  %2101 = vmatprep.subr.bf16.mxu0 %v1396
  %2102 = vmatpush1.bf16.msra.mxu0 %v1395
  %2103 = vmatprep.subr.bf16.mxu0 %v1404
  %2104 = vmatpush1.bf16.msra.mxu0 %v1403
  %2105 = vmatprep.subr.bf16.mxu0 %v1412
  %2106 = vmatpush1.bf16.msra.mxu0 %v1411
  %2107 = vmatprep.subr.bf16.mxu0 %v1420
  %2108 = vmatpush1.bf16.msra.mxu0 %v1419
  %2109 = vmatprep.mubr.bf16.mxu0 %v1994
  %2110 = vmatmul.mubr.bf16.gmra.mrb[0].mxu0 %v1993
  %v2111 = vpop.f32.mrb[0].mxu0
  %v2112 = vadd.f32 0.0, %v2111
  %v2113 = vpop.f32.mrb[0].mxu0
  %v2114 = vadd.f32 0.0, %v2113
  %v2115 = vpop.f32.mrb[0].mxu0
  %v2116 = vpop.f32.mrb[0].mxu0
  %2117 = vdwg.mxu0
  %2118 = vmatprep.subr.bf16.mxu0 %v1302
  %2119 = vmatpush1.bf16.msra.mxu0 %v1301
  %2120 = vmatprep.subr.bf16.mxu0 %v1310
  %2121 = vmatpush1.bf16.msra.mxu0 %v1309
  %2122 = vmatprep.subr.bf16.mxu0 %v1318
  %2123 = vmatpush1.bf16.msra.mxu0 %v1317
  %2124 = vmatprep.subr.bf16.mxu0 %v1326
  %2125 = vmatpush1.bf16.msra.mxu0 %v1325
  %2126 = vmatprep.subr.bf16.mxu0 %v1334
  %2127 = vmatpush1.bf16.msra.mxu0 %v1333
  %2128 = vmatprep.subr.bf16.mxu0 %v1342
  %2129 = vmatpush1.bf16.msra.mxu0 %v1341
  %2130 = vmatprep.subr.bf16.mxu0 %v1350
  %2131 = vmatpush1.bf16.msra.mxu0 %v1349
  %2132 = vmatprep.subr.bf16.mxu0 %v1358
  %2133 = vmatpush1.bf16.msra.mxu0 %v1357
  %2134 = vmatprep.subr.bf16.mxu0 %v1366
  %2135 = vmatpush1.bf16.msra.mxu0 %v1365
  %2136 = vmatprep.subr.bf16.mxu0 %v1374
  %2137 = vmatpush1.bf16.msra.mxu0 %v1373
  %2138 = vmatprep.subr.bf16.mxu0 %v1382
  %2139 = vmatpush1.bf16.msra.mxu0 %v1381
  %2140 = vmatprep.subr.bf16.mxu0 %v1390
  %2141 = vmatpush1.bf16.msra.mxu0 %v1389
  %2142 = vmatprep.subr.bf16.mxu0 %v1398
  %2143 = vmatpush1.bf16.msra.mxu0 %v1397
  %2144 = vmatprep.subr.bf16.mxu0 %v1406
  %2145 = vmatpush1.bf16.msra.mxu0 %v1405
  %2146 = vmatprep.subr.bf16.mxu0 %v1414
  %2147 = vmatpush1.bf16.msra.mxu0 %v1413
  %2148 = vmatprep.subr.bf16.mxu0 %v1422
  %2149 = vmatpush1.bf16.msra.mxu0 %v1421
  %2150 = vmatprep.mubr.bf16.mxu0 %v1994
  %2151 = vmatmul.mubr.bf16.gmra.mrb[0].mxu0 %v1993
  %v2152 = vpop.f32.mrb[0].mxu0
  %v2153 = vadd.f32 0.0, %v2152
  %v2154 = vpop.f32.mrb[0].mxu0
  %v2155 = vadd.f32 0.0, %v2154
  %v2156 = vpop.f32.mrb[0].mxu0
  %v2157 = vpop.f32.mrb[0].mxu0
  %2158 = vdwg.mxu0
  %v2159 = vadd.f32 %v2030, %v536
  %v2160 = vadd.f32 %v2032, %v538
  %v2161 = vadd.f32 %v2071, %v609
  %v2162 = vadd.f32 %v2073, %v611
  %v2163 = vadd.f32 %v2112, %v696
  %v2164 = vadd.f32 %v2114, %v698
  %v2165 = vadd.f32 %v2153, %v769
  %v2166 = vadd.f32 %v2155, %v771
  %v2167 = vxor.u32 %v2159, 2147483648
  %v2168 = vxor.u32 %v2160, 2147483648
  %v2169 = vxor.u32 %v2161, 2147483648
  %v2170 = vmul.f32 %v2167, 1.442695
  %v2171 = vpow.pop %v2170
  %v2172 = vmul.f32 %v2168, 1.442695
  %v2173 = vpow.pop %v2172
  %v2174 = vmul.f32 %v2169, 1.442695
  %v2175 = vpow.pop %v2174
  %v2176 = vadd.f32 %v2171, 1.0
  %v2177 = vadd.f32 %v2173, 1.0
  %v2178 = vadd.f32 %v2175, 1.0
  %v2179 = vrcp.pop %v2176
  %v2180 = vmul.f32 1.0, %v2179
  %v2181 = vrcp.pop %v2177
  %v2182 = vmul.f32 1.0, %v2181
  %v2183 = vrcp.pop %v2178
  %v2184 = vmul.f32 1.0, %v2183
  %v2185 = vxor.u32 %v2163, 2147483648
  %v2186 = vxor.u32 %v2164, 2147483648
  %v2187 = vxor.u32 %v2165, 2147483648
  %v2188 = vmul.f32 %v2185, 1.442695
  %v2189 = vpow.pop %v2188
  %v2190 = vmul.f32 %v2186, 1.442695
  %v2191 = vpow.pop %v2190
  %v2192 = vmul.f32 %v2187, 1.442695
  %v2193 = vpow.pop %v2192
  %v2194 = vadd.f32 %v2189, 1.0
  %v2195 = vadd.f32 %v2191, 1.0
  %v2196 = vadd.f32 %v2193, 1.0
  %v2197 = vrcp.pop %v2194
  %v2198 = vmul.f32 1.0, %v2197
  %v2199 = vrcp.pop %v2195
  %v2200 = vmul.f32 1.0, %v2199
  %v2201 = vrcp.pop %v2196
  %v2202 = vmul.f32 1.0, %v2201
  %v2203 = vtanh.pop %v2162
  %v2204 = vtanh.pop %v2166
  %v2205 = vmul.f32 %v2182, %v1985
  %v2206 = vmul.f32 %v2180, %v2203
  %v2207 = vadd.f32 %v2205, %v2206
  %v2208 = vmul.f32 %v2200, %v1988
  %v2209 = vmul.f32 %v2198, %v2204
  %v2210 = vadd.f32 %v2208, %v2209
  %v2211 = vtanh.pop %v2207
  %v2212 = vmul.f32 %v2184, %v2211
  %v2213 = vtanh.pop %v2210
  %v2214 = vmul.f32 %v2202, %v2213
  %v2215 = vpack.c.bf16 %v2212, %v2212
  %v2216 = vpack.c.bf16 %v2214, %v2214
  %2217 = vmatprep.subr.bf16.mxu0 %v1296
  %2218 = vmatpush1.bf16.msra.mxu0 %v1295
  %2219 = vmatprep.subr.bf16.mxu0 %v1304
  %2220 = vmatpush1.bf16.msra.mxu0 %v1303
  %2221 = vmatprep.subr.bf16.mxu0 %v1312
  %2222 = vmatpush1.bf16.msra.mxu0 %v1311
  %2223 = vmatprep.subr.bf16.mxu0 %v1320
  %2224 = vmatpush1.bf16.msra.mxu0 %v1319
  %2225 = vmatprep.subr.bf16.mxu0 %v1328
  %2226 = vmatpush1.bf16.msra.mxu0 %v1327
  %2227 = vmatprep.subr.bf16.mxu0 %v1336
  %2228 = vmatpush1.bf16.msra.mxu0 %v1335
  %2229 = vmatprep.subr.bf16.mxu0 %v1344
  %2230 = vmatpush1.bf16.msra.mxu0 %v1343
  %2231 = vmatprep.subr.bf16.mxu0 %v1352
  %2232 = vmatpush1.bf16.msra.mxu0 %v1351
  %2233 = vmatprep.subr.bf16.mxu0 %v1360
  %2234 = vmatpush1.bf16.msra.mxu0 %v1359
  %2235 = vmatprep.subr.bf16.mxu0 %v1368
  %2236 = vmatpush1.bf16.msra.mxu0 %v1367
  %2237 = vmatprep.subr.bf16.mxu0 %v1376
  %2238 = vmatpush1.bf16.msra.mxu0 %v1375
  %2239 = vmatprep.subr.bf16.mxu0 %v1384
  %2240 = vmatpush1.bf16.msra.mxu0 %v1383
  %2241 = vmatprep.subr.bf16.mxu0 %v1392
  %2242 = vmatpush1.bf16.msra.mxu0 %v1391
  %2243 = vmatprep.subr.bf16.mxu0 %v1400
  %2244 = vmatpush1.bf16.msra.mxu0 %v1399
  %2245 = vmatprep.subr.bf16.mxu0 %v1408
  %2246 = vmatpush1.bf16.msra.mxu0 %v1407
  %2247 = vmatprep.subr.bf16.mxu0 %v1416
  %2248 = vmatpush1.bf16.msra.mxu0 %v1415
  %2249 = vmatprep.mubr.bf16.mxu0 %v2216
  %2250 = vmatmul.mubr.bf16.gmra.mrb[0].mxu0 %v2215
  %v2251 = vpop.f32.mrb[0].mxu0
  %v2252 = vadd.f32 0.0, %v2251
  %v2253 = vpop.f32.mrb[0].mxu0
  %v2254 = vadd.f32 0.0, %v2253
  %v2255 = vpop.f32.mrb[0].mxu0
  %v2256 = vpop.f32.mrb[0].mxu0
  %2257 = vdwg.mxu0
  %2258 = vmatprep.subr.bf16.mxu0 %v1298
  %2259 = vmatpush1.bf16.msra.mxu0 %v1297
  %2260 = vmatprep.subr.bf16.mxu0 %v1306
  %2261 = vmatpush1.bf16.msra.mxu0 %v1305
  %2262 = vmatprep.subr.bf16.mxu0 %v1314
  %2263 = vmatpush1.bf16.msra.mxu0 %v1313
  %2264 = vmatprep.subr.bf16.mxu0 %v1322
  %2265 = vmatpush1.bf16.msra.mxu0 %v1321
  %2266 = vmatprep.subr.bf16.mxu0 %v1330
  %2267 = vmatpush1.bf16.msra.mxu0 %v1329
  %2268 = vmatprep.subr.bf16.mxu0 %v1338
  %2269 = vmatpush1.bf16.msra.mxu0 %v1337
  %2270 = vmatprep.subr.bf16.mxu0 %v1346
  %2271 = vmatpush1.bf16.msra.mxu0 %v1345
  %2272 = vmatprep.subr.bf16.mxu0 %v1354
  %2273 = vmatpush1.bf16.msra.mxu0 %v1353
  %2274 = vmatprep.subr.bf16.mxu0 %v1362
  %2275 = vmatpush1.bf16.msra.mxu0 %v1361
  %2276 = vmatprep.subr.bf16.mxu0 %v1370
  %2277 = vmatpush1.bf16.msra.mxu0 %v1369
  %2278 = vmatprep.subr.bf16.mxu0 %v1378
  %2279 = vmatpush1.bf16.msra.mxu0 %v1377
  %2280 = vmatprep.subr.bf16.mxu0 %v1386
  %2281 = vmatpush1.bf16.msra.mxu0 %v1385
  %2282 = vmatprep.subr.bf16.mxu0 %v1394
  %2283 = vmatpush1.bf16.msra.mxu0 %v1393
  %2284 = vmatprep.subr.bf16.mxu0 %v1402
  %2285 = vmatpush1.bf16.msra.mxu0 %v1401
  %2286 = vmatprep.subr.bf16.mxu0 %v1410
  %2287 = vmatpush1.bf16.msra.mxu0 %v1409
  %2288 = vmatprep.subr.bf16.mxu0 %v1418
  %2289 = vmatpush1.bf16.msra.mxu0 %v1417
  %2290 = vmatprep.mubr.bf16.mxu0 %v2216
  %2291 = vmatmul.mubr.bf16.gmra.mrb[0].mxu0 %v2215
  %v2292 = vpop.f32.mrb[0].mxu0
  %v2293 = vadd.f32 0.0, %v2292
  %v2294 = vpop.f32.mrb[0].mxu0
  %v2295 = vadd.f32 0.0, %v2294
  %v2296 = vpop.f32.mrb[0].mxu0
  %v2297 = vpop.f32.mrb[0].mxu0
  %2298 = vdwg.mxu0
  %2299 = vmatprep.subr.bf16.mxu0 %v1300
  %2300 = vmatpush1.bf16.msra.mxu0 %v1299
  %2301 = vmatprep.subr.bf16.mxu0 %v1308
  %2302 = vmatpush1.bf16.msra.mxu0 %v1307
  %2303 = vmatprep.subr.bf16.mxu0 %v1316
  %2304 = vmatpush1.bf16.msra.mxu0 %v1315
  %2305 = vmatprep.subr.bf16.mxu0 %v1324
  %2306 = vmatpush1.bf16.msra.mxu0 %v1323
  %2307 = vmatprep.subr.bf16.mxu0 %v1332
  %2308 = vmatpush1.bf16.msra.mxu0 %v1331
  %2309 = vmatprep.subr.bf16.mxu0 %v1340
  %2310 = vmatpush1.bf16.msra.mxu0 %v1339
  %2311 = vmatprep.subr.bf16.mxu0 %v1348
  %2312 = vmatpush1.bf16.msra.mxu0 %v1347
  %2313 = vmatprep.subr.bf16.mxu0 %v1356
  %2314 = vmatpush1.bf16.msra.mxu0 %v1355
  %2315 = vmatprep.subr.bf16.mxu0 %v1364
  %2316 = vmatpush1.bf16.msra.mxu0 %v1363
  %2317 = vmatprep.subr.bf16.mxu0 %v1372
  %2318 = vmatpush1.bf16.msra.mxu0 %v1371
  %2319 = vmatprep.subr.bf16.mxu0 %v1380
  %2320 = vmatpush1.bf16.msra.mxu0 %v1379
  %2321 = vmatprep.subr.bf16.mxu0 %v1388
  %2322 = vmatpush1.bf16.msra.mxu0 %v1387
  %2323 = vmatprep.subr.bf16.mxu0 %v1396
  %2324 = vmatpush1.bf16.msra.mxu0 %v1395
  %2325 = vmatprep.subr.bf16.mxu0 %v1404
  %2326 = vmatpush1.bf16.msra.mxu0 %v1403
  %2327 = vmatprep.subr.bf16.mxu0 %v1412
  %2328 = vmatpush1.bf16.msra.mxu0 %v1411
  %2329 = vmatprep.subr.bf16.mxu0 %v1420
  %2330 = vmatpush1.bf16.msra.mxu0 %v1419
  %2331 = vmatprep.mubr.bf16.mxu0 %v2216
  %2332 = vmatmul.mubr.bf16.gmra.mrb[0].mxu0 %v2215
  %v2333 = vpop.f32.mrb[0].mxu0
  %v2334 = vadd.f32 0.0, %v2333
  %v2335 = vpop.f32.mrb[0].mxu0
  %v2336 = vadd.f32 0.0, %v2335
  %v2337 = vpop.f32.mrb[0].mxu0
  %v2338 = vpop.f32.mrb[0].mxu0
  %2339 = vdwg.mxu0
  %2340 = vmatprep.subr.bf16.mxu0 %v1302
  %2341 = vmatpush1.bf16.msra.mxu0 %v1301
  %2342 = vmatprep.subr.bf16.mxu0 %v1310
  %2343 = vmatpush1.bf16.msra.mxu0 %v1309
  %2344 = vmatprep.subr.bf16.mxu0 %v1318
  %2345 = vmatpush1.bf16.msra.mxu0 %v1317
  %2346 = vmatprep.subr.bf16.mxu0 %v1326
  %2347 = vmatpush1.bf16.msra.mxu0 %v1325
  %2348 = vmatprep.subr.bf16.mxu0 %v1334
  %2349 = vmatpush1.bf16.msra.mxu0 %v1333
  %2350 = vmatprep.subr.bf16.mxu0 %v1342
  %2351 = vmatpush1.bf16.msra.mxu0 %v1341
  %2352 = vmatprep.subr.bf16.mxu0 %v1350
  %2353 = vmatpush1.bf16.msra.mxu0 %v1349
  %2354 = vmatprep.subr.bf16.mxu0 %v1358
  %2355 = vmatpush1.bf16.msra.mxu0 %v1357
  %2356 = vmatprep.subr.bf16.mxu0 %v1366
  %2357 = vmatpush1.bf16.msra.mxu0 %v1365
  %2358 = vmatprep.subr.bf16.mxu0 %v1374
  %2359 = vmatpush1.bf16.msra.mxu0 %v1373
  %2360 = vmatprep.subr.bf16.mxu0 %v1382
  %2361 = vmatpush1.bf16.msra.mxu0 %v1381
  %2362 = vmatprep.subr.bf16.mxu0 %v1390
  %2363 = vmatpush1.bf16.msra.mxu0 %v1389
  %2364 = vmatprep.subr.bf16.mxu0 %v1398
  %2365 = vmatpush1.bf16.msra.mxu0 %v1397
  %2366 = vmatprep.subr.bf16.mxu0 %v1406
  %2367 = vmatpush1.bf16.msra.mxu0 %v1405
  %2368 = vmatprep.subr.bf16.mxu0 %v1414
  %2369 = vmatpush1.bf16.msra.mxu0 %v1413
  %2370 = vmatprep.subr.bf16.mxu0 %v1422
  %2371 = vmatpush1.bf16.msra.mxu0 %v1421
  %2372 = vmatprep.mubr.bf16.mxu0 %v2216
  %2373 = vmatmul.mubr.bf16.gmra.mrb[0].mxu0 %v2215
  %v2374 = vpop.f32.mrb[0].mxu0
  %v2375 = vadd.f32 0.0, %v2374
  %v2376 = vpop.f32.mrb[0].mxu0
  %v2377 = vadd.f32 0.0, %v2376
  %v2378 = vpop.f32.mrb[0].mxu0
  %v2379 = vpop.f32.mrb[0].mxu0
  %2380 = vdwg.mxu0
  %v2381 = vadd.f32 %v2252, %v540
  %v2382 = vadd.f32 %v2254, %v542
  %v2383 = vadd.f32 %v2293, %v613
  %v2384 = vadd.f32 %v2295, %v615
  %v2385 = vadd.f32 %v2334, %v692
  %v2386 = vadd.f32 %v2336, %v694
  %v2387 = vadd.f32 %v2375, %v765
  %v2388 = vadd.f32 %v2377, %v767
  %v2389 = vxor.u32 %v2381, 2147483648
  %v2390 = vxor.u32 %v2382, 2147483648
  %v2391 = vxor.u32 %v2383, 2147483648
  %v2392 = vmul.f32 %v2389, 1.442695
  %v2393 = vpow.pop %v2392
  %v2394 = vmul.f32 %v2390, 1.442695
  %v2395 = vpow.pop %v2394
  %v2396 = vmul.f32 %v2391, 1.442695
  %v2397 = vpow.pop %v2396
  %v2398 = vadd.f32 %v2393, 1.0
  %v2399 = vadd.f32 %v2395, 1.0
  %v2400 = vadd.f32 %v2397, 1.0
  %v2401 = vrcp.pop %v2398
  %v2402 = vmul.f32 1.0, %v2401
  %v2403 = vrcp.pop %v2399
  %v2404 = vmul.f32 1.0, %v2403
  %v2405 = vrcp.pop %v2400
  %v2406 = vmul.f32 1.0, %v2405
  %v2407 = vxor.u32 %v2385, 2147483648
  %v2408 = vxor.u32 %v2386, 2147483648
  %v2409 = vxor.u32 %v2387, 2147483648
  %v2410 = vmul.f32 %v2407, 1.442695
  %v2411 = vpow.pop %v2410
  %v2412 = vmul.f32 %v2408, 1.442695
  %v2413 = vpow.pop %v2412
  %v2414 = vmul.f32 %v2409, 1.442695
  %v2415 = vpow.pop %v2414
  %v2416 = vadd.f32 %v2411, 1.0
  %v2417 = vadd.f32 %v2413, 1.0
  %v2418 = vadd.f32 %v2415, 1.0
  %v2419 = vrcp.pop %v2416
  %v2420 = vmul.f32 1.0, %v2419
  %v2421 = vrcp.pop %v2417
  %v2422 = vmul.f32 1.0, %v2421
  %v2423 = vrcp.pop %v2418
  %v2424 = vmul.f32 1.0, %v2423
  %v2425 = vtanh.pop %v2384
  %v2426 = vtanh.pop %v2388
  %v2427 = vmul.f32 %v2404, %v2207
  %v2428 = vmul.f32 %v2402, %v2425
  %v2429 = vadd.f32 %v2427, %v2428
  %v2430 = vmul.f32 %v2422, %v2210
  %v2431 = vmul.f32 %v2420, %v2426
  %v2432 = vadd.f32 %v2430, %v2431
  %v2433 = vtanh.pop %v2429
  %v2434 = vmul.f32 %v2406, %v2433
  %v2435 = vtanh.pop %v2432
  %v2436 = vmul.f32 %v2424, %v2435
  %v2437 = vpack.c.bf16 %v2434, %v2434
  %v2438 = vpack.c.bf16 %v2436, %v2436
  %2439 = vmatprep.subr.bf16.mxu0 %v1296
  %2440 = vmatpush1.bf16.msra.mxu0 %v1295
  %2441 = vmatprep.subr.bf16.mxu0 %v1304
  %2442 = vmatpush1.bf16.msra.mxu0 %v1303
  %2443 = vmatprep.subr.bf16.mxu0 %v1312
  %2444 = vmatpush1.bf16.msra.mxu0 %v1311
  %2445 = vmatprep.subr.bf16.mxu0 %v1320
  %2446 = vmatpush1.bf16.msra.mxu0 %v1319
  %2447 = vmatprep.subr.bf16.mxu0 %v1328
  %2448 = vmatpush1.bf16.msra.mxu0 %v1327
  %2449 = vmatprep.subr.bf16.mxu0 %v1336
  %2450 = vmatpush1.bf16.msra.mxu0 %v1335
  %2451 = vmatprep.subr.bf16.mxu0 %v1344
  %2452 = vmatpush1.bf16.msra.mxu0 %v1343
  %2453 = vmatprep.subr.bf16.mxu0 %v1352
  %2454 = vmatpush1.bf16.msra.mxu0 %v1351
  %2455 = vmatprep.subr.bf16.mxu0 %v1360
  %2456 = vmatpush1.bf16.msra.mxu0 %v1359
  %2457 = vmatprep.subr.bf16.mxu0 %v1368
  %2458 = vmatpush1.bf16.msra.mxu0 %v1367
  %2459 = vmatprep.subr.bf16.mxu0 %v1376
  %2460 = vmatpush1.bf16.msra.mxu0 %v1375
  %2461 = vmatprep.subr.bf16.mxu0 %v1384
  %2462 = vmatpush1.bf16.msra.mxu0 %v1383
  %2463 = vmatprep.subr.bf16.mxu0 %v1392
  %2464 = vmatpush1.bf16.msra.mxu0 %v1391
  %2465 = vmatprep.subr.bf16.mxu0 %v1400
  %2466 = vmatpush1.bf16.msra.mxu0 %v1399
  %2467 = vmatprep.subr.bf16.mxu0 %v1408
  %2468 = vmatpush1.bf16.msra.mxu0 %v1407
  %2469 = vmatprep.subr.bf16.mxu0 %v1416
  %2470 = vmatpush1.bf16.msra.mxu0 %v1415
  %2471 = vmatprep.mubr.bf16.mxu0 %v2438
  %2472 = vmatmul.mubr.bf16.gmra.mrb[0].mxu0 %v2437
  %v2473 = vpop.f32.mrb[0].mxu0
  %v2474 = vadd.f32 0.0, %v2473
  %v2475 = vpop.f32.mrb[0].mxu0
  %v2476 = vadd.f32 0.0, %v2475
  %v2477 = vpop.f32.mrb[0].mxu0
  %v2478 = vpop.f32.mrb[0].mxu0
  %2479 = vdwg.mxu0
  %2480 = vmatprep.subr.bf16.mxu0 %v1298
  %2481 = vmatpush1.bf16.msra.mxu0 %v1297
  %2482 = vmatprep.subr.bf16.mxu0 %v1306
  %2483 = vmatpush1.bf16.msra.mxu0 %v1305
  %2484 = vmatprep.subr.bf16.mxu0 %v1314
  %2485 = vmatpush1.bf16.msra.mxu0 %v1313
  %2486 = vmatprep.subr.bf16.mxu0 %v1322
  %2487 = vmatpush1.bf16.msra.mxu0 %v1321
  %2488 = vmatprep.subr.bf16.mxu0 %v1330
  %2489 = vmatpush1.bf16.msra.mxu0 %v1329
  %2490 = vmatprep.subr.bf16.mxu0 %v1338
  %2491 = vmatpush1.bf16.msra.mxu0 %v1337
  %2492 = vmatprep.subr.bf16.mxu0 %v1346
  %2493 = vmatpush1.bf16.msra.mxu0 %v1345
  %2494 = vmatprep.subr.bf16.mxu0 %v1354
  %2495 = vmatpush1.bf16.msra.mxu0 %v1353
  %2496 = vmatprep.subr.bf16.mxu0 %v1362
  %2497 = vmatpush1.bf16.msra.mxu0 %v1361
  %2498 = vmatprep.subr.bf16.mxu0 %v1370
  %2499 = vmatpush1.bf16.msra.mxu0 %v1369
  %2500 = vmatprep.subr.bf16.mxu0 %v1378
  %2501 = vmatpush1.bf16.msra.mxu0 %v1377
  %2502 = vmatprep.subr.bf16.mxu0 %v1386
  %2503 = vmatpush1.bf16.msra.mxu0 %v1385
  %2504 = vmatprep.subr.bf16.mxu0 %v1394
  %2505 = vmatpush1.bf16.msra.mxu0 %v1393
  %2506 = vmatprep.subr.bf16.mxu0 %v1402
  %2507 = vmatpush1.bf16.msra.mxu0 %v1401
  %2508 = vmatprep.subr.bf16.mxu0 %v1410
  %2509 = vmatpush1.bf16.msra.mxu0 %v1409
  %2510 = vmatprep.subr.bf16.mxu0 %v1418
  %2511 = vmatpush1.bf16.msra.mxu0 %v1417
  %2512 = vmatprep.mubr.bf16.mxu0 %v2438
  %2513 = vmatmul.mubr.bf16.gmra.mrb[0].mxu0 %v2437
  %v2514 = vpop.f32.mrb[0].mxu0
  %v2515 = vadd.f32 0.0, %v2514
  %v2516 = vpop.f32.mrb[0].mxu0
  %v2517 = vadd.f32 0.0, %v2516
  %v2518 = vpop.f32.mrb[0].mxu0
  %v2519 = vpop.f32.mrb[0].mxu0
  %2520 = vdwg.mxu0
  %2521 = vmatprep.subr.bf16.mxu0 %v1300
  %2522 = vmatpush1.bf16.msra.mxu0 %v1299
  %2523 = vmatprep.subr.bf16.mxu0 %v1308
  %2524 = vmatpush1.bf16.msra.mxu0 %v1307
  %2525 = vmatprep.subr.bf16.mxu0 %v1316
  %2526 = vmatpush1.bf16.msra.mxu0 %v1315
  %2527 = vmatprep.subr.bf16.mxu0 %v1324
  %2528 = vmatpush1.bf16.msra.mxu0 %v1323
  %2529 = vmatprep.subr.bf16.mxu0 %v1332
  %2530 = vmatpush1.bf16.msra.mxu0 %v1331
  %2531 = vmatprep.subr.bf16.mxu0 %v1340
  %2532 = vmatpush1.bf16.msra.mxu0 %v1339
  %2533 = vmatprep.subr.bf16.mxu0 %v1348
  %2534 = vmatpush1.bf16.msra.mxu0 %v1347
  %2535 = vmatprep.subr.bf16.mxu0 %v1356
  %2536 = vmatpush1.bf16.msra.mxu0 %v1355
  %2537 = vmatprep.subr.bf16.mxu0 %v1364
  %2538 = vmatpush1.bf16.msra.mxu0 %v1363
  %2539 = vmatprep.subr.bf16.mxu0 %v1372
  %2540 = vmatpush1.bf16.msra.mxu0 %v1371
  %2541 = vmatprep.subr.bf16.mxu0 %v1380
  %2542 = vmatpush1.bf16.msra.mxu0 %v1379
  %2543 = vmatprep.subr.bf16.mxu0 %v1388
  %2544 = vmatpush1.bf16.msra.mxu0 %v1387
  %2545 = vmatprep.subr.bf16.mxu0 %v1396
  %2546 = vmatpush1.bf16.msra.mxu0 %v1395
  %2547 = vmatprep.subr.bf16.mxu0 %v1404
  %2548 = vmatpush1.bf16.msra.mxu0 %v1403
  %2549 = vmatprep.subr.bf16.mxu0 %v1412
  %2550 = vmatpush1.bf16.msra.mxu0 %v1411
  %2551 = vmatprep.subr.bf16.mxu0 %v1420
  %2552 = vmatpush1.bf16.msra.mxu0 %v1419
  %2553 = vmatprep.mubr.bf16.mxu0 %v2438
  %2554 = vmatmul.mubr.bf16.gmra.mrb[0].mxu0 %v2437
  %v2555 = vpop.f32.mrb[0].mxu0
  %v2556 = vadd.f32 0.0, %v2555
  %v2557 = vpop.f32.mrb[0].mxu0
  %v2558 = vadd.f32 0.0, %v2557
  %v2559 = vpop.f32.mrb[0].mxu0
  %v2560 = vpop.f32.mrb[0].mxu0
  %2561 = vdwg.mxu0
  %2562 = vmatprep.subr.bf16.mxu0 %v1302
  %2563 = vmatpush1.bf16.msra.mxu0 %v1301
  %2564 = vmatprep.subr.bf16.mxu0 %v1310
  %2565 = vmatpush1.bf16.msra.mxu0 %v1309
  %2566 = vmatprep.subr.bf16.mxu0 %v1318
  %2567 = vmatpush1.bf16.msra.mxu0 %v1317
  %2568 = vmatprep.subr.bf16.mxu0 %v1326
  %2569 = vmatpush1.bf16.msra.mxu0 %v1325
  %2570 = vmatprep.subr.bf16.mxu0 %v1334
  %2571 = vmatpush1.bf16.msra.mxu0 %v1333
  %2572 = vmatprep.subr.bf16.mxu0 %v1342
  %2573 = vmatpush1.bf16.msra.mxu0 %v1341
  %2574 = vmatprep.subr.bf16.mxu0 %v1350
  %2575 = vmatpush1.bf16.msra.mxu0 %v1349
  %2576 = vmatprep.subr.bf16.mxu0 %v1358
  %2577 = vmatpush1.bf16.msra.mxu0 %v1357
  %2578 = vmatprep.subr.bf16.mxu0 %v1366
  %2579 = vmatpush1.bf16.msra.mxu0 %v1365
  %2580 = vmatprep.subr.bf16.mxu0 %v1374
  %2581 = vmatpush1.bf16.msra.mxu0 %v1373
  %2582 = vmatprep.subr.bf16.mxu0 %v1382
  %2583 = vmatpush1.bf16.msra.mxu0 %v1381
  %2584 = vmatprep.subr.bf16.mxu0 %v1390
  %2585 = vmatpush1.bf16.msra.mxu0 %v1389
  %2586 = vmatprep.subr.bf16.mxu0 %v1398
  %2587 = vmatpush1.bf16.msra.mxu0 %v1397
  %2588 = vmatprep.subr.bf16.mxu0 %v1406
  %2589 = vmatpush1.bf16.msra.mxu0 %v1405
  %2590 = vmatprep.subr.bf16.mxu0 %v1414
  %2591 = vmatpush1.bf16.msra.mxu0 %v1413
  %2592 = vmatprep.subr.bf16.mxu0 %v1422
  %2593 = vmatpush1.bf16.msra.mxu0 %v1421
  %2594 = vmatprep.mubr.bf16.mxu0 %v2438
  %2595 = vmatmul.mubr.bf16.gmra.mrb[0].mxu0 %v2437
  %v2596 = vpop.f32.mrb[0].mxu0
  %v2597 = vadd.f32 0.0, %v2596
  %v2598 = vpop.f32.mrb[0].mxu0
  %v2599 = vadd.f32 0.0, %v2598
  %v2600 = vpop.f32.mrb[0].mxu0
  %v2601 = vpop.f32.mrb[0].mxu0
  %2602 = vdwg.mxu0
  %v2603 = vadd.f32 %v2474, %v546
  %v2604 = vadd.f32 %v2476, %v548
  %v2605 = vadd.f32 %v2515, %v619
  %v2606 = vadd.f32 %v2517, %v621
  %v2607 = vadd.f32 %v2556, %v686
  %v2608 = vadd.f32 %v2558, %v688
  %v2609 = vadd.f32 %v2597, %v759
  %v2610 = vadd.f32 %v2599, %v761
  %v2611 = vxor.u32 %v2603, 2147483648
  %v2612 = vxor.u32 %v2604, 2147483648
  %v2613 = vxor.u32 %v2605, 2147483648
  %v2614 = vmul.f32 %v2611, 1.442695
  %v2615 = vpow.pop %v2614
  %v2616 = vmul.f32 %v2612, 1.442695
  %v2617 = vpow.pop %v2616
  %v2618 = vmul.f32 %v2613, 1.442695
  %v2619 = vpow.pop %v2618
  %v2620 = vadd.f32 %v2615, 1.0
  %v2621 = vadd.f32 %v2617, 1.0
  %v2622 = vadd.f32 %v2619, 1.0
  %v2623 = vrcp.pop %v2620
  %v2624 = vmul.f32 1.0, %v2623
  %v2625 = vrcp.pop %v2621
  %v2626 = vmul.f32 1.0, %v2625
  %v2627 = vrcp.pop %v2622
  %v2628 = vmul.f32 1.0, %v2627
  %v2629 = vxor.u32 %v2607, 2147483648
  %v2630 = vxor.u32 %v2608, 2147483648
  %v2631 = vxor.u32 %v2609, 2147483648
  %v2632 = vmul.f32 %v2629, 1.442695
  %v2633 = vpow.pop %v2632
  %v2634 = vmul.f32 %v2630, 1.442695
  %v2635 = vpow.pop %v2634
  %v2636 = vmul.f32 %v2631, 1.442695
  %v2637 = vpow.pop %v2636
  %v2638 = vadd.f32 %v2633, 1.0
  %v2639 = vadd.f32 %v2635, 1.0
  %v2640 = vadd.f32 %v2637, 1.0
  %v2641 = vrcp.pop %v2638
  %v2642 = vmul.f32 1.0, %v2641
  %v2643 = vrcp.pop %v2639
  %v2644 = vmul.f32 1.0, %v2643
  %v2645 = vrcp.pop %v2640
  %v2646 = vmul.f32 1.0, %v2645
  %v2647 = vtanh.pop %v2606
  %v2648 = vtanh.pop %v2610
  %v2649 = vmul.f32 %v2626, %v2429
  %v2650 = vmul.f32 %v2624, %v2647
  %v2651 = vadd.f32 %v2649, %v2650
  %v2652 = vmul.f32 %v2644, %v2432
  %v2653 = vmul.f32 %v2642, %v2648
  %v2654 = vadd.f32 %v2652, %v2653
  %v2655 = vtanh.pop %v2651
  %v2656 = vmul.f32 %v2628, %v2655
  %v2657 = vtanh.pop %v2654
  %v2658 = vmul.f32 %v2646, %v2657
  %v2659 = vpack.c.bf16 %v2656, %v2656
  %v2660 = vpack.c.bf16 %v2658, %v2658
  %2661 = vmatprep.subr.bf16.mxu0 %v1296
  %2662 = vmatpush1.bf16.msra.mxu0 %v1295
  %2663 = vmatprep.subr.bf16.mxu0 %v1304
  %2664 = vmatpush1.bf16.msra.mxu0 %v1303
  %2665 = vmatprep.subr.bf16.mxu0 %v1312
  %2666 = vmatpush1.bf16.msra.mxu0 %v1311
  %2667 = vmatprep.subr.bf16.mxu0 %v1320
  %2668 = vmatpush1.bf16.msra.mxu0 %v1319
  %2669 = vmatprep.subr.bf16.mxu0 %v1328
  %2670 = vmatpush1.bf16.msra.mxu0 %v1327
  %2671 = vmatprep.subr.bf16.mxu0 %v1336
  %2672 = vmatpush1.bf16.msra.mxu0 %v1335
  %2673 = vmatprep.subr.bf16.mxu0 %v1344
  %2674 = vmatpush1.bf16.msra.mxu0 %v1343
  %2675 = vmatprep.subr.bf16.mxu0 %v1352
  %2676 = vmatpush1.bf16.msra.mxu0 %v1351
  %2677 = vmatprep.subr.bf16.mxu0 %v1360
  %2678 = vmatpush1.bf16.msra.mxu0 %v1359
  %2679 = vmatprep.subr.bf16.mxu0 %v1368
  %2680 = vmatpush1.bf16.msra.mxu0 %v1367
  %2681 = vmatprep.subr.bf16.mxu0 %v1376
  %2682 = vmatpush1.bf16.msra.mxu0 %v1375
  %2683 = vmatprep.subr.bf16.mxu0 %v1384
  %2684 = vmatpush1.bf16.msra.mxu0 %v1383
  %2685 = vmatprep.subr.bf16.mxu0 %v1392
  %2686 = vmatpush1.bf16.msra.mxu0 %v1391
  %2687 = vmatprep.subr.bf16.mxu0 %v1400
  %2688 = vmatpush1.bf16.msra.mxu0 %v1399
  %2689 = vmatprep.subr.bf16.mxu0 %v1408
  %2690 = vmatpush1.bf16.msra.mxu0 %v1407
  %2691 = vmatprep.subr.bf16.mxu0 %v1416
  %2692 = vmatpush1.bf16.msra.mxu0 %v1415
  %2693 = vmatprep.mubr.bf16.mxu0 %v2660
  %2694 = vmatmul.mubr.bf16.gmra.mrb[0].mxu0 %v2659
  %v2695 = vpop.f32.mrb[0].mxu0
  %v2696 = vadd.f32 0.0, %v2695
  %v2697 = vpop.f32.mrb[0].mxu0
  %v2698 = vadd.f32 0.0, %v2697
  %v2699 = vpop.f32.mrb[0].mxu0
  %v2700 = vpop.f32.mrb[0].mxu0
  %2701 = vdwg.mxu0
  %2702 = vmatprep.subr.bf16.mxu0 %v1298
  %2703 = vmatpush1.bf16.msra.mxu0 %v1297
  %2704 = vmatprep.subr.bf16.mxu0 %v1306
  %2705 = vmatpush1.bf16.msra.mxu0 %v1305
  %2706 = vmatprep.subr.bf16.mxu0 %v1314
  %2707 = vmatpush1.bf16.msra.mxu0 %v1313
  %2708 = vmatprep.subr.bf16.mxu0 %v1322
  %2709 = vmatpush1.bf16.msra.mxu0 %v1321
  %2710 = vmatprep.subr.bf16.mxu0 %v1330
  %2711 = vmatpush1.bf16.msra.mxu0 %v1329
  %2712 = vmatprep.subr.bf16.mxu0 %v1338
  %2713 = vmatpush1.bf16.msra.mxu0 %v1337
  %2714 = vmatprep.subr.bf16.mxu0 %v1346
  %2715 = vmatpush1.bf16.msra.mxu0 %v1345
  %2716 = vmatprep.subr.bf16.mxu0 %v1354
  %2717 = vmatpush1.bf16.msra.mxu0 %v1353
  %2718 = vmatprep.subr.bf16.mxu0 %v1362
  %2719 = vmatpush1.bf16.msra.mxu0 %v1361
  %2720 = vmatprep.subr.bf16.mxu0 %v1370
  %2721 = vmatpush1.bf16.msra.mxu0 %v1369
  %2722 = vmatprep.subr.bf16.mxu0 %v1378
  %2723 = vmatpush1.bf16.msra.mxu0 %v1377
  %2724 = vmatprep.subr.bf16.mxu0 %v1386
  %2725 = vmatpush1.bf16.msra.mxu0 %v1385
  %2726 = vmatprep.subr.bf16.mxu0 %v1394
  %2727 = vmatpush1.bf16.msra.mxu0 %v1393
  %2728 = vmatprep.subr.bf16.mxu0 %v1402
  %2729 = vmatpush1.bf16.msra.mxu0 %v1401
  %2730 = vmatprep.subr.bf16.mxu0 %v1410
  %2731 = vmatpush1.bf16.msra.mxu0 %v1409
  %2732 = vmatprep.subr.bf16.mxu0 %v1418
  %2733 = vmatpush1.bf16.msra.mxu0 %v1417
  %2734 = vmatprep.mubr.bf16.mxu0 %v2660
  %2735 = vmatmul.mubr.bf16.gmra.mrb[0].mxu0 %v2659
  %v2736 = vpop.f32.mrb[0].mxu0
  %v2737 = vadd.f32 0.0, %v2736
  %v2738 = vpop.f32.mrb[0].mxu0
  %v2739 = vadd.f32 0.0, %v2738
  %v2740 = vpop.f32.mrb[0].mxu0
  %v2741 = vpop.f32.mrb[0].mxu0
  %2742 = vdwg.mxu0
  %2743 = vmatprep.subr.bf16.mxu0 %v1300
  %2744 = vmatpush1.bf16.msra.mxu0 %v1299
  %2745 = vmatprep.subr.bf16.mxu0 %v1308
  %2746 = vmatpush1.bf16.msra.mxu0 %v1307
  %2747 = vmatprep.subr.bf16.mxu0 %v1316
  %2748 = vmatpush1.bf16.msra.mxu0 %v1315
  %2749 = vmatprep.subr.bf16.mxu0 %v1324
  %2750 = vmatpush1.bf16.msra.mxu0 %v1323
  %2751 = vmatprep.subr.bf16.mxu0 %v1332
  %2752 = vmatpush1.bf16.msra.mxu0 %v1331
  %2753 = vmatprep.subr.bf16.mxu0 %v1340
  %2754 = vmatpush1.bf16.msra.mxu0 %v1339
  %2755 = vmatprep.subr.bf16.mxu0 %v1348
  %2756 = vmatpush1.bf16.msra.mxu0 %v1347
  %2757 = vmatprep.subr.bf16.mxu0 %v1356
  %2758 = vmatpush1.bf16.msra.mxu0 %v1355
  %2759 = vmatprep.subr.bf16.mxu0 %v1364
  %2760 = vmatpush1.bf16.msra.mxu0 %v1363
  %2761 = vmatprep.subr.bf16.mxu0 %v1372
  %2762 = vmatpush1.bf16.msra.mxu0 %v1371
  %2763 = vmatprep.subr.bf16.mxu0 %v1380
  %2764 = vmatpush1.bf16.msra.mxu0 %v1379
  %2765 = vmatprep.subr.bf16.mxu0 %v1388
  %2766 = vmatpush1.bf16.msra.mxu0 %v1387
  %2767 = vmatprep.subr.bf16.mxu0 %v1396
  %2768 = vmatpush1.bf16.msra.mxu0 %v1395
  %2769 = vmatprep.subr.bf16.mxu0 %v1404
  %2770 = vmatpush1.bf16.msra.mxu0 %v1403
  %2771 = vmatprep.subr.bf16.mxu0 %v1412
  %2772 = vmatpush1.bf16.msra.mxu0 %v1411
  %2773 = vmatprep.subr.bf16.mxu0 %v1420
  %2774 = vmatpush1.bf16.msra.mxu0 %v1419
  %2775 = vmatprep.mubr.bf16.mxu0 %v2660
  %2776 = vmatmul.mubr.bf16.gmra.mrb[0].mxu0 %v2659
  %v2777 = vpop.f32.mrb[0].mxu0
  %v2778 = vadd.f32 0.0, %v2777
  %v2779 = vpop.f32.mrb[0].mxu0
  %v2780 = vadd.f32 0.0, %v2779
  %v2781 = vpop.f32.mrb[0].mxu0
  %v2782 = vpop.f32.mrb[0].mxu0
  %2783 = vdwg.mxu0
  %2784 = vmatprep.subr.bf16.mxu0 %v1302
  %2785 = vmatpush1.bf16.msra.mxu0 %v1301
  %2786 = vmatprep.subr.bf16.mxu0 %v1310
  %2787 = vmatpush1.bf16.msra.mxu0 %v1309
  %2788 = vmatprep.subr.bf16.mxu0 %v1318
  %2789 = vmatpush1.bf16.msra.mxu0 %v1317
  %2790 = vmatprep.subr.bf16.mxu0 %v1326
  %2791 = vmatpush1.bf16.msra.mxu0 %v1325
  %2792 = vmatprep.subr.bf16.mxu0 %v1334
  %2793 = vmatpush1.bf16.msra.mxu0 %v1333
  %2794 = vmatprep.subr.bf16.mxu0 %v1342
  %2795 = vmatpush1.bf16.msra.mxu0 %v1341
  %2796 = vmatprep.subr.bf16.mxu0 %v1350
  %2797 = vmatpush1.bf16.msra.mxu0 %v1349
  %2798 = vmatprep.subr.bf16.mxu0 %v1358
  %2799 = vmatpush1.bf16.msra.mxu0 %v1357
  %2800 = vmatprep.subr.bf16.mxu0 %v1366
  %2801 = vmatpush1.bf16.msra.mxu0 %v1365
  %2802 = vmatprep.subr.bf16.mxu0 %v1374
  %2803 = vmatpush1.bf16.msra.mxu0 %v1373
  %2804 = vmatprep.subr.bf16.mxu0 %v1382
  %2805 = vmatpush1.bf16.msra.mxu0 %v1381
  %2806 = vmatprep.subr.bf16.mxu0 %v1390
  %2807 = vmatpush1.bf16.msra.mxu0 %v1389
  %2808 = vmatprep.subr.bf16.mxu0 %v1398
  %2809 = vmatpush1.bf16.msra.mxu0 %v1397
  %2810 = vmatprep.subr.bf16.mxu0 %v1406
  %2811 = vmatpush1.bf16.msra.mxu0 %v1405
  %2812 = vmatprep.subr.bf16.mxu0 %v1414
  %2813 = vmatpush1.bf16.msra.mxu0 %v1413
  %2814 = vmatprep.subr.bf16.mxu0 %v1422
  %2815 = vmatpush1.bf16.msra.mxu0 %v1421
  %2816 = vmatprep.mubr.bf16.mxu0 %v2660
  %2817 = vmatmul.mubr.bf16.gmra.mrb[0].mxu0 %v2659
  %v2818 = vpop.f32.mrb[0].mxu0
  %v2819 = vadd.f32 0.0, %v2818
  %v2820 = vpop.f32.mrb[0].mxu0
  %v2821 = vadd.f32 0.0, %v2820
  %v2822 = vpop.f32.mrb[0].mxu0
  %v2823 = vpop.f32.mrb[0].mxu0
  %2824 = vdwg.mxu0
  %v2825 = vadd.f32 %v2696, %v550
  %v2826 = vadd.f32 %v2698, %v552
  %v2827 = vadd.f32 %v2737, %v623
  %v2828 = vadd.f32 %v2739, %v625
  %v2829 = vadd.f32 %v2778, %v682
  %v2830 = vadd.f32 %v2780, %v684
  %v2831 = vadd.f32 %v2819, %v755
  %v2832 = vadd.f32 %v2821, %v757
  %v2833 = vxor.u32 %v2825, 2147483648
  %v2834 = vxor.u32 %v2826, 2147483648
  %v2835 = vxor.u32 %v2827, 2147483648
  %v2836 = vmul.f32 %v2833, 1.442695
  %v2837 = vpow.pop %v2836
  %v2838 = vmul.f32 %v2834, 1.442695
  %v2839 = vpow.pop %v2838
  %v2840 = vmul.f32 %v2835, 1.442695
  %v2841 = vpow.pop %v2840
  %v2842 = vadd.f32 %v2837, 1.0
  %v2843 = vadd.f32 %v2839, 1.0
  %v2844 = vadd.f32 %v2841, 1.0
  %v2845 = vrcp.pop %v2842
  %v2846 = vmul.f32 1.0, %v2845
  %v2847 = vrcp.pop %v2843
  %v2848 = vmul.f32 1.0, %v2847
  %v2849 = vrcp.pop %v2844
  %v2850 = vmul.f32 1.0, %v2849
  %v2851 = vxor.u32 %v2829, 2147483648
  %v2852 = vxor.u32 %v2830, 2147483648
  %v2853 = vxor.u32 %v2831, 2147483648
  %v2854 = vmul.f32 %v2851, 1.442695
  %v2855 = vpow.pop %v2854
  %v2856 = vmul.f32 %v2852, 1.442695
  %v2857 = vpow.pop %v2856
  %v2858 = vmul.f32 %v2853, 1.442695
  %v2859 = vpow.pop %v2858
  %v2860 = vadd.f32 %v2855, 1.0
  %v2861 = vadd.f32 %v2857, 1.0
  %v2862 = vadd.f32 %v2859, 1.0
  %v2863 = vrcp.pop %v2860
  %v2864 = vmul.f32 1.0, %v2863
  %v2865 = vrcp.pop %v2861
  %v2866 = vmul.f32 1.0, %v2865
  %v2867 = vrcp.pop %v2862
  %v2868 = vmul.f32 1.0, %v2867
  %v2869 = vtanh.pop %v2828
  %v2870 = vtanh.pop %v2832
  %v2871 = vmul.f32 %v2848, %v2651
  %v2872 = vmul.f32 %v2846, %v2869
  %v2873 = vadd.f32 %v2871, %v2872
  %v2874 = vmul.f32 %v2866, %v2654
  %v2875 = vmul.f32 %v2864, %v2870
  %v2876 = vadd.f32 %v2874, %v2875
  %v2877 = vtanh.pop %v2873
  %v2878 = vmul.f32 %v2850, %v2877
  %v2879 = vtanh.pop %v2876
  %v2880 = vmul.f32 %v2868, %v2879
  %v2881 = vpack.c.bf16 %v2878, %v2878
  %v2882 = vpack.c.bf16 %v2880, %v2880
  %2883 = vmatprep.subr.bf16.mxu0 %v1296
  %2884 = vmatpush1.bf16.msra.mxu0 %v1295
  %2885 = vmatprep.subr.bf16.mxu0 %v1304
  %2886 = vmatpush1.bf16.msra.mxu0 %v1303
  %2887 = vmatprep.subr.bf16.mxu0 %v1312
  %2888 = vmatpush1.bf16.msra.mxu0 %v1311
  %2889 = vmatprep.subr.bf16.mxu0 %v1320
  %2890 = vmatpush1.bf16.msra.mxu0 %v1319
  %2891 = vmatprep.subr.bf16.mxu0 %v1328
  %2892 = vmatpush1.bf16.msra.mxu0 %v1327
  %2893 = vmatprep.subr.bf16.mxu0 %v1336
  %2894 = vmatpush1.bf16.msra.mxu0 %v1335
  %2895 = vmatprep.subr.bf16.mxu0 %v1344
  %2896 = vmatpush1.bf16.msra.mxu0 %v1343
  %2897 = vmatprep.subr.bf16.mxu0 %v1352
  %2898 = vmatpush1.bf16.msra.mxu0 %v1351
  %2899 = vmatprep.subr.bf16.mxu0 %v1360
  %2900 = vmatpush1.bf16.msra.mxu0 %v1359
  %2901 = vmatprep.subr.bf16.mxu0 %v1368
  %2902 = vmatpush1.bf16.msra.mxu0 %v1367
  %2903 = vmatprep.subr.bf16.mxu0 %v1376
  %2904 = vmatpush1.bf16.msra.mxu0 %v1375
  %2905 = vmatprep.subr.bf16.mxu0 %v1384
  %2906 = vmatpush1.bf16.msra.mxu0 %v1383
  %2907 = vmatprep.subr.bf16.mxu0 %v1392
  %2908 = vmatpush1.bf16.msra.mxu0 %v1391
  %2909 = vmatprep.subr.bf16.mxu0 %v1400
  %2910 = vmatpush1.bf16.msra.mxu0 %v1399
  %2911 = vmatprep.subr.bf16.mxu0 %v1408
  %2912 = vmatpush1.bf16.msra.mxu0 %v1407
  %2913 = vmatprep.subr.bf16.mxu0 %v1416
  %2914 = vmatpush1.bf16.msra.mxu0 %v1415
  %2915 = vmatprep.mubr.bf16.mxu0 %v2882
  %2916 = vmatmul.mubr.bf16.gmra.mrb[0].mxu0 %v2881
  %v2917 = vpop.f32.mrb[0].mxu0
  %v2918 = vadd.f32 0.0, %v2917
  %v2919 = vpop.f32.mrb[0].mxu0
  %v2920 = vadd.f32 0.0, %v2919
  %v2921 = vpop.f32.mrb[0].mxu0
  %v2922 = vpop.f32.mrb[0].mxu0
  %2923 = vdwg.mxu0
  %2924 = vmatprep.subr.bf16.mxu0 %v1298
  %2925 = vmatpush1.bf16.msra.mxu0 %v1297
  %2926 = vmatprep.subr.bf16.mxu0 %v1306
  %2927 = vmatpush1.bf16.msra.mxu0 %v1305
  %2928 = vmatprep.subr.bf16.mxu0 %v1314
  %2929 = vmatpush1.bf16.msra.mxu0 %v1313
  %2930 = vmatprep.subr.bf16.mxu0 %v1322
  %2931 = vmatpush1.bf16.msra.mxu0 %v1321
  %2932 = vmatprep.subr.bf16.mxu0 %v1330
  %2933 = vmatpush1.bf16.msra.mxu0 %v1329
  %2934 = vmatprep.subr.bf16.mxu0 %v1338
  %2935 = vmatpush1.bf16.msra.mxu0 %v1337
  %2936 = vmatprep.subr.bf16.mxu0 %v1346
  %2937 = vmatpush1.bf16.msra.mxu0 %v1345
  %2938 = vmatprep.subr.bf16.mxu0 %v1354
  %2939 = vmatpush1.bf16.msra.mxu0 %v1353
  %2940 = vmatprep.subr.bf16.mxu0 %v1362
  %2941 = vmatpush1.bf16.msra.mxu0 %v1361
  %2942 = vmatprep.subr.bf16.mxu0 %v1370
  %2943 = vmatpush1.bf16.msra.mxu0 %v1369
  %2944 = vmatprep.subr.bf16.mxu0 %v1378
  %2945 = vmatpush1.bf16.msra.mxu0 %v1377
  %2946 = vmatprep.subr.bf16.mxu0 %v1386
  %2947 = vmatpush1.bf16.msra.mxu0 %v1385
  %2948 = vmatprep.subr.bf16.mxu0 %v1394
  %2949 = vmatpush1.bf16.msra.mxu0 %v1393
  %2950 = vmatprep.subr.bf16.mxu0 %v1402
  %2951 = vmatpush1.bf16.msra.mxu0 %v1401
  %2952 = vmatprep.subr.bf16.mxu0 %v1410
  %2953 = vmatpush1.bf16.msra.mxu0 %v1409
  %2954 = vmatprep.subr.bf16.mxu0 %v1418
  %2955 = vmatpush1.bf16.msra.mxu0 %v1417
  %2956 = vmatprep.mubr.bf16.mxu0 %v2882
  %2957 = vmatmul.mubr.bf16.gmra.mrb[0].mxu0 %v2881
  %v2958 = vpop.f32.mrb[0].mxu0
  %v2959 = vadd.f32 0.0, %v2958
  %v2960 = vpop.f32.mrb[0].mxu0
  %v2961 = vadd.f32 0.0, %v2960
  %v2962 = vpop.f32.mrb[0].mxu0
  %v2963 = vpop.f32.mrb[0].mxu0
  %2964 = vdwg.mxu0
  %2965 = vmatprep.subr.bf16.mxu0 %v1300
  %2966 = vmatpush1.bf16.msra.mxu0 %v1299
  %2967 = vmatprep.subr.bf16.mxu0 %v1308
  %2968 = vmatpush1.bf16.msra.mxu0 %v1307
  %2969 = vmatprep.subr.bf16.mxu0 %v1316
  %2970 = vmatpush1.bf16.msra.mxu0 %v1315
  %2971 = vmatprep.subr.bf16.mxu0 %v1324
  %2972 = vmatpush1.bf16.msra.mxu0 %v1323
  %2973 = vmatprep.subr.bf16.mxu0 %v1332
  %2974 = vmatpush1.bf16.msra.mxu0 %v1331
  %2975 = vmatprep.subr.bf16.mxu0 %v1340
  %2976 = vmatpush1.bf16.msra.mxu0 %v1339
  %2977 = vmatprep.subr.bf16.mxu0 %v1348
  %2978 = vmatpush1.bf16.msra.mxu0 %v1347
  %2979 = vmatprep.subr.bf16.mxu0 %v1356
  %2980 = vmatpush1.bf16.msra.mxu0 %v1355
  %2981 = vmatprep.subr.bf16.mxu0 %v1364
  %2982 = vmatpush1.bf16.msra.mxu0 %v1363
  %2983 = vmatprep.subr.bf16.mxu0 %v1372
  %2984 = vmatpush1.bf16.msra.mxu0 %v1371
  %2985 = vmatprep.subr.bf16.mxu0 %v1380
  %2986 = vmatpush1.bf16.msra.mxu0 %v1379
  %2987 = vmatprep.subr.bf16.mxu0 %v1388
  %2988 = vmatpush1.bf16.msra.mxu0 %v1387
  %2989 = vmatprep.subr.bf16.mxu0 %v1396
  %2990 = vmatpush1.bf16.msra.mxu0 %v1395
  %2991 = vmatprep.subr.bf16.mxu0 %v1404
  %2992 = vmatpush1.bf16.msra.mxu0 %v1403
  %2993 = vmatprep.subr.bf16.mxu0 %v1412
  %2994 = vmatpush1.bf16.msra.mxu0 %v1411
  %2995 = vmatprep.subr.bf16.mxu0 %v1420
  %2996 = vmatpush1.bf16.msra.mxu0 %v1419
  %2997 = vmatprep.mubr.bf16.mxu0 %v2882
  %2998 = vmatmul.mubr.bf16.gmra.mrb[0].mxu0 %v2881
  %v2999 = vpop.f32.mrb[0].mxu0
  %v3000 = vadd.f32 0.0, %v2999
  %v3001 = vpop.f32.mrb[0].mxu0
  %v3002 = vadd.f32 0.0, %v3001
  %v3003 = vpop.f32.mrb[0].mxu0
  %v3004 = vpop.f32.mrb[0].mxu0
  %3005 = vdwg.mxu0
  %3006 = vmatprep.subr.bf16.mxu0 %v1302
  %3007 = vmatpush1.bf16.msra.mxu0 %v1301
  %3008 = vmatprep.subr.bf16.mxu0 %v1310
  %3009 = vmatpush1.bf16.msra.mxu0 %v1309
  %3010 = vmatprep.subr.bf16.mxu0 %v1318
  %3011 = vmatpush1.bf16.msra.mxu0 %v1317
  %3012 = vmatprep.subr.bf16.mxu0 %v1326
  %3013 = vmatpush1.bf16.msra.mxu0 %v1325
  %3014 = vmatprep.subr.bf16.mxu0 %v1334
  %3015 = vmatpush1.bf16.msra.mxu0 %v1333
  %3016 = vmatprep.subr.bf16.mxu0 %v1342
  %3017 = vmatpush1.bf16.msra.mxu0 %v1341
  %3018 = vmatprep.subr.bf16.mxu0 %v1350
  %3019 = vmatpush1.bf16.msra.mxu0 %v1349
  %3020 = vmatprep.subr.bf16.mxu0 %v1358
  %3021 = vmatpush1.bf16.msra.mxu0 %v1357
  %3022 = vmatprep.subr.bf16.mxu0 %v1366
  %3023 = vmatpush1.bf16.msra.mxu0 %v1365
  %3024 = vmatprep.subr.bf16.mxu0 %v1374
  %3025 = vmatpush1.bf16.msra.mxu0 %v1373
  %3026 = vmatprep.subr.bf16.mxu0 %v1382
  %3027 = vmatpush1.bf16.msra.mxu0 %v1381
  %3028 = vmatprep.subr.bf16.mxu0 %v1390
  %3029 = vmatpush1.bf16.msra.mxu0 %v1389
  %3030 = vmatprep.subr.bf16.mxu0 %v1398
  %3031 = vmatpush1.bf16.msra.mxu0 %v1397
  %3032 = vmatprep.subr.bf16.mxu0 %v1406
  %3033 = vmatpush1.bf16.msra.mxu0 %v1405
  %3034 = vmatprep.subr.bf16.mxu0 %v1414
  %3035 = vmatpush1.bf16.msra.mxu0 %v1413
  %3036 = vmatprep.subr.bf16.mxu0 %v1422
  %3037 = vmatpush1.bf16.msra.mxu0 %v1421
  %3038 = vmatprep.mubr.bf16.mxu0 %v2882
  %3039 = vmatmul.mubr.bf16.gmra.mrb[0].mxu0 %v2881
  %v3040 = vpop.f32.mrb[0].mxu0
  %v3041 = vadd.f32 0.0, %v3040
  %v3042 = vpop.f32.mrb[0].mxu0
  %v3043 = vadd.f32 0.0, %v3042
  %v3044 = vpop.f32.mrb[0].mxu0
  %v3045 = vpop.f32.mrb[0].mxu0
  %3046 = vdwg.mxu0
  %v3047 = vadd.f32 %v2918, %v556
  %v3048 = vadd.f32 %v2920, %v558
  %v3049 = vadd.f32 %v2959, %v629
  %v3050 = vadd.f32 %v2961, %v631
  %v3051 = vadd.f32 %v3000, %v676
  %v3052 = vadd.f32 %v3002, %v678
  %v3053 = vadd.f32 %v3041, %v749
  %v3054 = vadd.f32 %v3043, %v751
  %v3055 = vxor.u32 %v3047, 2147483648
  %v3056 = vxor.u32 %v3048, 2147483648
  %v3057 = vxor.u32 %v3049, 2147483648
  %v3058 = vmul.f32 %v3055, 1.442695
  %v3059 = vpow.pop %v3058
  %v3060 = vmul.f32 %v3056, 1.442695
  %v3061 = vpow.pop %v3060
  %v3062 = vmul.f32 %v3057, 1.442695
  %v3063 = vpow.pop %v3062
  %v3064 = vadd.f32 %v3059, 1.0
  %v3065 = vadd.f32 %v3061, 1.0
  %v3066 = vadd.f32 %v3063, 1.0
  %v3067 = vrcp.pop %v3064
  %v3068 = vmul.f32 1.0, %v3067
  %v3069 = vrcp.pop %v3065
  %v3070 = vmul.f32 1.0, %v3069
  %v3071 = vrcp.pop %v3066
  %v3072 = vmul.f32 1.0, %v3071
  %v3073 = vxor.u32 %v3051, 2147483648
  %v3074 = vxor.u32 %v3052, 2147483648
  %v3075 = vxor.u32 %v3053, 2147483648
  %v3076 = vmul.f32 %v3073, 1.442695
  %v3077 = vpow.pop %v3076
  %v3078 = vmul.f32 %v3074, 1.442695
  %v3079 = vpow.pop %v3078
  %v3080 = vmul.f32 %v3075, 1.442695
  %v3081 = vpow.pop %v3080
  %v3082 = vadd.f32 %v3077, 1.0
  %v3083 = vadd.f32 %v3079, 1.0
  %v3084 = vadd.f32 %v3081, 1.0
  %v3085 = vrcp.pop %v3082
  %v3086 = vmul.f32 1.0, %v3085
  %v3087 = vrcp.pop %v3083
  %v3088 = vmul.f32 1.0, %v3087
  %v3089 = vrcp.pop %v3084
  %v3090 = vmul.f32 1.0, %v3089
  %v3091 = vtanh.pop %v3050
  %v3092 = vtanh.pop %v3054
  %v3093 = vmul.f32 %v3070, %v2873
  %v3094 = vmul.f32 %v3068, %v3091
  %v3095 = vadd.f32 %v3093, %v3094
  %v3096 = vmul.f32 %v3088, %v2876
  %v3097 = vmul.f32 %v3086, %v3092
  %v3098 = vadd.f32 %v3096, %v3097
  %v3099 = vtanh.pop %v3095
  %v3100 = vmul.f32 %v3072, %v3099
  %v3101 = vtanh.pop %v3098
  %v3102 = vmul.f32 %v3090, %v3101
  %v3103 = vpack.c.bf16 %v3100, %v3100
  %v3104 = vpack.c.bf16 %v3102, %v3102
  %3105 = vmatprep.subr.bf16.mxu0 %v1296
  %3106 = vmatpush1.bf16.msra.mxu0 %v1295
  %3107 = vmatprep.subr.bf16.mxu0 %v1304
  %3108 = vmatpush1.bf16.msra.mxu0 %v1303
  %3109 = vmatprep.subr.bf16.mxu0 %v1312
  %3110 = vmatpush1.bf16.msra.mxu0 %v1311
  %3111 = vmatprep.subr.bf16.mxu0 %v1320
  %3112 = vmatpush1.bf16.msra.mxu0 %v1319
  %3113 = vmatprep.subr.bf16.mxu0 %v1328
  %3114 = vmatpush1.bf16.msra.mxu0 %v1327
  %3115 = vmatprep.subr.bf16.mxu0 %v1336
  %3116 = vmatpush1.bf16.msra.mxu0 %v1335
  %3117 = vmatprep.subr.bf16.mxu0 %v1344
  %3118 = vmatpush1.bf16.msra.mxu0 %v1343
  %3119 = vmatprep.subr.bf16.mxu0 %v1352
  %3120 = vmatpush1.bf16.msra.mxu0 %v1351
  %3121 = vmatprep.subr.bf16.mxu0 %v1360
  %3122 = vmatpush1.bf16.msra.mxu0 %v1359
  %3123 = vmatprep.subr.bf16.mxu0 %v1368
  %3124 = vmatpush1.bf16.msra.mxu0 %v1367
  %3125 = vmatprep.subr.bf16.mxu0 %v1376
  %3126 = vmatpush1.bf16.msra.mxu0 %v1375
  %3127 = vmatprep.subr.bf16.mxu0 %v1384
  %3128 = vmatpush1.bf16.msra.mxu0 %v1383
  %3129 = vmatprep.subr.bf16.mxu0 %v1392
  %3130 = vmatpush1.bf16.msra.mxu0 %v1391
  %3131 = vmatprep.subr.bf16.mxu0 %v1400
  %3132 = vmatpush1.bf16.msra.mxu0 %v1399
  %3133 = vmatprep.subr.bf16.mxu0 %v1408
  %3134 = vmatpush1.bf16.msra.mxu0 %v1407
  %3135 = vmatprep.subr.bf16.mxu0 %v1416
  %3136 = vmatpush1.bf16.msra.mxu0 %v1415
  %3137 = vmatprep.mubr.bf16.mxu0 %v3104
  %3138 = vmatmul.mubr.bf16.gmra.mrb[0].mxu0 %v3103
  %v3139 = vpop.f32.mrb[0].mxu0
  %v3140 = vadd.f32 0.0, %v3139
  %v3141 = vpop.f32.mrb[0].mxu0
  %v3142 = vadd.f32 0.0, %v3141
  %v3143 = vpop.f32.mrb[0].mxu0
  %v3144 = vpop.f32.mrb[0].mxu0
  %3145 = vdwg.mxu0
  %3146 = vmatprep.subr.bf16.mxu0 %v1298
  %3147 = vmatpush1.bf16.msra.mxu0 %v1297
  %3148 = vmatprep.subr.bf16.mxu0 %v1306
  %3149 = vmatpush1.bf16.msra.mxu0 %v1305
  %3150 = vmatprep.subr.bf16.mxu0 %v1314
  %3151 = vmatpush1.bf16.msra.mxu0 %v1313
  %3152 = vmatprep.subr.bf16.mxu0 %v1322
  %3153 = vmatpush1.bf16.msra.mxu0 %v1321
  %3154 = vmatprep.subr.bf16.mxu0 %v1330
  %3155 = vmatpush1.bf16.msra.mxu0 %v1329
  %3156 = vmatprep.subr.bf16.mxu0 %v1338
  %3157 = vmatpush1.bf16.msra.mxu0 %v1337
  %3158 = vmatprep.subr.bf16.mxu0 %v1346
  %3159 = vmatpush1.bf16.msra.mxu0 %v1345
  %3160 = vmatprep.subr.bf16.mxu0 %v1354
  %3161 = vmatpush1.bf16.msra.mxu0 %v1353
  %3162 = vmatprep.subr.bf16.mxu0 %v1362
  %3163 = vmatpush1.bf16.msra.mxu0 %v1361
  %3164 = vmatprep.subr.bf16.mxu0 %v1370
  %3165 = vmatpush1.bf16.msra.mxu0 %v1369
  %3166 = vmatprep.subr.bf16.mxu0 %v1378
  %3167 = vmatpush1.bf16.msra.mxu0 %v1377
  %3168 = vmatprep.subr.bf16.mxu0 %v1386
  %3169 = vmatpush1.bf16.msra.mxu0 %v1385
  %3170 = vmatprep.subr.bf16.mxu0 %v1394
  %3171 = vmatpush1.bf16.msra.mxu0 %v1393
  %3172 = vmatprep.subr.bf16.mxu0 %v1402
  %3173 = vmatpush1.bf16.msra.mxu0 %v1401
  %3174 = vmatprep.subr.bf16.mxu0 %v1410
  %3175 = vmatpush1.bf16.msra.mxu0 %v1409
  %3176 = vmatprep.subr.bf16.mxu0 %v1418
  %3177 = vmatpush1.bf16.msra.mxu0 %v1417
  %3178 = vmatprep.mubr.bf16.mxu0 %v3104
  %3179 = vmatmul.mubr.bf16.gmra.mrb[0].mxu0 %v3103
  %v3180 = vpop.f32.mrb[0].mxu0
  %v3181 = vadd.f32 0.0, %v3180
  %v3182 = vpop.f32.mrb[0].mxu0
  %v3183 = vadd.f32 0.0, %v3182
  %v3184 = vpop.f32.mrb[0].mxu0
  %v3185 = vpop.f32.mrb[0].mxu0
  %3186 = vdwg.mxu0
  %3187 = vmatprep.subr.bf16.mxu0 %v1300
  %3188 = vmatpush1.bf16.msra.mxu0 %v1299
  %3189 = vmatprep.subr.bf16.mxu0 %v1308
  %3190 = vmatpush1.bf16.msra.mxu0 %v1307
  %3191 = vmatprep.subr.bf16.mxu0 %v1316
  %3192 = vmatpush1.bf16.msra.mxu0 %v1315
  %3193 = vmatprep.subr.bf16.mxu0 %v1324
  %3194 = vmatpush1.bf16.msra.mxu0 %v1323
  %3195 = vmatprep.subr.bf16.mxu0 %v1332
  %3196 = vmatpush1.bf16.msra.mxu0 %v1331
  %3197 = vmatprep.subr.bf16.mxu0 %v1340
  %3198 = vmatpush1.bf16.msra.mxu0 %v1339
  %3199 = vmatprep.subr.bf16.mxu0 %v1348
  %3200 = vmatpush1.bf16.msra.mxu0 %v1347
  %3201 = vmatprep.subr.bf16.mxu0 %v1356
  %3202 = vmatpush1.bf16.msra.mxu0 %v1355
  %3203 = vmatprep.subr.bf16.mxu0 %v1364
  %3204 = vmatpush1.bf16.msra.mxu0 %v1363
  %3205 = vmatprep.subr.bf16.mxu0 %v1372
  %3206 = vmatpush1.bf16.msra.mxu0 %v1371
  %3207 = vmatprep.subr.bf16.mxu0 %v1380
  %3208 = vmatpush1.bf16.msra.mxu0 %v1379
  %3209 = vmatprep.subr.bf16.mxu0 %v1388
  %3210 = vmatpush1.bf16.msra.mxu0 %v1387
  %3211 = vmatprep.subr.bf16.mxu0 %v1396
  %3212 = vmatpush1.bf16.msra.mxu0 %v1395
  %3213 = vmatprep.subr.bf16.mxu0 %v1404
  %3214 = vmatpush1.bf16.msra.mxu0 %v1403
  %3215 = vmatprep.subr.bf16.mxu0 %v1412
  %3216 = vmatpush1.bf16.msra.mxu0 %v1411
  %3217 = vmatprep.subr.bf16.mxu0 %v1420
  %3218 = vmatpush1.bf16.msra.mxu0 %v1419
  %3219 = vmatprep.mubr.bf16.mxu0 %v3104
  %3220 = vmatmul.mubr.bf16.gmra.mrb[0].mxu0 %v3103
  %v3221 = vpop.f32.mrb[0].mxu0
  %v3222 = vadd.f32 0.0, %v3221
  %v3223 = vpop.f32.mrb[0].mxu0
  %v3224 = vadd.f32 0.0, %v3223
  %v3225 = vpop.f32.mrb[0].mxu0
  %v3226 = vpop.f32.mrb[0].mxu0
  %3227 = vdwg.mxu0
  %3228 = vmatprep.subr.bf16.mxu0 %v1302
  %3229 = vmatpush1.bf16.msra.mxu0 %v1301
  %3230 = vmatprep.subr.bf16.mxu0 %v1310
  %3231 = vmatpush1.bf16.msra.mxu0 %v1309
  %3232 = vmatprep.subr.bf16.mxu0 %v1318
  %3233 = vmatpush1.bf16.msra.mxu0 %v1317
  %3234 = vmatprep.subr.bf16.mxu0 %v1326
  %3235 = vmatpush1.bf16.msra.mxu0 %v1325
  %3236 = vmatprep.subr.bf16.mxu0 %v1334
  %3237 = vmatpush1.bf16.msra.mxu0 %v1333
  %3238 = vmatprep.subr.bf16.mxu0 %v1342
  %3239 = vmatpush1.bf16.msra.mxu0 %v1341
  %3240 = vmatprep.subr.bf16.mxu0 %v1350
  %3241 = vmatpush1.bf16.msra.mxu0 %v1349
  %3242 = vmatprep.subr.bf16.mxu0 %v1358
  %3243 = vmatpush1.bf16.msra.mxu0 %v1357
  %3244 = vmatprep.subr.bf16.mxu0 %v1366
  %3245 = vmatpush1.bf16.msra.mxu0 %v1365
  %3246 = vmatprep.subr.bf16.mxu0 %v1374
  %3247 = vmatpush1.bf16.msra.mxu0 %v1373
  %3248 = vmatprep.subr.bf16.mxu0 %v1382
  %3249 = vmatpush1.bf16.msra.mxu0 %v1381
  %3250 = vmatprep.subr.bf16.mxu0 %v1390
  %3251 = vmatpush1.bf16.msra.mxu0 %v1389
  %3252 = vmatprep.subr.bf16.mxu0 %v1398
  %3253 = vmatpush1.bf16.msra.mxu0 %v1397
  %3254 = vmatprep.subr.bf16.mxu0 %v1406
  %3255 = vmatpush1.bf16.msra.mxu0 %v1405
  %3256 = vmatprep.subr.bf16.mxu0 %v1414
  %3257 = vmatpush1.bf16.msra.mxu0 %v1413
  %3258 = vmatprep.subr.bf16.mxu0 %v1422
  %3259 = vmatpush1.bf16.msra.mxu0 %v1421
  %3260 = vmatprep.mubr.bf16.mxu0 %v3104
  %3261 = vmatmul.mubr.bf16.gmra.mrb[0].mxu0 %v3103
  %v3262 = vpop.f32.mrb[0].mxu0
  %v3263 = vadd.f32 0.0, %v3262
  %v3264 = vpop.f32.mrb[0].mxu0
  %v3265 = vadd.f32 0.0, %v3264
  %v3266 = vpop.f32.mrb[0].mxu0
  %v3267 = vpop.f32.mrb[0].mxu0
  %3268 = vdwg.mxu0
  %v3269 = vadd.f32 %v3140, %v560
  %v3270 = vadd.f32 %v3142, %v562
  %v3271 = vadd.f32 %v3181, %v633
  %v3272 = vadd.f32 %v3183, %v635
  %v3273 = vadd.f32 %v3222, %v672
  %v3274 = vadd.f32 %v3224, %v674
  %v3275 = vadd.f32 %v3263, %v745
  %v3276 = vadd.f32 %v3265, %v747
  %v3277 = vxor.u32 %v3269, 2147483648
  %v3278 = vxor.u32 %v3270, 2147483648
  %v3279 = vxor.u32 %v3271, 2147483648
  %v3280 = vmul.f32 %v3277, 1.442695
  %v3281 = vpow.pop %v3280
  %v3282 = vmul.f32 %v3278, 1.442695
  %v3283 = vpow.pop %v3282
  %v3284 = vmul.f32 %v3279, 1.442695
  %v3285 = vpow.pop %v3284
  %v3286 = vadd.f32 %v3281, 1.0
  %v3287 = vadd.f32 %v3283, 1.0
  %v3288 = vadd.f32 %v3285, 1.0
  %v3289 = vrcp.pop %v3286
  %v3290 = vmul.f32 1.0, %v3289
  %v3291 = vrcp.pop %v3287
  %v3292 = vmul.f32 1.0, %v3291
  %v3293 = vrcp.pop %v3288
  %v3294 = vmul.f32 1.0, %v3293
  %v3295 = vxor.u32 %v3273, 2147483648
  %v3296 = vxor.u32 %v3274, 2147483648
  %v3297 = vxor.u32 %v3275, 2147483648
  %v3298 = vmul.f32 %v3295, 1.442695
  %v3299 = vpow.pop %v3298
  %v3300 = vmul.f32 %v3296, 1.442695
  %v3301 = vpow.pop %v3300
  %v3302 = vmul.f32 %v3297, 1.442695
  %v3303 = vpow.pop %v3302
  %v3304 = vadd.f32 %v3299, 1.0
  %v3305 = vadd.f32 %v3301, 1.0
  %v3306 = vadd.f32 %v3303, 1.0
  %v3307 = vrcp.pop %v3304
  %v3308 = vmul.f32 1.0, %v3307
  %v3309 = vrcp.pop %v3305
  %v3310 = vmul.f32 1.0, %v3309
  %v3311 = vrcp.pop %v3306
  %v3312 = vmul.f32 1.0, %v3311
  %v3313 = vtanh.pop %v3272
  %v3314 = vtanh.pop %v3276
  %v3315 = vmul.f32 %v3292, %v3095
  %v3316 = vmul.f32 %v3290, %v3313
  %v3317 = vadd.f32 %v3315, %v3316
  %v3318 = vmul.f32 %v3310, %v3098
  %v3319 = vmul.f32 %v3308, %v3314
  %v3320 = vadd.f32 %v3318, %v3319
  %v3321 = vtanh.pop %v3317
  %v3322 = vmul.f32 %v3294, %v3321
  %v3323 = vtanh.pop %v3320
  %v3324 = vmul.f32 %v3312, %v3323
  %v3325 = vpack.c.bf16 %v3322, %v3322
  %v3326 = vpack.c.bf16 %v3324, %v3324
  %v3327 = vld [vmem:[%s5] sm:$0xf]
  %v3328 = vld [vmem:[%s5 + $0x4] sm:$0xf]
  %v3329 = vld [vmem:[%s5 + $0x8] sm:$0xf]
  %v3330 = vld [vmem:[%s5 + $0xc] sm:$0xf]
  %v3331 = vld [vmem:[%s5 + $0x10] sm:$0xf]
  %v3332 = vld [vmem:[%s5 + $0x14] sm:$0xf]
  %v3333 = vld [vmem:[%s5 + $0x18] sm:$0xf]
  %v3334 = vld [vmem:[%s5 + $0x1c] sm:$0xf]
  %v3335 = vld [vmem:[%s5 + $0x20] sm:$0xf]
  %v3336 = vld [vmem:[%s5 + $0x24] sm:$0xf]
  %v3337 = vld [vmem:[%s5 + $0x28] sm:$0xf]
  %v3338 = vld [vmem:[%s5 + $0x2c] sm:$0xf]
  %v3339 = vld [vmem:[%s5 + $0x30] sm:$0xf]
  %v3340 = vld [vmem:[%s5 + $0x34] sm:$0xf]
  %v3341 = vld [vmem:[%s5 + $0x38] sm:$0xf]
  %v3342 = vld [vmem:[%s5 + $0x3c] sm:$0xf]
  %v3343 = vld [vmem:[%s5 + $0x40] sm:$0xf]
  %v3344 = vld [vmem:[%s5 + $0x44] sm:$0xf]
  %v3345 = vld [vmem:[%s5 + $0x48] sm:$0xf]
  %v3346 = vld [vmem:[%s5 + $0x4c] sm:$0xf]
  %v3347 = vld [vmem:[%s5 + $0x50] sm:$0xf]
  %v3348 = vld [vmem:[%s5 + $0x54] sm:$0xf]
  %v3349 = vld [vmem:[%s5 + $0x58] sm:$0xf]
  %v3350 = vld [vmem:[%s5 + $0x5c] sm:$0xf]
  %v3351 = vld [vmem:[%s5 + $0x60] sm:$0xf]
  %v3352 = vld [vmem:[%s5 + $0x64] sm:$0xf]
  %v3353 = vld [vmem:[%s5 + $0x68] sm:$0xf]
  %v3354 = vld [vmem:[%s5 + $0x6c] sm:$0xf]
  %v3355 = vld [vmem:[%s5 + $0x70] sm:$0xf]
  %v3356 = vld [vmem:[%s5 + $0x74] sm:$0xf]
  %v3357 = vld [vmem:[%s5 + $0x78] sm:$0xf]
  %v3358 = vld [vmem:[%s5 + $0x7c] sm:$0xf]
  %v3359 = vld [vmem:[%s6] sm:$0x1]
  %v3361 = vlaneseq
  %v3362 = vshrl.u32 %v3361, 7
  %v3363 = vsub.s32 0, %v3362
  %v3364 = vrot.slane %v3359, %v3363
  %v3398 = vunpack.c.l.b16 %v3327
  %v3399 = vunpack.c.l.b16 %v3328
  %v3400 = vunpack.c.l.b16 %v3329
  %v3401 = vunpack.c.l.b16 %v3330
  %v3402 = vunpack.c.l.b16 %v3331
  %v3403 = vunpack.c.l.b16 %v3332
  %v3404 = vunpack.c.l.b16 %v3333
  %v3405 = vunpack.c.l.b16 %v3334
  %v3406 = vunpack.c.l.b16 %v3335
  %v3407 = vunpack.c.l.b16 %v3336
  %v3408 = vunpack.c.l.b16 %v3337
  %v3409 = vunpack.c.l.b16 %v3338
  %v3410 = vunpack.c.l.b16 %v3339
  %v3411 = vunpack.c.l.b16 %v3340
  %v3412 = vunpack.c.l.b16 %v3341
  %v3413 = vunpack.c.l.b16 %v3342
  %v3414 = vunpack.c.l.b16 %v3343
  %v3415 = vunpack.c.l.b16 %v3344
  %v3416 = vunpack.c.l.b16 %v3345
  %v3417 = vunpack.c.l.b16 %v3346
  %v3418 = vunpack.c.l.b16 %v3347
  %v3419 = vunpack.c.l.b16 %v3348
  %v3420 = vunpack.c.l.b16 %v3349
  %v3421 = vunpack.c.l.b16 %v3350
  %v3422 = vunpack.c.l.b16 %v3351
  %v3423 = vunpack.c.l.b16 %v3352
  %v3424 = vunpack.c.l.b16 %v3353
  %v3425 = vunpack.c.l.b16 %v3354
  %v3426 = vunpack.c.l.b16 %v3355
  %v3427 = vunpack.c.l.b16 %v3356
  %v3428 = vunpack.c.l.b16 %v3357
  %v3429 = vunpack.c.l.b16 %v3358
  %v3430 = vpack.c.b16 %v3399, %v3398
  %v3431 = vpack.c.b16 %v3401, %v3400
  %v3432 = vpack.c.b16 %v3403, %v3402
  %v3433 = vpack.c.b16 %v3405, %v3404
  %v3434 = vpack.c.b16 %v3407, %v3406
  %v3435 = vpack.c.b16 %v3409, %v3408
  %v3436 = vpack.c.b16 %v3411, %v3410
  %v3437 = vpack.c.b16 %v3413, %v3412
  %v3438 = vpack.c.b16 %v3415, %v3414
  %v3439 = vpack.c.b16 %v3417, %v3416
  %v3440 = vpack.c.b16 %v3419, %v3418
  %v3441 = vpack.c.b16 %v3421, %v3420
  %v3442 = vpack.c.b16 %v3423, %v3422
  %v3443 = vpack.c.b16 %v3425, %v3424
  %v3444 = vpack.c.b16 %v3427, %v3426
  %v3445 = vpack.c.b16 %v3429, %v3428
  %3462 = vmatprep.subr.bf16.mxu0 0
  %3463 = vmatpush1.bf16.msra.mxu0 %v3430
  %3464 = vmatprep.subr.bf16.mxu0 0
  %3465 = vmatpush1.bf16.msra.mxu0 %v3431
  %3466 = vmatprep.subr.bf16.mxu0 0
  %3467 = vmatpush1.bf16.msra.mxu0 %v3432
  %3468 = vmatprep.subr.bf16.mxu0 0
  %3469 = vmatpush1.bf16.msra.mxu0 %v3433
  %3470 = vmatprep.subr.bf16.mxu0 0
  %3471 = vmatpush1.bf16.msra.mxu0 %v3434
  %3472 = vmatprep.subr.bf16.mxu0 0
  %3473 = vmatpush1.bf16.msra.mxu0 %v3435
  %3474 = vmatprep.subr.bf16.mxu0 0
  %3475 = vmatpush1.bf16.msra.mxu0 %v3436
  %3476 = vmatprep.subr.bf16.mxu0 0
  %3477 = vmatpush1.bf16.msra.mxu0 %v3437
  %3478 = vmatprep.subr.bf16.mxu0 0
  %3479 = vmatpush1.bf16.msra.mxu0 %v3438
  %3480 = vmatprep.subr.bf16.mxu0 0
  %3481 = vmatpush1.bf16.msra.mxu0 %v3439
  %3482 = vmatprep.subr.bf16.mxu0 0
  %3483 = vmatpush1.bf16.msra.mxu0 %v3440
  %3484 = vmatprep.subr.bf16.mxu0 0
  %3485 = vmatpush1.bf16.msra.mxu0 %v3441
  %3486 = vmatprep.subr.bf16.mxu0 0
  %3487 = vmatpush1.bf16.msra.mxu0 %v3442
  %3488 = vmatprep.subr.bf16.mxu0 0
  %3489 = vmatpush1.bf16.msra.mxu0 %v3443
  %3490 = vmatprep.subr.bf16.mxu0 0
  %3491 = vmatpush1.bf16.msra.mxu0 %v3444
  %3492 = vmatprep.subr.bf16.mxu0 0
  %3493 = vmatpush1.bf16.msra.mxu0 %v3445
  %3494 = vmatprep.mubr.bf16.mxu0 %v3326
  %3495 = vmatmul.mubr.bf16.gmra.mrb[0].mxu0 %v3325
  %v3496 = vpop.f32.mrb[0].mxu0
  %v3497 = vadd.f32 %v3364, %v3496
  %v3498 = vpop.f32.mrb[0].mxu0
  %v3499 = vpop.f32.mrb[0].mxu0
  %v3500 = vpop.f32.mrb[0].mxu0
  %3501 = vdwg.mxu0
  %v3502 = vld [vmem:[%s1] sm:$0x3]
  %v3503 = vld [vmem:[%s1 + $0x2] sm:$0x3]
  %v3504 = vld [vmem:[%s1 + $0x4] sm:$0x3]
  %v3505 = vld [vmem:[%s1 + $0x6] sm:$0x3]
  %v3506 = vld [vmem:[%s1 + $0x8] sm:$0x3]
  %v3507 = vld [vmem:[%s1 + $0xa] sm:$0x3]
  %v3508 = vld [vmem:[%s1 + $0xc] sm:$0x3]
  %v3509 = vld [vmem:[%s1 + $0xe] sm:$0x3]
  %v3510 = vld [vmem:[%s7] sm:$0xf]
  %v3511 = vld [vmem:[%s7 + $0x4] sm:$0xf]
  %v3512 = vld [vmem:[%s7 + $0x8] sm:$0xf]
  %v3513 = vld [vmem:[%s7 + $0xc] sm:$0xf]
  %v3514 = vld [vmem:[%s7 + $0x10] sm:$0xf]
  %v3515 = vld [vmem:[%s7 + $0x14] sm:$0xf]
  %v3516 = vld [vmem:[%s7 + $0x18] sm:$0xf]
  %v3517 = vld [vmem:[%s7 + $0x1c] sm:$0xf]
  %v3518 = vld [vmem:[%s7 + $0x20] sm:$0xf]
  %v3519 = vld [vmem:[%s7 + $0x24] sm:$0xf]
  %v3520 = vld [vmem:[%s7 + $0x28] sm:$0xf]
  %v3521 = vld [vmem:[%s7 + $0x2c] sm:$0xf]
  %v3522 = vld [vmem:[%s7 + $0x30] sm:$0xf]
  %v3523 = vld [vmem:[%s7 + $0x34] sm:$0xf]
  %v3524 = vld [vmem:[%s7 + $0x38] sm:$0xf]
  %v3525 = vld [vmem:[%s7 + $0x3c] sm:$0xf]
  %v3526 = vld [vmem:[%s8] sm:$0x1]
  %v3528 = vlaneseq
  %v3529 = vshrl.u32 %v3528, 7
  %v3530 = vsub.s32 0, %v3529
  %v3531 = vrot.slane %v3526, %v3530
  %v3541 = vcombine.low %v3502, %v3503
  %v3542 = vcombine.low %v3504, %v3505
  %v3544 = vunpack.c.l.s4 1983009808
  %v3545 = vunpack.c.0.s8 %v3544
  %v3546 = vlaneseq
  %v3547 = vshrl.u32 %v3546, 7
  %v3548 = vsub.s32 %v3545, %v3547
  %v3549 = vrot.slane %v3541, %v3548
  %v3551 = vunpack.c.l.s4 1983009808
  %v3552 = vunpack.c.0.s8 %v3551
  %v3553 = vlaneseq
  %v3554 = vshrl.u32 %v3553, 7
  %v3555 = vsub.s32 %v3552, %v3554
  %v3556 = vrot.slane %v3542, %v3555
  %v3557 = vcombine.low %v3549, %v3556
  %v3558 = vcombine.low %v3506, %v3507
  %v3559 = vcombine.low %v3508, %v3509
  %v3561 = vunpack.c.l.s4 1983009808
  %v3562 = vunpack.c.0.s8 %v3561
  %v3563 = vlaneseq
  %v3564 = vshrl.u32 %v3563, 7
  %v3565 = vsub.s32 %v3562, %v3564
  %v3566 = vrot.slane %v3558, %v3565
  %v3568 = vunpack.c.l.s4 1983009808
  %v3569 = vunpack.c.0.s8 %v3568
  %v3570 = vlaneseq
  %v3571 = vshrl.u32 %v3570, 7
  %v3572 = vsub.s32 %v3569, %v3571
  %v3573 = vrot.slane %v3559, %v3572
  %v3574 = vcombine.low %v3566, %v3573
  %v3593 = vunpack.c.l.b16 %v3510
  %v3594 = vunpack.c.l.b16 %v3511
  %v3595 = vunpack.c.l.b16 %v3512
  %v3596 = vunpack.c.l.b16 %v3513
  %v3597 = vunpack.c.l.b16 %v3514
  %v3598 = vunpack.c.l.b16 %v3515
  %v3599 = vunpack.c.l.b16 %v3516
  %v3600 = vunpack.c.l.b16 %v3517
  %v3601 = vunpack.c.l.b16 %v3518
  %v3602 = vunpack.c.l.b16 %v3519
  %v3603 = vunpack.c.l.b16 %v3520
  %v3604 = vunpack.c.l.b16 %v3521
  %v3605 = vunpack.c.l.b16 %v3522
  %v3606 = vunpack.c.l.b16 %v3523
  %v3607 = vunpack.c.l.b16 %v3524
  %v3608 = vunpack.c.l.b16 %v3525
  %v3609 = vpack.c.b16 %v3594, %v3593
  %v3610 = vpack.c.b16 %v3596, %v3595
  %v3611 = vpack.c.b16 %v3598, %v3597
  %v3612 = vpack.c.b16 %v3600, %v3599
  %v3613 = vpack.c.b16 %v3602, %v3601
  %v3614 = vpack.c.b16 %v3604, %v3603
  %v3615 = vpack.c.b16 %v3606, %v3605
  %v3616 = vpack.c.b16 %v3608, %v3607
  %3625 = vmatprep.subr.bf16.mxu0 0
  %3626 = vmatpush1.bf16.msra.mxu0 %v3609
  %3627 = vmatprep.subr.bf16.mxu0 0
  %3628 = vmatpush1.bf16.msra.mxu0 %v3610
  %3629 = vmatprep.subr.bf16.mxu0 0
  %3630 = vmatpush1.bf16.msra.mxu0 %v3611
  %3631 = vmatprep.subr.bf16.mxu0 0
  %3632 = vmatpush1.bf16.msra.mxu0 %v3612
  %3633 = vmatprep.subr.bf16.mxu0 0
  %3634 = vmatpush1.bf16.msra.mxu0 %v3613
  %3635 = vmatprep.subr.bf16.mxu0 0
  %3636 = vmatpush1.bf16.msra.mxu0 %v3614
  %3637 = vmatprep.subr.bf16.mxu0 0
  %3638 = vmatpush1.bf16.msra.mxu0 %v3615
  %3639 = vmatprep.subr.bf16.mxu0 0
  %3640 = vmatpush1.bf16.msra.mxu0 %v3616
  %3641 = vmatprep.subr.bf16.mxu0 0
  %3642 = vmatpush1.bf16.msra.mxu0 0
  %3643 = vmatprep.subr.bf16.mxu0 0
  %3644 = vmatpush1.bf16.msra.mxu0 0
  %3645 = vmatprep.subr.bf16.mxu0 0
  %3646 = vmatpush1.bf16.msra.mxu0 0
  %3647 = vmatprep.subr.bf16.mxu0 0
  %3648 = vmatpush1.bf16.msra.mxu0 0
  %3649 = vmatprep.subr.bf16.mxu0 0
  %3650 = vmatpush1.bf16.msra.mxu0 0
  %3651 = vmatprep.subr.bf16.mxu0 0
  %3652 = vmatpush1.bf16.msra.mxu0 0
  %3653 = vmatprep.subr.bf16.mxu0 0
  %3654 = vmatpush1.bf16.msra.mxu0 0
  %3655 = vmatprep.subr.bf16.mxu0 0
  %3656 = vmatpush1.bf16.msra.mxu0 0
  %3657 = vmatprep.mubr.bf16.mxu0 0
  %3658 = vmatmul.mubr.bf16.gmra.mrb[0].mxu0 %v3557
  %v3659 = vpop.f32.mrb[0].mxu0
  %v3660 = vadd.f32 %v3531, %v3659
  %v3661 = vpop.f32.mrb[0].mxu0
  %v3662 = vpop.f32.mrb[0].mxu0
  %v3663 = vadd.f32 %v3531, %v3662
  %v3664 = vpop.f32.mrb[0].mxu0
  %3665 = vmatprep.mubr.bf16.mxu0 0
  %3666 = vmatmul.mubr.bf16.gmra.mrb[0].mxu0 %v3574
  %v3667 = vpop.f32.mrb[0].mxu0
  %v3668 = vadd.f32 %v3531, %v3667
  %v3669 = vpop.f32.mrb[0].mxu0
  %v3670 = vpop.f32.mrb[0].mxu0
  %v3671 = vadd.f32 %v3531, %v3670
  %v3672 = vpop.f32.mrb[0].mxu0
  %3673 = vdwg.mxu0
  %v3678 = vcombine.high %v3660, %v3660
  %v3679 = vcombine.high %v3663, %v3663
  %v3680 = vcombine.high %v3668, %v3668
  %v3681 = vcombine.high %v3671, %v3671
  %v3687 = vcombine.high %v3497, %v3497
  %v3689 = vunpack.c.l.s4 1966171168
  %v3690 = vunpack.c.0.s8 %v3689
  %v3691 = vlaneseq
  %v3692 = vshrl.u32 %v3691, 7
  %v3693 = vsub.s32 %v3690, %v3692
  %v3694 = vrot.slane %v3497, %v3693
  %v3696 = vunpack.c.l.s4 1966171168
  %v3697 = vunpack.c.0.s8 %v3696
  %v3698 = vlaneseq
  %v3699 = vshrl.u32 %v3698, 7
  %v3700 = vsub.s32 %v3697, %v3699
  %v3701 = vrot.slane %v3687, %v3700
  %v3702 = vcombine.high %v3694, %v3694
  %v3703 = vcombine.high %v3701, %v3701
  %v3705 = vunpack.c.l.s4 1966171168
  %v3706 = vunpack.c.0.s8 %v3705
  %v3707 = vlaneseq
  %v3708 = vshrl.u32 %v3707, 7
  %v3709 = vsub.s32 %v3706, %v3708
  %v3710 = vrot.slane %v3694, %v3709
  %v3712 = vunpack.c.l.s4 1966171168
  %v3713 = vunpack.c.0.s8 %v3712
  %v3714 = vlaneseq
  %v3715 = vshrl.u32 %v3714, 7
  %v3716 = vsub.s32 %v3713, %v3715
  %v3717 = vrot.slane %v3701, %v3716
  %v3719 = vunpack.c.l.s4 1966171168
  %v3720 = vunpack.c.0.s8 %v3719
  %v3721 = vlaneseq
  %v3722 = vshrl.u32 %v3721, 7
  %v3723 = vsub.s32 %v3720, %v3722
  %v3724 = vrot.slane %v3702, %v3723
  %v3726 = vunpack.c.l.s4 1966171168
  %v3727 = vunpack.c.0.s8 %v3726
  %v3728 = vlaneseq
  %v3729 = vshrl.u32 %v3728, 7
  %v3730 = vsub.s32 %v3727, %v3729
  %v3731 = vrot.slane %v3703, %v3730
  %v3732 = vcombine.high %v3710, %v3710
  %v3733 = vcombine.high %v3717, %v3717
  %v3734 = vcombine.high %v3724, %v3724
  %v3735 = vcombine.high %v3731, %v3731
  %v3736 = vlaneseq
  %v3737 = vshrl.u32 %v3736, 7
  %v3738 = vsub.s32 0, %v3737
  %v3739 = vrot.slane %v3710, %v3738
  %v3740 = vlaneseq
  %v3741 = vshrl.u32 %v3740, 7
  %v3742 = vsub.s32 0, %v3741
  %v3743 = vrot.slane %v3724, %v3742
  %v3744 = vlaneseq
  %v3745 = vshrl.u32 %v3744, 7
  %v3746 = vsub.s32 0, %v3745
  %v3747 = vrot.slane %v3732, %v3746
  %v3748 = vlaneseq
  %v3749 = vshrl.u32 %v3748, 7
  %v3750 = vsub.s32 0, %v3749
  %v3751 = vrot.slane %v3734, %v3750
  %v3752 = vlaneseq
  %v3753 = vshrl.u32 %v3752, 7
  %v3754 = vsub.s32 0, %v3753
  %v3755 = vrot.slane %v3717, %v3754
  %v3756 = vlaneseq
  %v3757 = vshrl.u32 %v3756, 7
  %v3758 = vsub.s32 0, %v3757
  %v3759 = vrot.slane %v3731, %v3758
  %v3760 = vlaneseq
  %v3761 = vshrl.u32 %v3760, 7
  %v3762 = vsub.s32 0, %v3761
  %v3763 = vrot.slane %v3733, %v3762
  %v3764 = vlaneseq
  %v3765 = vshrl.u32 %v3764, 7
  %v3766 = vsub.s32 0, %v3765
  %v3767 = vrot.slane %v3735, %v3766
  %v3776 = vmul.f32 %v3739, %v3660
  %v3777 = vmul.f32 %v3743, %v3678
  %v3778 = vmul.f32 %v3747, %v3663
  %v3779 = vmul.f32 %v3751, %v3679
  %v3780 = vmul.f32 %v3755, %v3668
  %v3781 = vmul.f32 %v3759, %v3680
  %v3782 = vmul.f32 %v3763, %v3671
  %v3783 = vmul.f32 %v3767, %v3681
  %vm3784 = vcmask 1043456
  %v3785 = vsel %vm3784, %v3776, 0.0
  %3786 = vadd.xlane.f32.xlu0 %v3785
  %v3787 = vpop.xlane.xlu0 %3786
  %v3788 = vsel %vm3784, %v3777, 0.0
  %3789 = vadd.xlane.f32.xlu0 %v3788
  %v3790 = vpop.xlane.xlu0 %3789
  %v3791 = vsel %vm3784, %v3778, 0.0
  %3792 = vadd.xlane.f32.xlu0 %v3791
  %v3793 = vpop.xlane.xlu0 %3792
  %v3794 = vsel %vm3784, %v3779, 0.0
  %3795 = vadd.xlane.f32.xlu0 %v3794
  %v3796 = vpop.xlane.xlu0 %3795
  %v3797 = vsel %vm3784, %v3780, 0.0
  %3798 = vadd.xlane.f32.xlu0 %v3797
  %v3799 = vpop.xlane.xlu0 %3798
  %v3800 = vsel %vm3784, %v3781, 0.0
  %3801 = vadd.xlane.f32.xlu0 %v3800
  %v3802 = vpop.xlane.xlu0 %3801
  %v3803 = vsel %vm3784, %v3782, 0.0
  %3804 = vadd.xlane.f32.xlu0 %v3803
  %v3805 = vpop.xlane.xlu0 %3804
  %v3806 = vsel %vm3784, %v3783, 0.0
  %3807 = vadd.xlane.f32.xlu0 %v3806
  %v3808 = vpop.xlane.xlu0 %3807
  %v3809 = vmul.f32 %v3497, %v3497
  %3810 = vadd.xlane.f32.xlu0 %v3809
  %v3811 = vpop.xlane.xlu0 %3810
  %v3812 = vrsqrt.pop %v3811
  %v3813 = vmul.f32 %v3811, %v3812
  %vm3814 = vcmp.eq.f32.partialorder %v3811, inf
  %v3815 = vsel %vm3814, %v3811, %v3813
  %vm3816 = vcmp.eq.f32.partialorder %v3811, 0.0
  %v3817 = vand.u32 %v3811, 2147483648
  %v3818 = vsel %vm3816, %v3817, %v3815
  %v3819 = vmul.f32 %v3660, %v3660
  %v3820 = vmul.f32 %v3678, %v3678
  %v3821 = vmul.f32 %v3663, %v3663
  %v3822 = vmul.f32 %v3679, %v3679
  %v3823 = vmul.f32 %v3668, %v3668
  %v3824 = vmul.f32 %v3680, %v3680
  %v3825 = vmul.f32 %v3671, %v3671
  %v3826 = vmul.f32 %v3681, %v3681
  %v3827 = vsel %vm3784, %v3819, 0.0
  %3828 = vadd.xlane.f32.xlu0 %v3827
  %v3829 = vpop.xlane.xlu0 %3828
  %v3830 = vsel %vm3784, %v3820, 0.0
  %3831 = vadd.xlane.f32.xlu0 %v3830
  %v3832 = vpop.xlane.xlu0 %3831
  %v3833 = vsel %vm3784, %v3821, 0.0
  %3834 = vadd.xlane.f32.xlu0 %v3833
  %v3835 = vpop.xlane.xlu0 %3834
  %v3836 = vsel %vm3784, %v3822, 0.0
  %3837 = vadd.xlane.f32.xlu0 %v3836
  %v3838 = vpop.xlane.xlu0 %3837
  %v3839 = vsel %vm3784, %v3823, 0.0
  %3840 = vadd.xlane.f32.xlu0 %v3839
  %v3841 = vpop.xlane.xlu0 %3840
  %v3842 = vsel %vm3784, %v3824, 0.0
  %3843 = vadd.xlane.f32.xlu0 %v3842
  %v3844 = vpop.xlane.xlu0 %3843
  %v3845 = vsel %vm3784, %v3825, 0.0
  %3846 = vadd.xlane.f32.xlu0 %v3845
  %v3847 = vpop.xlane.xlu0 %3846
  %v3848 = vsel %vm3784, %v3826, 0.0
  %3849 = vadd.xlane.f32.xlu0 %v3848
  %v3850 = vpop.xlane.xlu0 %3849
  %v3851 = vrsqrt.pop %v3829
  %v3852 = vmul.f32 %v3829, %v3851
  %vm3853 = vcmp.eq.f32.partialorder %v3829, inf
  %v3854 = vsel %vm3853, %v3829, %v3852
  %vm3855 = vcmp.eq.f32.partialorder %v3829, 0.0
  %v3856 = vand.u32 %v3829, 2147483648
  %v3857 = vsel %vm3855, %v3856, %v3854
  %v3858 = vrsqrt.pop %v3832
  %v3859 = vmul.f32 %v3832, %v3858
  %vm3860 = vcmp.eq.f32.partialorder %v3832, inf
  %v3861 = vsel %vm3860, %v3832, %v3859
  %vm3862 = vcmp.eq.f32.partialorder %v3832, 0.0
  %v3863 = vand.u32 %v3832, 2147483648
  %v3864 = vsel %vm3862, %v3863, %v3861
  %v3865 = vrsqrt.pop %v3835
  %v3866 = vmul.f32 %v3835, %v3865
  %vm3867 = vcmp.eq.f32.partialorder %v3835, inf
  %v3868 = vsel %vm3867, %v3835, %v3866
  %vm3869 = vcmp.eq.f32.partialorder %v3835, 0.0
  %v3870 = vand.u32 %v3835, 2147483648
  %v3871 = vsel %vm3869, %v3870, %v3868
  %v3872 = vrsqrt.pop %v3838
  %v3873 = vmul.f32 %v3838, %v3872
  %vm3874 = vcmp.eq.f32.partialorder %v3838, inf
  %v3875 = vsel %vm3874, %v3838, %v3873
  %vm3876 = vcmp.eq.f32.partialorder %v3838, 0.0
  %v3877 = vand.u32 %v3838, 2147483648
  %v3878 = vsel %vm3876, %v3877, %v3875
  %v3879 = vrsqrt.pop %v3841
  %v3880 = vmul.f32 %v3841, %v3879
  %vm3881 = vcmp.eq.f32.partialorder %v3841, inf
  %v3882 = vsel %vm3881, %v3841, %v3880
  %vm3883 = vcmp.eq.f32.partialorder %v3841, 0.0
  %v3884 = vand.u32 %v3841, 2147483648
  %v3885 = vsel %vm3883, %v3884, %v3882
  %v3886 = vrsqrt.pop %v3844
  %v3887 = vmul.f32 %v3844, %v3886
  %vm3888 = vcmp.eq.f32.partialorder %v3844, inf
  %v3889 = vsel %vm3888, %v3844, %v3887
  %vm3890 = vcmp.eq.f32.partialorder %v3844, 0.0
  %v3891 = vand.u32 %v3844, 2147483648
  %v3892 = vsel %vm3890, %v3891, %v3889
  %v3893 = vrsqrt.pop %v3847
  %v3894 = vmul.f32 %v3847, %v3893
  %vm3895 = vcmp.eq.f32.partialorder %v3847, inf
  %v3896 = vsel %vm3895, %v3847, %v3894
  %vm3897 = vcmp.eq.f32.partialorder %v3847, 0.0
  %v3898 = vand.u32 %v3847, 2147483648
  %v3899 = vsel %vm3897, %v3898, %v3896
  %v3900 = vrsqrt.pop %v3850
  %v3901 = vmul.f32 %v3850, %v3900
  %vm3902 = vcmp.eq.f32.partialorder %v3850, inf
  %v3903 = vsel %vm3902, %v3850, %v3901
  %vm3904 = vcmp.eq.f32.partialorder %v3850, 0.0
  %v3905 = vand.u32 %v3850, 2147483648
  %v3906 = vsel %vm3904, %v3905, %v3903
  %v3907 = vmax.f32 %v3818, 1e-08
  %v3908 = vmax.f32 %v3857, 1e-08
  %v3909 = vmax.f32 %v3864, 1e-08
  %v3910 = vmax.f32 %v3871, 1e-08
  %v3911 = vmax.f32 %v3878, 1e-08
  %v3912 = vmax.f32 %v3885, 1e-08
  %v3913 = vmax.f32 %v3892, 1e-08
  %v3914 = vmax.f32 %v3899, 1e-08
  %v3915 = vmax.f32 %v3906, 1e-08
  %v3924 = vlaneseq
  %v3925 = vand.u32 %v3924, 127
  %v3926 = vlaneseq
  %v3927 = vshrl.u32 %v3926, 7
  %v3928 = vsub.s32 %v3925, %v3927
  %v3929 = vrot.slane %v3908, %v3928
  %v3930 = vlaneseq
  %v3931 = vshrl.u32 %v3930, 7
  %v3932 = vsub.s32 %v3925, %v3931
  %v3933 = vrot.slane %v3909, %v3932
  %v3934 = vlaneseq
  %v3935 = vshrl.u32 %v3934, 7
  %v3936 = vsub.s32 %v3925, %v3935
  %v3937 = vrot.slane %v3910, %v3936
  %v3938 = vlaneseq
  %v3939 = vshrl.u32 %v3938, 7
  %v3940 = vsub.s32 %v3925, %v3939
  %v3941 = vrot.slane %v3911, %v3940
  %v3942 = vlaneseq
  %v3943 = vshrl.u32 %v3942, 7
  %v3944 = vsub.s32 %v3925, %v3943
  %v3945 = vrot.slane %v3912, %v3944
  %v3946 = vlaneseq
  %v3947 = vshrl.u32 %v3946, 7
  %v3948 = vsub.s32 %v3925, %v3947
  %v3949 = vrot.slane %v3913, %v3948
  %v3950 = vlaneseq
  %v3951 = vshrl.u32 %v3950, 7
  %v3952 = vsub.s32 %v3925, %v3951
  %v3953 = vrot.slane %v3914, %v3952
  %v3954 = vlaneseq
  %v3955 = vshrl.u32 %v3954, 7
  %v3956 = vsub.s32 %v3925, %v3955
  %v3957 = vrot.slane %v3915, %v3956
  %vm3958 = vcmask 1041409
  %v3959 = vsel %vm3958, %v3933, %v3929
  %vm3960 = vcmask 1042434
  %v3961 = vsel %vm3960, %v3937, %v3959
  %vm3962 = vcmask 1043459
  %v3963 = vsel %vm3962, %v3941, %v3961
  %vm3964 = vcmask 1044484
  %v3965 = vsel %vm3964, %v3945, %v3963
  %vm3966 = vcmask 1045509
  %v3967 = vsel %vm3966, %v3949, %v3965
  %vm3968 = vcmask 1046534
  %v3969 = vsel %vm3968, %v3953, %v3967
  %vm3970 = vcmask 1047559
  %v3971 = vsel %vm3970, %v3957, %v3969
  %v3973 = vmul.f32 %v3907, %v3971
  %v3975 = vlaneseq
  %v3976 = vshrl.u32 %v3975, 7
  %v3977 = vsub.s32 0, %v3976
  %v3978 = vrot.slane %v3973, %v3977
  %3980 = vbcast.lane.b32.xlu0 %v3978, 256
  %v3981 = vpop.permute.xlu0 %3980
  %v3982 = vlaneseq
  %v3983 = vshrl.u32 %v3982, 7
  %v3984 = vsub.s32 1, %v3983
  %v3985 = vrot.slane %v3973, %v3984
  %3987 = vbcast.lane.b32.xlu0 %v3985, 256
  %v3988 = vpop.permute.xlu0 %3987
  %v3989 = vlaneseq
  %v3990 = vshrl.u32 %v3989, 7
  %v3991 = vsub.s32 2, %v3990
  %v3992 = vrot.slane %v3973, %v3991
  %3994 = vbcast.lane.b32.xlu0 %v3992, 256
  %v3995 = vpop.permute.xlu0 %3994
  %v3996 = vlaneseq
  %v3997 = vshrl.u32 %v3996, 7
  %v3998 = vsub.s32 3, %v3997
  %v3999 = vrot.slane %v3973, %v3998
  %4001 = vbcast.lane.b32.xlu0 %v3999, 256
  %v4002 = vpop.permute.xlu0 %4001
  %v4003 = vlaneseq
  %v4004 = vshrl.u32 %v4003, 7
  %v4005 = vsub.s32 4, %v4004
  %v4006 = vrot.slane %v3973, %v4005
  %4008 = vbcast.lane.b32.xlu0 %v4006, 256
  %v4009 = vpop.permute.xlu0 %4008
  %v4010 = vlaneseq
  %v4011 = vshrl.u32 %v4010, 7
  %v4012 = vsub.s32 5, %v4011
  %v4013 = vrot.slane %v3973, %v4012
  %4015 = vbcast.lane.b32.xlu0 %v4013, 256
  %v4016 = vpop.permute.xlu0 %4015
  %v4017 = vlaneseq
  %v4018 = vshrl.u32 %v4017, 7
  %v4019 = vsub.s32 6, %v4018
  %v4020 = vrot.slane %v3973, %v4019
  %4022 = vbcast.lane.b32.xlu0 %v4020, 256
  %v4023 = vpop.permute.xlu0 %4022
  %v4024 = vlaneseq
  %v4025 = vshrl.u32 %v4024, 7
  %v4026 = vsub.s32 7, %v4025
  %v4027 = vrot.slane %v3973, %v4026
  %4029 = vbcast.lane.b32.xlu0 %v4027, 256
  %v4030 = vpop.permute.xlu0 %4029
  %v4039 = vrcp.pop %v3981
  %v4040 = vmul.f32 %v3787, %v4039
  %v4041 = vrcp.pop %v3988
  %v4042 = vmul.f32 %v3790, %v4041
  %v4043 = vrcp.pop %v3995
  %v4044 = vmul.f32 %v3793, %v4043
  %v4045 = vrcp.pop %v4002
  %v4046 = vmul.f32 %v3796, %v4045
  %v4047 = vrcp.pop %v4009
  %v4048 = vmul.f32 %v3799, %v4047
  %v4049 = vrcp.pop %v4016
  %v4050 = vmul.f32 %v3802, %v4049
  %v4051 = vrcp.pop %v4023
  %v4052 = vmul.f32 %v3805, %v4051
  %v4053 = vrcp.pop %v4030
  %v4054 = vmul.f32 %v3808, %v4053
  %4063 = vset.pattern.permute.xlu0 0
  %4064 = vperm.xlu0 %4063, %v4040
  %v4065 = vpop.permute.xlu0 %4064
  %4066 = vset.pattern.permute.xlu0 0
  %4067 = vperm.xlu0 %4066, %v4042
  %v4068 = vpop.permute.xlu0 %4067
  %4069 = vset.pattern.permute.xlu0 0
  %4070 = vperm.xlu0 %4069, %v4044
  %v4071 = vpop.permute.xlu0 %4070
  %4072 = vset.pattern.permute.xlu0 0
  %4073 = vperm.xlu0 %4072, %v4046
  %v4074 = vpop.permute.xlu0 %4073
  %4075 = vset.pattern.permute.xlu0 0
  %4076 = vperm.xlu0 %4075, %v4048
  %v4077 = vpop.permute.xlu0 %4076
  %4078 = vset.pattern.permute.xlu0 0
  %4079 = vperm.xlu0 %4078, %v4050
  %v4080 = vpop.permute.xlu0 %4079
  %4081 = vset.pattern.permute.xlu0 0
  %4082 = vperm.xlu0 %4081, %v4052
  %v4083 = vpop.permute.xlu0 %4082
  %4084 = vset.pattern.permute.xlu0 0
  %4085 = vperm.xlu0 %4084, %v4054
  %v4086 = vpop.permute.xlu0 %4085
  %v4087 = vlaneseq
  %v4088 = vshrl.u32 %v4087, 7
  %v4089 = vsub.s32 %v3925, %v4088
  %v4090 = vrot.slane %v4065, %v4089
  %v4091 = vlaneseq
  %v4092 = vshrl.u32 %v4091, 7
  %v4093 = vsub.s32 %v3925, %v4092
  %v4094 = vrot.slane %v4068, %v4093
  %v4095 = vlaneseq
  %v4096 = vshrl.u32 %v4095, 7
  %v4097 = vsub.s32 %v3925, %v4096
  %v4098 = vrot.slane %v4071, %v4097
  %v4099 = vlaneseq
  %v4100 = vshrl.u32 %v4099, 7
  %v4101 = vsub.s32 %v3925, %v4100
  %v4102 = vrot.slane %v4074, %v4101
  %v4103 = vlaneseq
  %v4104 = vshrl.u32 %v4103, 7
  %v4105 = vsub.s32 %v3925, %v4104
  %v4106 = vrot.slane %v4077, %v4105
  %v4107 = vlaneseq
  %v4108 = vshrl.u32 %v4107, 7
  %v4109 = vsub.s32 %v3925, %v4108
  %v4110 = vrot.slane %v4080, %v4109
  %v4111 = vlaneseq
  %v4112 = vshrl.u32 %v4111, 7
  %v4113 = vsub.s32 %v3925, %v4112
  %v4114 = vrot.slane %v4083, %v4113
  %v4115 = vlaneseq
  %v4116 = vshrl.u32 %v4115, 7
  %v4117 = vsub.s32 %v3925, %v4116
  %v4118 = vrot.slane %v4086, %v4117
  %v4119 = vsel %vm3958, %v4094, %v4090
  %v4120 = vsel %vm3960, %v4098, %v4119
  %v4121 = vsel %vm3962, %v4102, %v4120
  %v4122 = vsel %vm3964, %v4106, %v4121
  %v4123 = vsel %vm3966, %v4110, %v4122
  %v4124 = vsel %vm3968, %v4114, %v4123
  %v4125 = vsel %vm3970, %v4118, %v4124
  %vm4127 = vcmask 31744
  %4128 = vst.msk [vmem:[%s9] sm:$0xff] %vm4127, %v4125
  // Predicated region
  $region38: #{column_predictor_forward.1} parent=0 // pred_check
    _
  $region39: #{column_predictor_forward.1} parent=0 // pred_check_branch
    %4130 = sbr.rel (0) target = $region41
  $region40: #{column_predictor_forward.1} parent=0 // pred_region
    _
  $region41: #{column_predictor_forward.1} parent=0 // pred_fallthru
    _
  // Predicated region
  $region42: #{column_predictor_forward.1} parent=0 // pred_check
    _
  $region43: #{column_predictor_forward.1} parent=0 // pred_check_branch
    %4132 = sbr.rel (0) target = $region45
  $region44: #{column_predictor_forward.1} parent=0 // pred_region
    _
  $region45: #{column_predictor_forward.1} parent=0 // pred_fallthru
    _

// kernel: column_predictor_forward.1
$region0: #{column_predictor_forward.1}
  #allocation0 [shape = 'u32[]', space=smem, size = 0x4, offset = 0x4, fixed_abs, tag = 'smem constant byte address 0x4 - core index']
  #allocation1 [shape = 'u32[144,128]{1,0:T(1,128)}', space=vmem, size = 0x12000, scoped, tag = 'internal scratch']
  %s0 = inlined_call_operand.vmem [shape: bf16[8,8,128], index: 0, kind: input, shape index: {}]
  %s1 = inlined_call_operand.vmem [shape: bf16[8,4,128], index: 1, kind: input, shape index: {}]
  %s2 = inlined_call_operand.vmem [shape: bf16[128,1024], index: 2, kind: input, shape index: {}]
  %s3 = inlined_call_operand.vmem [shape: bf16[256,1024], index: 3, kind: input, shape index: {}]
  %s4 = inlined_call_operand.vmem [shape: f32[1,1024], index: 4, kind: input, shape index: {}]
  %s5 = inlined_call_operand.vmem [shape: bf16[256,128], index: 5, kind: input, shape index: {}]
  %s6 = inlined_call_operand.vmem [shape: f32[1,128], index: 6, kind: input, shape index: {}]
  %s7 = inlined_call_operand.vmem [shape: bf16[128,128], index: 7, kind: input, shape index: {}]
  %s8 = inlined_call_operand.vmem [shape: f32[1,128], index: 8, kind: input, shape index: {}]
  %s9 = inlined_call_operand.vmem [shape: f32[8,4], index: 9, kind: output, shape index: {}]
  %s10 = sld [smem:[#allocation0]]
  $region46: #{column_predictor_forward.1} parent=0
    _
  %s12 = ssub.s32 1, %s10
  %s13 = scalar_select 0, %s12, %s10
  // Predicated region
  $region2: #{column_predictor_forward.1} parent=0 // pred_check
    _
  $region3: #{column_predictor_forward.1} parent=0 // pred_check_branch
    %15 = sbr.rel (0) target = $region5
  $region4: #{column_predictor_forward.1} parent=0 // pred_region
    _
  $region5: #{column_predictor_forward.1} parent=0 // pred_fallthru
    _
  // Predicated region
  $region6: #{column_predictor_forward.1} parent=0 // pred_check
    _
  $region7: #{column_predictor_forward.1} parent=0 // pred_check_branch
    %17 = sbr.rel (0) target = $region9
  $region8: #{column_predictor_forward.1} parent=0 // pred_region
    _
  $region9: #{column_predictor_forward.1} parent=0 // pred_fallthru
    _
  // Predicated region
  $region10: #{column_predictor_forward.1} parent=0 // pred_check
    _
  $region11: #{column_predictor_forward.1} parent=0 // pred_check_branch
    %19 = sbr.rel (0) target = $region13
  $region12: #{column_predictor_forward.1} parent=0 // pred_region
    _
  $region13: #{column_predictor_forward.1} parent=0 // pred_fallthru
    _
  // Predicated region
  $region14: #{column_predictor_forward.1} parent=0 // pred_check
    _
  $region15: #{column_predictor_forward.1} parent=0 // pred_check_branch
    %21 = sbr.rel (0) target = $region17
  $region16: #{column_predictor_forward.1} parent=0 // pred_region
    _
  $region17: #{column_predictor_forward.1} parent=0 // pred_fallthru
    _
  // Predicated region
  $region18: #{column_predictor_forward.1} parent=0 // pred_check
    _
  $region19: #{column_predictor_forward.1} parent=0 // pred_check_branch
    %23 = sbr.rel (0) target = $region21
  $region20: #{column_predictor_forward.1} parent=0 // pred_region
    _
  $region21: #{column_predictor_forward.1} parent=0 // pred_fallthru
    _
  // Predicated region
  $region22: #{column_predictor_forward.1} parent=0 // pred_check
    _
  $region23: #{column_predictor_forward.1} parent=0 // pred_check_branch
    %25 = sbr.rel (0) target = $region25
  $region24: #{column_predictor_forward.1} parent=0 // pred_region
    _
  $region25: #{column_predictor_forward.1} parent=0 // pred_fallthru
    _
  // Predicated region
  $region26: #{column_predictor_forward.1} parent=0 // pred_check
    _
  $region27: #{column_predictor_forward.1} parent=0 // pred_check_branch
    %27 = sbr.rel (0) target = $region29
  $region28: #{column_predictor_forward.1} parent=0 // pred_region
    _
  $region29: #{column_predictor_forward.1} parent=0 // pred_fallthru
    _
  // Predicated region
  $region30: #{column_predictor_forward.1} parent=0 // pred_check
    _
  $region31: #{column_predictor_forward.1} parent=0 // pred_check_branch
    %29 = sbr.rel (0) target = $region33
  $region32: #{column_predictor_forward.1} parent=0 // pred_region
    _
  $region33: #{column_predictor_forward.1} parent=0 // pred_fallthru
    _
  // Predicated region
  $region34: #{column_predictor_forward.1} parent=0 // pred_check
    _
  $region35: #{column_predictor_forward.1} parent=0 // pred_check_branch
    %31 = sbr.rel (0) target = $region37
  $region36: #{column_predictor_forward.1} parent=0 // pred_region
    _
  $region37: #{column_predictor_forward.1} parent=0 // pred_fallthru
    _
  %v33 = vld [vmem:[%s0] sm:$0xf]
  %v34 = vld [vmem:[%s0 + $0x4] sm:$0xf]
  %v35 = vld [vmem:[%s0 + $0x8] sm:$0xf]
  %v36 = vld [vmem:[%s0 + $0xc] sm:$0xf]
  %v37 = vld [vmem:[%s0 + $0x10] sm:$0xf]
  %v38 = vld [vmem:[%s0 + $0x14] sm:$0xf]
  %v39 = vld [vmem:[%s0 + $0x18] sm:$0xf]
  %v40 = vld [vmem:[%s0 + $0x1c] sm:$0xf]
  %v41 = vld [vmem:[%s2] sm:$0xff]
  %v42 = vld [vmem:[%s2 + $0x8] sm:$0xff]
  %v43 = vld [vmem:[%s2 + $0x10] sm:$0xff]
  %v44 = vld [vmem:[%s2 + $0x18] sm:$0xff]
  %v45 = vld [vmem:[%s2 + $0x20] sm:$0xff]
  %v46 = vld [vmem:[%s2 + $0x28] sm:$0xff]
  %v47 = vld [vmem:[%s2 + $0x30] sm:$0xff]
  %v48 = vld [vmem:[%s2 + $0x38] sm:$0xff]
  %v49 = vld [vmem:[%s2 + $0x40] sm:$0xff]
  %v50 = vld [vmem:[%s2 + $0x48] sm:$0xff]
  %v51 = vld [vmem:[%s2 + $0x50] sm:$0xff]
  %v52 = vld [vmem:[%s2 + $0x58] sm:$0xff]
  %v53 = vld [vmem:[%s2 + $0x60] sm:$0xff]
  %v54 = vld [vmem:[%s2 + $0x68] sm:$0xff]
  %v55 = vld [vmem:[%s2 + $0x70] sm:$0xff]
  %v56 = vld [vmem:[%s2 + $0x78] sm:$0xff]
  %v57 = vld [vmem:[%s2 + $0x80] sm:$0xff]
  %v58 = vld [vmem:[%s2 + $0x88] sm:$0xff]
  %v59 = vld [vmem:[%s2 + $0x90] sm:$0xff]
  %v60 = vld [vmem:[%s2 + $0x98] sm:$0xff]
  %v61 = vld [vmem:[%s2 + $0xa0] sm:$0xff]
  %v62 = vld [vmem:[%s2 + $0xa8] sm:$0xff]
  %v63 = vld [vmem:[%s2 + $0xb0] sm:$0xff]
  %v64 = vld [vmem:[%s2 + $0xb8] sm:$0xff]
  %v65 = vld [vmem:[%s2 + $0xc0] sm:$0xff]
  %v66 = vld [vmem:[%s2 + $0xc8] sm:$0xff]
  %v67 = vld [vmem:[%s2 + $0xd0] sm:$0xff]
  %v68 = vld [vmem:[%s2 + $0xd8] sm:$0xff]
  %v69 = vld [vmem:[%s2 + $0xe0] sm:$0xff]
  %v70 = vld [vmem:[%s2 + $0xe8] sm:$0xff]
  %v71 = vld [vmem:[%s2 + $0xf0] sm:$0xff]
  %v72 = vld [vmem:[%s2 + $0xf8] sm:$0xff]
  %v73 = vld [vmem:[%s2 + $0x100] sm:$0xff]
  %v74 = vld [vmem:[%s2 + $0x108] sm:$0xff]
  %v75 = vld [vmem:[%s2 + $0x110] sm:$0xff]
  %v76 = vld [vmem:[%s2 + $0x118] sm:$0xff]
  %v77 = vld [vmem:[%s2 + $0x120] sm:$0xff]
  %v78 = vld [vmem:[%s2 + $0x128] sm:$0xff]
  %v79 = vld [vmem:[%s2 + $0x130] sm:$0xff]
  %v80 = vld [vmem:[%s2 + $0x138] sm:$0xff]
  %v81 = vld [vmem:[%s2 + $0x140] sm:$0xff]
  %v82 = vld [vmem:[%s2 + $0x148] sm:$0xff]
  %v83 = vld [vmem:[%s2 + $0x150] sm:$0xff]
  %v84 = vld [vmem:[%s2 + $0x158] sm:$0xff]
  %v85 = vld [vmem:[%s2 + $0x160] sm:$0xff]
  %v86 = vld [vmem:[%s2 + $0x168] sm:$0xff]
  %v87 = vld [vmem:[%s2 + $0x170] sm:$0xff]
  %v88 = vld [vmem:[%s2 + $0x178] sm:$0xff]
  %v89 = vld [vmem:[%s2 + $0x180] sm:$0xff]
  %v90 = vld [vmem:[%s2 + $0x188] sm:$0xff]
  %v91 = vld [vmem:[%s2 + $0x190] sm:$0xff]
  %v92 = vld [vmem:[%s2 + $0x198] sm:$0xff]
  %v93 = vld [vmem:[%s2 + $0x1a0] sm:$0xff]
  %v94 = vld [vmem:[%s2 + $0x1a8] sm:$0xff]
  %v95 = vld [vmem:[%s2 + $0x1b0] sm:$0xff]
  %v96 = vld [vmem:[%s2 + $0x1b8] sm:$0xff]
  %v97 = vld [vmem:[%s2 + $0x1c0] sm:$0xff]
  %v98 = vld [vmem:[%s2 + $0x1c8] sm:$0xff]
  %v99 = vld [vmem:[%s2 + $0x1d0] sm:$0xff]
  %v100 = vld [vmem:[%s2 + $0x1d8] sm:$0xff]
  %v101 = vld [vmem:[%s2 + $0x1e0] sm:$0xff]
  %v102 = vld [vmem:[%s2 + $0x1e8] sm:$0xff]
  %v103 = vld [vmem:[%s2 + $0x1f0] sm:$0xff]
  %v104 = vld [vmem:[%s2 + $0x1f8] sm:$0xff]
  %v105 = vld [vmem:[%s4] sm:$0xff]
  %v107 = vlaneseq
  %v108 = vshrl.u32 %v107, 7
  %v109 = vsub.s32 0, %v108
  %v110 = vrot.slane %v105, %v109
  %v111 = vlaneseq
  %v112 = vshrl.u32 %v111, 7
  %v113 = vsub.s32 1, %v112
  %v114 = vrot.slane %v105, %v113
  %v115 = vlaneseq
  %v116 = vshrl.u32 %v115, 7
  %v117 = vsub.s32 2, %v116
  %v118 = vrot.slane %v105, %v117
  %v119 = vlaneseq
  %v120 = vshrl.u32 %v119, 7
  %v121 = vsub.s32 3, %v120
  %v122 = vrot.slane %v105, %v121
  %v123 = vlaneseq
  %v124 = vshrl.u32 %v123, 7
  %v125 = vsub.s32 4, %v124
  %v126 = vrot.slane %v105, %v125
  %v127 = vlaneseq
  %v128 = vshrl.u32 %v127, 7
  %v129 = vsub.s32 5, %v128
  %v130 = vrot.slane %v105, %v129
  %v131 = vlaneseq
  %v132 = vshrl.u32 %v131, 7
  %v133 = vsub.s32 6, %v132
  %v134 = vrot.slane %v105, %v133
  %v135 = vlaneseq
  %v136 = vshrl.u32 %v135, 7
  %v137 = vsub.s32 7, %v136
  %v138 = vrot.slane %v105, %v137
  %v155 = vunpack.c.l.b16 %v33
  %v156 = vunpack.c.l.b16 %v34
  %v157 = vunpack.c.l.b16 %v35
  %v158 = vunpack.c.l.b16 %v36
  %v159 = vunpack.c.l.b16 %v37
  %v160 = vunpack.c.l.b16 %v38
  %v161 = vunpack.c.l.b16 %v39
  %v162 = vunpack.c.l.b16 %v40
  %v163 = vpack.c.b16 %v156, %v155
  %v164 = vpack.c.b16 %v158, %v157
  %v165 = vpack.c.b16 %v160, %v159
  %v166 = vpack.c.b16 %v162, %v161
  %v235 = vunpack.c.l.b16 %v41
  %v236 = vunpack.c.h.b16 %v41
  %v237 = vunpack.c.l.b16 %v42
  %v238 = vunpack.c.h.b16 %v42
  %v239 = vunpack.c.l.b16 %v43
  %v240 = vunpack.c.h.b16 %v43
  %v241 = vunpack.c.l.b16 %v44
  %v242 = vunpack.c.h.b16 %v44
  %v243 = vunpack.c.l.b16 %v45
  %v244 = vunpack.c.h.b16 %v45
  %v245 = vunpack.c.l.b16 %v46
  %v246 = vunpack.c.h.b16 %v46
  %v247 = vunpack.c.l.b16 %v47
  %v248 = vunpack.c.h.b16 %v47
  %v249 = vunpack.c.l.b16 %v48
  %v250 = vunpack.c.h.b16 %v48
  %v251 = vunpack.c.l.b16 %v49
  %v252 = vunpack.c.h.b16 %v49
  %v253 = vunpack.c.l.b16 %v50
  %v254 = vunpack.c.h.b16 %v50
  %v255 = vunpack.c.l.b16 %v51
  %v256 = vunpack.c.h.b16 %v51
  %v257 = vunpack.c.l.b16 %v52
  %v258 = vunpack.c.h.b16 %v52
  %v259 = vunpack.c.l.b16 %v53
  %v260 = vunpack.c.h.b16 %v53
  %v261 = vunpack.c.l.b16 %v54
  %v262 = vunpack.c.h.b16 %v54
  %v263 = vunpack.c.l.b16 %v55
  %v264 = vunpack.c.h.b16 %v55
  %v265 = vunpack.c.l.b16 %v56
  %v266 = vunpack.c.h.b16 %v56
  %v267 = vunpack.c.l.b16 %v57
  %v268 = vunpack.c.h.b16 %v57
  %v269 = vunpack.c.l.b16 %v58
  %v270 = vunpack.c.h.b16 %v58
  %v271 = vunpack.c.l.b16 %v59
  %v272 = vunpack.c.h.b16 %v59
  %v273 = vunpack.c.l.b16 %v60
  %v274 = vunpack.c.h.b16 %v60
  %v275 = vunpack.c.l.b16 %v61
  %v276 = vunpack.c.h.b16 %v61
  %v277 = vunpack.c.l.b16 %v62
  %v278 = vunpack.c.h.b16 %v62
  %v279 = vunpack.c.l.b16 %v63
  %v280 = vunpack.c.h.b16 %v63
  %v281 = vunpack.c.l.b16 %v64
  %v282 = vunpack.c.h.b16 %v64
  %v283 = vunpack.c.l.b16 %v65
  %v284 = vunpack.c.h.b16 %v65
  %v285 = vunpack.c.l.b16 %v66
  %v286 = vunpack.c.h.b16 %v66
  %v287 = vunpack.c.l.b16 %v67
  %v288 = vunpack.c.h.b16 %v67
  %v289 = vunpack.c.l.b16 %v68
  %v290 = vunpack.c.h.b16 %v68
  %v291 = vunpack.c.l.b16 %v69
  %v292 = vunpack.c.h.b16 %v69
  %v293 = vunpack.c.l.b16 %v70
  %v294 = vunpack.c.h.b16 %v70
  %v295 = vunpack.c.l.b16 %v71
  %v296 = vunpack.c.h.b16 %v71
  %v297 = vunpack.c.l.b16 %v72
  %v298 = vunpack.c.h.b16 %v72
  %v299 = vunpack.c.l.b16 %v73
  %v300 = vunpack.c.h.b16 %v73
  %v301 = vunpack.c.l.b16 %v74
  %v302 = vunpack.c.h.b16 %v74
  %v303 = vunpack.c.l.b16 %v75
  %v304 = vunpack.c.h.b16 %v75
  %v305 = vunpack.c.l.b16 %v76
  %v306 = vunpack.c.h.b16 %v76
  %v307 = vunpack.c.l.b16 %v77
  %v308 = vunpack.c.h.b16 %v77
  %v309 = vunpack.c.l.b16 %v78
  %v310 = vunpack.c.h.b16 %v78
  %v311 = vunpack.c.l.b16 %v79
  %v312 = vunpack.c.h.b16 %v79
  %v313 = vunpack.c.l.b16 %v80
  %v314 = vunpack.c.h.b16 %v80
  %v315 = vunpack.c.l.b16 %v81
  %v316 = vunpack.c.h.b16 %v81
  %v317 = vunpack.c.l.b16 %v82
  %v318 = vunpack.c.h.b16 %v82
  %v319 = vunpack.c.l.b16 %v83
  %v320 = vunpack.c.h.b16 %v83
  %v321 = vunpack.c.l.b16 %v84
  %v322 = vunpack.c.h.b16 %v84
  %v323 = vunpack.c.l.b16 %v85
  %v324 = vunpack.c.h.b16 %v85
  %v325 = vunpack.c.l.b16 %v86
  %v326 = vunpack.c.h.b16 %v86
  %v327 = vunpack.c.l.b16 %v87
  %v328 = vunpack.c.h.b16 %v87
  %v329 = vunpack.c.l.b16 %v88
  %v330 = vunpack.c.h.b16 %v88
  %v331 = vunpack.c.l.b16 %v89
  %v332 = vunpack.c.h.b16 %v89
  %v333 = vunpack.c.l.b16 %v90
  %v334 = vunpack.c.h.b16 %v90
  %v335 = vunpack.c.l.b16 %v91
  %v336 = vunpack.c.h.b16 %v91
  %v337 = vunpack.c.l.b16 %v92
  %v338 = vunpack.c.h.b16 %v92
  %v339 = vunpack.c.l.b16 %v93
  %v340 = vunpack.c.h.b16 %v93
  %v341 = vunpack.c.l.b16 %v94
  %v342 = vunpack.c.h.b16 %v94
  %v343 = vunpack.c.l.b16 %v95
  %v344 = vunpack.c.h.b16 %v95
  %v345 = vunpack.c.l.b16 %v96
  %v346 = vunpack.c.h.b16 %v96
  %v347 = vunpack.c.l.b16 %v97
  %v348 = vunpack.c.h.b16 %v97
  %v349 = vunpack.c.l.b16 %v98
  %v350 = vunpack.c.h.b16 %v98
  %v351 = vunpack.c.l.b16 %v99
  %v352 = vunpack.c.h.b16 %v99
  %v353 = vunpack.c.l.b16 %v100
  %v354 = vunpack.c.h.b16 %v100
  %v355 = vunpack.c.l.b16 %v101
  %v356 = vunpack.c.h.b16 %v101
  %v357 = vunpack.c.l.b16 %v102
  %v358 = vunpack.c.h.b16 %v102
  %v359 = vunpack.c.l.b16 %v103
  %v360 = vunpack.c.h.b16 %v103
  %v361 = vunpack.c.l.b16 %v104
  %v362 = vunpack.c.h.b16 %v104
  %v363 = vpack.c.b16 %v243, %v235
  %v364 = vpack.c.b16 %v244, %v236
  %v365 = vpack.c.b16 %v245, %v237
  %v366 = vpack.c.b16 %v246, %v238
  %v367 = vpack.c.b16 %v247, %v239
  %v368 = vpack.c.b16 %v248, %v240
  %v369 = vpack.c.b16 %v249, %v241
  %v370 = vpack.c.b16 %v250, %v242
  %v371 = vpack.c.b16 %v259, %v251
  %v372 = vpack.c.b16 %v260, %v252
  %v373 = vpack.c.b16 %v261, %v253
  %v374 = vpack.c.b16 %v262, %v254
  %v375 = vpack.c.b16 %v263, %v255
  %v376 = vpack.c.b16 %v264, %v256
  %v377 = vpack.c.b16 %v265, %v257
  %v378 = vpack.c.b16 %v266, %v258
  %v379 = vpack.c.b16 %v275, %v267
  %v380 = vpack.c.b16 %v276, %v268
  %v381 = vpack.c.b16 %v277, %v269
  %v382 = vpack.c.b16 %v278, %v270
  %v383 = vpack.c.b16 %v279, %v271
  %v384 = vpack.c.b16 %v280, %v272
  %v385 = vpack.c.b16 %v281, %v273
  %v386 = vpack.c.b16 %v282, %v274
  %v387 = vpack.c.b16 %v291, %v283
  %v388 = vpack.c.b16 %v292, %v284
  %v389 = vpack.c.b16 %v293, %v285
  %v390 = vpack.c.b16 %v294, %v286
  %v391 = vpack.c.b16 %v295, %v287
  %v392 = vpack.c.b16 %v296, %v288
  %v393 = vpack.c.b16 %v297, %v289
  %v394 = vpack.c.b16 %v298, %v290
  %v395 = vpack.c.b16 %v307, %v299
  %v396 = vpack.c.b16 %v308, %v300
  %v397 = vpack.c.b16 %v309, %v301
  %v398 = vpack.c.b16 %v310, %v302
  %v399 = vpack.c.b16 %v311, %v303
  %v400 = vpack.c.b16 %v312, %v304
  %v401 = vpack.c.b16 %v313, %v305
  %v402 = vpack.c.b16 %v314, %v306
  %v403 = vpack.c.b16 %v323, %v315
  %v404 = vpack.c.b16 %v324, %v316
  %v405 = vpack.c.b16 %v325, %v317
  %v406 = vpack.c.b16 %v326, %v318
  %v407 = vpack.c.b16 %v327, %v319
  %v408 = vpack.c.b16 %v328, %v320
  %v409 = vpack.c.b16 %v329, %v321
  %v410 = vpack.c.b16 %v330, %v322
  %v411 = vpack.c.b16 %v339, %v331
  %v412 = vpack.c.b16 %v340, %v332
  %v413 = vpack.c.b16 %v341, %v333
  %v414 = vpack.c.b16 %v342, %v334
  %v415 = vpack.c.b16 %v343, %v335
  %v416 = vpack.c.b16 %v344, %v336
  %v417 = vpack.c.b16 %v345, %v337
  %v418 = vpack.c.b16 %v346, %v338
  %v419 = vpack.c.b16 %v355, %v347
  %v420 = vpack.c.b16 %v356, %v348
  %v421 = vpack.c.b16 %v357, %v349
  %v422 = vpack.c.b16 %v358, %v350
  %v423 = vpack.c.b16 %v359, %v351
  %v424 = vpack.c.b16 %v360, %v352
  %v425 = vpack.c.b16 %v361, %v353
  %v426 = vpack.c.b16 %v362, %v354
  %491 = vmatprep.subr.bf16.mxu0 %v364
  %492 = vmatpush1.bf16.msra.mxu0 %v363
  %493 = vmatprep.subr.bf16.mxu0 %v372
  %494 = vmatpush1.bf16.msra.mxu0 %v371
  %495 = vmatprep.subr.bf16.mxu0 %v380
  %496 = vmatpush1.bf16.msra.mxu0 %v379
  %497 = vmatprep.subr.bf16.mxu0 %v388
  %498 = vmatpush1.bf16.msra.mxu0 %v387
  %499 = vmatprep.subr.bf16.mxu0 %v396
  %500 = vmatpush1.bf16.msra.mxu0 %v395
  %501 = vmatprep.subr.bf16.mxu0 %v404
  %502 = vmatpush1.bf16.msra.mxu0 %v403
  %503 = vmatprep.subr.bf16.mxu0 %v412
  %504 = vmatpush1.bf16.msra.mxu0 %v411
  %505 = vmatprep.subr.bf16.mxu0 %v420
  %506 = vmatpush1.bf16.msra.mxu0 %v419
  %507 = vmatprep.subr.bf16.mxu0 0
  %508 = vmatpush1.bf16.msra.mxu0 0
  %509 = vmatprep.subr.bf16.mxu0 0
  %510 = vmatpush1.bf16.msra.mxu0 0
  %511 = vmatprep.subr.bf16.mxu0 0
  %512 = vmatpush1.bf16.msra.mxu0 0
  %513 = vmatprep.subr.bf16.mxu0 0
  %514 = vmatpush1.bf16.msra.mxu0 0
  %515 = vmatprep.subr.bf16.mxu0 0
  %516 = vmatpush1.bf16.msra.mxu0 0
  %517 = vmatprep.subr.bf16.mxu0 0
  %518 = vmatpush1.bf16.msra.mxu0 0
  %519 = vmatprep.subr.bf16.mxu0 0
  %520 = vmatpush1.bf16.msra.mxu0 0
  %521 = vmatprep.subr.bf16.mxu0 0
  %522 = vmatpush1.bf16.msra.mxu0 0
  %523 = vmatprep.mubr.bf16.mxu0 0
  %524 = vmatmul.mubr.bf16.gmra.mrb[0].mxu0 %v163
  %v525 = vpop.f32.mrb[0].mxu0
  %v526 = vadd.f32 %v110, %v525
  %v527 = vpop.f32.mrb[0].mxu0
  %v528 = vadd.f32 %v114, %v527
  %v529 = vpop.f32.mrb[0].mxu0
  %v530 = vadd.f32 %v110, %v529
  %v531 = vpop.f32.mrb[0].mxu0
  %v532 = vadd.f32 %v114, %v531
  %533 = vmatprep.mubr.bf16.mxu0 0
  %534 = vmatmul.mubr.bf16.gmra.mrb[0].mxu0 %v164
  %v535 = vpop.f32.mrb[0].mxu0
  %v536 = vadd.f32 %v110, %v535
  %v537 = vpop.f32.mrb[0].mxu0
  %v538 = vadd.f32 %v114, %v537
  %v539 = vpop.f32.mrb[0].mxu0
  %v540 = vadd.f32 %v110, %v539
  %v541 = vpop.f32.mrb[0].mxu0
  %v542 = vadd.f32 %v114, %v541
  %543 = vmatprep.mubr.bf16.mxu0 0
  %544 = vmatmul.mubr.bf16.gmra.mrb[0].mxu0 %v165
  %v545 = vpop.f32.mrb[0].mxu0
  %v546 = vadd.f32 %v110, %v545
  %v547 = vpop.f32.mrb[0].mxu0
  %v548 = vadd.f32 %v114, %v547
  %v549 = vpop.f32.mrb[0].mxu0
  %v550 = vadd.f32 %v110, %v549
  %v551 = vpop.f32.mrb[0].mxu0
  %v552 = vadd.f32 %v114, %v551
  %553 = vmatprep.mubr.bf16.mxu0 0
  %554 = vmatmul.mubr.bf16.gmra.mrb[0].mxu0 %v166
  %v555 = vpop.f32.mrb[0].mxu0
  %v556 = vadd.f32 %v110, %v555
  %v557 = vpop.f32.mrb[0].mxu0
  %v558 = vadd.f32 %v114, %v557
  %v559 = vpop.f32.mrb[0].mxu0
  %v560 = vadd.f32 %v110, %v559
  %v561 = vpop.f32.mrb[0].mxu0
  %v562 = vadd.f32 %v114, %v561
  %563 = vdwg.mxu0
  %564 = vmatprep.subr.bf16.mxu0 %v366
  %565 = vmatpush1.bf16.msra.mxu0 %v365
  %566 = vmatprep.subr.bf16.mxu0 %v374
  %567 = vmatpush1.bf16.msra.mxu0 %v373
  %568 = vmatprep.subr.bf16.mxu0 %v382
  %569 = vmatpush1.bf16.msra.mxu0 %v381
  %570 = vmatprep.subr.bf16.mxu0 %v390
  %571 = vmatpush1.bf16.msra.mxu0 %v389
  %572 = vmatprep.subr.bf16.mxu0 %v398
  %573 = vmatpush1.bf16.msra.mxu0 %v397
  %574 = vmatprep.subr.bf16.mxu0 %v406
  %575 = vmatpush1.bf16.msra.mxu0 %v405
  %576 = vmatprep.subr.bf16.mxu0 %v414
  %577 = vmatpush1.bf16.msra.mxu0 %v413
  %578 = vmatprep.subr.bf16.mxu0 %v422
  %579 = vmatpush1.bf16.msra.mxu0 %v421
  %580 = vmatprep.subr.bf16.mxu0 0
  %581 = vmatpush1.bf16.msra.mxu0 0
  %582 = vmatprep.subr.bf16.mxu0 0
  %583 = vmatpush1.bf16.msra.mxu0 0
  %584 = vmatprep.subr.bf16.mxu0 0
  %585 = vmatpush1.bf16.msra.mxu0 0
  %586 = vmatprep.subr.bf16.mxu0 0
  %587 = vmatpush1.bf16.msra.mxu0 0
  %588 = vmatprep.subr.bf16.mxu0 0
  %589 = vmatpush1.bf16.msra.mxu0 0
  %590 = vmatprep.subr.bf16.mxu0 0
  %591 = vmatpush1.bf16.msra.mxu0 0
  %592 = vmatprep.subr.bf16.mxu0 0
  %593 = vmatpush1.bf16.msra.mxu0 0
  %594 = vmatprep.subr.bf16.mxu0 0
  %595 = vmatpush1.bf16.msra.mxu0 0
  %596 = vmatprep.mubr.bf16.mxu0 0
  %597 = vmatmul.mubr.bf16.gmra.mrb[0].mxu0 %v163
  %v598 = vpop.f32.mrb[0].mxu0
  %v599 = vadd.f32 %v118, %v598
  %v600 = vpop.f32.mrb[0].mxu0
  %v601 = vadd.f32 %v122, %v600
  %v602 = vpop.f32.mrb[0].mxu0
  %v603 = vadd.f32 %v118, %v602
  %v604 = vpop.f32.mrb[0].mxu0
  %v605 = vadd.f32 %v122, %v604
  %606 = vmatprep.mubr.bf16.mxu0 0
  %607 = vmatmul.mubr.bf16.gmra.mrb[0].mxu0 %v164
  %v608 = vpop.f32.mrb[0].mxu0
  %v609 = vadd.f32 %v118, %v608
  %v610 = vpop.f32.mrb[0].mxu0
  %v611 = vadd.f32 %v122, %v610
  %v612 = vpop.f32.mrb[0].mxu0
  %v613 = vadd.f32 %v118, %v612
  %v614 = vpop.f32.mrb[0].mxu0
  %v615 = vadd.f32 %v122, %v614
  %616 = vmatprep.mubr.bf16.mxu0 0
  %617 = vmatmul.mubr.bf16.gmra.mrb[0].mxu0 %v165
  %v618 = vpop.f32.mrb[0].mxu0
  %v619 = vadd.f32 %v118, %v618
  %v620 = vpop.f32.mrb[0].mxu0
  %v621 = vadd.f32 %v122, %v620
  %v622 = vpop.f32.mrb[0].mxu0
  %v623 = vadd.f32 %v118, %v622
  %v624 = vpop.f32.mrb[0].mxu0
  %v625 = vadd.f32 %v122, %v624
  %626 = vmatprep.mubr.bf16.mxu0 0
  %627 = vmatmul.mubr.bf16.gmra.mrb[0].mxu0 %v166
  %v628 = vpop.f32.mrb[0].mxu0
  %v629 = vadd.f32 %v118, %v628
  %v630 = vpop.f32.mrb[0].mxu0
  %v631 = vadd.f32 %v122, %v630
  %v632 = vpop.f32.mrb[0].mxu0
  %v633 = vadd.f32 %v118, %v632
  %v634 = vpop.f32.mrb[0].mxu0
  %v635 = vadd.f32 %v122, %v634
  %636 = vdwg.mxu0
  %637 = vmatprep.subr.bf16.mxu0 %v368
  %638 = vmatpush1.bf16.msra.mxu0 %v367
  %639 = vmatprep.subr.bf16.mxu0 %v376
  %640 = vmatpush1.bf16.msra.mxu0 %v375
  %641 = vmatprep.subr.bf16.mxu0 %v384
  %642 = vmatpush1.bf16.msra.mxu0 %v383
  %643 = vmatprep.subr.bf16.mxu0 %v392
  %644 = vmatpush1.bf16.msra.mxu0 %v391
  %645 = vmatprep.subr.bf16.mxu0 %v400
  %646 = vmatpush1.bf16.msra.mxu0 %v399
  %647 = vmatprep.subr.bf16.mxu0 %v408
  %648 = vmatpush1.bf16.msra.mxu0 %v407
  %649 = vmatprep.subr.bf16.mxu0 %v416
  %650 = vmatpush1.bf16.msra.mxu0 %v415
  %651 = vmatprep.subr.bf16.mxu0 %v424
  %652 = vmatpush1.bf16.msra.mxu0 %v423
  %653 = vmatprep.subr.bf16.mxu0 0
  %654 = vmatpush1.bf16.msra.mxu0 0
  %655 = vmatprep.subr.bf16.mxu0 0
  %656 = vmatpush1.bf16.msra.mxu0 0
  %657 = vmatprep.subr.bf16.mxu0 0
  %658 = vmatpush1.bf16.msra.mxu0 0
  %659 = vmatprep.subr.bf16.mxu0 0
  %660 = vmatpush1.bf16.msra.mxu0 0
  %661 = vmatprep.subr.bf16.mxu0 0
  %662 = vmatpush1.bf16.msra.mxu0 0
  %663 = vmatprep.subr.bf16.mxu0 0
  %664 = vmatpush1.bf16.msra.mxu0 0
  %665 = vmatprep.subr.bf16.mxu0 0
  %666 = vmatpush1.bf16.msra.mxu0 0
  %667 = vmatprep.subr.bf16.mxu0 0
  %668 = vmatpush1.bf16.msra.mxu0 0
  %669 = vmatprep.mubr.bf16.mxu0 0
  %670 = vmatmul.mubr.bf16.gmra.mrb[0].mxu0 %v163
  %v671 = vpop.f32.mrb[0].mxu0
  %v672 = vadd.f32 %v126, %v671
  %v673 = vpop.f32.mrb[0].mxu0
  %v674 = vadd.f32 %v130, %v673
  %v675 = vpop.f32.mrb[0].mxu0
  %v676 = vadd.f32 %v126, %v675
  %v677 = vpop.f32.mrb[0].mxu0
  %v678 = vadd.f32 %v130, %v677
  %679 = vmatprep.mubr.bf16.mxu0 0
  %680 = vmatmul.mubr.bf16.gmra.mrb[0].mxu0 %v164
  %v681 = vpop.f32.mrb[0].mxu0
  %v682 = vadd.f32 %v126, %v681
  %v683 = vpop.f32.mrb[0].mxu0
  %v684 = vadd.f32 %v130, %v683
  %v685 = vpop.f32.mrb[0].mxu0
  %v686 = vadd.f32 %v126, %v685
  %v687 = vpop.f32.mrb[0].mxu0
  %v688 = vadd.f32 %v130, %v687
  %689 = vmatprep.mubr.bf16.mxu0 0
  %690 = vmatmul.mubr.bf16.gmra.mrb[0].mxu0 %v165
  %v691 = vpop.f32.mrb[0].mxu0
  %v692 = vadd.f32 %v126, %v691
  %v693 = vpop.f32.mrb[0].mxu0
  %v694 = vadd.f32 %v130, %v693
  %v695 = vpop.f32.mrb[0].mxu0
  %v696 = vadd.f32 %v126, %v695
  %v697 = vpop.f32.mrb[0].mxu0
  %v698 = vadd.f32 %v130, %v697
  %699 = vmatprep.mubr.bf16.mxu0 0
  %700 = vmatmul.mubr.bf16.gmra.mrb[0].mxu0 %v166
  %v701 = vpop.f32.mrb[0].mxu0
  %v702 = vadd.f32 %v126, %v701
  %v703 = vpop.f32.mrb[0].mxu0
  %v704 = vadd.f32 %v130, %v703
  %v705 = vpop.f32.mrb[0].mxu0
  %v706 = vadd.f32 %v126, %v705
  %v707 = vpop.f32.mrb[0].mxu0
  %v708 = vadd.f32 %v130, %v707
  %709 = vdwg.mxu0
  %710 = vmatprep.subr.bf16.mxu0 %v370
  %711 = vmatpush1.bf16.msra.mxu0 %v369
  %712 = vmatprep.subr.bf16.mxu0 %v378
  %713 = vmatpush1.bf16.msra.mxu0 %v377
  %714 = vmatprep.subr.bf16.mxu0 %v386
  %715 = vmatpush1.bf16.msra.mxu0 %v385
  %716 = vmatprep.subr.bf16.mxu0 %v394
  %717 = vmatpush1.bf16.msra.mxu0 %v393
  %718 = vmatprep.subr.bf16.mxu0 %v402
  %719 = vmatpush1.bf16.msra.mxu0 %v401
  %720 = vmatprep.subr.bf16.mxu0 %v410
  %721 = vmatpush1.bf16.msra.mxu0 %v409
  %722 = vmatprep.subr.bf16.mxu0 %v418
  %723 = vmatpush1.bf16.msra.mxu0 %v417
  %724 = vmatprep.subr.bf16.mxu0 %v426
  %725 = vmatpush1.bf16.msra.mxu0 %v425
  %726 = vmatprep.subr.bf16.mxu0 0
  %727 = vmatpush1.bf16.msra.mxu0 0
  %728 = vmatprep.subr.bf16.mxu0 0
  %729 = vmatpush1.bf16.msra.mxu0 0
  %730 = vmatprep.subr.bf16.mxu0 0
  %731 = vmatpush1.bf16.msra.mxu0 0
  %732 = vmatprep.subr.bf16.mxu0 0
  %733 = vmatpush1.bf16.msra.mxu0 0
  %734 = vmatprep.subr.bf16.mxu0 0
  %735 = vmatpush1.bf16.msra.mxu0 0
  %736 = vmatprep.subr.bf16.mxu0 0
  %737 = vmatpush1.bf16.msra.mxu0 0
  %738 = vmatprep.subr.bf16.mxu0 0
  %739 = vmatpush1.bf16.msra.mxu0 0
  %740 = vmatprep.subr.bf16.mxu0 0
  %741 = vmatpush1.bf16.msra.mxu0 0
  %742 = vmatprep.mubr.bf16.mxu0 0
  %743 = vmatmul.mubr.bf16.gmra.mrb[0].mxu0 %v163
  %v744 = vpop.f32.mrb[0].mxu0
  %v745 = vadd.f32 %v134, %v744
  %v746 = vpop.f32.mrb[0].mxu0
  %v747 = vadd.f32 %v138, %v746
  %v748 = vpop.f32.mrb[0].mxu0
  %v749 = vadd.f32 %v134, %v748
  %v750 = vpop.f32.mrb[0].mxu0
  %v751 = vadd.f32 %v138, %v750
  %752 = vmatprep.mubr.bf16.mxu0 0
  %753 = vmatmul.mubr.bf16.gmra.mrb[0].mxu0 %v164
  %v754 = vpop.f32.mrb[0].mxu0
  %v755 = vadd.f32 %v134, %v754
  %v756 = vpop.f32.mrb[0].mxu0
  %v757 = vadd.f32 %v138, %v756
  %v758 = vpop.f32.mrb[0].mxu0
  %v759 = vadd.f32 %v134, %v758
  %v760 = vpop.f32.mrb[0].mxu0
  %v761 = vadd.f32 %v138, %v760
  %762 = vmatprep.mubr.bf16.mxu0 0
  %763 = vmatmul.mubr.bf16.gmra.mrb[0].mxu0 %v165
  %v764 = vpop.f32.mrb[0].mxu0
  %v765 = vadd.f32 %v134, %v764
  %v766 = vpop.f32.mrb[0].mxu0
  %v767 = vadd.f32 %v138, %v766
  %v768 = vpop.f32.mrb[0].mxu0
  %v769 = vadd.f32 %v134, %v768
  %v770 = vpop.f32.mrb[0].mxu0
  %v771 = vadd.f32 %v138, %v770
  %772 = vmatprep.mubr.bf16.mxu0 0
  %773 = vmatmul.mubr.bf16.gmra.mrb[0].mxu0 %v166
  %v774 = vpop.f32.mrb[0].mxu0
  %v775 = vadd.f32 %v134, %v774
  %v776 = vpop.f32.mrb[0].mxu0
  %v777 = vadd.f32 %v138, %v776
  %v778 = vpop.f32.mrb[0].mxu0
  %v779 = vadd.f32 %v134, %v778
  %v780 = vpop.f32.mrb[0].mxu0
  %v781 = vadd.f32 %v138, %v780
  %782 = vdwg.mxu0
  %v783 = vld [vmem:[%s3] sm:$0xff]
  %v784 = vld [vmem:[%s3 + $0x8] sm:$0xff]
  %v785 = vld [vmem:[%s3 + $0x10] sm:$0xff]
  %v786 = vld [vmem:[%s3 + $0x18] sm:$0xff]
  %v787 = vld [vmem:[%s3 + $0x20] sm:$0xff]
  %v788 = vld [vmem:[%s3 + $0x28] sm:$0xff]
  %v789 = vld [vmem:[%s3 + $0x30] sm:$0xff]
  %v790 = vld [vmem:[%s3 + $0x38] sm:$0xff]
  %v791 = vld [vmem:[%s3 + $0x40] sm:$0xff]
  %v792 = vld [vmem:[%s3 + $0x48] sm:$0xff]
  %v793 = vld [vmem:[%s3 + $0x50] sm:$0xff]
  %v794 = vld [vmem:[%s3 + $0x58] sm:$0xff]
  %v795 = vld [vmem:[%s3 + $0x60] sm:$0xff]
  %v796 = vld [vmem:[%s3 + $0x68] sm:$0xff]
  %v797 = vld [vmem:[%s3 + $0x70] sm:$0xff]
  %v798 = vld [vmem:[%s3 + $0x78] sm:$0xff]
  %v799 = vld [vmem:[%s3 + $0x80] sm:$0xff]
  %v800 = vld [vmem:[%s3 + $0x88] sm:$0xff]
  %v801 = vld [vmem:[%s3 + $0x90] sm:$0xff]
  %v802 = vld [vmem:[%s3 + $0x98] sm:$0xff]
  %v803 = vld [vmem:[%s3 + $0xa0] sm:$0xff]
  %v804 = vld [vmem:[%s3 + $0xa8] sm:$0xff]
  %v805 = vld [vmem:[%s3 + $0xb0] sm:$0xff]
  %v806 = vld [vmem:[%s3 + $0xb8] sm:$0xff]
  %v807 = vld [vmem:[%s3 + $0xc0] sm:$0xff]
  %v808 = vld [vmem:[%s3 + $0xc8] sm:$0xff]
  %v809 = vld [vmem:[%s3 + $0xd0] sm:$0xff]
  %v810 = vld [vmem:[%s3 + $0xd8] sm:$0xff]
  %v811 = vld [vmem:[%s3 + $0xe0] sm:$0xff]
  %v812 = vld [vmem:[%s3 + $0xe8] sm:$0xff]
  %v813 = vld [vmem:[%s3 + $0xf0] sm:$0xff]
  %v814 = vld [vmem:[%s3 + $0xf8] sm:$0xff]
  %v815 = vld [vmem:[%s3 + $0x100] sm:$0xff]
  %v816 = vld [vmem:[%s3 + $0x108] sm:$0xff]
  %v817 = vld [vmem:[%s3 + $0x110] sm:$0xff]
  %v818 = vld [vmem:[%s3 + $0x118] sm:$0xff]
  %v819 = vld [vmem:[%s3 + $0x120] sm:$0xff]
  %v820 = vld [vmem:[%s3 + $0x128] sm:$0xff]
  %v821 = vld [vmem:[%s3 + $0x130] sm:$0xff]
  %v822 = vld [vmem:[%s3 + $0x138] sm:$0xff]
  %v823 = vld [vmem:[%s3 + $0x140] sm:$0xff]
  %v824 = vld [vmem:[%s3 + $0x148] sm:$0xff]
  %v825 = vld [vmem:[%s3 + $0x150] sm:$0xff]
  %v826 = vld [vmem:[%s3 + $0x158] sm:$0xff]
  %v827 = vld [vmem:[%s3 + $0x160] sm:$0xff]
  %v828 = vld [vmem:[%s3 + $0x168] sm:$0xff]
  %v829 = vld [vmem:[%s3 + $0x170] sm:$0xff]
  %v830 = vld [vmem:[%s3 + $0x178] sm:$0xff]
  %v831 = vld [vmem:[%s3 + $0x180] sm:$0xff]
  %v832 = vld [vmem:[%s3 + $0x188] sm:$0xff]
  %v833 = vld [vmem:[%s3 + $0x190] sm:$0xff]
  %v834 = vld [vmem:[%s3 + $0x198] sm:$0xff]
  %v835 = vld [vmem:[%s3 + $0x1a0] sm:$0xff]
  %v836 = vld [vmem:[%s3 + $0x1a8] sm:$0xff]
  %v837 = vld [vmem:[%s3 + $0x1b0] sm:$0xff]
  %v838 = vld [vmem:[%s3 + $0x1b8] sm:$0xff]
  %v839 = vld [vmem:[%s3 + $0x1c0] sm:$0xff]
  %v840 = vld [vmem:[%s3 + $0x1c8] sm:$0xff]
  %v841 = vld [vmem:[%s3 + $0x1d0] sm:$0xff]
  %v842 = vld [vmem:[%s3 + $0x1d8] sm:$0xff]
  %v843 = vld [vmem:[%s3 + $0x1e0] sm:$0xff]
  %v844 = vld [vmem:[%s3 + $0x1e8] sm:$0xff]
  %v845 = vld [vmem:[%s3 + $0x1f0] sm:$0xff]
  %v846 = vld [vmem:[%s3 + $0x1f8] sm:$0xff]
  %v847 = vld [vmem:[%s3 + $0x200] sm:$0xff]
  %v848 = vld [vmem:[%s3 + $0x208] sm:$0xff]
  %v849 = vld [vmem:[%s3 + $0x210] sm:$0xff]
  %v850 = vld [vmem:[%s3 + $0x218] sm:$0xff]
  %v851 = vld [vmem:[%s3 + $0x220] sm:$0xff]
  %v852 = vld [vmem:[%s3 + $0x228] sm:$0xff]
  %v853 = vld [vmem:[%s3 + $0x230] sm:$0xff]
  %v854 = vld [vmem:[%s3 + $0x238] sm:$0xff]
  %v855 = vld [vmem:[%s3 + $0x240] sm:$0xff]
  %v856 = vld [vmem:[%s3 + $0x248] sm:$0xff]
  %v857 = vld [vmem:[%s3 + $0x250] sm:$0xff]
  %v858 = vld [vmem:[%s3 + $0x258] sm:$0xff]
  %v859 = vld [vmem:[%s3 + $0x260] sm:$0xff]
  %v860 = vld [vmem:[%s3 + $0x268] sm:$0xff]
  %v861 = vld [vmem:[%s3 + $0x270] sm:$0xff]
  %v862 = vld [vmem:[%s3 + $0x278] sm:$0xff]
  %v863 = vld [vmem:[%s3 + $0x280] sm:$0xff]
  %v864 = vld [vmem:[%s3 + $0x288] sm:$0xff]
  %v865 = vld [vmem:[%s3 + $0x290] sm:$0xff]
  %v866 = vld [vmem:[%s3 + $0x298] sm:$0xff]
  %v867 = vld [vmem:[%s3 + $0x2a0] sm:$0xff]
  %v868 = vld [vmem:[%s3 + $0x2a8] sm:$0xff]
  %v869 = vld [vmem:[%s3 + $0x2b0] sm:$0xff]
  %v870 = vld [vmem:[%s3 + $0x2b8] sm:$0xff]
  %v871 = vld [vmem:[%s3 + $0x2c0] sm:$0xff]
  %v872 = vld [vmem:[%s3 + $0x2c8] sm:$0xff]
  %v873 = vld [vmem:[%s3 + $0x2d0] sm:$0xff]
  %v874 = vld [vmem:[%s3 + $0x2d8] sm:$0xff]
  %v875 = vld [vmem:[%s3 + $0x2e0] sm:$0xff]
  %v876 = vld [vmem:[%s3 + $0x2e8] sm:$0xff]
  %v877 = vld [vmem:[%s3 + $0x2f0] sm:$0xff]
  %v878 = vld [vmem:[%s3 + $0x2f8] sm:$0xff]
  %v879 = vld [vmem:[%s3 + $0x300] sm:$0xff]
  %v880 = vld [vmem:[%s3 + $0x308] sm:$0xff]
  %v881 = vld [vmem:[%s3 + $0x310] sm:$0xff]
  %v882 = vld [vmem:[%s3 + $0x318] sm:$0xff]
  %v883 = vld [vmem:[%s3 + $0x320] sm:$0xff]
  %v884 = vld [vmem:[%s3 + $0x328] sm:$0xff]
  %v885 = vld [vmem:[%s3 + $0x330] sm:$0xff]
  %v886 = vld [vmem:[%s3 + $0x338] sm:$0xff]
  %v887 = vld [vmem:[%s3 + $0x340] sm:$0xff]
  %v888 = vld [vmem:[%s3 + $0x348] sm:$0xff]
  %v889 = vld [vmem:[%s3 + $0x350] sm:$0xff]
  %v890 = vld [vmem:[%s3 + $0x358] sm:$0xff]
  %v891 = vld [vmem:[%s3 + $0x360] sm:$0xff]
  %v892 = vld [vmem:[%s3 + $0x368] sm:$0xff]
  %v893 = vld [vmem:[%s3 + $0x370] sm:$0xff]
  %v894 = vld [vmem:[%s3 + $0x378] sm:$0xff]
  %v895 = vld [vmem:[%s3 + $0x380] sm:$0xff]
  %v896 = vld [vmem:[%s3 + $0x388] sm:$0xff]
  %v897 = vld [vmem:[%s3 + $0x390] sm:$0xff]
  %v898 = vld [vmem:[%s3 + $0x398] sm:$0xff]
  %v899 = vld [vmem:[%s3 + $0x3a0] sm:$0xff]
  %v900 = vld [vmem:[%s3 + $0x3a8] sm:$0xff]
  %v901 = vld [vmem:[%s3 + $0x3b0] sm:$0xff]
  %v902 = vld [vmem:[%s3 + $0x3b8] sm:$0xff]
  %v903 = vld [vmem:[%s3 + $0x3c0] sm:$0xff]
  %v904 = vld [vmem:[%s3 + $0x3c8] sm:$0xff]
  %v905 = vld [vmem:[%s3 + $0x3d0] sm:$0xff]
  %v906 = vld [vmem:[%s3 + $0x3d8] sm:$0xff]
  %v907 = vld [vmem:[%s3 + $0x3e0] sm:$0xff]
  %v908 = vld [vmem:[%s3 + $0x3e8] sm:$0xff]
  %v909 = vld [vmem:[%s3 + $0x3f0] sm:$0xff]
  %v910 = vld [vmem:[%s3 + $0x3f8] sm:$0xff]
  %v1039 = vunpack.c.l.b16 %v783
  %v1040 = vunpack.c.h.b16 %v783
  %v1041 = vunpack.c.l.b16 %v784
  %v1042 = vunpack.c.h.b16 %v784
  %v1043 = vunpack.c.l.b16 %v785
  %v1044 = vunpack.c.h.b16 %v785
  %v1045 = vunpack.c.l.b16 %v786
  %v1046 = vunpack.c.h.b16 %v786
  %v1047 = vunpack.c.l.b16 %v787
  %v1048 = vunpack.c.h.b16 %v787
  %v1049 = vunpack.c.l.b16 %v788
  %v1050 = vunpack.c.h.b16 %v788
  %v1051 = vunpack.c.l.b16 %v789
  %v1052 = vunpack.c.h.b16 %v789
  %v1053 = vunpack.c.l.b16 %v790
  %v1054 = vunpack.c.h.b16 %v790
  %v1055 = vunpack.c.l.b16 %v791
  %v1056 = vunpack.c.h.b16 %v791
  %v1057 = vunpack.c.l.b16 %v792
  %v1058 = vunpack.c.h.b16 %v792
  %v1059 = vunpack.c.l.b16 %v793
  %v1060 = vunpack.c.h.b16 %v793
  %v1061 = vunpack.c.l.b16 %v794
  %v1062 = vunpack.c.h.b16 %v794
  %v1063 = vunpack.c.l.b16 %v795
  %v1064 = vunpack.c.h.b16 %v795
  %v1065 = vunpack.c.l.b16 %v796
  %v1066 = vunpack.c.h.b16 %v796
  %v1067 = vunpack.c.l.b16 %v797
  %v1068 = vunpack.c.h.b16 %v797
  %v1069 = vunpack.c.l.b16 %v798
  %v1070 = vunpack.c.h.b16 %v798
  %v1071 = vunpack.c.l.b16 %v799
  %v1072 = vunpack.c.h.b16 %v799
  %v1073 = vunpack.c.l.b16 %v800
  %v1074 = vunpack.c.h.b16 %v800
  %v1075 = vunpack.c.l.b16 %v801
  %v1076 = vunpack.c.h.b16 %v801
  %v1077 = vunpack.c.l.b16 %v802
  %v1078 = vunpack.c.h.b16 %v802
  %v1079 = vunpack.c.l.b16 %v803
  %v1080 = vunpack.c.h.b16 %v803
  %v1081 = vunpack.c.l.b16 %v804
  %v1082 = vunpack.c.h.b16 %v804
  %v1083 = vunpack.c.l.b16 %v805
  %v1084 = vunpack.c.h.b16 %v805
  %v1085 = vunpack.c.l.b16 %v806
  %v1086 = vunpack.c.h.b16 %v806
  %v1087 = vunpack.c.l.b16 %v807
  %v1088 = vunpack.c.h.b16 %v807
  %v1089 = vunpack.c.l.b16 %v808
  %v1090 = vunpack.c.h.b16 %v808
  %v1091 = vunpack.c.l.b16 %v809
  %v1092 = vunpack.c.h.b16 %v809
  %v1093 = vunpack.c.l.b16 %v810
  %v1094 = vunpack.c.h.b16 %v810
  %v1095 = vunpack.c.l.b16 %v811
  %v1096 = vunpack.c.h.b16 %v811
  %v1097 = vunpack.c.l.b16 %v812
  %v1098 = vunpack.c.h.b16 %v812
  %v1099 = vunpack.c.l.b16 %v813
  %v1100 = vunpack.c.h.b16 %v813
  %v1101 = vunpack.c.l.b16 %v814
  %v1102 = vunpack.c.h.b16 %v814
  %v1103 = vunpack.c.l.b16 %v815
  %v1104 = vunpack.c.h.b16 %v815
  %v1105 = vunpack.c.l.b16 %v816
  %v1106 = vunpack.c.h.b16 %v816
  %v1107 = vunpack.c.l.b16 %v817
  %v1108 = vunpack.c.h.b16 %v817
  %v1109 = vunpack.c.l.b16 %v818
  %v1110 = vunpack.c.h.b16 %v818
  %v1111 = vunpack.c.l.b16 %v819
  %v1112 = vunpack.c.h.b16 %v819
  %v1113 = vunpack.c.l.b16 %v820
  %v1114 = vunpack.c.h.b16 %v820
  %v1115 = vunpack.c.l.b16 %v821
  %v1116 = vunpack.c.h.b16 %v821
  %v1117 = vunpack.c.l.b16 %v822
  %v1118 = vunpack.c.h.b16 %v822
  %v1119 = vunpack.c.l.b16 %v823
  %v1120 = vunpack.c.h.b16 %v823
  %v1121 = vunpack.c.l.b16 %v824
  %v1122 = vunpack.c.h.b16 %v824
  %v1123 = vunpack.c.l.b16 %v825
  %v1124 = vunpack.c.h.b16 %v825
  %v1125 = vunpack.c.l.b16 %v826
  %v1126 = vunpack.c.h.b16 %v826
  %v1127 = vunpack.c.l.b16 %v827
  %v1128 = vunpack.c.h.b16 %v827
  %v1129 = vunpack.c.l.b16 %v828
  %v1130 = vunpack.c.h.b16 %v828
  %v1131 = vunpack.c.l.b16 %v829
  %v1132 = vunpack.c.h.b16 %v829
  %v1133 = vunpack.c.l.b16 %v830
  %v1134 = vunpack.c.h.b16 %v830
  %v1135 = vunpack.c.l.b16 %v831
  %v1136 = vunpack.c.h.b16 %v831
  %v1137 = vunpack.c.l.b16 %v832
  %v1138 = vunpack.c.h.b16 %v832
  %v1139 = vunpack.c.l.b16 %v833
  %v1140 = vunpack.c.h.b16 %v833
  %v1141 = vunpack.c.l.b16 %v834
  %v1142 = vunpack.c.h.b16 %v834
  %v1143 = vunpack.c.l.b16 %v835
  %v1144 = vunpack.c.h.b16 %v835
  %v1145 = vunpack.c.l.b16 %v836
  %v1146 = vunpack.c.h.b16 %v836
  %v1147 = vunpack.c.l.b16 %v837
  %v1148 = vunpack.c.h.b16 %v837
  %v1149 = vunpack.c.l.b16 %v838
  %v1150 = vunpack.c.h.b16 %v838
  %v1151 = vunpack.c.l.b16 %v839
  %v1152 = vunpack.c.h.b16 %v839
  %v1153 = vunpack.c.l.b16 %v840
  %v1154 = vunpack.c.h.b16 %v840
  %v1155 = vunpack.c.l.b16 %v841
  %v1156 = vunpack.c.h.b16 %v841
  %v1157 = vunpack.c.l.b16 %v842
  %v1158 = vunpack.c.h.b16 %v842
  %v1159 = vunpack.c.l.b16 %v843
  %v1160 = vunpack.c.h.b16 %v843
  %v1161 = vunpack.c.l.b16 %v844
  %v1162 = vunpack.c.h.b16 %v844
  %v1163 = vunpack.c.l.b16 %v845
  %v1164 = vunpack.c.h.b16 %v845
  %v1165 = vunpack.c.l.b16 %v846
  %v1166 = vunpack.c.h.b16 %v846
  %v1167 = vunpack.c.l.b16 %v847
  %v1168 = vunpack.c.h.b16 %v847
  %v1169 = vunpack.c.l.b16 %v848
  %v1170 = vunpack.c.h.b16 %v848
  %v1171 = vunpack.c.l.b16 %v849
  %v1172 = vunpack.c.h.b16 %v849
  %v1173 = vunpack.c.l.b16 %v850
  %v1174 = vunpack.c.h.b16 %v850
  %v1175 = vunpack.c.l.b16 %v851
  %v1176 = vunpack.c.h.b16 %v851
  %v1177 = vunpack.c.l.b16 %v852
  %v1178 = vunpack.c.h.b16 %v852
  %v1179 = vunpack.c.l.b16 %v853
  %v1180 = vunpack.c.h.b16 %v853
  %v1181 = vunpack.c.l.b16 %v854
  %v1182 = vunpack.c.h.b16 %v854
  %v1183 = vunpack.c.l.b16 %v855
  %v1184 = vunpack.c.h.b16 %v855
  %v1185 = vunpack.c.l.b16 %v856
  %v1186 = vunpack.c.h.b16 %v856
  %v1187 = vunpack.c.l.b16 %v857
  %v1188 = vunpack.c.h.b16 %v857
  %v1189 = vunpack.c.l.b16 %v858
  %v1190 = vunpack.c.h.b16 %v858
  %v1191 = vunpack.c.l.b16 %v859
  %v1192 = vunpack.c.h.b16 %v859
  %v1193 = vunpack.c.l.b16 %v860
  %v1194 = vunpack.c.h.b16 %v860
  %v1195 = vunpack.c.l.b16 %v861
  %v1196 = vunpack.c.h.b16 %v861
  %v1197 = vunpack.c.l.b16 %v862
  %v1198 = vunpack.c.h.b16 %v862
  %v1199 = vunpack.c.l.b16 %v863
  %v1200 = vunpack.c.h.b16 %v863
  %v1201 = vunpack.c.l.b16 %v864
  %v1202 = vunpack.c.h.b16 %v864
  %v1203 = vunpack.c.l.b16 %v865
  %v1204 = vunpack.c.h.b16 %v865
  %v1205 = vunpack.c.l.b16 %v866
  %v1206 = vunpack.c.h.b16 %v866
  %v1207 = vunpack.c.l.b16 %v867
  %v1208 = vunpack.c.h.b16 %v867
  %v1209 = vunpack.c.l.b16 %v868
  %v1210 = vunpack.c.h.b16 %v868
  %v1211 = vunpack.c.l.b16 %v869
  %v1212 = vunpack.c.h.b16 %v869
  %v1213 = vunpack.c.l.b16 %v870
  %v1214 = vunpack.c.h.b16 %v870
  %v1215 = vunpack.c.l.b16 %v871
  %v1216 = vunpack.c.h.b16 %v871
  %v1217 = vunpack.c.l.b16 %v872
  %v1218 = vunpack.c.h.b16 %v872
  %v1219 = vunpack.c.l.b16 %v873
  %v1220 = vunpack.c.h.b16 %v873
  %v1221 = vunpack.c.l.b16 %v874
  %v1222 = vunpack.c.h.b16 %v874
  %v1223 = vunpack.c.l.b16 %v875
  %v1224 = vunpack.c.h.b16 %v875
  %v1225 = vunpack.c.l.b16 %v876
  %v1226 = vunpack.c.h.b16 %v876
  %v1227 = vunpack.c.l.b16 %v877
  %v1228 = vunpack.c.h.b16 %v877
  %v1229 = vunpack.c.l.b16 %v878
  %v1230 = vunpack.c.h.b16 %v878
  %v1231 = vunpack.c.l.b16 %v879
  %v1232 = vunpack.c.h.b16 %v879
  %v1233 = vunpack.c.l.b16 %v880
  %v1234 = vunpack.c.h.b16 %v880
  %v1235 = vunpack.c.l.b16 %v881
  %v1236 = vunpack.c.h.b16 %v881
  %v1237 = vunpack.c.l.b16 %v882
  %v1238 = vunpack.c.h.b16 %v882
  %v1239 = vunpack.c.l.b16 %v883
  %v1240 = vunpack.c.h.b16 %v883
  %v1241 = vunpack.c.l.b16 %v884
  %v1242 = vunpack.c.h.b16 %v884
  %v1243 = vunpack.c.l.b16 %v885
  %v1244 = vunpack.c.h.b16 %v885
  %v1245 = vunpack.c.l.b16 %v886
  %v1246 = vunpack.c.h.b16 %v886
  %v1247 = vunpack.c.l.b16 %v887
  %v1248 = vunpack.c.h.b16 %v887
  %v1249 = vunpack.c.l.b16 %v888
  %v1250 = vunpack.c.h.b16 %v888
  %v1251 = vunpack.c.l.b16 %v889
  %v1252 = vunpack.c.h.b16 %v889
  %v1253 = vunpack.c.l.b16 %v890
  %v1254 = vunpack.c.h.b16 %v890
  %v1255 = vunpack.c.l.b16 %v891
  %v1256 = vunpack.c.h.b16 %v891
  %v1257 = vunpack.c.l.b16 %v892
  %v1258 = vunpack.c.h.b16 %v892
  %v1259 = vunpack.c.l.b16 %v893
  %v1260 = vunpack.c.h.b16 %v893
  %v1261 = vunpack.c.l.b16 %v894
  %v1262 = vunpack.c.h.b16 %v894
  %v1263 = vunpack.c.l.b16 %v895
  %v1264 = vunpack.c.h.b16 %v895
  %v1265 = vunpack.c.l.b16 %v896
  %v1266 = vunpack.c.h.b16 %v896
  %v1267 = vunpack.c.l.b16 %v897
  %v1268 = vunpack.c.h.b16 %v897
  %v1269 = vunpack.c.l.b16 %v898
  %v1270 = vunpack.c.h.b16 %v898
  %v1271 = vunpack.c.l.b16 %v899
  %v1272 = vunpack.c.h.b16 %v899
  %v1273 = vunpack.c.l.b16 %v900
  %v1274 = vunpack.c.h.b16 %v900
  %v1275 = vunpack.c.l.b16 %v901
  %v1276 = vunpack.c.h.b16 %v901
  %v1277 = vunpack.c.l.b16 %v902
  %v1278 = vunpack.c.h.b16 %v902
  %v1279 = vunpack.c.l.b16 %v903
  %v1280 = vunpack.c.h.b16 %v903
  %v1281 = vunpack.c.l.b16 %v904
  %v1282 = vunpack.c.h.b16 %v904
  %v1283 = vunpack.c.l.b16 %v905
  %v1284 = vunpack.c.h.b16 %v905
  %v1285 = vunpack.c.l.b16 %v906
  %v1286 = vunpack.c.h.b16 %v906
  %v1287 = vunpack.c.l.b16 %v907
  %v1288 = vunpack.c.h.b16 %v907
  %v1289 = vunpack.c.l.b16 %v908
  %v1290 = vunpack.c.h.b16 %v908
  %v1291 = vunpack.c.l.b16 %v909
  %v1292 = vunpack.c.h.b16 %v909
  %v1293 = vunpack.c.l.b16 %v910
  %v1294 = vunpack.c.h.b16 %v910
  %v1295 = vpack.c.b16 %v1047, %v1039
  %v1296 = vpack.c.b16 %v1048, %v1040
  %v1297 = vpack.c.b16 %v1049, %v1041
  %v1298 = vpack.c.b16 %v1050, %v1042
  %v1299 = vpack.c.b16 %v1051, %v1043
  %v1300 = vpack.c.b16 %v1052, %v1044
  %v1301 = vpack.c.b16 %v1053, %v1045
  %v1302 = vpack.c.b16 %v1054, %v1046
  %v1303 = vpack.c.b16 %v1063, %v1055
  %v1304 = vpack.c.b16 %v1064, %v1056
  %v1305 = vpack.c.b16 %v1065, %v1057
  %v1306 = vpack.c.b16 %v1066, %v1058
  %v1307 = vpack.c.b16 %v1067, %v1059
  %v1308 = vpack.c.b16 %v1068, %v1060
  %v1309 = vpack.c.b16 %v1069, %v1061
  %v1310 = vpack.c.b16 %v1070, %v1062
  %v1311 = vpack.c.b16 %v1079, %v1071
  %v1312 = vpack.c.b16 %v1080, %v1072
  %v1313 = vpack.c.b16 %v1081, %v1073
  %v1314 = vpack.c.b16 %v1082, %v1074
  %v1315 = vpack.c.b16 %v1083, %v1075
  %v1316 = vpack.c.b16 %v1084, %v1076
  %v1317 = vpack.c.b16 %v1085, %v1077
  %v1318 = vpack.c.b16 %v1086, %v1078
  %v1319 = vpack.c.b16 %v1095, %v1087
  %v1320 = vpack.c.b16 %v1096, %v1088
  %v1321 = vpack.c.b16 %v1097, %v1089
  %v1322 = vpack.c.b16 %v1098, %v1090
  %v1323 = vpack.c.b16 %v1099, %v1091
  %v1324 = vpack.c.b16 %v1100, %v1092
  %v1325 = vpack.c.b16 %v1101, %v1093
  %v1326 = vpack.c.b16 %v1102, %v1094
  %v1327 = vpack.c.b16 %v1111, %v1103
  %v1328 = vpack.c.b16 %v1112, %v1104
  %v1329 = vpack.c.b16 %v1113, %v1105
  %v1330 = vpack.c.b16 %v1114, %v1106
  %v1331 = vpack.c.b16 %v1115, %v1107
  %v1332 = vpack.c.b16 %v1116, %v1108
  %v1333 = vpack.c.b16 %v1117, %v1109
  %v1334 = vpack.c.b16 %v1118, %v1110
  %v1335 = vpack.c.b16 %v1127, %v1119
  %v1336 = vpack.c.b16 %v1128, %v1120
  %v1337 = vpack.c.b16 %v1129, %v1121
  %v1338 = vpack.c.b16 %v1130, %v1122
  %v1339 = vpack.c.b16 %v1131, %v1123
  %v1340 = vpack.c.b16 %v1132, %v1124
  %v1341 = vpack.c.b16 %v1133, %v1125
  %v1342 = vpack.c.b16 %v1134, %v1126
  %v1343 = vpack.c.b16 %v1143, %v1135
  %v1344 = vpack.c.b16 %v1144, %v1136
  %v1345 = vpack.c.b16 %v1145, %v1137
  %v1346 = vpack.c.b16 %v1146, %v1138
  %v1347 = vpack.c.b16 %v1147, %v1139
  %v1348 = vpack.c.b16 %v1148, %v1140
  %v1349 = vpack.c.b16 %v1149, %v1141
  %v1350 = vpack.c.b16 %v1150, %v1142
  %v1351 = vpack.c.b16 %v1159, %v1151
  %v1352 = vpack.c.b16 %v1160, %v1152
  %v1353 = vpack.c.b16 %v1161, %v1153
  %v1354 = vpack.c.b16 %v1162, %v1154
  %v1355 = vpack.c.b16 %v1163, %v1155
  %v1356 = vpack.c.b16 %v1164, %v1156
  %v1357 = vpack.c.b16 %v1165, %v1157
  %v1358 = vpack.c.b16 %v1166, %v1158
  %v1359 = vpack.c.b16 %v1175, %v1167
  %v1360 = vpack.c.b16 %v1176, %v1168
  %v1361 = vpack.c.b16 %v1177, %v1169
  %v1362 = vpack.c.b16 %v1178, %v1170
  %v1363 = vpack.c.b16 %v1179, %v1171
  %v1364 = vpack.c.b16 %v1180, %v1172
  %v1365 = vpack.c.b16 %v1181, %v1173
  %v1366 = vpack.c.b16 %v1182, %v1174
  %v1367 = vpack.c.b16 %v1191, %v1183
  %v1368 = vpack.c.b16 %v1192, %v1184
  %v1369 = vpack.c.b16 %v1193, %v1185
  %v1370 = vpack.c.b16 %v1194, %v1186
  %v1371 = vpack.c.b16 %v1195, %v1187
  %v1372 = vpack.c.b16 %v1196, %v1188
  %v1373 = vpack.c.b16 %v1197, %v1189
  %v1374 = vpack.c.b16 %v1198, %v1190
  %v1375 = vpack.c.b16 %v1207, %v1199
  %v1376 = vpack.c.b16 %v1208, %v1200
  %v1377 = vpack.c.b16 %v1209, %v1201
  %v1378 = vpack.c.b16 %v1210, %v1202
  %v1379 = vpack.c.b16 %v1211, %v1203
  %v1380 = vpack.c.b16 %v1212, %v1204
  %v1381 = vpack.c.b16 %v1213, %v1205
  %v1382 = vpack.c.b16 %v1214, %v1206
  %v1383 = vpack.c.b16 %v1223, %v1215
  %v1384 = vpack.c.b16 %v1224, %v1216
  %v1385 = vpack.c.b16 %v1225, %v1217
  %v1386 = vpack.c.b16 %v1226, %v1218
  %v1387 = vpack.c.b16 %v1227, %v1219
  %v1388 = vpack.c.b16 %v1228, %v1220
  %v1389 = vpack.c.b16 %v1229, %v1221
  %v1390 = vpack.c.b16 %v1230, %v1222
  %v1391 = vpack.c.b16 %v1239, %v1231
  %v1392 = vpack.c.b16 %v1240, %v1232
  %v1393 = vpack.c.b16 %v1241, %v1233
  %v1394 = vpack.c.b16 %v1242, %v1234
  %v1395 = vpack.c.b16 %v1243, %v1235
  %v1396 = vpack.c.b16 %v1244, %v1236
  %v1397 = vpack.c.b16 %v1245, %v1237
  %v1398 = vpack.c.b16 %v1246, %v1238
  %v1399 = vpack.c.b16 %v1255, %v1247
  %v1400 = vpack.c.b16 %v1256, %v1248
  %v1401 = vpack.c.b16 %v1257, %v1249
  %v1402 = vpack.c.b16 %v1258, %v1250
  %v1403 = vpack.c.b16 %v1259, %v1251
  %v1404 = vpack.c.b16 %v1260, %v1252
  %v1405 = vpack.c.b16 %v1261, %v1253
  %v1406 = vpack.c.b16 %v1262, %v1254
  %v1407 = vpack.c.b16 %v1271, %v1263
  %v1408 = vpack.c.b16 %v1272, %v1264
  %v1409 = vpack.c.b16 %v1273, %v1265
  %v1410 = vpack.c.b16 %v1274, %v1266
  %v1411 = vpack.c.b16 %v1275, %v1267
  %v1412 = vpack.c.b16 %v1276, %v1268
  %v1413 = vpack.c.b16 %v1277, %v1269
  %v1414 = vpack.c.b16 %v1278, %v1270
  %v1415 = vpack.c.b16 %v1287, %v1279
  %v1416 = vpack.c.b16 %v1288, %v1280
  %v1417 = vpack.c.b16 %v1289, %v1281
  %v1418 = vpack.c.b16 %v1290, %v1282
  %v1419 = vpack.c.b16 %v1291, %v1283
  %v1420 = vpack.c.b16 %v1292, %v1284
  %v1421 = vpack.c.b16 %v1293, %v1285
  %v1422 = vpack.c.b16 %v1294, %v1286
  %1551 = vmatprep.subr.bf16.mxu0 %v1296
  %1552 = vmatpush1.bf16.msra.mxu0 %v1295
  %1553 = vmatprep.subr.bf16.mxu0 %v1304
  %1554 = vmatpush1.bf16.msra.mxu0 %v1303
  %1555 = vmatprep.subr.bf16.mxu0 %v1312
  %1556 = vmatpush1.bf16.msra.mxu0 %v1311
  %1557 = vmatprep.subr.bf16.mxu0 %v1320
  %1558 = vmatpush1.bf16.msra.mxu0 %v1319
  %1559 = vmatprep.subr.bf16.mxu0 %v1328
  %1560 = vmatpush1.bf16.msra.mxu0 %v1327
  %1561 = vmatprep.subr.bf16.mxu0 %v1336
  %1562 = vmatpush1.bf16.msra.mxu0 %v1335
  %1563 = vmatprep.subr.bf16.mxu0 %v1344
  %1564 = vmatpush1.bf16.msra.mxu0 %v1343
  %1565 = vmatprep.subr.bf16.mxu0 %v1352
  %1566 = vmatpush1.bf16.msra.mxu0 %v1351
  %1567 = vmatprep.subr.bf16.mxu0 %v1360
  %1568 = vmatpush1.bf16.msra.mxu0 %v1359
  %1569 = vmatprep.subr.bf16.mxu0 %v1368
  %1570 = vmatpush1.bf16.msra.mxu0 %v1367
  %1571 = vmatprep.subr.bf16.mxu0 %v1376
  %1572 = vmatpush1.bf16.msra.mxu0 %v1375
  %1573 = vmatprep.subr.bf16.mxu0 %v1384
  %1574 = vmatpush1.bf16.msra.mxu0 %v1383
  %1575 = vmatprep.subr.bf16.mxu0 %v1392
  %1576 = vmatpush1.bf16.msra.mxu0 %v1391
  %1577 = vmatprep.subr.bf16.mxu0 %v1400
  %1578 = vmatpush1.bf16.msra.mxu0 %v1399
  %1579 = vmatprep.subr.bf16.mxu0 %v1408
  %1580 = vmatpush1.bf16.msra.mxu0 %v1407
  %1581 = vmatprep.subr.bf16.mxu0 %v1416
  %1582 = vmatpush1.bf16.msra.mxu0 %v1415
  %1583 = vmatprep.mubr.bf16.mxu0 0
  %1584 = vmatmul.mubr.bf16.gmra.mrb[0].mxu0 0
  %v1585 = vpop.f32.mrb[0].mxu0
  %v1586 = vadd.f32 0.0, %v1585
  %v1587 = vpop.f32.mrb[0].mxu0
  %v1588 = vadd.f32 0.0, %v1587
  %v1589 = vpop.f32.mrb[0].mxu0
  %v1590 = vpop.f32.mrb[0].mxu0
  %1591 = vdwg.mxu0
  %1592 = vmatprep.subr.bf16.mxu0 %v1298
  %1593 = vmatpush1.bf16.msra.mxu0 %v1297
  %1594 = vmatprep.subr.bf16.mxu0 %v1306
  %1595 = vmatpush1.bf16.msra.mxu0 %v1305
  %1596 = vmatprep.subr.bf16.mxu0 %v1314
  %1597 = vmatpush1.bf16.msra.mxu0 %v1313
  %1598 = vmatprep.subr.bf16.mxu0 %v1322
  %1599 = vmatpush1.bf16.msra.mxu0 %v1321
  %1600 = vmatprep.subr.bf16.mxu0 %v1330
  %1601 = vmatpush1.bf16.msra.mxu0 %v1329
  %1602 = vmatprep.subr.bf16.mxu0 %v1338
  %1603 = vmatpush1.bf16.msra.mxu0 %v1337
  %1604 = vmatprep.subr.bf16.mxu0 %v1346
  %1605 = vmatpush1.bf16.msra.mxu0 %v1345
  %1606 = vmatprep.subr.bf16.mxu0 %v1354
  %1607 = vmatpush1.bf16.msra.mxu0 %v1353
  %1608 = vmatprep.subr.bf16.mxu0 %v1362
  %1609 = vmatpush1.bf16.msra.mxu0 %v1361
  %1610 = vmatprep.subr.bf16.mxu0 %v1370
  %1611 = vmatpush1.bf16.msra.mxu0 %v1369
  %1612 = vmatprep.subr.bf16.mxu0 %v1378
  %1613 = vmatpush1.bf16.msra.mxu0 %v1377
  %1614 = vmatprep.subr.bf16.mxu0 %v1386
  %1615 = vmatpush1.bf16.msra.mxu0 %v1385
  %1616 = vmatprep.subr.bf16.mxu0 %v1394
  %1617 = vmatpush1.bf16.msra.mxu0 %v1393
  %1618 = vmatprep.subr.bf16.mxu0 %v1402
  %1619 = vmatpush1.bf16.msra.mxu0 %v1401
  %1620 = vmatprep.subr.bf16.mxu0 %v1410
  %1621 = vmatpush1.bf16.msra.mxu0 %v1409
  %1622 = vmatprep.subr.bf16.mxu0 %v1418
  %1623 = vmatpush1.bf16.msra.mxu0 %v1417
  %1624 = vmatprep.mubr.bf16.mxu0 0
  %1625 = vmatmul.mubr.bf16.gmra.mrb[0].mxu0 0
  %v1626 = vpop.f32.mrb[0].mxu0
  %v1627 = vadd.f32 0.0, %v1626
  %v1628 = vpop.f32.mrb[0].mxu0
  %v1629 = vadd.f32 0.0, %v1628
  %v1630 = vpop.f32.mrb[0].mxu0
  %v1631 = vpop.f32.mrb[0].mxu0
  %1632 = vdwg.mxu0
  %1633 = vmatprep.subr.bf16.mxu0 %v1300
  %1634 = vmatpush1.bf16.msra.mxu0 %v1299
  %1635 = vmatprep.subr.bf16.mxu0 %v1308
  %1636 = vmatpush1.bf16.msra.mxu0 %v1307
  %1637 = vmatprep.subr.bf16.mxu0 %v1316
  %1638 = vmatpush1.bf16.msra.mxu0 %v1315
  %1639 = vmatprep.subr.bf16.mxu0 %v1324
  %1640 = vmatpush1.bf16.msra.mxu0 %v1323
  %1641 = vmatprep.subr.bf16.mxu0 %v1332
  %1642 = vmatpush1.bf16.msra.mxu0 %v1331
  %1643 = vmatprep.subr.bf16.mxu0 %v1340
  %1644 = vmatpush1.bf16.msra.mxu0 %v1339
  %1645 = vmatprep.subr.bf16.mxu0 %v1348
  %1646 = vmatpush1.bf16.msra.mxu0 %v1347
  %1647 = vmatprep.subr.bf16.mxu0 %v1356
  %1648 = vmatpush1.bf16.msra.mxu0 %v1355
  %1649 = vmatprep.subr.bf16.mxu0 %v1364
  %1650 = vmatpush1.bf16.msra.mxu0 %v1363
  %1651 = vmatprep.subr.bf16.mxu0 %v1372
  %1652 = vmatpush1.bf16.msra.mxu0 %v1371
  %1653 = vmatprep.subr.bf16.mxu0 %v1380
  %1654 = vmatpush1.bf16.msra.mxu0 %v1379
  %1655 = vmatprep.subr.bf16.mxu0 %v1388
  %1656 = vmatpush1.bf16.msra.mxu0 %v1387
  %1657 = vmatprep.subr.bf16.mxu0 %v1396
  %1658 = vmatpush1.bf16.msra.mxu0 %v1395
  %1659 = vmatprep.subr.bf16.mxu0 %v1404
  %1660 = vmatpush1.bf16.msra.mxu0 %v1403
  %1661 = vmatprep.subr.bf16.mxu0 %v1412
  %1662 = vmatpush1.bf16.msra.mxu0 %v1411
  %1663 = vmatprep.subr.bf16.mxu0 %v1420
  %1664 = vmatpush1.bf16.msra.mxu0 %v1419
  %1665 = vmatprep.mubr.bf16.mxu0 0
  %1666 = vmatmul.mubr.bf16.gmra.mrb[0].mxu0 0
  %v1667 = vpop.f32.mrb[0].mxu0
  %v1668 = vadd.f32 0.0, %v1667
  %v1669 = vpop.f32.mrb[0].mxu0
  %v1670 = vadd.f32 0.0, %v1669
  %v1671 = vpop.f32.mrb[0].mxu0
  %v1672 = vpop.f32.mrb[0].mxu0
  %1673 = vdwg.mxu0
  %1674 = vmatprep.subr.bf16.mxu0 %v1302
  %1675 = vmatpush1.bf16.msra.mxu0 %v1301
  %1676 = vmatprep.subr.bf16.mxu0 %v1310
  %1677 = vmatpush1.bf16.msra.mxu0 %v1309
  %1678 = vmatprep.subr.bf16.mxu0 %v1318
  %1679 = vmatpush1.bf16.msra.mxu0 %v1317
  %1680 = vmatprep.subr.bf16.mxu0 %v1326
  %1681 = vmatpush1.bf16.msra.mxu0 %v1325
  %1682 = vmatprep.subr.bf16.mxu0 %v1334
  %1683 = vmatpush1.bf16.msra.mxu0 %v1333
  %1684 = vmatprep.subr.bf16.mxu0 %v1342
  %1685 = vmatpush1.bf16.msra.mxu0 %v1341
  %1686 = vmatprep.subr.bf16.mxu0 %v1350
  %1687 = vmatpush1.bf16.msra.mxu0 %v1349
  %1688 = vmatprep.subr.bf16.mxu0 %v1358
  %1689 = vmatpush1.bf16.msra.mxu0 %v1357
  %1690 = vmatprep.subr.bf16.mxu0 %v1366
  %1691 = vmatpush1.bf16.msra.mxu0 %v1365
  %1692 = vmatprep.subr.bf16.mxu0 %v1374
  %1693 = vmatpush1.bf16.msra.mxu0 %v1373
  %1694 = vmatprep.subr.bf16.mxu0 %v1382
  %1695 = vmatpush1.bf16.msra.mxu0 %v1381
  %1696 = vmatprep.subr.bf16.mxu0 %v1390
  %1697 = vmatpush1.bf16.msra.mxu0 %v1389
  %1698 = vmatprep.subr.bf16.mxu0 %v1398
  %1699 = vmatpush1.bf16.msra.mxu0 %v1397
  %1700 = vmatprep.subr.bf16.mxu0 %v1406
  %1701 = vmatpush1.bf16.msra.mxu0 %v1405
  %1702 = vmatprep.subr.bf16.mxu0 %v1414
  %1703 = vmatpush1.bf16.msra.mxu0 %v1413
  %1704 = vmatprep.subr.bf16.mxu0 %v1422
  %1705 = vmatpush1.bf16.msra.mxu0 %v1421
  %1706 = vmatprep.mubr.bf16.mxu0 0
  %1707 = vmatmul.mubr.bf16.gmra.mrb[0].mxu0 0
  %v1708 = vpop.f32.mrb[0].mxu0
  %v1709 = vadd.f32 0.0, %v1708
  %v1710 = vpop.f32.mrb[0].mxu0
  %v1711 = vadd.f32 0.0, %v1710
  %v1712 = vpop.f32.mrb[0].mxu0
  %v1713 = vpop.f32.mrb[0].mxu0
  %1714 = vdwg.mxu0
  %v1715 = vadd.f32 %v1586, %v526
  %v1716 = vadd.f32 %v1588, %v528
  %v1717 = vadd.f32 %v1627, %v599
  %v1718 = vadd.f32 %v1629, %v601
  %v1719 = vadd.f32 %v1668, %v706
  %v1720 = vadd.f32 %v1670, %v708
  %v1721 = vadd.f32 %v1709, %v779
  %v1722 = vadd.f32 %v1711, %v781
  %v1723 = vxor.u32 %v1715, 2147483648
  %v1724 = vxor.u32 %v1716, 2147483648
  %v1725 = vxor.u32 %v1717, 2147483648
  %v1726 = vmul.f32 %v1723, 1.442695
  %v1727 = vpow.pop %v1726
  %v1728 = vmul.f32 %v1724, 1.442695
  %v1729 = vpow.pop %v1728
  %v1730 = vmul.f32 %v1725, 1.442695
  %v1731 = vpow.pop %v1730
  %v1732 = vadd.f32 %v1727, 1.0
  %v1733 = vadd.f32 %v1729, 1.0
  %v1734 = vadd.f32 %v1731, 1.0
  %v1735 = vrcp.pop %v1732
  %v1736 = vmul.f32 1.0, %v1735
  %v1737 = vrcp.pop %v1733
  %v1738 = vmul.f32 1.0, %v1737
  %v1739 = vrcp.pop %v1734
  %v1740 = vmul.f32 1.0, %v1739
  %v1741 = vxor.u32 %v1719, 2147483648
  %v1742 = vxor.u32 %v1720, 2147483648
  %v1743 = vxor.u32 %v1721, 2147483648
  %v1744 = vmul.f32 %v1741, 1.442695
  %v1745 = vpow.pop %v1744
  %v1746 = vmul.f32 %v1742, 1.442695
  %v1747 = vpow.pop %v1746
  %v1748 = vmul.f32 %v1743, 1.442695
  %v1749 = vpow.pop %v1748
  %v1750 = vadd.f32 %v1745, 1.0
  %v1751 = vadd.f32 %v1747, 1.0
  %v1752 = vadd.f32 %v1749, 1.0
  %v1753 = vrcp.pop %v1750
  %v1754 = vmul.f32 1.0, %v1753
  %v1755 = vrcp.pop %v1751
  %v1756 = vmul.f32 1.0, %v1755
  %v1757 = vrcp.pop %v1752
  %v1758 = vmul.f32 1.0, %v1757
  %v1759 = vtanh.pop %v1718
  %v1760 = vtanh.pop %v1722
  %v1761 = vmul.f32 %v1738, 0.0
  %v1762 = vmul.f32 %v1736, %v1759
  %v1763 = vadd.f32 %v1761, %v1762
  %v1764 = vmul.f32 %v1756, 0.0
  %v1765 = vmul.f32 %v1754, %v1760
  %v1766 = vadd.f32 %v1764, %v1765
  %v1767 = vtanh.pop %v1763
  %v1768 = vmul.f32 %v1740, %v1767
  %v1769 = vtanh.pop %v1766
  %v1770 = vmul.f32 %v1758, %v1769
  %v1771 = vpack.c.bf16 %v1768, %v1768
  %v1772 = vpack.c.bf16 %v1770, %v1770
  %1773 = vmatprep.subr.bf16.mxu0 %v1296
  %1774 = vmatpush1.bf16.msra.mxu0 %v1295
  %1775 = vmatprep.subr.bf16.mxu0 %v1304
  %1776 = vmatpush1.bf16.msra.mxu0 %v1303
  %1777 = vmatprep.subr.bf16.mxu0 %v1312
  %1778 = vmatpush1.bf16.msra.mxu0 %v1311
  %1779 = vmatprep.subr.bf16.mxu0 %v1320
  %1780 = vmatpush1.bf16.msra.mxu0 %v1319
  %1781 = vmatprep.subr.bf16.mxu0 %v1328
  %1782 = vmatpush1.bf16.msra.mxu0 %v1327
  %1783 = vmatprep.subr.bf16.mxu0 %v1336
  %1784 = vmatpush1.bf16.msra.mxu0 %v1335
  %1785 = vmatprep.subr.bf16.mxu0 %v1344
  %1786 = vmatpush1.bf16.msra.mxu0 %v1343
  %1787 = vmatprep.subr.bf16.mxu0 %v1352
  %1788 = vmatpush1.bf16.msra.mxu0 %v1351
  %1789 = vmatprep.subr.bf16.mxu0 %v1360
  %1790 = vmatpush1.bf16.msra.mxu0 %v1359
  %1791 = vmatprep.subr.bf16.mxu0 %v1368
  %1792 = vmatpush1.bf16.msra.mxu0 %v1367
  %1793 = vmatprep.subr.bf16.mxu0 %v1376
  %1794 = vmatpush1.bf16.msra.mxu0 %v1375
  %1795 = vmatprep.subr.bf16.mxu0 %v1384
  %1796 = vmatpush1.bf16.msra.mxu0 %v1383
  %1797 = vmatprep.subr.bf16.mxu0 %v1392
  %1798 = vmatpush1.bf16.msra.mxu0 %v1391
  %1799 = vmatprep.subr.bf16.mxu0 %v1400
  %1800 = vmatpush1.bf16.msra.mxu0 %v1399
  %1801 = vmatprep.subr.bf16.mxu0 %v1408
  %1802 = vmatpush1.bf16.msra.mxu0 %v1407
  %1803 = vmatprep.subr.bf16.mxu0 %v1416
  %1804 = vmatpush1.bf16.msra.mxu0 %v1415
  %1805 = vmatprep.mubr.bf16.mxu0 %v1772
  %1806 = vmatmul.mubr.bf16.gmra.mrb[0].mxu0 %v1771
  %v1807 = vpop.f32.mrb[0].mxu0
  %v1808 = vadd.f32 0.0, %v1807
  %v1809 = vpop.f32.mrb[0].mxu0
  %v1810 = vadd.f32 0.0, %v1809
  %v1811 = vpop.f32.mrb[0].mxu0
  %v1812 = vpop.f32.mrb[0].mxu0
  %1813 = vdwg.mxu0
  %1814 = vmatprep.subr.bf16.mxu0 %v1298
  %1815 = vmatpush1.bf16.msra.mxu0 %v1297
  %1816 = vmatprep.subr.bf16.mxu0 %v1306
  %1817 = vmatpush1.bf16.msra.mxu0 %v1305
  %1818 = vmatprep.subr.bf16.mxu0 %v1314
  %1819 = vmatpush1.bf16.msra.mxu0 %v1313
  %1820 = vmatprep.subr.bf16.mxu0 %v1322
  %1821 = vmatpush1.bf16.msra.mxu0 %v1321
  %1822 = vmatprep.subr.bf16.mxu0 %v1330
  %1823 = vmatpush1.bf16.msra.mxu0 %v1329
  %1824 = vmatprep.subr.bf16.mxu0 %v1338
  %1825 = vmatpush1.bf16.msra.mxu0 %v1337
  %1826 = vmatprep.subr.bf16.mxu0 %v1346
  %1827 = vmatpush1.bf16.msra.mxu0 %v1345
  %1828 = vmatprep.subr.bf16.mxu0 %v1354
  %1829 = vmatpush1.bf16.msra.mxu0 %v1353
  %1830 = vmatprep.subr.bf16.mxu0 %v1362
  %1831 = vmatpush1.bf16.msra.mxu0 %v1361
  %1832 = vmatprep.subr.bf16.mxu0 %v1370
  %1833 = vmatpush1.bf16.msra.mxu0 %v1369
  %1834 = vmatprep.subr.bf16.mxu0 %v1378
  %1835 = vmatpush1.bf16.msra.mxu0 %v1377
  %1836 = vmatprep.subr.bf16.mxu0 %v1386
  %1837 = vmatpush1.bf16.msra.mxu0 %v1385
  %1838 = vmatprep.subr.bf16.mxu0 %v1394
  %1839 = vmatpush1.bf16.msra.mxu0 %v1393
  %1840 = vmatprep.subr.bf16.mxu0 %v1402
  %1841 = vmatpush1.bf16.msra.mxu0 %v1401
  %1842 = vmatprep.subr.bf16.mxu0 %v1410
  %1843 = vmatpush1.bf16.msra.mxu0 %v1409
  %1844 = vmatprep.subr.bf16.mxu0 %v1418
  %1845 = vmatpush1.bf16.msra.mxu0 %v1417
  %1846 = vmatprep.mubr.bf16.mxu0 %v1772
  %1847 = vmatmul.mubr.bf16.gmra.mrb[0].mxu0 %v1771
  %v1848 = vpop.f32.mrb[0].mxu0
  %v1849 = vadd.f32 0.0, %v1848
  %v1850 = vpop.f32.mrb[0].mxu0
  %v1851 = vadd.f32 0.0, %v1850
  %v1852 = vpop.f32.mrb[0].mxu0
  %v1853 = vpop.f32.mrb[0].mxu0
  %1854 = vdwg.mxu0
  %1855 = vmatprep.subr.bf16.mxu0 %v1300
  %1856 = vmatpush1.bf16.msra.mxu0 %v1299
  %1857 = vmatprep.subr.bf16.mxu0 %v1308
  %1858 = vmatpush1.bf16.msra.mxu0 %v1307
  %1859 = vmatprep.subr.bf16.mxu0 %v1316
  %1860 = vmatpush1.bf16.msra.mxu0 %v1315
  %1861 = vmatprep.subr.bf16.mxu0 %v1324
  %1862 = vmatpush1.bf16.msra.mxu0 %v1323
  %1863 = vmatprep.subr.bf16.mxu0 %v1332
  %1864 = vmatpush1.bf16.msra.mxu0 %v1331
  %1865 = vmatprep.subr.bf16.mxu0 %v1340
  %1866 = vmatpush1.bf16.msra.mxu0 %v1339
  %1867 = vmatprep.subr.bf16.mxu0 %v1348
  %1868 = vmatpush1.bf16.msra.mxu0 %v1347
  %1869 = vmatprep.subr.bf16.mxu0 %v1356
  %1870 = vmatpush1.bf16.msra.mxu0 %v1355
  %1871 = vmatprep.subr.bf16.mxu0 %v1364
  %1872 = vmatpush1.bf16.msra.mxu0 %v1363
  %1873 = vmatprep.subr.bf16.mxu0 %v1372
  %1874 = vmatpush1.bf16.msra.mxu0 %v1371
  %1875 = vmatprep.subr.bf16.mxu0 %v1380
  %1876 = vmatpush1.bf16.msra.mxu0 %v1379
  %1877 = vmatprep.subr.bf16.mxu0 %v1388
  %1878 = vmatpush1.bf16.msra.mxu0 %v1387
  %1879 = vmatprep.subr.bf16.mxu0 %v1396
  %1880 = vmatpush1.bf16.msra.mxu0 %v1395
  %1881 = vmatprep.subr.bf16.mxu0 %v1404
  %1882 = vmatpush1.bf16.msra.mxu0 %v1403
  %1883 = vmatprep.subr.bf16.mxu0 %v1412
  %1884 = vmatpush1.bf16.msra.mxu0 %v1411
  %1885 = vmatprep.subr.bf16.mxu0 %v1420
  %1886 = vmatpush1.bf16.msra.mxu0 %v1419
  %1887 = vmatprep.mubr.bf16.mxu0 %v1772
  %1888 = vmatmul.mubr.bf16.gmra.mrb[0].mxu0 %v1771
  %v1889 = vpop.f32.mrb[0].mxu0
  %v1890 = vadd.f32 0.0, %v1889
  %v1891 = vpop.f32.mrb[0].mxu0
  %v1892 = vadd.f32 0.0, %v1891
  %v1893 = vpop.f32.mrb[0].mxu0
  %v1894 = vpop.f32.mrb[0].mxu0
  %1895 = vdwg.mxu0
  %1896 = vmatprep.subr.bf16.mxu0 %v1302
  %1897 = vmatpush1.bf16.msra.mxu0 %v1301
  %1898 = vmatprep.subr.bf16.mxu0 %v1310
  %1899 = vmatpush1.bf16.msra.mxu0 %v1309
  %1900 = vmatprep.subr.bf16.mxu0 %v1318
  %1901 = vmatpush1.bf16.msra.mxu0 %v1317
  %1902 = vmatprep.subr.bf16.mxu0 %v1326
  %1903 = vmatpush1.bf16.msra.mxu0 %v1325
  %1904 = vmatprep.subr.bf16.mxu0 %v1334
  %1905 = vmatpush1.bf16.msra.mxu0 %v1333
  %1906 = vmatprep.subr.bf16.mxu0 %v1342
  %1907 = vmatpush1.bf16.msra.mxu0 %v1341
  %1908 = vmatprep.subr.bf16.mxu0 %v1350
  %1909 = vmatpush1.bf16.msra.mxu0 %v1349
  %1910 = vmatprep.subr.bf16.mxu0 %v1358
  %1911 = vmatpush1.bf16.msra.mxu0 %v1357
  %1912 = vmatprep.subr.bf16.mxu0 %v1366
  %1913 = vmatpush1.bf16.msra.mxu0 %v1365
  %1914 = vmatprep.subr.bf16.mxu0 %v1374
  %1915 = vmatpush1.bf16.msra.mxu0 %v1373
  %1916 = vmatprep.subr.bf16.mxu0 %v1382
  %1917 = vmatpush1.bf16.msra.mxu0 %v1381
  %1918 = vmatprep.subr.bf16.mxu0 %v1390
  %1919 = vmatpush1.bf16.msra.mxu0 %v1389
  %1920 = vmatprep.subr.bf16.mxu0 %v1398
  %1921 = vmatpush1.bf16.msra.mxu0 %v1397
  %1922 = vmatprep.subr.bf16.mxu0 %v1406
  %1923 = vmatpush1.bf16.msra.mxu0 %v1405
  %1924 = vmatprep.subr.bf16.mxu0 %v1414
  %1925 = vmatpush1.bf16.msra.mxu0 %v1413
  %1926 = vmatprep.subr.bf16.mxu0 %v1422
  %1927 = vmatpush1.bf16.msra.mxu0 %v1421
  %1928 = vmatprep.mubr.bf16.mxu0 %v1772
  %1929 = vmatmul.mubr.bf16.gmra.mrb[0].mxu0 %v1771
  %v1930 = vpop.f32.mrb[0].mxu0
  %v1931 = vadd.f32 0.0, %v1930
  %v1932 = vpop.f32.mrb[0].mxu0
  %v1933 = vadd.f32 0.0, %v1932
  %v1934 = vpop.f32.mrb[0].mxu0
  %v1935 = vpop.f32.mrb[0].mxu0
  %1936 = vdwg.mxu0
  %v1937 = vadd.f32 %v1808, %v530
  %v1938 = vadd.f32 %v1810, %v532
  %v1939 = vadd.f32 %v1849, %v603
  %v1940 = vadd.f32 %v1851, %v605
  %v1941 = vadd.f32 %v1890, %v702
  %v1942 = vadd.f32 %v1892, %v704
  %v1943 = vadd.f32 %v1931, %v775
  %v1944 = vadd.f32 %v1933, %v777
  %v1945 = vxor.u32 %v1937, 2147483648
  %v1946 = vxor.u32 %v1938, 2147483648
  %v1947 = vxor.u32 %v1939, 2147483648
  %v1948 = vmul.f32 %v1945, 1.442695
  %v1949 = vpow.pop %v1948
  %v1950 = vmul.f32 %v1946, 1.442695
  %v1951 = vpow.pop %v1950
  %v1952 = vmul.f32 %v1947, 1.442695
  %v1953 = vpow.pop %v1952
  %v1954 = vadd.f32 %v1949, 1.0
  %v1955 = vadd.f32 %v1951, 1.0
  %v1956 = vadd.f32 %v1953, 1.0
  %v1957 = vrcp.pop %v1954
  %v1958 = vmul.f32 1.0, %v1957
  %v1959 = vrcp.pop %v1955
  %v1960 = vmul.f32 1.0, %v1959
  %v1961 = vrcp.pop %v1956
  %v1962 = vmul.f32 1.0, %v1961
  %v1963 = vxor.u32 %v1941, 2147483648
  %v1964 = vxor.u32 %v1942, 2147483648
  %v1965 = vxor.u32 %v1943, 2147483648
  %v1966 = vmul.f32 %v1963, 1.442695
  %v1967 = vpow.pop %v1966
  %v1968 = vmul.f32 %v1964, 1.442695
  %v1969 = vpow.pop %v1968
  %v1970 = vmul.f32 %v1965, 1.442695
  %v1971 = vpow.pop %v1970
  %v1972 = vadd.f32 %v1967, 1.0
  %v1973 = vadd.f32 %v1969, 1.0
  %v1974 = vadd.f32 %v1971, 1.0
  %v1975 = vrcp.pop %v1972
  %v1976 = vmul.f32 1.0, %v1975
  %v1977 = vrcp.pop %v1973
  %v1978 = vmul.f32 1.0, %v1977
  %v1979 = vrcp.pop %v1974
  %v1980 = vmul.f32 1.0, %v1979
  %v1981 = vtanh.pop %v1940
  %v1982 = vtanh.pop %v1944
  %v1983 = vmul.f32 %v1960, %v1763
  %v1984 = vmul.f32 %v1958, %v1981
  %v1985 = vadd.f32 %v1983, %v1984
  %v1986 = vmul.f32 %v1978, %v1766
  %v1987 = vmul.f32 %v1976, %v1982
  %v1988 = vadd.f32 %v1986, %v1987
  %v1989 = vtanh.pop %v1985
  %v1990 = vmul.f32 %v1962, %v1989
  %v1991 = vtanh.pop %v1988
  %v1992 = vmul.f32 %v1980, %v1991
  %v1993 = vpack.c.bf16 %v1990, %v1990
  %v1994 = vpack.c.bf16 %v1992, %v1992
  %1995 = vmatprep.subr.bf16.mxu0 %v1296
  %1996 = vmatpush1.bf16.msra.mxu0 %v1295
  %1997 = vmatprep.subr.bf16.mxu0 %v1304
  %1998 = vmatpush1.bf16.msra.mxu0 %v1303
  %1999 = vmatprep.subr.bf16.mxu0 %v1312
  %2000 = vmatpush1.bf16.msra.mxu0 %v1311
  %2001 = vmatprep.subr.bf16.mxu0 %v1320
  %2002 = vmatpush1.bf16.msra.mxu0 %v1319
  %2003 = vmatprep.subr.bf16.mxu0 %v1328
  %2004 = vmatpush1.bf16.msra.mxu0 %v1327
  %2005 = vmatprep.subr.bf16.mxu0 %v1336
  %2006 = vmatpush1.bf16.msra.mxu0 %v1335
  %2007 = vmatprep.subr.bf16.mxu0 %v1344
  %2008 = vmatpush1.bf16.msra.mxu0 %v1343
  %2009 = vmatprep.subr.bf16.mxu0 %v1352
  %2010 = vmatpush1.bf16.msra.mxu0 %v1351
  %2011 = vmatprep.subr.bf16.mxu0 %v1360
  %2012 = vmatpush1.bf16.msra.mxu0 %v1359
  %2013 = vmatprep.subr.bf16.mxu0 %v1368
  %2014 = vmatpush1.bf16.msra.mxu0 %v1367
  %2015 = vmatprep.subr.bf16.mxu0 %v1376
  %2016 = vmatpush1.bf16.msra.mxu0 %v1375
  %2017 = vmatprep.subr.bf16.mxu0 %v1384
  %2018 = vmatpush1.bf16.msra.mxu0 %v1383
  %2019 = vmatprep.subr.bf16.mxu0 %v1392
  %2020 = vmatpush1.bf16.msra.mxu0 %v1391
  %2021 = vmatprep.subr.bf16.mxu0 %v1400
  %2022 = vmatpush1.bf16.msra.mxu0 %v1399
  %2023 = vmatprep.subr.bf16.mxu0 %v1408
  %2024 = vmatpush1.bf16.msra.mxu0 %v1407
  %2025 = vmatprep.subr.bf16.mxu0 %v1416
  %2026 = vmatpush1.bf16.msra.mxu0 %v1415
  %2027 = vmatprep.mubr.bf16.mxu0 %v1994
  %2028 = vmatmul.mubr.bf16.gmra.mrb[0].mxu0 %v1993
  %v2029 = vpop.f32.mrb[0].mxu0
  %v2030 = vadd.f32 0.0, %v2029
  %v2031 = vpop.f32.mrb[0].mxu0
  %v2032 = vadd.f32 0.0, %v2031
  %v2033 = vpop.f32.mrb[0].mxu0
  %v2034 = vpop.f32.mrb[0].mxu0
  %2035 = vdwg.mxu0
  %2036 = vmatprep.subr.bf16.mxu0 %v1298
  %2037 = vmatpush1.bf16.msra.mxu0 %v1297
  %2038 = vmatprep.subr.bf16.mxu0 %v1306
  %2039 = vmatpush1.bf16.msra.mxu0 %v1305
  %2040 = vmatprep.subr.bf16.mxu0 %v1314
  %2041 = vmatpush1.bf16.msra.mxu0 %v1313
  %2042 = vmatprep.subr.bf16.mxu0 %v1322
  %2043 = vmatpush1.bf16.msra.mxu0 %v1321
  %2044 = vmatprep.subr.bf16.mxu0 %v1330
  %2045 = vmatpush1.bf16.msra.mxu0 %v1329
  %2046 = vmatprep.subr.bf16.mxu0 %v1338
  %2047 = vmatpush1.bf16.msra.mxu0 %v1337
  %2048 = vmatprep.subr.bf16.mxu0 %v1346
  %2049 = vmatpush1.bf16.msra.mxu0 %v1345
  %2050 = vmatprep.subr.bf16.mxu0 %v1354
  %2051 = vmatpush1.bf16.msra.mxu0 %v1353
  %2052 = vmatprep.subr.bf16.mxu0 %v1362
  %2053 = vmatpush1.bf16.msra.mxu0 %v1361
  %2054 = vmatprep.subr.bf16.mxu0 %v1370
  %2055 = vmatpush1.bf16.msra.mxu0 %v1369
  %2056 = vmatprep.subr.bf16.mxu0 %v1378
  %2057 = vmatpush1.bf16.msra.mxu0 %v1377
  %2058 = vmatprep.subr.bf16.mxu0 %v1386
  %2059 = vmatpush1.bf16.msra.mxu0 %v1385
  %2060 = vmatprep.subr.bf16.mxu0 %v1394
  %2061 = vmatpush1.bf16.msra.mxu0 %v1393
  %2062 = vmatprep.subr.bf16.mxu0 %v1402
  %2063 = vmatpush1.bf16.msra.mxu0 %v1401
  %2064 = vmatprep.subr.bf16.mxu0 %v1410
  %2065 = vmatpush1.bf16.msra.mxu0 %v1409
  %2066 = vmatprep.subr.bf16.mxu0 %v1418
  %2067 = vmatpush1.bf16.msra.mxu0 %v1417
  %2068 = vmatprep.mubr.bf16.mxu0 %v1994
  %2069 = vmatmul.mubr.bf16.gmra.mrb[0].mxu0 %v1993
  %v2070 = vpop.f32.mrb[0].mxu0
  %v2071 = vadd.f32 0.0, %v2070
  %v2072 = vpop.f32.mrb[0].mxu0
  %v2073 = vadd.f32 0.0, %v2072
  %v2074 = vpop.f32.mrb[0].mxu0
  %v2075 = vpop.f32.mrb[0].mxu0
  %2076 = vdwg.mxu0
  %2077 = vmatprep.subr.bf16.mxu0 %v1300
  %2078 = vmatpush1.bf16.msra.mxu0 %v1299
  %2079 = vmatprep.subr.bf16.mxu0 %v1308
  %2080 = vmatpush1.bf16.msra.mxu0 %v1307
  %2081 = vmatprep.subr.bf16.mxu0 %v1316
  %2082 = vmatpush1.bf16.msra.mxu0 %v1315
  %2083 = vmatprep.subr.bf16.mxu0 %v1324
  %2084 = vmatpush1.bf16.msra.mxu0 %v1323
  %2085 = vmatprep.subr.bf16.mxu0 %v1332
  %2086 = vmatpush1.bf16.msra.mxu0 %v1331
  %2087 = vmatprep.subr.bf16.mxu0 %v1340
  %2088 = vmatpush1.bf16.msra.mxu0 %v1339
  %2089 = vmatprep.subr.bf16.mxu0 %v1348
  %2090 = vmatpush1.bf16.msra.mxu0 %v1347
  %2091 = vmatprep.subr.bf16.mxu0 %v1356
  %2092 = vmatpush1.bf16.msra.mxu0 %v1355
  %2093 = vmatprep.subr.bf16.mxu0 %v1364
  %2094 = vmatpush1.bf16.msra.mxu0 %v1363
  %2095 = vmatprep.subr.bf16.mxu0 %v1372
  %2096 = vmatpush1.bf16.msra.mxu0 %v1371
  %2097 = vmatprep.subr.bf16.mxu0 %v1380
  %2098 = vmatpush1.bf16.msra.mxu0 %v1379
  %2099 = vmatprep.subr.bf16.mxu0 %v1388
  %2100 = vmatpush1.bf16.msra.mxu0 %v1387
  %2101 = vmatprep.subr.bf16.mxu0 %v1396
  %2102 = vmatpush1.bf16.msra.mxu0 %v1395
  %2103 = vmatprep.subr.bf16.mxu0 %v1404
  %2104 = vmatpush1.bf16.msra.mxu0 %v1403
  %2105 = vmatprep.subr.bf16.mxu0 %v1412
  %2106 = vmatpush1.bf16.msra.mxu0 %v1411
  %2107 = vmatprep.subr.bf16.mxu0 %v1420
  %2108 = vmatpush1.bf16.msra.mxu0 %v1419
  %2109 = vmatprep.mubr.bf16.mxu0 %v1994
  %2110 = vmatmul.mubr.bf16.gmra.mrb[0].mxu0 %v1993
  %v2111 = vpop.f32.mrb[0].mxu0
  %v2112 = vadd.f32 0.0, %v2111
  %v2113 = vpop.f32.mrb[0].mxu0
  %v2114 = vadd.f32 0.0, %v2113
  %v2115 = vpop.f32.mrb[0].mxu0
  %v2116 = vpop.f32.mrb[0].mxu0
  %2117 = vdwg.mxu0
  %2118 = vmatprep.subr.bf16.mxu0 %v1302
  %2119 = vmatpush1.bf16.msra.mxu0 %v1301
  %2120 = vmatprep.subr.bf16.mxu0 %v1310
  %2121 = vmatpush1.bf16.msra.mxu0 %v1309
  %2122 = vmatprep.subr.bf16.mxu0 %v1318
  %2123 = vmatpush1.bf16.msra.mxu0 %v1317
  %2124 = vmatprep.subr.bf16.mxu0 %v1326
  %2125 = vmatpush1.bf16.msra.mxu0 %v1325
  %2126 = vmatprep.subr.bf16.mxu0 %v1334
  %2127 = vmatpush1.bf16.msra.mxu0 %v1333
  %2128 = vmatprep.subr.bf16.mxu0 %v1342
  %2129 = vmatpush1.bf16.msra.mxu0 %v1341
  %2130 = vmatprep.subr.bf16.mxu0 %v1350
  %2131 = vmatpush1.bf16.msra.mxu0 %v1349
  %2132 = vmatprep.subr.bf16.mxu0 %v1358
  %2133 = vmatpush1.bf16.msra.mxu0 %v1357
  %2134 = vmatprep.subr.bf16.mxu0 %v1366
  %2135 = vmatpush1.bf16.msra.mxu0 %v1365
  %2136 = vmatprep.subr.bf16.mxu0 %v1374
  %2137 = vmatpush1.bf16.msra.mxu0 %v1373
  %2138 = vmatprep.subr.bf16.mxu0 %v1382
  %2139 = vmatpush1.bf16.msra.mxu0 %v1381
  %2140 = vmatprep.subr.bf16.mxu0 %v1390
  %2141 = vmatpush1.bf16.msra.mxu0 %v1389
  %2142 = vmatprep.subr.bf16.mxu0 %v1398
  %2143 = vmatpush1.bf16.msra.mxu0 %v1397
  %2144 = vmatprep.subr.bf16.mxu0 %v1406
  %2145 = vmatpush1.bf16.msra.mxu0 %v1405
  %2146 = vmatprep.subr.bf16.mxu0 %v1414
  %2147 = vmatpush1.bf16.msra.mxu0 %v1413
  %2148 = vmatprep.subr.bf16.mxu0 %v1422
  %2149 = vmatpush1.bf16.msra.mxu0 %v1421
  %2150 = vmatprep.mubr.bf16.mxu0 %v1994
  %2151 = vmatmul.mubr.bf16.gmra.mrb[0].mxu0 %v1993
  %v2152 = vpop.f32.mrb[0].mxu0
  %v2153 = vadd.f32 0.0, %v2152
  %v2154 = vpop.f32.mrb[0].mxu0
  %v2155 = vadd.f32 0.0, %v2154
  %v2156 = vpop.f32.mrb[0].mxu0
  %v2157 = vpop.f32.mrb[0].mxu0
  %2158 = vdwg.mxu0
  %v2159 = vadd.f32 %v2030, %v536
  %v2160 = vadd.f32 %v2032, %v538
  %v2161 = vadd.f32 %v2071, %v609
  %v2162 = vadd.f32 %v2073, %v611
  %v2163 = vadd.f32 %v2112, %v696
  %v2164 = vadd.f32 %v2114, %v698
  %v2165 = vadd.f32 %v2153, %v769
  %v2166 = vadd.f32 %v2155, %v771
  %v2167 = vxor.u32 %v2159, 2147483648
  %v2168 = vxor.u32 %v2160, 2147483648
  %v2169 = vxor.u32 %v2161, 2147483648
  %v2170 = vmul.f32 %v2167, 1.442695
  %v2171 = vpow.pop %v2170
  %v2172 = vmul.f32 %v2168, 1.442695
  %v2173 = vpow.pop %v2172
  %v2174 = vmul.f32 %v2169, 1.442695
  %v2175 = vpow.pop %v2174
  %v2176 = vadd.f32 %v2171, 1.0
  %v2177 = vadd.f32 %v2173, 1.0
  %v2178 = vadd.f32 %v2175, 1.0
  %v2179 = vrcp.pop %v2176
  %v2180 = vmul.f32 1.0, %v2179
  %v2181 = vrcp.pop %v2177
  %v2182 = vmul.f32 1.0, %v2181
  %v2183 = vrcp.pop %v2178
  %v2184 = vmul.f32 1.0, %v2183
  %v2185 = vxor.u32 %v2163, 2147483648
  %v2186 = vxor.u32 %v2164, 2147483648
  %v2187 = vxor.u32 %v2165, 2147483648
  %v2188 = vmul.f32 %v2185, 1.442695
  %v2189 = vpow.pop %v2188
  %v2190 = vmul.f32 %v2186, 1.442695
  %v2191 = vpow.pop %v2190
  %v2192 = vmul.f32 %v2187, 1.442695
  %v2193 = vpow.pop %v2192
  %v2194 = vadd.f32 %v2189, 1.0
  %v2195 = vadd.f32 %v2191, 1.0
  %v2196 = vadd.f32 %v2193, 1.0
  %v2197 = vrcp.pop %v2194
  %v2198 = vmul.f32 1.0, %v2197
  %v2199 = vrcp.pop %v2195
  %v2200 = vmul.f32 1.0, %v2199
  %v2201 = vrcp.pop %v2196
  %v2202 = vmul.f32 1.0, %v2201
  %v2203 = vtanh.pop %v2162
  %v2204 = vtanh.pop %v2166
  %v2205 = vmul.f32 %v2182, %v1985
  %v2206 = vmul.f32 %v2180, %v2203
  %v2207 = vadd.f32 %v2205, %v2206
  %v2208 = vmul.f32 %v2200, %v1988
  %v2209 = vmul.f32 %v2198, %v2204
  %v2210 = vadd.f32 %v2208, %v2209
  %v2211 = vtanh.pop %v2207
  %v2212 = vmul.f32 %v2184, %v2211
  %v2213 = vtanh.pop %v2210
  %v2214 = vmul.f32 %v2202, %v2213
  %v2215 = vpack.c.bf16 %v2212, %v2212
  %v2216 = vpack.c.bf16 %v2214, %v2214
  %2217 = vmatprep.subr.bf16.mxu0 %v1296
  %2218 = vmatpush1.bf16.msra.mxu0 %v1295
  %2219 = vmatprep.subr.bf16.mxu0 %v1304
  %2220 = vmatpush1.bf16.msra.mxu0 %v1303
  %2221 = vmatprep.subr.bf16.mxu0 %v1312
  %2222 = vmatpush1.bf16.msra.mxu0 %v1311
  %2223 = vmatprep.subr.bf16.mxu0 %v1320
  %2224 = vmatpush1.bf16.msra.mxu0 %v1319
  %2225 = vmatprep.subr.bf16.mxu0 %v1328
  %2226 = vmatpush1.bf16.msra.mxu0 %v1327
  %2227 = vmatprep.subr.bf16.mxu0 %v1336
  %2228 = vmatpush1.bf16.msra.mxu0 %v1335
  %2229 = vmatprep.subr.bf16.mxu0 %v1344
  %2230 = vmatpush1.bf16.msra.mxu0 %v1343
  %2231 = vmatprep.subr.bf16.mxu0 %v1352
  %2232 = vmatpush1.bf16.msra.mxu0 %v1351
  %2233 = vmatprep.subr.bf16.mxu0 %v1360
  %2234 = vmatpush1.bf16.msra.mxu0 %v1359
  %2235 = vmatprep.subr.bf16.mxu0 %v1368
  %2236 = vmatpush1.bf16.msra.mxu0 %v1367
  %2237 = vmatprep.subr.bf16.mxu0 %v1376
  %2238 = vmatpush1.bf16.msra.mxu0 %v1375
  %2239 = vmatprep.subr.bf16.mxu0 %v1384
  %2240 = vmatpush1.bf16.msra.mxu0 %v1383
  %2241 = vmatprep.subr.bf16.mxu0 %v1392
  %2242 = vmatpush1.bf16.msra.mxu0 %v1391
  %2243 = vmatprep.subr.bf16.mxu0 %v1400
  %2244 = vmatpush1.bf16.msra.mxu0 %v1399
  %2245 = vmatprep.subr.bf16.mxu0 %v1408
  %2246 = vmatpush1.bf16.msra.mxu0 %v1407
  %2247 = vmatprep.subr.bf16.mxu0 %v1416
  %2248 = vmatpush1.bf16.msra.mxu0 %v1415
  %2249 = vmatprep.mubr.bf16.mxu0 %v2216
  %2250 = vmatmul.mubr.bf16.gmra.mrb[0].mxu0 %v2215
  %v2251 = vpop.f32.mrb[0].mxu0
  %v2252 = vadd.f32 0.0, %v2251
  %v2253 = vpop.f32.mrb[0].mxu0
  %v2254 = vadd.f32 0.0, %v2253
  %v2255 = vpop.f32.mrb[0].mxu0
  %v2256 = vpop.f32.mrb[0].mxu0
  %2257 = vdwg.mxu0
  %2258 = vmatprep.subr.bf16.mxu0 %v1298
  %2259 = vmatpush1.bf16.msra.mxu0 %v1297
  %2260 = vmatprep.subr.bf16.mxu0 %v1306
  %2261 = vmatpush1.bf16.msra.mxu0 %v1305
  %2262 = vmatprep.subr.bf16.mxu0 %v1314
  %2263 = vmatpush1.bf16.msra.mxu0 %v1313
  %2264 = vmatprep.subr.bf16.mxu0 %v1322
  %2265 = vmatpush1.bf16.msra.mxu0 %v1321
  %2266 = vmatprep.subr.bf16.mxu0 %v1330
  %2267 = vmatpush1.bf16.msra.mxu0 %v1329
  %2268 = vmatprep.subr.bf16.mxu0 %v1338
  %2269 = vmatpush1.bf16.msra.mxu0 %v1337
  %2270 = vmatprep.subr.bf16.mxu0 %v1346
  %2271 = vmatpush1.bf16.msra.mxu0 %v1345
  %2272 = vmatprep.subr.bf16.mxu0 %v1354
  %2273 = vmatpush1.bf16.msra.mxu0 %v1353
  %2274 = vmatprep.subr.bf16.mxu0 %v1362
  %2275 = vmatpush1.bf16.msra.mxu0 %v1361
  %2276 = vmatprep.subr.bf16.mxu0 %v1370
  %2277 = vmatpush1.bf16.msra.mxu0 %v1369
  %2278 = vmatprep.subr.bf16.mxu0 %v1378
  %2279 = vmatpush1.bf16.msra.mxu0 %v1377
  %2280 = vmatprep.subr.bf16.mxu0 %v1386
  %2281 = vmatpush1.bf16.msra.mxu0 %v1385
  %2282 = vmatprep.subr.bf16.mxu0 %v1394
  %2283 = vmatpush1.bf16.msra.mxu0 %v1393
  %2284 = vmatprep.subr.bf16.mxu0 %v1402
  %2285 = vmatpush1.bf16.msra.mxu0 %v1401
  %2286 = vmatprep.subr.bf16.mxu0 %v1410
  %2287 = vmatpush1.bf16.msra.mxu0 %v1409
  %2288 = vmatprep.subr.bf16.mxu0 %v1418
  %2289 = vmatpush1.bf16.msra.mxu0 %v1417
  %2290 = vmatprep.mubr.bf16.mxu0 %v2216
  %2291 = vmatmul.mubr.bf16.gmra.mrb[0].mxu0 %v2215
  %v2292 = vpop.f32.mrb[0].mxu0
  %v2293 = vadd.f32 0.0, %v2292
  %v2294 = vpop.f32.mrb[0].mxu0
  %v2295 = vadd.f32 0.0, %v2294
  %v2296 = vpop.f32.mrb[0].mxu0
  %v2297 = vpop.f32.mrb[0].mxu0
  %2298 = vdwg.mxu0
  %2299 = vmatprep.subr.bf16.mxu0 %v1300
  %2300 = vmatpush1.bf16.msra.mxu0 %v1299
  %2301 = vmatprep.subr.bf16.mxu0 %v1308
  %2302 = vmatpush1.bf16.msra.mxu0 %v1307
  %2303 = vmatprep.subr.bf16.mxu0 %v1316
  %2304 = vmatpush1.bf16.msra.mxu0 %v1315
  %2305 = vmatprep.subr.bf16.mxu0 %v1324
  %2306 = vmatpush1.bf16.msra.mxu0 %v1323
  %2307 = vmatprep.subr.bf16.mxu0 %v1332
  %2308 = vmatpush1.bf16.msra.mxu0 %v1331
  %2309 = vmatprep.subr.bf16.mxu0 %v1340
  %2310 = vmatpush1.bf16.msra.mxu0 %v1339
  %2311 = vmatprep.subr.bf16.mxu0 %v1348
  %2312 = vmatpush1.bf16.msra.mxu0 %v1347
  %2313 = vmatprep.subr.bf16.mxu0 %v1356
  %2314 = vmatpush1.bf16.msra.mxu0 %v1355
  %2315 = vmatprep.subr.bf16.mxu0 %v1364
  %2316 = vmatpush1.bf16.msra.mxu0 %v1363
  %2317 = vmatprep.subr.bf16.mxu0 %v1372
  %2318 = vmatpush1.bf16.msra.mxu0 %v1371
  %2319 = vmatprep.subr.bf16.mxu0 %v1380
  %2320 = vmatpush1.bf16.msra.mxu0 %v1379
  %2321 = vmatprep.subr.bf16.mxu0 %v1388
  %2322 = vmatpush1.bf16.msra.mxu0 %v1387
  %2323 = vmatprep.subr.bf16.mxu0 %v1396
  %2324 = vmatpush1.bf16.msra.mxu0 %v1395
  %2325 = vmatprep.subr.bf16.mxu0 %v1404
  %2326 = vmatpush1.bf16.msra.mxu0 %v1403
  %2327 = vmatprep.subr.bf16.mxu0 %v1412
  %2328 = vmatpush1.bf16.msra.mxu0 %v1411
  %2329 = vmatprep.subr.bf16.mxu0 %v1420
  %2330 = vmatpush1.bf16.msra.mxu0 %v1419
  %2331 = vmatprep.mubr.bf16.mxu0 %v2216
  %2332 = vmatmul.mubr.bf16.gmra.mrb[0].mxu0 %v2215
  %v2333 = vpop.f32.mrb[0].mxu0
  %v2334 = vadd.f32 0.0, %v2333
  %v2335 = vpop.f32.mrb[0].mxu0
  %v2336 = vadd.f32 0.0, %v2335
  %v2337 = vpop.f32.mrb[0].mxu0
  %v2338 = vpop.f32.mrb[0].mxu0
  %2339 = vdwg.mxu0
  %2340 = vmatprep.subr.bf16.mxu0 %v1302
  %2341 = vmatpush1.bf16.msra.mxu0 %v1301
  %2342 = vmatprep.subr.bf16.mxu0 %v1310
  %2343 = vmatpush1.bf16.msra.mxu0 %v1309
  %2344 = vmatprep.subr.bf16.mxu0 %v1318
  %2345 = vmatpush1.bf16.msra.mxu0 %v1317
  %2346 = vmatprep.subr.bf16.mxu0 %v1326
  %2347 = vmatpush1.bf16.msra.mxu0 %v1325
  %2348 = vmatprep.subr.bf16.mxu0 %v1334
  %2349 = vmatpush1.bf16.msra.mxu0 %v1333
  %2350 = vmatprep.subr.bf16.mxu0 %v1342
  %2351 = vmatpush1.bf16.msra.mxu0 %v1341
  %2352 = vmatprep.subr.bf16.mxu0 %v1350
  %2353 = vmatpush1.bf16.msra.mxu0 %v1349
  %2354 = vmatprep.subr.bf16.mxu0 %v1358
  %2355 = vmatpush1.bf16.msra.mxu0 %v1357
  %2356 = vmatprep.subr.bf16.mxu0 %v1366
  %2357 = vmatpush1.bf16.msra.mxu0 %v1365
  %2358 = vmatprep.subr.bf16.mxu0 %v1374
  %2359 = vmatpush1.bf16.msra.mxu0 %v1373
  %2360 = vmatprep.subr.bf16.mxu0 %v1382
  %2361 = vmatpush1.bf16.msra.mxu0 %v1381
  %2362 = vmatprep.subr.bf16.mxu0 %v1390
  %2363 = vmatpush1.bf16.msra.mxu0 %v1389
  %2364 = vmatprep.subr.bf16.mxu0 %v1398
  %2365 = vmatpush1.bf16.msra.mxu0 %v1397
  %2366 = vmatprep.subr.bf16.mxu0 %v1406
  %2367 = vmatpush1.bf16.msra.mxu0 %v1405
  %2368 = vmatprep.subr.bf16.mxu0 %v1414
  %2369 = vmatpush1.bf16.msra.mxu0 %v1413
  %2370 = vmatprep.subr.bf16.mxu0 %v1422
  %2371 = vmatpush1.bf16.msra.mxu0 %v1421
  %2372 = vmatprep.mubr.bf16.mxu0 %v2216
  %2373 = vmatmul.mubr.bf16.gmra.mrb[0].mxu0 %v2215
  %v2374 = vpop.f32.mrb[0].mxu0
  %v2375 = vadd.f32 0.0, %v2374
  %v2376 = vpop.f32.mrb[0].mxu0
  %v2377 = vadd.f32 0.0, %v2376
  %v2378 = vpop.f32.mrb[0].mxu0
  %v2379 = vpop.f32.mrb[0].mxu0
  %2380 = vdwg.mxu0
  %v2381 = vadd.f32 %v2252, %v540
  %v2382 = vadd.f32 %v2254, %v542
  %v2383 = vadd.f32 %v2293, %v613
  %v2384 = vadd.f32 %v2295, %v615
  %v2385 = vadd.f32 %v2334, %v692
  %v2386 = vadd.f32 %v2336, %v694
  %v2387 = vadd.f32 %v2375, %v765
  %v2388 = vadd.f32 %v2377, %v767
  %v2389 = vxor.u32 %v2381, 2147483648
  %v2390 = vxor.u32 %v2382, 2147483648
  %v2391 = vxor.u32 %v2383, 2147483648
  %v2392 = vmul.f32 %v2389, 1.442695
  %v2393 = vpow.pop %v2392
  %v2394 = vmul.f32 %v2390, 1.442695
  %v2395 = vpow.pop %v2394
  %v2396 = vmul.f32 %v2391, 1.442695
  %v2397 = vpow.pop %v2396
  %v2398 = vadd.f32 %v2393, 1.0
  %v2399 = vadd.f32 %v2395, 1.0
  %v2400 = vadd.f32 %v2397, 1.0
  %v2401 = vrcp.pop %v2398
  %v2402 = vmul.f32 1.0, %v2401
  %v2403 = vrcp.pop %v2399
  %v2404 = vmul.f32 1.0, %v2403
  %v2405 = vrcp.pop %v2400
  %v2406 = vmul.f32 1.0, %v2405
  %v2407 = vxor.u32 %v2385, 2147483648
  %v2408 = vxor.u32 %v2386, 2147483648
  %v2409 = vxor.u32 %v2387, 2147483648
  %v2410 = vmul.f32 %v2407, 1.442695
  %v2411 = vpow.pop %v2410
  %v2412 = vmul.f32 %v2408, 1.442695
  %v2413 = vpow.pop %v2412
  %v2414 = vmul.f32 %v2409, 1.442695
  %v2415 = vpow.pop %v2414
  %v2416 = vadd.f32 %v2411, 1.0
  %v2417 = vadd.f32 %v2413, 1.0
  %v2418 = vadd.f32 %v2415, 1.0
  %v2419 = vrcp.pop %v2416
  %v2420 = vmul.f32 1.0, %v2419
  %v2421 = vrcp.pop %v2417
  %v2422 = vmul.f32 1.0, %v2421
  %v2423 = vrcp.pop %v2418
  %v2424 = vmul.f32 1.0, %v2423
  %v2425 = vtanh.pop %v2384
  %v2426 = vtanh.pop %v2388
  %v2427 = vmul.f32 %v2404, %v2207
  %v2428 = vmul.f32 %v2402, %v2425
  %v2429 = vadd.f32 %v2427, %v2428
  %v2430 = vmul.f32 %v2422, %v2210
  %v2431 = vmul.f32 %v2420, %v2426
  %v2432 = vadd.f32 %v2430, %v2431
  %v2433 = vtanh.pop %v2429
  %v2434 = vmul.f32 %v2406, %v2433
  %v2435 = vtanh.pop %v2432
  %v2436 = vmul.f32 %v2424, %v2435
  %v2437 = vpack.c.bf16 %v2434, %v2434
  %v2438 = vpack.c.bf16 %v2436, %v2436
  %2439 = vmatprep.subr.bf16.mxu0 %v1296
  %2440 = vmatpush1.bf16.msra.mxu0 %v1295
  %2441 = vmatprep.subr.bf16.mxu0 %v1304
  %2442 = vmatpush1.bf16.msra.mxu0 %v1303
  %2443 = vmatprep.subr.bf16.mxu0 %v1312
  %2444 = vmatpush1.bf16.msra.mxu0 %v1311
  %2445 = vmatprep.subr.bf16.mxu0 %v1320
  %2446 = vmatpush1.bf16.msra.mxu0 %v1319
  %2447 = vmatprep.subr.bf16.mxu0 %v1328
  %2448 = vmatpush1.bf16.msra.mxu0 %v1327
  %2449 = vmatprep.subr.bf16.mxu0 %v1336
  %2450 = vmatpush1.bf16.msra.mxu0 %v1335
  %2451 = vmatprep.subr.bf16.mxu0 %v1344
  %2452 = vmatpush1.bf16.msra.mxu0 %v1343
  %2453 = vmatprep.subr.bf16.mxu0 %v1352
  %2454 = vmatpush1.bf16.msra.mxu0 %v1351
  %2455 = vmatprep.subr.bf16.mxu0 %v1360
  %2456 = vmatpush1.bf16.msra.mxu0 %v1359
  %2457 = vmatprep.subr.bf16.mxu0 %v1368
  %2458 = vmatpush1.bf16.msra.mxu0 %v1367
  %2459 = vmatprep.subr.bf16.mxu0 %v1376
  %2460 = vmatpush1.bf16.msra.mxu0 %v1375
  %2461 = vmatprep.subr.bf16.mxu0 %v1384
  %2462 = vmatpush1.bf16.msra.mxu0 %v1383
  %2463 = vmatprep.subr.bf16.mxu0 %v1392
  %2464 = vmatpush1.bf16.msra.mxu0 %v1391
  %2465 = vmatprep.subr.bf16.mxu0 %v1400
  %2466 = vmatpush1.bf16.msra.mxu0 %v1399
  %2467 = vmatprep.subr.bf16.mxu0 %v1408
  %2468 = vmatpush1.bf16.msra.mxu0 %v1407
  %2469 = vmatprep.subr.bf16.mxu0 %v1416
  %2470 = vmatpush1.bf16.msra.mxu0 %v1415
  %2471 = vmatprep.mubr.bf16.mxu0 %v2438
  %2472 = vmatmul.mubr.bf16.gmra.mrb[0].mxu0 %v2437
  %v2473 = vpop.f32.mrb[0].mxu0
  %v2474 = vadd.f32 0.0, %v2473
  %v2475 = vpop.f32.mrb[0].mxu0
  %v2476 = vadd.f32 0.0, %v2475
  %v2477 = vpop.f32.mrb[0].mxu0
  %v2478 = vpop.f32.mrb[0].mxu0
  %2479 = vdwg.mxu0
  %2480 = vmatprep.subr.bf16.mxu0 %v1298
  %2481 = vmatpush1.bf16.msra.mxu0 %v1297
  %2482 = vmatprep.subr.bf16.mxu0 %v1306
  %2483 = vmatpush1.bf16.msra.mxu0 %v1305
  %2484 = vmatprep.subr.bf16.mxu0 %v1314
  %2485 = vmatpush1.bf16.msra.mxu0 %v1313
  %2486 = vmatprep.subr.bf16.mxu0 %v1322
  %2487 = vmatpush1.bf16.msra.mxu0 %v1321
  %2488 = vmatprep.subr.bf16.mxu0 %v1330
  %2489 = vmatpush1.bf16.msra.mxu0 %v1329
  %2490 = vmatprep.subr.bf16.mxu0 %v1338
  %2491 = vmatpush1.bf16.msra.mxu0 %v1337
  %2492 = vmatprep.subr.bf16.mxu0 %v1346
  %2493 = vmatpush1.bf16.msra.mxu0 %v1345
  %2494 = vmatprep.subr.bf16.mxu0 %v1354
  %2495 = vmatpush1.bf16.msra.mxu0 %v1353
  %2496 = vmatprep.subr.bf16.mxu0 %v1362
  %2497 = vmatpush1.bf16.msra.mxu0 %v1361
  %2498 = vmatprep.subr.bf16.mxu0 %v1370
  %2499 = vmatpush1.bf16.msra.mxu0 %v1369
  %2500 = vmatprep.subr.bf16.mxu0 %v1378
  %2501 = vmatpush1.bf16.msra.mxu0 %v1377
  %2502 = vmatprep.subr.bf16.mxu0 %v1386
  %2503 = vmatpush1.bf16.msra.mxu0 %v1385
  %2504 = vmatprep.subr.bf16.mxu0 %v1394
  %2505 = vmatpush1.bf16.msra.mxu0 %v1393
  %2506 = vmatprep.subr.bf16.mxu0 %v1402
  %2507 = vmatpush1.bf16.msra.mxu0 %v1401
  %2508 = vmatprep.subr.bf16.mxu0 %v1410
  %2509 = vmatpush1.bf16.msra.mxu0 %v1409
  %2510 = vmatprep.subr.bf16.mxu0 %v1418
  %2511 = vmatpush1.bf16.msra.mxu0 %v1417
  %2512 = vmatprep.mubr.bf16.mxu0 %v2438
  %2513 = vmatmul.mubr.bf16.gmra.mrb[0].mxu0 %v2437
  %v2514 = vpop.f32.mrb[0].mxu0
  %v2515 = vadd.f32 0.0, %v2514
  %v2516 = vpop.f32.mrb[0].mxu0
  %v2517 = vadd.f32 0.0, %v2516
  %v2518 = vpop.f32.mrb[0].mxu0
  %v2519 = vpop.f32.mrb[0].mxu0
  %2520 = vdwg.mxu0
  %2521 = vmatprep.subr.bf16.mxu0 %v1300
  %2522 = vmatpush1.bf16.msra.mxu0 %v1299
  %2523 = vmatprep.subr.bf16.mxu0 %v1308
  %2524 = vmatpush1.bf16.msra.mxu0 %v1307
  %2525 = vmatprep.subr.bf16.mxu0 %v1316
  %2526 = vmatpush1.bf16.msra.mxu0 %v1315
  %2527 = vmatprep.subr.bf16.mxu0 %v1324
  %2528 = vmatpush1.bf16.msra.mxu0 %v1323
  %2529 = vmatprep.subr.bf16.mxu0 %v1332
  %2530 = vmatpush1.bf16.msra.mxu0 %v1331
  %2531 = vmatprep.subr.bf16.mxu0 %v1340
  %2532 = vmatpush1.bf16.msra.mxu0 %v1339
  %2533 = vmatprep.subr.bf16.mxu0 %v1348
  %2534 = vmatpush1.bf16.msra.mxu0 %v1347
  %2535 = vmatprep.subr.bf16.mxu0 %v1356
  %2536 = vmatpush1.bf16.msra.mxu0 %v1355
  %2537 = vmatprep.subr.bf16.mxu0 %v1364
  %2538 = vmatpush1.bf16.msra.mxu0 %v1363
  %2539 = vmatprep.subr.bf16.mxu0 %v1372
  %2540 = vmatpush1.bf16.msra.mxu0 %v1371
  %2541 = vmatprep.subr.bf16.mxu0 %v1380
  %2542 = vmatpush1.bf16.msra.mxu0 %v1379
  %2543 = vmatprep.subr.bf16.mxu0 %v1388
  %2544 = vmatpush1.bf16.msra.mxu0 %v1387
  %2545 = vmatprep.subr.bf16.mxu0 %v1396
  %2546 = vmatpush1.bf16.msra.mxu0 %v1395
  %2547 = vmatprep.subr.bf16.mxu0 %v1404
  %2548 = vmatpush1.bf16.msra.mxu0 %v1403
  %2549 = vmatprep.subr.bf16.mxu0 %v1412
  %2550 = vmatpush1.bf16.msra.mxu0 %v1411
  %2551 = vmatprep.subr.bf16.mxu0 %v1420
  %2552 = vmatpush1.bf16.msra.mxu0 %v1419
  %2553 = vmatprep.mubr.bf16.mxu0 %v2438
  %2554 = vmatmul.mubr.bf16.gmra.mrb[0].mxu0 %v2437
  %v2555 = vpop.f32.mrb[0].mxu0
  %v2556 = vadd.f32 0.0, %v2555
  %v2557 = vpop.f32.mrb[0].mxu0
  %v2558 = vadd.f32 0.0, %v2557
  %v2559 = vpop.f32.mrb[0].mxu0
  %v2560 = vpop.f32.mrb[0].mxu0
  %2561 = vdwg.mxu0
  %2562 = vmatprep.subr.bf16.mxu0 %v1302
  %2563 = vmatpush1.bf16.msra.mxu0 %v1301
  %2564 = vmatprep.subr.bf16.mxu0 %v1310
  %2565 = vmatpush1.bf16.msra.mxu0 %v1309
  %2566 = vmatprep.subr.bf16.mxu0 %v1318
  %2567 = vmatpush1.bf16.msra.mxu0 %v1317
  %2568 = vmatprep.subr.bf16.mxu0 %v1326
  %2569 = vmatpush1.bf16.msra.mxu0 %v1325
  %2570 = vmatprep.subr.bf16.mxu0 %v1334
  %2571 = vmatpush1.bf16.msra.mxu0 %v1333
  %2572 = vmatprep.subr.bf16.mxu0 %v1342
  %2573 = vmatpush1.bf16.msra.mxu0 %v1341
  %2574 = vmatprep.subr.bf16.mxu0 %v1350
  %2575 = vmatpush1.bf16.msra.mxu0 %v1349
  %2576 = vmatprep.subr.bf16.mxu0 %v1358
  %2577 = vmatpush1.bf16.msra.mxu0 %v1357
  %2578 = vmatprep.subr.bf16.mxu0 %v1366
  %2579 = vmatpush1.bf16.msra.mxu0 %v1365
  %2580 = vmatprep.subr.bf16.mxu0 %v1374
  %2581 = vmatpush1.bf16.msra.mxu0 %v1373
  %2582 = vmatprep.subr.bf16.mxu0 %v1382
  %2583 = vmatpush1.bf16.msra.mxu0 %v1381
  %2584 = vmatprep.subr.bf16.mxu0 %v1390
  %2585 = vmatpush1.bf16.msra.mxu0 %v1389
  %2586 = vmatprep.subr.bf16.mxu0 %v1398
  %2587 = vmatpush1.bf16.msra.mxu0 %v1397
  %2588 = vmatprep.subr.bf16.mxu0 %v1406
  %2589 = vmatpush1.bf16.msra.mxu0 %v1405
  %2590 = vmatprep.subr.bf16.mxu0 %v1414
  %2591 = vmatpush1.bf16.msra.mxu0 %v1413
  %2592 = vmatprep.subr.bf16.mxu0 %v1422
  %2593 = vmatpush1.bf16.msra.mxu0 %v1421
  %2594 = vmatprep.mubr.bf16.mxu0 %v2438
  %2595 = vmatmul.mubr.bf16.gmra.mrb[0].mxu0 %v2437
  %v2596 = vpop.f32.mrb[0].mxu0
  %v2597 = vadd.f32 0.0, %v2596
  %v2598 = vpop.f32.mrb[0].mxu0
  %v2599 = vadd.f32 0.0, %v2598
  %v2600 = vpop.f32.mrb[0].mxu0
  %v2601 = vpop.f32.mrb[0].mxu0
  %2602 = vdwg.mxu0
  %v2603 = vadd.f32 %v2474, %v546
  %v2604 = vadd.f32 %v2476, %v548
  %v2605 = vadd.f32 %v2515, %v619
  %v2606 = vadd.f32 %v2517, %v621
  %v2607 = vadd.f32 %v2556, %v686
  %v2608 = vadd.f32 %v2558, %v688
  %v2609 = vadd.f32 %v2597, %v759
  %v2610 = vadd.f32 %v2599, %v761
  %v2611 = vxor.u32 %v2603, 2147483648
  %v2612 = vxor.u32 %v2604, 2147483648
  %v2613 = vxor.u32 %v2605, 2147483648
  %v2614 = vmul.f32 %v2611, 1.442695
  %v2615 = vpow.pop %v2614
  %v2616 = vmul.f32 %v2612, 1.442695
  %v2617 = vpow.pop %v2616
  %v2618 = vmul.f32 %v2613, 1.442695
  %v2619 = vpow.pop %v2618
  %v2620 = vadd.f32 %v2615, 1.0
  %v2621 = vadd.f32 %v2617, 1.0
  %v2622 = vadd.f32 %v2619, 1.0
  %v2623 = vrcp.pop %v2620
  %v2624 = vmul.f32 1.0, %v2623
  %v2625 = vrcp.pop %v2621
  %v2626 = vmul.f32 1.0, %v2625
  %v2627 = vrcp.pop %v2622
  %v2628 = vmul.f32 1.0, %v2627
  %v2629 = vxor.u32 %v2607, 2147483648
  %v2630 = vxor.u32 %v2608, 2147483648
  %v2631 = vxor.u32 %v2609, 2147483648
  %v2632 = vmul.f32 %v2629, 1.442695
  %v2633 = vpow.pop %v2632
  %v2634 = vmul.f32 %v2630, 1.442695
  %v2635 = vpow.pop %v2634
  %v2636 = vmul.f32 %v2631, 1.442695
  %v2637 = vpow.pop %v2636
  %v2638 = vadd.f32 %v2633, 1.0
  %v2639 = vadd.f32 %v2635, 1.0
  %v2640 = vadd.f32 %v2637, 1.0
  %v2641 = vrcp.pop %v2638
  %v2642 = vmul.f32 1.0, %v2641
  %v2643 = vrcp.pop %v2639
  %v2644 = vmul.f32 1.0, %v2643
  %v2645 = vrcp.pop %v2640
  %v2646 = vmul.f32 1.0, %v2645
  %v2647 = vtanh.pop %v2606
  %v2648 = vtanh.pop %v2610
  %v2649 = vmul.f32 %v2626, %v2429
  %v2650 = vmul.f32 %v2624, %v2647
  %v2651 = vadd.f32 %v2649, %v2650
  %v2652 = vmul.f32 %v2644, %v2432
  %v2653 = vmul.f32 %v2642, %v2648
  %v2654 = vadd.f32 %v2652, %v2653
  %v2655 = vtanh.pop %v2651
  %v2656 = vmul.f32 %v2628, %v2655
  %v2657 = vtanh.pop %v2654
  %v2658 = vmul.f32 %v2646, %v2657
  %v2659 = vpack.c.bf16 %v2656, %v2656
  %v2660 = vpack.c.bf16 %v2658, %v2658
  %2661 = vmatprep.subr.bf16.mxu0 %v1296
  %2662 = vmatpush1.bf16.msra.mxu0 %v1295
  %2663 = vmatprep.subr.bf16.mxu0 %v1304
  %2664 = vmatpush1.bf16.msra.mxu0 %v1303
  %2665 = vmatprep.subr.bf16.mxu0 %v1312
  %2666 = vmatpush1.bf16.msra.mxu0 %v1311
  %2667 = vmatprep.subr.bf16.mxu0 %v1320
  %2668 = vmatpush1.bf16.msra.mxu0 %v1319
  %2669 = vmatprep.subr.bf16.mxu0 %v1328
  %2670 = vmatpush1.bf16.msra.mxu0 %v1327
  %2671 = vmatprep.subr.bf16.mxu0 %v1336
  %2672 = vmatpush1.bf16.msra.mxu0 %v1335
  %2673 = vmatprep.subr.bf16.mxu0 %v1344
  %2674 = vmatpush1.bf16.msra.mxu0 %v1343
  %2675 = vmatprep.subr.bf16.mxu0 %v1352
  %2676 = vmatpush1.bf16.msra.mxu0 %v1351
  %2677 = vmatprep.subr.bf16.mxu0 %v1360
  %2678 = vmatpush1.bf16.msra.mxu0 %v1359
  %2679 = vmatprep.subr.bf16.mxu0 %v1368
  %2680 = vmatpush1.bf16.msra.mxu0 %v1367
  %2681 = vmatprep.subr.bf16.mxu0 %v1376
  %2682 = vmatpush1.bf16.msra.mxu0 %v1375
  %2683 = vmatprep.subr.bf16.mxu0 %v1384
  %2684 = vmatpush1.bf16.msra.mxu0 %v1383
  %2685 = vmatprep.subr.bf16.mxu0 %v1392
  %2686 = vmatpush1.bf16.msra.mxu0 %v1391
  %2687 = vmatprep.subr.bf16.mxu0 %v1400
  %2688 = vmatpush1.bf16.msra.mxu0 %v1399
  %2689 = vmatprep.subr.bf16.mxu0 %v1408
  %2690 = vmatpush1.bf16.msra.mxu0 %v1407
  %2691 = vmatprep.subr.bf16.mxu0 %v1416
  %2692 = vmatpush1.bf16.msra.mxu0 %v1415
  %2693 = vmatprep.mubr.bf16.mxu0 %v2660
  %2694 = vmatmul.mubr.bf16.gmra.mrb[0].mxu0 %v2659
  %v2695 = vpop.f32.mrb[0].mxu0
  %v2696 = vadd.f32 0.0, %v2695
  %v2697 = vpop.f32.mrb[0].mxu0
  %v2698 = vadd.f32 0.0, %v2697
  %v2699 = vpop.f32.mrb[0].mxu0
  %v2700 = vpop.f32.mrb[0].mxu0
  %2701 = vdwg.mxu0
  %2702 = vmatprep.subr.bf16.mxu0 %v1298
  %2703 = vmatpush1.bf16.msra.mxu0 %v1297
  %2704 = vmatprep.subr.bf16.mxu0 %v1306
  %2705 = vmatpush1.bf16.msra.mxu0 %v1305
  %2706 = vmatprep.subr.bf16.mxu0 %v1314
  %2707 = vmatpush1.bf16.msra.mxu0 %v1313
  %2708 = vmatprep.subr.bf16.mxu0 %v1322
  %2709 = vmatpush1.bf16.msra.mxu0 %v1321
  %2710 = vmatprep.subr.bf16.mxu0 %v1330
  %2711 = vmatpush1.bf16.msra.mxu0 %v1329
  %2712 = vmatprep.subr.bf16.mxu0 %v1338
  %2713 = vmatpush1.bf16.msra.mxu0 %v1337
  %2714 = vmatprep.subr.bf16.mxu0 %v1346
  %2715 = vmatpush1.bf16.msra.mxu0 %v1345
  %2716 = vmatprep.subr.bf16.mxu0 %v1354
  %2717 = vmatpush1.bf16.msra.mxu0 %v1353
  %2718 = vmatprep.subr.bf16.mxu0 %v1362
  %2719 = vmatpush1.bf16.msra.mxu0 %v1361
  %2720 = vmatprep.subr.bf16.mxu0 %v1370
  %2721 = vmatpush1.bf16.msra.mxu0 %v1369
  %2722 = vmatprep.subr.bf16.mxu0 %v1378
  %2723 = vmatpush1.bf16.msra.mxu0 %v1377
  %2724 = vmatprep.subr.bf16.mxu0 %v1386
  %2725 = vmatpush1.bf16.msra.mxu0 %v1385
  %2726 = vmatprep.subr.bf16.mxu0 %v1394
  %2727 = vmatpush1.bf16.msra.mxu0 %v1393
  %2728 = vmatprep.subr.bf16.mxu0 %v1402
  %2729 = vmatpush1.bf16.msra.mxu0 %v1401
  %2730 = vmatprep.subr.bf16.mxu0 %v1410
  %2731 = vmatpush1.bf16.msra.mxu0 %v1409
  %2732 = vmatprep.subr.bf16.mxu0 %v1418
  %2733 = vmatpush1.bf16.msra.mxu0 %v1417
  %2734 = vmatprep.mubr.bf16.mxu0 %v2660
  %2735 = vmatmul.mubr.bf16.gmra.mrb[0].mxu0 %v2659
  %v2736 = vpop.f32.mrb[0].mxu0
  %v2737 = vadd.f32 0.0, %v2736
  %v2738 = vpop.f32.mrb[0].mxu0
  %v2739 = vadd.f32 0.0, %v2738
  %v2740 = vpop.f32.mrb[0].mxu0
  %v2741 = vpop.f32.mrb[0].mxu0
  %2742 = vdwg.mxu0
  %2743 = vmatprep.subr.bf16.mxu0 %v1300
  %2744 = vmatpush1.bf16.msra.mxu0 %v1299
  %2745 = vmatprep.subr.bf16.mxu0 %v1308
  %2746 = vmatpush1.bf16.msra.mxu0 %v1307
  %2747 = vmatprep.subr.bf16.mxu0 %v1316
  %2748 = vmatpush1.bf16.msra.mxu0 %v1315
  %2749 = vmatprep.subr.bf16.mxu0 %v1324
  %2750 = vmatpush1.bf16.msra.mxu0 %v1323
  %2751 = vmatprep.subr.bf16.mxu0 %v1332
  %2752 = vmatpush1.bf16.msra.mxu0 %v1331
  %2753 = vmatprep.subr.bf16.mxu0 %v1340
  %2754 = vmatpush1.bf16.msra.mxu0 %v1339
  %2755 = vmatprep.subr.bf16.mxu0 %v1348
  %2756 = vmatpush1.bf16.msra.mxu0 %v1347
  %2757 = vmatprep.subr.bf16.mxu0 %v1356
  %2758 = vmatpush1.bf16.msra.mxu0 %v1355
  %2759 = vmatprep.subr.bf16.mxu0 %v1364
  %2760 = vmatpush1.bf16.msra.mxu0 %v1363
  %2761 = vmatprep.subr.bf16.mxu0 %v1372
  %2762 = vmatpush1.bf16.msra.mxu0 %v1371
  %2763 = vmatprep.subr.bf16.mxu0 %v1380
  %2764 = vmatpush1.bf16.msra.mxu0 %v1379
  %2765 = vmatprep.subr.bf16.mxu0 %v1388
  %2766 = vmatpush1.bf16.msra.mxu0 %v1387
  %2767 = vmatprep.subr.bf16.mxu0 %v1396
  %2768 = vmatpush1.bf16.msra.mxu0 %v1395
  %2769 = vmatprep.subr.bf16.mxu0 %v1404
  %2770 = vmatpush1.bf16.msra.mxu0 %v1403
  %2771 = vmatprep.subr.bf16.mxu0 %v1412
  %2772 = vmatpush1.bf16.msra.mxu0 %v1411
  %2773 = vmatprep.subr.bf16.mxu0 %v1420
  %2774 = vmatpush1.bf16.msra.mxu0 %v1419
  %2775 = vmatprep.mubr.bf16.mxu0 %v2660
  %2776 = vmatmul.mubr.bf16.gmra.mrb[0].mxu0 %v2659
  %v2777 = vpop.f32.mrb[0].mxu0
  %v2778 = vadd.f32 0.0, %v2777
  %v2779 = vpop.f32.mrb[0].mxu0
  %v2780 = vadd.f32 0.0, %v2779
  %v2781 = vpop.f32.mrb[0].mxu0
  %v2782 = vpop.f32.mrb[0].mxu0
  %2783 = vdwg.mxu0
  %2784 = vmatprep.subr.bf16.mxu0 %v1302
  %2785 = vmatpush1.bf16.msra.mxu0 %v1301
  %2786 = vmatprep.subr.bf16.mxu0 %v1310
  %2787 = vmatpush1.bf16.msra.mxu0 %v1309
  %2788 = vmatprep.subr.bf16.mxu0 %v1318
  %2789 = vmatpush1.bf16.msra.mxu0 %v1317
  %2790 = vmatprep.subr.bf16.mxu0 %v1326
  %2791 = vmatpush1.bf16.msra.mxu0 %v1325
  %2792 = vmatprep.subr.bf16.mxu0 %v1334
  %2793 = vmatpush1.bf16.msra.mxu0 %v1333
  %2794 = vmatprep.subr.bf16.mxu0 %v1342
  %2795 = vmatpush1.bf16.msra.mxu0 %v1341
  %2796 = vmatprep.subr.bf16.mxu0 %v1350
  %2797 = vmatpush1.bf16.msra.mxu0 %v1349
  %2798 = vmatprep.subr.bf16.mxu0 %v1358
  %2799 = vmatpush1.bf16.msra.mxu0 %v1357
  %2800 = vmatprep.subr.bf16.mxu0 %v1366
  %2801 = vmatpush1.bf16.msra.mxu0 %v1365
  %2802 = vmatprep.subr.bf16.mxu0 %v1374
  %2803 = vmatpush1.bf16.msra.mxu0 %v1373
  %2804 = vmatprep.subr.bf16.mxu0 %v1382
  %2805 = vmatpush1.bf16.msra.mxu0 %v1381
  %2806 = vmatprep.subr.bf16.mxu0 %v1390
  %2807 = vmatpush1.bf16.msra.mxu0 %v1389
  %2808 = vmatprep.subr.bf16.mxu0 %v1398
  %2809 = vmatpush1.bf16.msra.mxu0 %v1397
  %2810 = vmatprep.subr.bf16.mxu0 %v1406
  %2811 = vmatpush1.bf16.msra.mxu0 %v1405
  %2812 = vmatprep.subr.bf16.mxu0 %v1414
  %2813 = vmatpush1.bf16.msra.mxu0 %v1413
  %2814 = vmatprep.subr.bf16.mxu0 %v1422
  %2815 = vmatpush1.bf16.msra.mxu0 %v1421
  %2816 = vmatprep.mubr.bf16.mxu0 %v2660
  %2817 = vmatmul.mubr.bf16.gmra.mrb[0].mxu0 %v2659
  %v2818 = vpop.f32.mrb[0].mxu0
  %v2819 = vadd.f32 0.0, %v2818
  %v2820 = vpop.f32.mrb[0].mxu0
  %v2821 = vadd.f32 0.0, %v2820
  %v2822 = vpop.f32.mrb[0].mxu0
  %v2823 = vpop.f32.mrb[0].mxu0
  %2824 = vdwg.mxu0
  %v2825 = vadd.f32 %v2696, %v550
  %v2826 = vadd.f32 %v2698, %v552
  %v2827 = vadd.f32 %v2737, %v623
  %v2828 = vadd.f32 %v2739, %v625
  %v2829 = vadd.f32 %v2778, %v682
  %v2830 = vadd.f32 %v2780, %v684
  %v2831 = vadd.f32 %v2819, %v755
  %v2832 = vadd.f32 %v2821, %v757
  %v2833 = vxor.u32 %v2825, 2147483648
  %v2834 = vxor.u32 %v2826, 2147483648
  %v2835 = vxor.u32 %v2827, 2147483648
  %v2836 = vmul.f32 %v2833, 1.442695
  %v2837 = vpow.pop %v2836
  %v2838 = vmul.f32 %v2834, 1.442695
  %v2839 = vpow.pop %v2838
  %v2840 = vmul.f32 %v2835, 1.442695
  %v2841 = vpow.pop %v2840
  %v2842 = vadd.f32 %v2837, 1.0
  %v2843 = vadd.f32 %v2839, 1.0
  %v2844 = vadd.f32 %v2841, 1.0
  %v2845 = vrcp.pop %v2842
  %v2846 = vmul.f32 1.0, %v2845
  %v2847 = vrcp.pop %v2843
  %v2848 = vmul.f32 1.0, %v2847
  %v2849 = vrcp.pop %v2844
  %v2850 = vmul.f32 1.0, %v2849
  %v2851 = vxor.u32 %v2829, 2147483648
  %v2852 = vxor.u32 %v2830, 2147483648
  %v2853 = vxor.u32 %v2831, 2147483648
  %v2854 = vmul.f32 %v2851, 1.442695
  %v2855 = vpow.pop %v2854
  %v2856 = vmul.f32 %v2852, 1.442695
  %v2857 = vpow.pop %v2856
  %v2858 = vmul.f32 %v2853, 1.442695
  %v2859 = vpow.pop %v2858
  %v2860 = vadd.f32 %v2855, 1.0
  %v2861 = vadd.f32 %v2857, 1.0
  %v2862 = vadd.f32 %v2859, 1.0
  %v2863 = vrcp.pop %v2860
  %v2864 = vmul.f32 1.0, %v2863
  %v2865 = vrcp.pop %v2861
  %v2866 = vmul.f32 1.0, %v2865
  %v2867 = vrcp.pop %v2862
  %v2868 = vmul.f32 1.0, %v2867
  %v2869 = vtanh.pop %v2828
  %v2870 = vtanh.pop %v2832
  %v2871 = vmul.f32 %v2848, %v2651
  %v2872 = vmul.f32 %v2846, %v2869
  %v2873 = vadd.f32 %v2871, %v2872
  %v2874 = vmul.f32 %v2866, %v2654
  %v2875 = vmul.f32 %v2864, %v2870
  %v2876 = vadd.f32 %v2874, %v2875
  %v2877 = vtanh.pop %v2873
  %v2878 = vmul.f32 %v2850, %v2877
  %v2879 = vtanh.pop %v2876
  %v2880 = vmul.f32 %v2868, %v2879
  %v2881 = vpack.c.bf16 %v2878, %v2878
  %v2882 = vpack.c.bf16 %v2880, %v2880
  %2883 = vmatprep.subr.bf16.mxu0 %v1296
  %2884 = vmatpush1.bf16.msra.mxu0 %v1295
  %2885 = vmatprep.subr.bf16.mxu0 %v1304
  %2886 = vmatpush1.bf16.msra.mxu0 %v1303
  %2887 = vmatprep.subr.bf16.mxu0 %v1312
  %2888 = vmatpush1.bf16.msra.mxu0 %v1311
  %2889 = vmatprep.subr.bf16.mxu0 %v1320
  %2890 = vmatpush1.bf16.msra.mxu0 %v1319
  %2891 = vmatprep.subr.bf16.mxu0 %v1328
  %2892 = vmatpush1.bf16.msra.mxu0 %v1327
  %2893 = vmatprep.subr.bf16.mxu0 %v1336
  %2894 = vmatpush1.bf16.msra.mxu0 %v1335
  %2895 = vmatprep.subr.bf16.mxu0 %v1344
  %2896 = vmatpush1.bf16.msra.mxu0 %v1343
  %2897 = vmatprep.subr.bf16.mxu0 %v1352
  %2898 = vmatpush1.bf16.msra.mxu0 %v1351
  %2899 = vmatprep.subr.bf16.mxu0 %v1360
  %2900 = vmatpush1.bf16.msra.mxu0 %v1359
  %2901 = vmatprep.subr.bf16.mxu0 %v1368
  %2902 = vmatpush1.bf16.msra.mxu0 %v1367
  %2903 = vmatprep.subr.bf16.mxu0 %v1376
  %2904 = vmatpush1.bf16.msra.mxu0 %v1375
  %2905 = vmatprep.subr.bf16.mxu0 %v1384
  %2906 = vmatpush1.bf16.msra.mxu0 %v1383
  %2907 = vmatprep.subr.bf16.mxu0 %v1392
  %2908 = vmatpush1.bf16.msra.mxu0 %v1391
  %2909 = vmatprep.subr.bf16.mxu0 %v1400
  %2910 = vmatpush1.bf16.msra.mxu0 %v1399
  %2911 = vmatprep.subr.bf16.mxu0 %v1408
  %2912 = vmatpush1.bf16.msra.mxu0 %v1407
  %2913 = vmatprep.subr.bf16.mxu0 %v1416
  %2914 = vmatpush1.bf16.msra.mxu0 %v1415
  %2915 = vmatprep.mubr.bf16.mxu0 %v2882
  %2916 = vmatmul.mubr.bf16.gmra.mrb[0].mxu0 %v2881
  %v2917 = vpop.f32.mrb[0].mxu0
  %v2918 = vadd.f32 0.0, %v2917
  %v2919 = vpop.f32.mrb[0].mxu0
  %v2920 = vadd.f32 0.0, %v2919
  %v2921 = vpop.f32.mrb[0].mxu0
  %v2922 = vpop.f32.mrb[0].mxu0
  %2923 = vdwg.mxu0
  %2924 = vmatprep.subr.bf16.mxu0 %v1298
  %2925 = vmatpush1.bf16.msra.mxu0 %v1297
  %2926 = vmatprep.subr.bf16.mxu0 %v1306
  %2927 = vmatpush1.bf16.msra.mxu0 %v1305
  %2928 = vmatprep.subr.bf16.mxu0 %v1314
  %2929 = vmatpush1.bf16.msra.mxu0 %v1313
  %2930 = vmatprep.subr.bf16.mxu0 %v1322
  %2931 = vmatpush1.bf16.msra.mxu0 %v1321
  %2932 = vmatprep.subr.bf16.mxu0 %v1330
  %2933 = vmatpush1.bf16.msra.mxu0 %v1329
  %2934 = vmatprep.subr.bf16.mxu0 %v1338
  %2935 = vmatpush1.bf16.msra.mxu0 %v1337
  %2936 = vmatprep.subr.bf16.mxu0 %v1346
  %2937 = vmatpush1.bf16.msra.mxu0 %v1345
  %2938 = vmatprep.subr.bf16.mxu0 %v1354
  %2939 = vmatpush1.bf16.msra.mxu0 %v1353
  %2940 = vmatprep.subr.bf16.mxu0 %v1362
  %2941 = vmatpush1.bf16.msra.mxu0 %v1361
  %2942 = vmatprep.subr.bf16.mxu0 %v1370
  %2943 = vmatpush1.bf16.msra.mxu0 %v1369
  %2944 = vmatprep.subr.bf16.mxu0 %v1378
  %2945 = vmatpush1.bf16.msra.mxu0 %v1377
  %2946 = vmatprep.subr.bf16.mxu0 %v1386
  %2947 = vmatpush1.bf16.msra.mxu0 %v1385
  %2948 = vmatprep.subr.bf16.mxu0 %v1394
  %2949 = vmatpush1.bf16.msra.mxu0 %v1393
  %2950 = vmatprep.subr.bf16.mxu0 %v1402
  %2951 = vmatpush1.bf16.msra.mxu0 %v1401
  %2952 = vmatprep.subr.bf16.mxu0 %v1410
  %2953 = vmatpush1.bf16.msra.mxu0 %v1409
  %2954 = vmatprep.subr.bf16.mxu0 %v1418
  %2955 = vmatpush1.bf16.msra.mxu0 %v1417
  %2956 = vmatprep.mubr.bf16.mxu0 %v2882
  %2957 = vmatmul.mubr.bf16.gmra.mrb[0].mxu0 %v2881
  %v2958 = vpop.f32.mrb[0].mxu0
  %v2959 = vadd.f32 0.0, %v2958
  %v2960 = vpop.f32.mrb[0].mxu0
  %v2961 = vadd.f32 0.0, %v2960
  %v2962 = vpop.f32.mrb[0].mxu0
  %v2963 = vpop.f32.mrb[0].mxu0
  %2964 = vdwg.mxu0
  %2965 = vmatprep.subr.bf16.mxu0 %v1300
  %2966 = vmatpush1.bf16.msra.mxu0 %v1299
  %2967 = vmatprep.subr.bf16.mxu0 %v1308
  %2968 = vmatpush1.bf16.msra.mxu0 %v1307
  %2969 = vmatprep.subr.bf16.mxu0 %v1316
  %2970 = vmatpush1.bf16.msra.mxu0 %v1315
  %2971 = vmatprep.subr.bf16.mxu0 %v1324
  %2972 = vmatpush1.bf16.msra.mxu0 %v1323
  %2973 = vmatprep.subr.bf16.mxu0 %v1332
  %2974 = vmatpush1.bf16.msra.mxu0 %v1331
  %2975 = vmatprep.subr.bf16.mxu0 %v1340
  %2976 = vmatpush1.bf16.msra.mxu0 %v1339
  %2977 = vmatprep.subr.bf16.mxu0 %v1348
  %2978 = vmatpush1.bf16.msra.mxu0 %v1347
  %2979 = vmatprep.subr.bf16.mxu0 %v1356
  %2980 = vmatpush1.bf16.msra.mxu0 %v1355
  %2981 = vmatprep.subr.bf16.mxu0 %v1364
  %2982 = vmatpush1.bf16.msra.mxu0 %v1363
  %2983 = vmatprep.subr.bf16.mxu0 %v1372
  %2984 = vmatpush1.bf16.msra.mxu0 %v1371
  %2985 = vmatprep.subr.bf16.mxu0 %v1380
  %2986 = vmatpush1.bf16.msra.mxu0 %v1379
  %2987 = vmatprep.subr.bf16.mxu0 %v1388
  %2988 = vmatpush1.bf16.msra.mxu0 %v1387
  %2989 = vmatprep.subr.bf16.mxu0 %v1396
  %2990 = vmatpush1.bf16.msra.mxu0 %v1395
  %2991 = vmatprep.subr.bf16.mxu0 %v1404
  %2992 = vmatpush1.bf16.msra.mxu0 %v1403
  %2993 = vmatprep.subr.bf16.mxu0 %v1412
  %2994 = vmatpush1.bf16.msra.mxu0 %v1411
  %2995 = vmatprep.subr.bf16.mxu0 %v1420
  %2996 = vmatpush1.bf16.msra.mxu0 %v1419
  %2997 = vmatprep.mubr.bf16.mxu0 %v2882
  %2998 = vmatmul.mubr.bf16.gmra.mrb[0].mxu0 %v2881
  %v2999 = vpop.f32.mrb[0].mxu0
  %v3000 = vadd.f32 0.0, %v2999
  %v3001 = vpop.f32.mrb[0].mxu0
  %v3002 = vadd.f32 0.0, %v3001
  %v3003 = vpop.f32.mrb[0].mxu0
  %v3004 = vpop.f32.mrb[0].mxu0
  %3005 = vdwg.mxu0
  %3006 = vmatprep.subr.bf16.mxu0 %v1302
  %3007 = vmatpush1.bf16.msra.mxu0 %v1301
  %3008 = vmatprep.subr.bf16.mxu0 %v1310
  %3009 = vmatpush1.bf16.msra.mxu0 %v1309
  %3010 = vmatprep.subr.bf16.mxu0 %v1318
  %3011 = vmatpush1.bf16.msra.mxu0 %v1317
  %3012 = vmatprep.subr.bf16.mxu0 %v1326
  %3013 = vmatpush1.bf16.msra.mxu0 %v1325
  %3014 = vmatprep.subr.bf16.mxu0 %v1334
  %3015 = vmatpush1.bf16.msra.mxu0 %v1333
  %3016 = vmatprep.subr.bf16.mxu0 %v1342
  %3017 = vmatpush1.bf16.msra.mxu0 %v1341
  %3018 = vmatprep.subr.bf16.mxu0 %v1350
  %3019 = vmatpush1.bf16.msra.mxu0 %v1349
  %3020 = vmatprep.subr.bf16.mxu0 %v1358
  %3021 = vmatpush1.bf16.msra.mxu0 %v1357
  %3022 = vmatprep.subr.bf16.mxu0 %v1366
  %3023 = vmatpush1.bf16.msra.mxu0 %v1365
  %3024 = vmatprep.subr.bf16.mxu0 %v1374
  %3025 = vmatpush1.bf16.msra.mxu0 %v1373
  %3026 = vmatprep.subr.bf16.mxu0 %v1382
  %3027 = vmatpush1.bf16.msra.mxu0 %v1381
  %3028 = vmatprep.subr.bf16.mxu0 %v1390
  %3029 = vmatpush1.bf16.msra.mxu0 %v1389
  %3030 = vmatprep.subr.bf16.mxu0 %v1398
  %3031 = vmatpush1.bf16.msra.mxu0 %v1397
  %3032 = vmatprep.subr.bf16.mxu0 %v1406
  %3033 = vmatpush1.bf16.msra.mxu0 %v1405
  %3034 = vmatprep.subr.bf16.mxu0 %v1414
  %3035 = vmatpush1.bf16.msra.mxu0 %v1413
  %3036 = vmatprep.subr.bf16.mxu0 %v1422
  %3037 = vmatpush1.bf16.msra.mxu0 %v1421
  %3038 = vmatprep.mubr.bf16.mxu0 %v2882
  %3039 = vmatmul.mubr.bf16.gmra.mrb[0].mxu0 %v2881
  %v3040 = vpop.f32.mrb[0].mxu0
  %v3041 = vadd.f32 0.0, %v3040
  %v3042 = vpop.f32.mrb[0].mxu0
  %v3043 = vadd.f32 0.0, %v3042
  %v3044 = vpop.f32.mrb[0].mxu0
  %v3045 = vpop.f32.mrb[0].mxu0
  %3046 = vdwg.mxu0
  %v3047 = vadd.f32 %v2918, %v556
  %v3048 = vadd.f32 %v2920, %v558
  %v3049 = vadd.f32 %v2959, %v629
  %v3050 = vadd.f32 %v2961, %v631
  %v3051 = vadd.f32 %v3000, %v676
  %v3052 = vadd.f32 %v3002, %v678
  %v3053 = vadd.f32 %v3041, %v749
  %v3054 = vadd.f32 %v3043, %v751
  %v3055 = vxor.u32 %v3047, 2147483648
  %v3056 = vxor.u32 %v3048, 2147483648
  %v3057 = vxor.u32 %v3049, 2147483648
  %v3058 = vmul.f32 %v3055, 1.442695
  %v3059 = vpow.pop %v3058
  %v3060 = vmul.f32 %v3056, 1.442695
  %v3061 = vpow.pop %v3060
  %v3062 = vmul.f32 %v3057, 1.442695
  %v3063 = vpow.pop %v3062
  %v3064 = vadd.f32 %v3059, 1.0
  %v3065 = vadd.f32 %v3061, 1.0
  %v3066 = vadd.f32 %v3063, 1.0
  %v3067 = vrcp.pop %v3064
  %v3068 = vmul.f32 1.0, %v3067
  %v3069 = vrcp.pop %v3065
  %v3070 = vmul.f32 1.0, %v3069
  %v3071 = vrcp.pop %v3066
  %v3072 = vmul.f32 1.0, %v3071
  %v3073 = vxor.u32 %v3051, 2147483648
  %v3074 = vxor.u32 %v3052, 2147483648
  %v3075 = vxor.u32 %v3053, 2147483648
  %v3076 = vmul.f32 %v3073, 1.442695
  %v3077 = vpow.pop %v3076
  %v3078 = vmul.f32 %v3074, 1.442695
  %v3079 = vpow.pop %v3078
  %v3080 = vmul.f32 %v3075, 1.442695
  %v3081 = vpow.pop %v3080
  %v3082 = vadd.f32 %v3077, 1.0
  %v3083 = vadd.f32 %v3079, 1.0
  %v3084 = vadd.f32 %v3081, 1.0
  %v3085 = vrcp.pop %v3082
  %v3086 = vmul.f32 1.0, %v3085
  %v3087 = vrcp.pop %v3083
  %v3088 = vmul.f32 1.0, %v3087
  %v3089 = vrcp.pop %v3084
  %v3090 = vmul.f32 1.0, %v3089
  %v3091 = vtanh.pop %v3050
  %v3092 = vtanh.pop %v3054
  %v3093 = vmul.f32 %v3070, %v2873
  %v3094 = vmul.f32 %v3068, %v3091
  %v3095 = vadd.f32 %v3093, %v3094
  %v3096 = vmul.f32 %v3088, %v2876
  %v3097 = vmul.f32 %v3086, %v3092
  %v3098 = vadd.f32 %v3096, %v3097
  %v3099 = vtanh.pop %v3095
  %v3100 = vmul.f32 %v3072, %v3099
  %v3101 = vtanh.pop %v3098
  %v3102 = vmul.f32 %v3090, %v3101
  %v3103 = vpack.c.bf16 %v3100, %v3100
  %v3104 = vpack.c.bf16 %v3102, %v3102
  %3105 = vmatprep.subr.bf16.mxu0 %v1296
  %3106 = vmatpush1.bf16.msra.mxu0 %v1295
  %3107 = vmatprep.subr.bf16.mxu0 %v1304
  %3108 = vmatpush1.bf16.msra.mxu0 %v1303
  %3109 = vmatprep.subr.bf16.mxu0 %v1312
  %3110 = vmatpush1.bf16.msra.mxu0 %v1311
  %3111 = vmatprep.subr.bf16.mxu0 %v1320
  %3112 = vmatpush1.bf16.msra.mxu0 %v1319
  %3113 = vmatprep.subr.bf16.mxu0 %v1328
  %3114 = vmatpush1.bf16.msra.mxu0 %v1327
  %3115 = vmatprep.subr.bf16.mxu0 %v1336
  %3116 = vmatpush1.bf16.msra.mxu0 %v1335
  %3117 = vmatprep.subr.bf16.mxu0 %v1344
  %3118 = vmatpush1.bf16.msra.mxu0 %v1343
  %3119 = vmatprep.subr.bf16.mxu0 %v1352
  %3120 = vmatpush1.bf16.msra.mxu0 %v1351
  %3121 = vmatprep.subr.bf16.mxu0 %v1360
  %3122 = vmatpush1.bf16.msra.mxu0 %v1359
  %3123 = vmatprep.subr.bf16.mxu0 %v1368
  %3124 = vmatpush1.bf16.msra.mxu0 %v1367
  %3125 = vmatprep.subr.bf16.mxu0 %v1376
  %3126 = vmatpush1.bf16.msra.mxu0 %v1375
  %3127 = vmatprep.subr.bf16.mxu0 %v1384
  %3128 = vmatpush1.bf16.msra.mxu0 %v1383
  %3129 = vmatprep.subr.bf16.mxu0 %v1392
  %3130 = vmatpush1.bf16.msra.mxu0 %v1391
  %3131 = vmatprep.subr.bf16.mxu0 %v1400
  %3132 = vmatpush1.bf16.msra.mxu0 %v1399
  %3133 = vmatprep.subr.bf16.mxu0 %v1408
  %3134 = vmatpush1.bf16.msra.mxu0 %v1407
  %3135 = vmatprep.subr.bf16.mxu0 %v1416
  %3136 = vmatpush1.bf16.msra.mxu0 %v1415
  %3137 = vmatprep.mubr.bf16.mxu0 %v3104
  %3138 = vmatmul.mubr.bf16.gmra.mrb[0].mxu0 %v3103
  %v3139 = vpop.f32.mrb[0].mxu0
  %v3140 = vadd.f32 0.0, %v3139
  %v3141 = vpop.f32.mrb[0].mxu0
  %v3142 = vadd.f32 0.0, %v3141
  %v3143 = vpop.f32.mrb[0].mxu0
  %v3144 = vpop.f32.mrb[0].mxu0
  %3145 = vdwg.mxu0
  %3146 = vmatprep.subr.bf16.mxu0 %v1298
  %3147 = vmatpush1.bf16.msra.mxu0 %v1297
  %3148 = vmatprep.subr.bf16.mxu0 %v1306
  %3149 = vmatpush1.bf16.msra.mxu0 %v1305
  %3150 = vmatprep.subr.bf16.mxu0 %v1314
  %3151 = vmatpush1.bf16.msra.mxu0 %v1313
  %3152 = vmatprep.subr.bf16.mxu0 %v1322
  %3153 = vmatpush1.bf16.msra.mxu0 %v1321
  %3154 = vmatprep.subr.bf16.mxu0 %v1330
  %3155 = vmatpush1.bf16.msra.mxu0 %v1329
  %3156 = vmatprep.subr.bf16.mxu0 %v1338
  %3157 = vmatpush1.bf16.msra.mxu0 %v1337
  %3158 = vmatprep.subr.bf16.mxu0 %v1346
  %3159 = vmatpush1.bf16.msra.mxu0 %v1345
  %3160 = vmatprep.subr.bf16.mxu0 %v1354
  %3161 = vmatpush1.bf16.msra.mxu0 %v1353
  %3162 = vmatprep.subr.bf16.mxu0 %v1362
  %3163 = vmatpush1.bf16.msra.mxu0 %v1361
  %3164 = vmatprep.subr.bf16.mxu0 %v1370
  %3165 = vmatpush1.bf16.msra.mxu0 %v1369
  %3166 = vmatprep.subr.bf16.mxu0 %v1378
  %3167 = vmatpush1.bf16.msra.mxu0 %v1377
  %3168 = vmatprep.subr.bf16.mxu0 %v1386
  %3169 = vmatpush1.bf16.msra.mxu0 %v1385
  %3170 = vmatprep.subr.bf16.mxu0 %v1394
  %3171 = vmatpush1.bf16.msra.mxu0 %v1393
  %3172 = vmatprep.subr.bf16.mxu0 %v1402
  %3173 = vmatpush1.bf16.msra.mxu0 %v1401
  %3174 = vmatprep.subr.bf16.mxu0 %v1410
  %3175 = vmatpush1.bf16.msra.mxu0 %v1409
  %3176 = vmatprep.subr.bf16.mxu0 %v1418
  %3177 = vmatpush1.bf16.msra.mxu0 %v1417
  %3178 = vmatprep.mubr.bf16.mxu0 %v3104
  %3179 = vmatmul.mubr.bf16.gmra.mrb[0].mxu0 %v3103
  %v3180 = vpop.f32.mrb[0].mxu0
  %v3181 = vadd.f32 0.0, %v3180
  %v3182 = vpop.f32.mrb[0].mxu0
  %v3183 = vadd.f32 0.0, %v3182
  %v3184 = vpop.f32.mrb[0].mxu0
  %v3185 = vpop.f32.mrb[0].mxu0
  %3186 = vdwg.mxu0
  %3187 = vmatprep.subr.bf16.mxu0 %v1300
  %3188 = vmatpush1.bf16.msra.mxu0 %v1299
  %3189 = vmatprep.subr.bf16.mxu0 %v1308
  %3190 = vmatpush1.bf16.msra.mxu0 %v1307
  %3191 = vmatprep.subr.bf16.mxu0 %v1316
  %3192 = vmatpush1.bf16.msra.mxu0 %v1315
  %3193 = vmatprep.subr.bf16.mxu0 %v1324
  %3194 = vmatpush1.bf16.msra.mxu0 %v1323
  %3195 = vmatprep.subr.bf16.mxu0 %v1332
  %3196 = vmatpush1.bf16.msra.mxu0 %v1331
  %3197 = vmatprep.subr.bf16.mxu0 %v1340
  %3198 = vmatpush1.bf16.msra.mxu0 %v1339
  %3199 = vmatprep.subr.bf16.mxu0 %v1348
  %3200 = vmatpush1.bf16.msra.mxu0 %v1347
  %3201 = vmatprep.subr.bf16.mxu0 %v1356
  %3202 = vmatpush1.bf16.msra.mxu0 %v1355
  %3203 = vmatprep.subr.bf16.mxu0 %v1364
  %3204 = vmatpush1.bf16.msra.mxu0 %v1363
  %3205 = vmatprep.subr.bf16.mxu0 %v1372
  %3206 = vmatpush1.bf16.msra.mxu0 %v1371
  %3207 = vmatprep.subr.bf16.mxu0 %v1380
  %3208 = vmatpush1.bf16.msra.mxu0 %v1379
  %3209 = vmatprep.subr.bf16.mxu0 %v1388
  %3210 = vmatpush1.bf16.msra.mxu0 %v1387
  %3211 = vmatprep.subr.bf16.mxu0 %v1396
  %3212 = vmatpush1.bf16.msra.mxu0 %v1395
  %3213 = vmatprep.subr.bf16.mxu0 %v1404
  %3214 = vmatpush1.bf16.msra.mxu0 %v1403
  %3215 = vmatprep.subr.bf16.mxu0 %v1412
  %3216 = vmatpush1.bf16.msra.mxu0 %v1411
  %3217 = vmatprep.subr.bf16.mxu0 %v1420
  %3218 = vmatpush1.bf16.msra.mxu0 %v1419
  %3219 = vmatprep.mubr.bf16.mxu0 %v3104
  %3220 = vmatmul.mubr.bf16.gmra.mrb[0].mxu0 %v3103
  %v3221 = vpop.f32.mrb[0].mxu0
  %v3222 = vadd.f32 0.0, %v3221
  %v3223 = vpop.f32.mrb[0].mxu0
  %v3224 = vadd.f32 0.0, %v3223
  %v3225 = vpop.f32.mrb[0].mxu0
  %v3226 = vpop.f32.mrb[0].mxu0
  %3227 = vdwg.mxu0
  %3228 = vmatprep.subr.bf16.mxu0 %v1302
  %3229 = vmatpush1.bf16.msra.mxu0 %v1301
  %3230 = vmatprep.subr.bf16.mxu0 %v1310
  %3231 = vmatpush1.bf16.msra.mxu0 %v1309
  %3232 = vmatprep.subr.bf16.mxu0 %v1318
  %3233 = vmatpush1.bf16.msra.mxu0 %v1317
  %3234 = vmatprep.subr.bf16.mxu0 %v1326
  %3235 = vmatpush1.bf16.msra.mxu0 %v1325
  %3236 = vmatprep.subr.bf16.mxu0 %v1334
  %3237 = vmatpush1.bf16.msra.mxu0 %v1333
  %3238 = vmatprep.subr.bf16.mxu0 %v1342
  %3239 = vmatpush1.bf16.msra.mxu0 %v1341
  %3240 = vmatprep.subr.bf16.mxu0 %v1350
  %3241 = vmatpush1.bf16.msra.mxu0 %v1349
  %3242 = vmatprep.subr.bf16.mxu0 %v1358
  %3243 = vmatpush1.bf16.msra.mxu0 %v1357
  %3244 = vmatprep.subr.bf16.mxu0 %v1366
  %3245 = vmatpush1.bf16.msra.mxu0 %v1365
  %3246 = vmatprep.subr.bf16.mxu0 %v1374
  %3247 = vmatpush1.bf16.msra.mxu0 %v1373
  %3248 = vmatprep.subr.bf16.mxu0 %v1382
  %3249 = vmatpush1.bf16.msra.mxu0 %v1381
  %3250 = vmatprep.subr.bf16.mxu0 %v1390
  %3251 = vmatpush1.bf16.msra.mxu0 %v1389
  %3252 = vmatprep.subr.bf16.mxu0 %v1398
  %3253 = vmatpush1.bf16.msra.mxu0 %v1397
  %3254 = vmatprep.subr.bf16.mxu0 %v1406
  %3255 = vmatpush1.bf16.msra.mxu0 %v1405
  %3256 = vmatprep.subr.bf16.mxu0 %v1414
  %3257 = vmatpush1.bf16.msra.mxu0 %v1413
  %3258 = vmatprep.subr.bf16.mxu0 %v1422
  %3259 = vmatpush1.bf16.msra.mxu0 %v1421
  %3260 = vmatprep.mubr.bf16.mxu0 %v3104
  %3261 = vmatmul.mubr.bf16.gmra.mrb[0].mxu0 %v3103
  %v3262 = vpop.f32.mrb[0].mxu0
  %v3263 = vadd.f32 0.0, %v3262
  %v3264 = vpop.f32.mrb[0].mxu0
  %v3265 = vadd.f32 0.0, %v3264
  %v3266 = vpop.f32.mrb[0].mxu0
  %v3267 = vpop.f32.mrb[0].mxu0
  %3268 = vdwg.mxu0
  %v3269 = vadd.f32 %v3140, %v560
  %v3270 = vadd.f32 %v3142, %v562
  %v3271 = vadd.f32 %v3181, %v633
  %v3272 = vadd.f32 %v3183, %v635
  %v3273 = vadd.f32 %v3222, %v672
  %v3274 = vadd.f32 %v3224, %v674
  %v3275 = vadd.f32 %v3263, %v745
  %v3276 = vadd.f32 %v3265, %v747
  %v3277 = vxor.u32 %v3269, 2147483648
  %v3278 = vxor.u32 %v3270, 2147483648
  %v3279 = vxor.u32 %v3271, 2147483648
  %v3280 = vmul.f32 %v3277, 1.442695
  %v3281 = vpow.pop %v3280
  %v3282 = vmul.f32 %v3278, 1.442695
  %v3283 = vpow.pop %v3282
  %v3284 = vmul.f32 %v3279, 1.442695
  %v3285 = vpow.pop %v3284
  %v3286 = vadd.f32 %v3281, 1.0
  %v3287 = vadd.f32 %v3283, 1.0
  %v3288 = vadd.f32 %v3285, 1.0
  %v3289 = vrcp.pop %v3286
  %v3290 = vmul.f32 1.0, %v3289
  %v3291 = vrcp.pop %v3287
  %v3292 = vmul.f32 1.0, %v3291
  %v3293 = vrcp.pop %v3288
  %v3294 = vmul.f32 1.0, %v3293
  %v3295 = vxor.u32 %v3273, 2147483648
  %v3296 = vxor.u32 %v3274, 2147483648
  %v3297 = vxor.u32 %v3275, 2147483648
  %v3298 = vmul.f32 %v3295, 1.442695
  %v3299 = vpow.pop %v3298
  %v3300 = vmul.f32 %v3296, 1.442695
  %v3301 = vpow.pop %v3300
  %v3302 = vmul.f32 %v3297, 1.442695
  %v3303 = vpow.pop %v3302
  %v3304 = vadd.f32 %v3299, 1.0
  %v3305 = vadd.f32 %v3301, 1.0
  %v3306 = vadd.f32 %v3303, 1.0
  %v3307 = vrcp.pop %v3304
  %v3308 = vmul.f32 1.0, %v3307
  %v3309 = vrcp.pop %v3305
  %v3310 = vmul.f32 1.0, %v3309
  %v3311 = vrcp.pop %v3306
  %v3312 = vmul.f32 1.0, %v3311
  %v3313 = vtanh.pop %v3272
  %v3314 = vtanh.pop %v3276
  %v3315 = vmul.f32 %v3292, %v3095
  %v3316 = vmul.f32 %v3290, %v3313
  %v3317 = vadd.f32 %v3315, %v3316
  %v3318 = vmul.f32 %v3310, %v3098
  %v3319 = vmul.f32 %v3308, %v3314
  %v3320 = vadd.f32 %v3318, %v3319
  %v3321 = vtanh.pop %v3317
  %v3322 = vmul.f32 %v3294, %v3321
  %v3323 = vtanh.pop %v3320
  %v3324 = vmul.f32 %v3312, %v3323
  %v3325 = vpack.c.bf16 %v3322, %v3322
  %v3326 = vpack.c.bf16 %v3324, %v3324
  %v3327 = vld [vmem:[%s5] sm:$0xf]
  %v3328 = vld [vmem:[%s5 + $0x4] sm:$0xf]
  %v3329 = vld [vmem:[%s5 + $0x8] sm:$0xf]
  %v3330 = vld [vmem:[%s5 + $0xc] sm:$0xf]
  %v3331 = vld [vmem:[%s5 + $0x10] sm:$0xf]
  %v3332 = vld [vmem:[%s5 + $0x14] sm:$0xf]
  %v3333 = vld [vmem:[%s5 + $0x18] sm:$0xf]
  %v3334 = vld [vmem:[%s5 + $0x1c] sm:$0xf]
  %v3335 = vld [vmem:[%s5 + $0x20] sm:$0xf]
  %v3336 = vld [vmem:[%s5 + $0x24] sm:$0xf]
  %v3337 = vld [vmem:[%s5 + $0x28] sm:$0xf]
  %v3338 = vld [vmem:[%s5 + $0x2c] sm:$0xf]
  %v3339 = vld [vmem:[%s5 + $0x30] sm:$0xf]
  %v3340 = vld [vmem:[%s5 + $0x34] sm:$0xf]
  %v3341 = vld [vmem:[%s5 + $0x38] sm:$0xf]
  %v3342 = vld [vmem:[%s5 + $0x3c] sm:$0xf]
  %v3343 = vld [vmem:[%s5 + $0x40] sm:$0xf]
  %v3344 = vld [vmem:[%s5 + $0x44] sm:$0xf]
  %v3345 = vld [vmem:[%s5 + $0x48] sm:$0xf]
  %v3346 = vld [vmem:[%s5 + $0x4c] sm:$0xf]
  %v3347 = vld [vmem:[%s5 + $0x50] sm:$0xf]
  %v3348 = vld [vmem:[%s5 + $0x54] sm:$0xf]
  %v3349 = vld [vmem:[%s5 + $0x58] sm:$0xf]
  %v3350 = vld [vmem:[%s5 + $0x5c] sm:$0xf]
  %v3351 = vld [vmem:[%s5 + $0x60] sm:$0xf]
  %v3352 = vld [vmem:[%s5 + $0x64] sm:$0xf]
  %v3353 = vld [vmem:[%s5 + $0x68] sm:$0xf]
  %v3354 = vld [vmem:[%s5 + $0x6c] sm:$0xf]
  %v3355 = vld [vmem:[%s5 + $0x70] sm:$0xf]
  %v3356 = vld [vmem:[%s5 + $0x74] sm:$0xf]
  %v3357 = vld [vmem:[%s5 + $0x78] sm:$0xf]
  %v3358 = vld [vmem:[%s5 + $0x7c] sm:$0xf]
  %v3359 = vld [vmem:[%s6] sm:$0x1]
  %v3361 = vlaneseq
  %v3362 = vshrl.u32 %v3361, 7
  %v3363 = vsub.s32 0, %v3362
  %v3364 = vrot.slane %v3359, %v3363
  %v3398 = vunpack.c.l.b16 %v3327
  %v3399 = vunpack.c.l.b16 %v3328
  %v3400 = vunpack.c.l.b16 %v3329
  %v3401 = vunpack.c.l.b16 %v3330
  %v3402 = vunpack.c.l.b16 %v3331
  %v3403 = vunpack.c.l.b16 %v3332
  %v3404 = vunpack.c.l.b16 %v3333
  %v3405 = vunpack.c.l.b16 %v3334
  %v3406 = vunpack.c.l.b16 %v3335
  %v3407 = vunpack.c.l.b16 %v3336
  %v3408 = vunpack.c.l.b16 %v3337
  %v3409 = vunpack.c.l.b16 %v3338
  %v3410 = vunpack.c.l.b16 %v3339
  %v3411 = vunpack.c.l.b16 %v3340
  %v3412 = vunpack.c.l.b16 %v3341
  %v3413 = vunpack.c.l.b16 %v3342
  %v3414 = vunpack.c.l.b16 %v3343
  %v3415 = vunpack.c.l.b16 %v3344
  %v3416 = vunpack.c.l.b16 %v3345
  %v3417 = vunpack.c.l.b16 %v3346
  %v3418 = vunpack.c.l.b16 %v3347
  %v3419 = vunpack.c.l.b16 %v3348
  %v3420 = vunpack.c.l.b16 %v3349
  %v3421 = vunpack.c.l.b16 %v3350
  %v3422 = vunpack.c.l.b16 %v3351
  %v3423 = vunpack.c.l.b16 %v3352
  %v3424 = vunpack.c.l.b16 %v3353
  %v3425 = vunpack.c.l.b16 %v3354
  %v3426 = vunpack.c.l.b16 %v3355
  %v3427 = vunpack.c.l.b16 %v3356
  %v3428 = vunpack.c.l.b16 %v3357
  %v3429 = vunpack.c.l.b16 %v3358
  %v3430 = vpack.c.b16 %v3399, %v3398
  %v3431 = vpack.c.b16 %v3401, %v3400
  %v3432 = vpack.c.b16 %v3403, %v3402
  %v3433 = vpack.c.b16 %v3405, %v3404
  %v3434 = vpack.c.b16 %v3407, %v3406
  %v3435 = vpack.c.b16 %v3409, %v3408
  %v3436 = vpack.c.b16 %v3411, %v3410
  %v3437 = vpack.c.b16 %v3413, %v3412
  %v3438 = vpack.c.b16 %v3415, %v3414
  %v3439 = vpack.c.b16 %v3417, %v3416
  %v3440 = vpack.c.b16 %v3419, %v3418
  %v3441 = vpack.c.b16 %v3421, %v3420
  %v3442 = vpack.c.b16 %v3423, %v3422
  %v3443 = vpack.c.b16 %v3425, %v3424
  %v3444 = vpack.c.b16 %v3427, %v3426
  %v3445 = vpack.c.b16 %v3429, %v3428
  %3462 = vmatprep.subr.bf16.mxu0 0
  %3463 = vmatpush1.bf16.msra.mxu0 %v3430
  %3464 = vmatprep.subr.bf16.mxu0 0
  %3465 = vmatpush1.bf16.msra.mxu0 %v3431
  %3466 = vmatprep.subr.bf16.mxu0 0
  %3467 = vmatpush1.bf16.msra.mxu0 %v3432
  %3468 = vmatprep.subr.bf16.mxu0 0
  %3469 = vmatpush1.bf16.msra.mxu0 %v3433
  %3470 = vmatprep.subr.bf16.mxu0 0
  %3471 = vmatpush1.bf16.msra.mxu0 %v3434
  %3472 = vmatprep.subr.bf16.mxu0 0
  %3473 = vmatpush1.bf16.msra.mxu0 %v3435
  %3474 = vmatprep.subr.bf16.mxu0 0
  %3475 = vmatpush1.bf16.msra.mxu0 %v3436
  %3476 = vmatprep.subr.bf16.mxu0 0
  %3477 = vmatpush1.bf16.msra.mxu0 %v3437
  %3478 = vmatprep.subr.bf16.mxu0 0
  %3479 = vmatpush1.bf16.msra.mxu0 %v3438
  %3480 = vmatprep.subr.bf16.mxu0 0
  %3481 = vmatpush1.bf16.msra.mxu0 %v3439
  %3482 = vmatprep.subr.bf16.mxu0 0
  %3483 = vmatpush1.bf16.msra.mxu0 %v3440
  %3484 = vmatprep.subr.bf16.mxu0 0
  %3485 = vmatpush1.bf16.msra.mxu0 %v3441
  %3486 = vmatprep.subr.bf16.mxu0 0
  %3487 = vmatpush1.bf16.msra.mxu0 %v3442
  %3488 = vmatprep.subr.bf16.mxu0 0
  %3489 = vmatpush1.bf16.msra.mxu0 %v3443
  %3490 = vmatprep.subr.bf16.mxu0 0
  %3491 = vmatpush1.bf16.msra.mxu0 %v3444
  %3492 = vmatprep.subr.bf16.mxu0 0
  %3493 = vmatpush1.bf16.msra.mxu0 %v3445
  %3494 = vmatprep.mubr.bf16.mxu0 %v3326
  %3495 = vmatmul.mubr.bf16.gmra.mrb[0].mxu0 %v3325
  %v3496 = vpop.f32.mrb[0].mxu0
  %v3497 = vadd.f32 %v3364, %v3496
  %v3498 = vpop.f32.mrb[0].mxu0
  %v3499 = vpop.f32.mrb[0].mxu0
  %v3500 = vpop.f32.mrb[0].mxu0
  %3501 = vdwg.mxu0
  %v3502 = vld [vmem:[%s1] sm:$0x3]
  %v3503 = vld [vmem:[%s1 + $0x2] sm:$0x3]
  %v3504 = vld [vmem:[%s1 + $0x4] sm:$0x3]
  %v3505 = vld [vmem:[%s1 + $0x6] sm:$0x3]
  %v3506 = vld [vmem:[%s1 + $0x8] sm:$0x3]
  %v3507 = vld [vmem:[%s1 + $0xa] sm:$0x3]
  %v3508 = vld [vmem:[%s1 + $0xc] sm:$0x3]
  %v3509 = vld [vmem:[%s1 + $0xe] sm:$0x3]
  %v3510 = vld [vmem:[%s7] sm:$0xf]
  %v3511 = vld [vmem:[%s7 + $0x4] sm:$0xf]
  %v3512 = vld [vmem:[%s7 + $0x8] sm:$0xf]
  %v3513 = vld [vmem:[%s7 + $0xc] sm:$0xf]
  %v3514 = vld [vmem:[%s7 + $0x10] sm:$0xf]
  %v3515 = vld [vmem:[%s7 + $0x14] sm:$0xf]
  %v3516 = vld [vmem:[%s7 + $0x18] sm:$0xf]
  %v3517 = vld [vmem:[%s7 + $0x1c] sm:$0xf]
  %v3518 = vld [vmem:[%s7 + $0x20] sm:$0xf]
  %v3519 = vld [vmem:[%s7 + $0x24] sm:$0xf]
  %v3520 = vld [vmem:[%s7 + $0x28] sm:$0xf]
  %v3521 = vld [vmem:[%s7 + $0x2c] sm:$0xf]
  %v3522 = vld [vmem:[%s7 + $0x30] sm:$0xf]
  %v3523 = vld [vmem:[%s7 + $0x34] sm:$0xf]
  %v3524 = vld [vmem:[%s7 + $0x38] sm:$0xf]
  %v3525 = vld [vmem:[%s7 + $0x3c] sm:$0xf]
  %v3526 = vld [vmem:[%s8] sm:$0x1]
  %v3528 = vlaneseq
  %v3529 = vshrl.u32 %v3528, 7
  %v3530 = vsub.s32 0, %v3529
  %v3531 = vrot.slane %v3526, %v3530
  %v3541 = vcombine.low %v3502, %v3503
  %v3542 = vcombine.low %v3504, %v3505
  %v3544 = vunpack.c.l.s4 1983009808
  %v3545 = vunpack.c.0.s8 %v3544
  %v3546 = vlaneseq
  %v3547 = vshrl.u32 %v3546, 7
  %v3548 = vsub.s32 %v3545, %v3547
  %v3549 = vrot.slane %v3541, %v3548
  %v3551 = vunpack.c.l.s4 1983009808
  %v3552 = vunpack.c.0.s8 %v3551
  %v3553 = vlaneseq
  %v3554 = vshrl.u32 %v3553, 7
  %v3555 = vsub.s32 %v3552, %v3554
  %v3556 = vrot.slane %v3542, %v3555
  %v3557 = vcombine.low %v3549, %v3556
  %v3558 = vcombine.low %v3506, %v3507
  %v3559 = vcombine.low %v3508, %v3509
  %v3561 = vunpack.c.l.s4 1983009808
  %v3562 = vunpack.c.0.s8 %v3561
  %v3563 = vlaneseq
  %v3564 = vshrl.u32 %v3563, 7
  %v3565 = vsub.s32 %v3562, %v3564
  %v3566 = vrot.slane %v3558, %v3565
  %v3568 = vunpack.c.l.s4 1983009808
  %v3569 = vunpack.c.0.s8 %v3568
  %v3570 = vlaneseq
  %v3571 = vshrl.u32 %v3570, 7
  %v3572 = vsub.s32 %v3569, %v3571
  %v3573 = vrot.slane %v3559, %v3572
  %v3574 = vcombine.low %v3566, %v3573
  %v3593 = vunpack.c.l.b16 %v3510
  %v3594 = vunpack.c.l.b16 %v3511
  %v3595 = vunpack.c.l.b16 %v3512
  %v3596 = vunpack.c.l.b16 %v3513
  %v3597 = vunpack.c.l.b16 %v3514
  %v3598 = vunpack.c.l.b16 %v3515
  %v3599 = vunpack.c.l.b16 %v3516
  %v3600 = vunpack.c.l.b16 %v3517
  %v3601 = vunpack.c.l.b16 %v3518
  %v3602 = vunpack.c.l.b16 %v3519
  %v3603 = vunpack.c.l.b16 %v3520
  %v3604 = vunpack.c.l.b16 %v3521
  %v3605 = vunpack.c.l.b16 %v3522
  %v3606 = vunpack.c.l.b16 %v3523
  %v3607 = vunpack.c.l.b16 %v3524
  %v3608 = vunpack.c.l.b16 %v3525
  %v3609 = vpack.c.b16 %v3594, %v3593
  %v3610 = vpack.c.b16 %v3596, %v3595
  %v3611 = vpack.c.b16 %v3598, %v3597
  %v3612 = vpack.c.b16 %v3600, %v3599
  %v3613 = vpack.c.b16 %v3602, %v3601
  %v3614 = vpack.c.b16 %v3604, %v3603
  %v3615 = vpack.c.b16 %v3606, %v3605
  %v3616 = vpack.c.b16 %v3608, %v3607
  %3625 = vmatprep.subr.bf16.mxu0 0
  %3626 = vmatpush1.bf16.msra.mxu0 %v3609
  %3627 = vmatprep.subr.bf16.mxu0 0
  %3628 = vmatpush1.bf16.msra.mxu0 %v3610
  %3629 = vmatprep.subr.bf16.mxu0 0
  %3630 = vmatpush1.bf16.msra.mxu0 %v3611
  %3631 = vmatprep.subr.bf16.mxu0 0
  %3632 = vmatpush1.bf16.msra.mxu0 %v3612
  %3633 = vmatprep.subr.bf16.mxu0 0
  %3634 = vmatpush1.bf16.msra.mxu0 %v3613
  %3635 = vmatprep.subr.bf16.mxu0 0
  %3636 = vmatpush1.bf16.msra.mxu0 %v3614
  %3637 = vmatprep.subr.bf16.mxu0 0
  %3638 = vmatpush1.bf16.msra.mxu0 %v3615
  %3639 = vmatprep.subr.bf16.mxu0 0
  %3640 = vmatpush1.bf16.msra.mxu0 %v3616
  %3641 = vmatprep.subr.bf16.mxu0 0
  %3642 = vmatpush1.bf16.msra.mxu0 0
  %3643 = vmatprep.subr.bf16.mxu0 0
  %3644 = vmatpush1.bf16.msra.mxu0 0
  %3645 = vmatprep.subr.bf16.mxu0 0
  %3646 = vmatpush1.bf16.msra.mxu0 0
  %3647 = vmatprep.subr.bf16.mxu0 0
  %3648 = vmatpush1.bf16.msra.mxu0 0
  %3649 = vmatprep.subr.bf16.mxu0 0
  %3650 = vmatpush1.bf16.msra.mxu0 0
  %3651 = vmatprep.subr.bf16.mxu0 0
  %3652 = vmatpush1.bf16.msra.mxu0 0
  %3653 = vmatprep.subr.bf16.mxu0 0
  %3654 = vmatpush1.bf16.msra.mxu0 0
  %3655 = vmatprep.subr.bf16.mxu0 0
  %3656 = vmatpush1.bf16.msra.mxu0 0
  %3657 = vmatprep.mubr.bf16.mxu0 0
  %3658 = vmatmul.mubr.bf16.gmra.mrb[0].mxu0 %v3557
  %v3659 = vpop.f32.mrb[0].mxu0
  %v3660 = vadd.f32 %v3531, %v3659
  %v3661 = vpop.f32.mrb[0].mxu0
  %v3662 = vpop.f32.mrb[0].mxu0
  %v3663 = vadd.f32 %v3531, %v3662
  %v3664 = vpop.f32.mrb[0].mxu0
  %3665 = vmatprep.mubr.bf16.mxu0 0
  %3666 = vmatmul.mubr.bf16.gmra.mrb[0].mxu0 %v3574
  %v3667 = vpop.f32.mrb[0].mxu0
  %v3668 = vadd.f32 %v3531, %v3667
  %v3669 = vpop.f32.mrb[0].mxu0
  %v3670 = vpop.f32.mrb[0].mxu0
  %v3671 = vadd.f32 %v3531, %v3670
  %v3672 = vpop.f32.mrb[0].mxu0
  %3673 = vdwg.mxu0
  %v3678 = vcombine.high %v3660, %v3660
  %v3679 = vcombine.high %v3663, %v3663
  %v3680 = vcombine.high %v3668, %v3668
  %v3681 = vcombine.high %v3671, %v3671
  %v3687 = vcombine.high %v3497, %v3497
  %v3689 = vunpack.c.l.s4 1966171168
  %v3690 = vunpack.c.0.s8 %v3689
  %v3691 = vlaneseq
  %v3692 = vshrl.u32 %v3691, 7
  %v3693 = vsub.s32 %v3690, %v3692
  %v3694 = vrot.slane %v3497, %v3693
  %v3696 = vunpack.c.l.s4 1966171168
  %v3697 = vunpack.c.0.s8 %v3696
  %v3698 = vlaneseq
  %v3699 = vshrl.u32 %v3698, 7
  %v3700 = vsub.s32 %v3697, %v3699
  %v3701 = vrot.slane %v3687, %v3700
  %v3702 = vcombine.high %v3694, %v3694
  %v3703 = vcombine.high %v3701, %v3701
  %v3705 = vunpack.c.l.s4 1966171168
  %v3706 = vunpack.c.0.s8 %v3705
  %v3707 = vlaneseq
  %v3708 = vshrl.u32 %v3707, 7
  %v3709 = vsub.s32 %v3706, %v3708
  %v3710 = vrot.slane %v3694, %v3709
  %v3712 = vunpack.c.l.s4 1966171168
  %v3713 = vunpack.c.0.s8 %v3712
  %v3714 = vlaneseq
  %v3715 = vshrl.u32 %v3714, 7
  %v3716 = vsub.s32 %v3713, %v3715
  %v3717 = vrot.slane %v3701, %v3716
  %v3719 = vunpack.c.l.s4 1966171168
  %v3720 = vunpack.c.0.s8 %v3719
  %v3721 = vlaneseq
  %v3722 = vshrl.u32 %v3721, 7
  %v3723 = vsub.s32 %v3720, %v3722
  %v3724 = vrot.slane %v3702, %v3723
  %v3726 = vunpack.c.l.s4 1966171168
  %v3727 = vunpack.c.0.s8 %v3726
  %v3728 = vlaneseq
  %v3729 = vshrl.u32 %v3728, 7
  %v3730 = vsub.s32 %v3727, %v3729
  %v3731 = vrot.slane %v3703, %v3730
  %v3732 = vcombine.high %v3710, %v3710
  %v3733 = vcombine.high %v3717, %v3717
  %v3734 = vcombine.high %v3724, %v3724
  %v3735 = vcombine.high %v3731, %v3731
  %v3736 = vlaneseq
  %v3737 = vshrl.u32 %v3736, 7
  %v3738 = vsub.s32 0, %v3737
  %v3739 = vrot.slane %v3710, %v3738
  %v3740 = vlaneseq
  %v3741 = vshrl.u32 %v3740, 7
  %v3742 = vsub.s32 0, %v3741
  %v3743 = vrot.slane %v3724, %v3742
  %v3744 = vlaneseq
  %v3745 = vshrl.u32 %v3744, 7
  %v3746 = vsub.s32 0, %v3745
  %v3747 = vrot.slane %v3732, %v3746
  %v3748 = vlaneseq
  %v3749 = vshrl.u32 %v3748, 7
  %v3750 = vsub.s32 0, %v3749
  %v3751 = vrot.slane %v3734, %v3750
  %v3752 = vlaneseq
  %v3753 = vshrl.u32 %v3752, 7
  %v3754 = vsub.s32 0, %v3753
  %v3755 = vrot.slane %v3717, %v3754
  %v3756 = vlaneseq
  %v3757 = vshrl.u32 %v3756, 7
  %v3758 = vsub.s32 0, %v3757
  %v3759 = vrot.slane %v3731, %v3758
  %v3760 = vlaneseq
  %v3761 = vshrl.u32 %v3760, 7
  %v3762 = vsub.s32 0, %v3761
  %v3763 = vrot.slane %v3733, %v3762
  %v3764 = vlaneseq
  %v3765 = vshrl.u32 %v3764, 7
  %v3766 = vsub.s32 0, %v3765
  %v3767 = vrot.slane %v3735, %v3766
  %v3776 = vmul.f32 %v3739, %v3660
  %v3777 = vmul.f32 %v3743, %v3678
  %v3778 = vmul.f32 %v3747, %v3663
  %v3779 = vmul.f32 %v3751, %v3679
  %v3780 = vmul.f32 %v3755, %v3668
  %v3781 = vmul.f32 %v3759, %v3680
  %v3782 = vmul.f32 %v3763, %v3671
  %v3783 = vmul.f32 %v3767, %v3681
  %vm3784 = vcmask 1043456
  %v3785 = vsel %vm3784, %v3776, 0.0
  %3786 = vadd.xlane.f32.xlu0 %v3785
  %v3787 = vpop.xlane.xlu0 %3786
  %v3788 = vsel %vm3784, %v3777, 0.0
  %3789 = vadd.xlane.f32.xlu0 %v3788
  %v3790 = vpop.xlane.xlu0 %3789
  %v3791 = vsel %vm3784, %v3778, 0.0
  %3792 = vadd.xlane.f32.xlu0 %v3791
  %v3793 = vpop.xlane.xlu0 %3792
  %v3794 = vsel %vm3784, %v3779, 0.0
  %3795 = vadd.xlane.f32.xlu0 %v3794
  %v3796 = vpop.xlane.xlu0 %3795
  %v3797 = vsel %vm3784, %v3780, 0.0
  %3798 = vadd.xlane.f32.xlu0 %v3797
  %v3799 = vpop.xlane.xlu0 %3798
  %v3800 = vsel %vm3784, %v3781, 0.0
  %3801 = vadd.xlane.f32.xlu0 %v3800
  %v3802 = vpop.xlane.xlu0 %3801
  %v3803 = vsel %vm3784, %v3782, 0.0
  %3804 = vadd.xlane.f32.xlu0 %v3803
  %v3805 = vpop.xlane.xlu0 %3804
  %v3806 = vsel %vm3784, %v3783, 0.0
  %3807 = vadd.xlane.f32.xlu0 %v3806
  %v3808 = vpop.xlane.xlu0 %3807
  %v3809 = vmul.f32 %v3497, %v3497
  %3810 = vadd.xlane.f32.xlu0 %v3809
  %v3811 = vpop.xlane.xlu0 %3810
  %v3812 = vrsqrt.pop %v3811
  %v3813 = vmul.f32 %v3811, %v3812
  %vm3814 = vcmp.eq.f32.partialorder %v3811, inf
  %v3815 = vsel %vm3814, %v3811, %v3813
  %vm3816 = vcmp.eq.f32.partialorder %v3811, 0.0
  %v3817 = vand.u32 %v3811, 2147483648
  %v3818 = vsel %vm3816, %v3817, %v3815
  %v3819 = vmul.f32 %v3660, %v3660
  %v3820 = vmul.f32 %v3678, %v3678
  %v3821 = vmul.f32 %v3663, %v3663
  %v3822 = vmul.f32 %v3679, %v3679
  %v3823 = vmul.f32 %v3668, %v3668
  %v3824 = vmul.f32 %v3680, %v3680
  %v3825 = vmul.f32 %v3671, %v3671
  %v3826 = vmul.f32 %v3681, %v3681
  %v3827 = vsel %vm3784, %v3819, 0.0
  %3828 = vadd.xlane.f32.xlu0 %v3827
  %v3829 = vpop.xlane.xlu0 %3828
  %v3830 = vsel %vm3784, %v3820, 0.0
  %3831 = vadd.xlane.f32.xlu0 %v3830
  %v3832 = vpop.xlane.xlu0 %3831
  %v3833 = vsel %vm3784, %v3821, 0.0
  %3834 = vadd.xlane.f32.xlu0 %v3833
  %v3835 = vpop.xlane.xlu0 %3834
  %v3836 = vsel %vm3784, %v3822, 0.0
  %3837 = vadd.xlane.f32.xlu0 %v3836
  %v3838 = vpop.xlane.xlu0 %3837
  %v3839 = vsel %vm3784, %v3823, 0.0
  %3840 = vadd.xlane.f32.xlu0 %v3839
  %v3841 = vpop.xlane.xlu0 %3840
  %v3842 = vsel %vm3784, %v3824, 0.0
  %3843 = vadd.xlane.f32.xlu0 %v3842
  %v3844 = vpop.xlane.xlu0 %3843
  %v3845 = vsel %vm3784, %v3825, 0.0
  %3846 = vadd.xlane.f32.xlu0 %v3845
  %v3847 = vpop.xlane.xlu0 %3846
  %v3848 = vsel %vm3784, %v3826, 0.0
  %3849 = vadd.xlane.f32.xlu0 %v3848
  %v3850 = vpop.xlane.xlu0 %3849
  %v3851 = vrsqrt.pop %v3829
  %v3852 = vmul.f32 %v3829, %v3851
  %vm3853 = vcmp.eq.f32.partialorder %v3829, inf
  %v3854 = vsel %vm3853, %v3829, %v3852
  %vm3855 = vcmp.eq.f32.partialorder %v3829, 0.0
  %v3856 = vand.u32 %v3829, 2147483648
  %v3857 = vsel %vm3855, %v3856, %v3854
  %v3858 = vrsqrt.pop %v3832
  %v3859 = vmul.f32 %v3832, %v3858
  %vm3860 = vcmp.eq.f32.partialorder %v3832, inf
  %v3861 = vsel %vm3860, %v3832, %v3859
  %vm3862 = vcmp.eq.f32.partialorder %v3832, 0.0
  %v3863 = vand.u32 %v3832, 2147483648
  %v3864 = vsel %vm3862, %v3863, %v3861
  %v3865 = vrsqrt.pop %v3835
  %v3866 = vmul.f32 %v3835, %v3865
  %vm3867 = vcmp.eq.f32.partialorder %v3835, inf
  %v3868 = vsel %vm3867, %v3835, %v3866
  %vm3869 = vcmp.eq.f32.partialorder %v3835, 0.0
  %v3870 = vand.u32 %v3835, 2147483648
  %v3871 = vsel %vm3869, %v3870, %v3868
  %v3872 = vrsqrt.pop %v3838
  %v3873 = vmul.f32 %v3838, %v3872
  %vm3874 = vcmp.eq.f32.partialorder %v3838, inf
  %v3875 = vsel %vm3874, %v3838, %v3873
  %vm3876 = vcmp.eq.f32.partialorder %v3838, 0.0
  %v3877 = vand.u32 %v3838, 2147483648
  %v3878 = vsel %vm3876, %v3877, %v3875
  %v3879 = vrsqrt.pop %v3841
  %v3880 = vmul.f32 %v3841, %v3879
  %vm3881 = vcmp.eq.f32.partialorder %v3841, inf
  %v3882 = vsel %vm3881, %v3841, %v3880
  %vm3883 = vcmp.eq.f32.partialorder %v3841, 0.0
  %v3884 = vand.u32 %v3841, 2147483648
  %v3885 = vsel %vm3883, %v3884, %v3882
  %v3886 = vrsqrt.pop %v3844
  %v3887 = vmul.f32 %v3844, %v3886
  %vm3888 = vcmp.eq.f32.partialorder %v3844, inf
  %v3889 = vsel %vm3888, %v3844, %v3887
  %vm3890 = vcmp.eq.f32.partialorder %v3844, 0.0
  %v3891 = vand.u32 %v3844, 2147483648
  %v3892 = vsel %vm3890, %v3891, %v3889
  %v3893 = vrsqrt.pop %v3847
  %v3894 = vmul.f32 %v3847, %v3893
  %vm3895 = vcmp.eq.f32.partialorder %v3847, inf
  %v3896 = vsel %vm3895, %v3847, %v3894
  %vm3897 = vcmp.eq.f32.partialorder %v3847, 0.0
  %v3898 = vand.u32 %v3847, 2147483648
  %v3899 = vsel %vm3897, %v3898, %v3896
  %v3900 = vrsqrt.pop %v3850
  %v3901 = vmul.f32 %v3850, %v3900
  %vm3902 = vcmp.eq.f32.partialorder %v3850, inf
  %v3903 = vsel %vm3902, %v3850, %v3901
  %vm3904 = vcmp.eq.f32.partialorder %v3850, 0.0
  %v3905 = vand.u32 %v3850, 2147483648
  %v3906 = vsel %vm3904, %v3905, %v3903
  %v3907 = vmax.f32 %v3818, 1e-08
  %v3908 = vmax.f32 %v3857, 1e-08
  %v3909 = vmax.f32 %v3864, 1e-08
  %v3910 = vmax.f32 %v3871, 1e-08
  %v3911 = vmax.f32 %v3878, 1e-08
  %v3912 = vmax.f32 %v3885, 1e-08
  %v3913 = vmax.f32 %v3892, 1e-08
  %v3914 = vmax.f32 %v3899, 1e-08
  %v3915 = vmax.f32 %v3906, 1e-08
  %v3924 = vlaneseq
  %v3925 = vand.u32 %v3924, 127
  %v3926 = vlaneseq
  %v3927 = vshrl.u32 %v3926, 7
  %v3928 = vsub.s32 %v3925, %v3927
  %v3929 = vrot.slane %v3908, %v3928
  %v3930 = vlaneseq
  %v3931 = vshrl.u32 %v3930, 7
  %v3932 = vsub.s32 %v3925, %v3931
  %v3933 = vrot.slane %v3909, %v3932
  %v3934 = vlaneseq
  %v3935 = vshrl.u32 %v3934, 7
  %v3936 = vsub.s32 %v3925, %v3935
  %v3937 = vrot.slane %v3910, %v3936
  %v3938 = vlaneseq
  %v3939 = vshrl.u32 %v3938, 7
  %v3940 = vsub.s32 %v3925, %v3939
  %v3941 = vrot.slane %v3911, %v3940
  %v3942 = vlaneseq
  %v3943 = vshrl.u32 %v3942, 7
  %v3944 = vsub.s32 %v3925, %v3943
  %v3945 = vrot.slane %v3912, %v3944
  %v3946 = vlaneseq
  %v3947 = vshrl.u32 %v3946, 7
  %v3948 = vsub.s32 %v3925, %v3947
  %v3949 = vrot.slane %v3913, %v3948
  %v3950 = vlaneseq
  %v3951 = vshrl.u32 %v3950, 7
  %v3952 = vsub.s32 %v3925, %v3951
  %v3953 = vrot.slane %v3914, %v3952
  %v3954 = vlaneseq
  %v3955 = vshrl.u32 %v3954, 7
  %v3956 = vsub.s32 %v3925, %v3955
  %v3957 = vrot.slane %v3915, %v3956
  %vm3958 = vcmask 1041409
  %v3959 = vsel %vm3958, %v3933, %v3929
  %vm3960 = vcmask 1042434
  %v3961 = vsel %vm3960, %v3937, %v3959
  %vm3962 = vcmask 1043459
  %v3963 = vsel %vm3962, %v3941, %v3961
  %vm3964 = vcmask 1044484
  %v3965 = vsel %vm3964, %v3945, %v3963
  %vm3966 = vcmask 1045509
  %v3967 = vsel %vm3966, %v3949, %v3965
  %vm3968 = vcmask 1046534
  %v3969 = vsel %vm3968, %v3953, %v3967
  %vm3970 = vcmask 1047559
  %v3971 = vsel %vm3970, %v3957, %v3969
  %v3973 = vmul.f32 %v3907, %v3971
  %v3975 = vlaneseq
  %v3976 = vshrl.u32 %v3975, 7
  %v3977 = vsub.s32 0, %v3976
  %v3978 = vrot.slane %v3973, %v3977
  %3980 = vbcast.lane.b32.xlu0 %v3978, 256
  %v3981 = vpop.permute.xlu0 %3980
  %v3982 = vlaneseq
  %v3983 = vshrl.u32 %v3982, 7
  %v3984 = vsub.s32 1, %v3983
  %v3985 = vrot.slane %v3973, %v3984
  %3987 = vbcast.lane.b32.xlu0 %v3985, 256
  %v3988 = vpop.permute.xlu0 %3987
  %v3989 = vlaneseq
  %v3990 = vshrl.u32 %v3989, 7
  %v3991 = vsub.s32 2, %v3990
  %v3992 = vrot.slane %v3973, %v3991
  %3994 = vbcast.lane.b32.xlu0 %v3992, 256
  %v3995 = vpop.permute.xlu0 %3994
  %v3996 = vlaneseq
  %v3997 = vshrl.u32 %v3996, 7
  %v3998 = vsub.s32 3, %v3997
  %v3999 = vrot.slane %v3973, %v3998
  %4001 = vbcast.lane.b32.xlu0 %v3999, 256
  %v4002 = vpop.permute.xlu0 %4001
  %v4003 = vlaneseq
  %v4004 = vshrl.u32 %v4003, 7
  %v4005 = vsub.s32 4, %v4004
  %v4006 = vrot.slane %v3973, %v4005
  %4008 = vbcast.lane.b32.xlu0 %v4006, 256
  %v4009 = vpop.permute.xlu0 %4008
  %v4010 = vlaneseq
  %v4011 = vshrl.u32 %v4010, 7
  %v4012 = vsub.s32 5, %v4011
  %v4013 = vrot.slane %v3973, %v4012
  %4015 = vbcast.lane.b32.xlu0 %v4013, 256
  %v4016 = vpop.permute.xlu0 %4015
  %v4017 = vlaneseq
  %v4018 = vshrl.u32 %v4017, 7
  %v4019 = vsub.s32 6, %v4018
  %v4020 = vrot.slane %v3973, %v4019
  %4022 = vbcast.lane.b32.xlu0 %v4020, 256
  %v4023 = vpop.permute.xlu0 %4022
  %v4024 = vlaneseq
  %v4025 = vshrl.u32 %v4024, 7
  %v4026 = vsub.s32 7, %v4025
  %v4027 = vrot.slane %v3973, %v4026
  %4029 = vbcast.lane.b32.xlu0 %v4027, 256
  %v4030 = vpop.permute.xlu0 %4029
  %v4039 = vrcp.pop %v3981
  %v4040 = vmul.f32 %v3787, %v4039
  %v4041 = vrcp.pop %v3988
  %v4042 = vmul.f32 %v3790, %v4041
  %v4043 = vrcp.pop %v3995
  %v4044 = vmul.f32 %v3793, %v4043
  %v4045 = vrcp.pop %v4002
  %v4046 = vmul.f32 %v3796, %v4045
  %v4047 = vrcp.pop %v4009
  %v4048 = vmul.f32 %v3799, %v4047
  %v4049 = vrcp.pop %v4016
  %v4050 = vmul.f32 %v3802, %v4049
  %v4051 = vrcp.pop %v4023
  %v4052 = vmul.f32 %v3805, %v4051
  %v4053 = vrcp.pop %v4030
  %v4054 = vmul.f32 %v3808, %v4053
  %4063 = vset.pattern.permute.xlu0 0
  %4064 = vperm.xlu0 %4063, %v4040
  %v4065 = vpop.permute.xlu0 %4064
  %4066 = vset.pattern.permute.xlu0 0
  %4067 = vperm.xlu0 %4066, %v4042
  %v4068 = vpop.permute.xlu0 %4067
  %4069 = vset.pattern.permute.xlu0 0
  %4070 = vperm.xlu0 %4069, %v4044
  %v4071 = vpop.permute.xlu0 %4070
  %4072 = vset.pattern.permute.xlu0 0
  %4073 = vperm.xlu0 %4072, %v4046
  %v4074 = vpop.permute.xlu0 %4073
  %4075 = vset.pattern.permute.xlu0 0
  %4076 = vperm.xlu0 %4075, %v4048
  %v4077 = vpop.permute.xlu0 %4076
  %4078 = vset.pattern.permute.xlu0 0
  %4079 = vperm.xlu0 %4078, %v4050
  %v4080 = vpop.permute.xlu0 %4079
  %4081 = vset.pattern.permute.xlu0 0
  %4082 = vperm.xlu0 %4081, %v4052
  %v4083 = vpop.permute.xlu0 %4082
  %4084 = vset.pattern.permute.xlu0 0
  %4085 = vperm.xlu0 %4084, %v4054
  %v4086 = vpop.permute.xlu0 %4085
  %v4087 = vlaneseq
  %v4088 = vshrl.u32 %v4087, 7
  %v4089 = vsub.s32 %v3925, %v4088
  %v4090 = vrot.slane %v4065, %v4089
  %v4091 = vlaneseq
  %v4092 = vshrl.u32 %v4091, 7
  %v4093 = vsub.s32 %v3925, %v4092
  %v4094 = vrot.slane %v4068, %v4093
  %v4095 = vlaneseq
  %v4096 = vshrl.u32 %v4095, 7
  %v4097 = vsub.s32 %v3925, %v4096
  %v4098 = vrot.slane %v4071, %v4097
  %v4099 = vlaneseq
  %v4100 = vshrl.u32 %v4099, 7
  %v4101 = vsub.s32 %v3925, %v4100
  %v4102 = vrot.slane %v4074, %v4101
  %v4103 = vlaneseq
  %v4104 = vshrl.u32 %v4103, 7
  %v4105 = vsub.s32 %v3925, %v4104
  %v4106 = vrot.slane %v4077, %v4105
  %v4107 = vlaneseq
  %v4108 = vshrl.u32 %v4107, 7
  %v4109 = vsub.s32 %v3925, %v4108
  %v4110 = vrot.slane %v4080, %v4109
  %v4111 = vlaneseq
  %v4112 = vshrl.u32 %v4111, 7
  %v4113 = vsub.s32 %v3925, %v4112
  %v4114 = vrot.slane %v4083, %v4113
  %v4115 = vlaneseq
  %v4116 = vshrl.u32 %v4115, 7
  %v4117 = vsub.s32 %v3925, %v4116
  %v4118 = vrot.slane %v4086, %v4117
  %v4119 = vsel %vm3958, %v4094, %v4090
  %v4120 = vsel %vm3960, %v4098, %v4119
  %v4121 = vsel %vm3962, %v4102, %v4120
  %v4122 = vsel %vm3964, %v4106, %v4121
  %v4123 = vsel %vm3966, %v4110, %v4122
  %v4124 = vsel %vm3968, %v4114, %v4123
  %v4125 = vsel %vm3970, %v4118, %v4124
  %vm4127 = vcmask 31744
  %4128 = vst.msk [vmem:[%s9] sm:$0xff] %vm4127, %v4125
  // Predicated region
  $region38: #{column_predictor_forward.1} parent=0 // pred_check
    _
  $region39: #{column_predictor_forward.1} parent=0 // pred_check_branch
    %4130 = sbr.rel (0) target = $region41
  $region40: #{column_predictor_forward.1} parent=0 // pred_region
    _
  $region41: #{column_predictor_forward.1} parent=0 // pred_fallthru
    _
  // Predicated region
  $region42: #{column_predictor_forward.1} parent=0 // pred_check
    _
  $region43: #{column_predictor_forward.1} parent=0 // pred_check_branch
    %4132 = sbr.rel (0) target = $region45
  $region44: #{column_predictor_forward.1} parent=0 // pred_region
    _
  $region45: #{column_predictor_forward.1} parent=0 // pred_fallthru
    _

</llo_original>
